<compile_context>
chip_gen: v7x
topology: tpu7x:2x2x1
jax: 0.10.0
libtpu: 0.0.40
codegen_flags: <defaults>
</compile_context>

<pallas_src>
import functools

import jax
import jax.numpy as jnp
from jax.experimental import pallas as pl
from jax.experimental.pallas import tpu as pltpu


BP = 8                      # batch rows per timestep, padded to the sublane width
MXU_DTYPE = jnp.bfloat16    # matmul-operand dtype (f32 accumulation / state / BN)


def _round_up(x, m):
    return (x + m - 1) // m * m


# ---------------------------------------------------------------------------
# Fused Generator kernel (no grid: the whole problem is one VMEM-resident slab)
# ---------------------------------------------------------------------------
def _generator_kernel(z_ref, wih0_ref, whh0_ref, b0_ref,
                      wih1_ref, whh1_ref, b1_ref,
                      bc1_ref, g1_ref, be1_ref,
                      bc2_ref, g2_ref, be2_ref,
                      bfc_ref,
                      wc1_hbm, wc2_hbm, wfc_hbm,
                      out_ref,
                      xg0_sc, pad1_sc, pad2_sc,
                      wc1_sc, wc2_sc, wfc_sc, dma_sem,
                      *, T, B, H):
    f32 = jnp.float32
    N = T * BP                              # time-major rows: row = t*BP + b

    def dot_bf(a, b):
        # MXU matmul in bf16 with f32 accumulation.
        return jnp.dot(a.astype(MXU_DTYPE), b, preferred_element_type=f32)

    # ---- Conv/FC weight DMAs start now and complete behind the recurrence ---
    cp_wc1 = pltpu.make_async_copy(wc1_hbm, wc1_sc, dma_sem.at[0])
    cp_wc2 = pltpu.make_async_copy(wc2_hbm, wc2_sc, dma_sem.at[1])
    cp_wfc = pltpu.make_async_copy(wfc_hbm, wfc_sc, dma_sem.at[2])
    cp_wc1.start()
    cp_wc2.start()
    cp_wfc.start()

    # ---------------- LSTM (2 layers), PyTorch gate order i, f, g, o ----------
    # Layer-0 input projection hoisted for all timesteps (one MXU-shaped matmul).
    xg0_sc[...] = dot_bf(z_ref[...], wih0_ref[...]) + b0_ref[...]

    # Zero the conv-1 time-halo rows (time -1 and time T).
    pad1_sc[pl.ds(0, BP), :] = jnp.zeros((BP, H), f32)
    pad1_sc[pl.ds((T + 1) * BP, BP), :] = jnp.zeros((BP, H), f32)

    # Recurrent weights read once, hoisted out of the time loop.
    whh0 = whh0_ref[...]
    wih1 = wih1_ref[...]
    whh1 = whh1_ref[...]
    b1 = b1_ref[...]

    def lstm_cell(gates, c):
        i = jax.nn.sigmoid(gates[:, 0 * H:1 * H])
        f = jax.nn.sigmoid(gates[:, 1 * H:2 * H])
        g = jnp.tanh(gates[:, 2 * H:3 * H])
        o = jax.nn.sigmoid(gates[:, 3 * H:4 * H])
        c_new = f * c + i * g
        h_new = o * jnp.tanh(c_new)
        return h_new, c_new

    h0 = jnp.zeros((BP, H), f32)
    c0 = jnp.zeros((BP, H), f32)
    h1 = jnp.zeros((BP, H), f32)
    c1 = jnp.zeros((BP, H), f32)

    # Interleaved two-layer recurrence (T static & small: full unroll).
    # Layer-1 step t needs layer-0's h_t and its own h_{t-1}; layer-0 step t+1
    # is independent of layer-1 step t, so the two serial chains overlap.
    for t in range(T):
        g0 = xg0_sc[pl.ds(t * BP, BP), :] + dot_bf(h0, whh0)
        h0, c0 = lstm_cell(g0, c0)
        g1 = dot_bf(h0, wih1) + b1 + dot_bf(h1, whh1)
        h1, c1 = lstm_cell(g1, c1)
        pad1_sc[pl.ds((t + 1) * BP, BP), :] = h1     # layer-1 hidden -> conv input

    # ---------------- Conv1d(k=3, pad=1) + BatchNorm1d + ReLU, twice ----------
    # BatchNorm statistics use only the B real batch rows (padding masked out).
    row_in_step = jax.lax.broadcasted_iota(jnp.int32, (N, 1), 0) % BP
    bn_mask = (row_in_step < B).astype(f32)                 # (N, 1)
    inv_cnt = 1.0 / float(B * T)

    def conv_bn_relu(src_ref, w_sc, b_ref_, gamma_ref, beta_ref):
        # k=3 conv over time == 3 shifted matmuls on the time-major slab
        # (one timestep shift == BP rows in the halo buffer).  Cast the slab
        # to bf16 once and slice the three taps from the value.
        x_bf = src_ref[...].astype(MXU_DTYPE)
        y = (jnp.dot(x_bf[0:N, :], w_sc[0], preferred_element_type=f32)
             + jnp.dot(x_bf[BP:BP + N, :], w_sc[1], preferred_element_type=f32)
             + jnp.dot(x_bf[2 * BP:2 * BP + N, :], w_sc[2],
                       preferred_element_type=f32)
             + b_ref_[...])
        # One-pass masked statistics (training-mode biased variance).
        ym = y * bn_mask
        mean = jnp.sum(ym, axis=0, keepdims=True) * inv_cnt
        var = jnp.sum(ym * ym, axis=0, keepdims=True) * inv_cnt - mean * mean
        var = jnp.maximum(var, 0.0)
        y = (y - mean) * jax.lax.rsqrt(var + 1e-5) * gamma_ref[...] + beta_ref[...]
        return jnp.maximum(y, 0.0)

    cp_wc1.wait()
    y1 = conv_bn_relu(pad1_sc, wc1_sc, bc1_ref, g1_ref, be1_ref)     # (N, 2H)

    pad2_sc[pl.ds(0, BP), :] = jnp.zeros((BP, 2 * H), f32)
    pad2_sc[pl.ds((T + 1) * BP, BP), :] = jnp.zeros((BP, 2 * H), f32)
    pad2_sc[pl.ds(BP, N), :] = y1

    cp_wc2.wait()
    y2 = conv_bn_relu(pad2_sc, wc2_sc, bc2_ref, g2_ref, be2_ref)     # (N, H)

    # ---------------- Linear + Tanh (lane-dense, column-padded output) --------
    cp_wfc.wait()
    out_ref[...] = jnp.tanh(
        jnp.dot(y2.astype(MXU_DTYPE), wfc_sc[...],
                preferred_element_type=f32) + bfc_ref[...])


# ---------------------------------------------------------------------------
# Wrapper: one tiny layout prep of z, one fused pallas_call, one tiny un-pad.
# ---------------------------------------------------------------------------
@functools.partial(jax.jit, static_argnames=("output_dim",))
def generator_forward(z, params, *, output_dim):
    B, T, Din = z.shape
    H = params["w_hh0"].shape[0]
    DIN_PAD = params["w_ih0"].shape[0]
    OUT_PAD = params["wfc"].shape[1]
    N = T * BP

    # Time-major, batch padded to the sublane width, lane-padded noise dim.
    zp = jnp.transpose(z, (1, 0, 2))                                 # (T, B, Din)
    zp = jnp.pad(zp, ((0, 0), (0, BP - B), (0, DIN_PAD - Din)))
    zp = zp.reshape(N, DIN_PAD).astype(MXU_DTYPE)

    kernel = functools.partial(_generator_kernel, T=T, B=B, H=H)

    vmem = pl.BlockSpec(memory_space=pltpu.MemorySpace.VMEM)
    hbm = pl.BlockSpec(memory_space=pl.ANY)        # conv/FC weights: DMA'd in-kernel

    args = (zp,
            params["w_ih0"], params["w_hh0"], params["b0"],
            params["w_ih1"], params["w_hh1"], params["b1"],
            params["bc1"], params["g1"], params["be1"],
            params["bc2"], params["g2"], params["be2"],
            params["bfc"],
            params["wc1"], params["wc2"], params["wfc"])
    in_specs = [vmem] * 14 + [hbm] * 3

    flops = 2 * N * (DIN_PAD * 4 * H + 3 * H * 4 * H
                     + 3 * H * 2 * H + 3 * 2 * H * H + H * OUT_PAD)
    transcendentals = 2 * T * BP * 5 * H + N * OUT_PAD
    bytes_accessed = (sum(int(a.size) * a.dtype.itemsize for a in args)
                      + N * OUT_PAD * 4)

    # NOTE (v7x): no grid -> runs on a single TensorCore; at B=2 sharding the
    # batch over cores is not worth it.  VMEM footprint is ~1.5 MiB total, so
    # no tiling is needed on any generation.
    out2d = pl.pallas_call(
        kernel,
        out_shape=jax.ShapeDtypeStruct((N, OUT_PAD), jnp.float32),
        in_specs=in_specs,
        out_specs=vmem,
        scratch_shapes=[
            pltpu.VMEM((N, 4 * H), jnp.float32),           # layer-0 gate pre-acts
            pltpu.VMEM((N + 2 * BP, H), jnp.float32),      # conv-1 input + time halo
            pltpu.VMEM((N + 2 * BP, 2 * H), jnp.float32),  # conv-2 input + time halo
            pltpu.VMEM((3, H, 2 * H), MXU_DTYPE),          # conv-1 weight landing
            pltpu.VMEM((3, 2 * H, H), MXU_DTYPE),          # conv-2 weight landing
            pltpu.VMEM((H, OUT_PAD), MXU_DTYPE),           # FC weight landing
            pltpu.SemaphoreType.DMA((3,)),                 # weight-DMA semaphores
        ],
        cost_estimate=pl.CostEstimate(flops=flops,
                                      transcendentals=transcendentals,
                                      bytes_accessed=bytes_accessed),
    )(*args)

    out = out2d.reshape(T, BP, OUT_PAD)[:, :B, :output_dim]          # drop padding
    return jnp.transpose(out, (1, 0, 2))                             # (B, T, out_dim)


# ---------------------------------------------------------------------------
# Deterministic parameter construction (PyTorch shapes, converted + padded).
# ---------------------------------------------------------------------------
def make_params(key, noise_dim, hidden_dim, output_dim):
    H = hidden_dim
    ks = jax.random.split(key, 16)
    DIN_PAD = _round_up(noise_dim, 128)
    OUT_PAD = _round_up(output_dim, 128)

    def n(k, shape, scale=0.1):
        return (scale * jax.random.normal(k, shape)).astype(jnp.float32)

    p = {}
    # LSTM layer 0: weight_ih (4H, Din), weight_hh (4H, H), bias_ih + bias_hh.
    w_ih0 = n(ks[0], (4 * H, noise_dim)).T                           # (Din, 4H)
    p["w_ih0"] = jnp.pad(w_ih0, ((0, DIN_PAD - noise_dim), (0, 0))).astype(MXU_DTYPE)
    p["w_hh0"] = n(ks[1], (4 * H, H)).T.astype(MXU_DTYPE)            # (H, 4H)
    p["b0"] = (n(ks[2], (4 * H,)) + n(ks[3], (4 * H,))).reshape(1, 4 * H)
    # LSTM layer 1: input size = H.
    p["w_ih1"] = n(ks[4], (4 * H, H)).T.astype(MXU_DTYPE)
    p["w_hh1"] = n(ks[5], (4 * H, H)).T.astype(MXU_DTYPE)
    p["b1"] = (n(ks[6], (4 * H,)) + n(ks[7], (4 * H,))).reshape(1, 4 * H)

    # Conv1: PyTorch weight (2H, H, 3) -> per-tap (Cin, Cout) slabs (3, H, 2H).
    wc1 = n(ks[8], (2 * H, H, 3))
    p["wc1"] = jnp.transpose(wc1, (2, 1, 0)).astype(MXU_DTYPE)
    p["bc1"] = n(ks[9], (2 * H,)).reshape(1, 2 * H)
    p["g1"] = jnp.ones((1, 2 * H), jnp.float32)                      # BN default init
    p["be1"] = jnp.zeros((1, 2 * H), jnp.float32)

    # Conv2: PyTorch weight (H, 2H, 3) -> (3, 2H, H).
    wc2 = n(ks[10], (H, 2 * H, 3))
    p["wc2"] = jnp.transpose(wc2, (2, 1, 0)).astype(MXU_DTYPE)
    p["bc2"] = n(ks[11], (H,)).reshape(1, H)
    p["g2"] = jnp.ones((1, H), jnp.float32)
    p["be2"] = jnp.zeros((1, H), jnp.float32)

    # Linear: weight (out_dim, H) -> (H, OUT_PAD) with zero-padded columns.
    wfc = n(ks[12], (output_dim, H)).T
    p["wfc"] = jnp.pad(wfc, ((0, 0), (0, OUT_PAD - output_dim))).astype(MXU_DTYPE)
    p["bfc"] = jnp.pad(n(ks[13], (output_dim,)),
                       (0, OUT_PAD - output_dim)).reshape(1, OUT_PAD)
    return p


if __name__ == "__main__":
    # Shapes from the module spec (hidden_dim=128, noise_dim=100, seq=10),
    # nh=4 -> output_dim = 16, small batch.
    batch = 2
    sequence_length = 10
    noise_dim = 100
    hidden_dim = 128
    nh = 4
    output_dim = nh * nh

    key = jax.random.PRNGKey(0)
    k_z, k_p = jax.random.split(key)
    z = jax.random.normal(k_z, (batch, sequence_length, noise_dim),
                          dtype=jnp.float32)
    params = make_params(k_p, noise_dim, hidden_dim, output_dim)

    out = generator_forward(z, params, output_dim=output_dim)
    out = jax.block_until_ready(out)
    assert out.shape == (batch, sequence_length, output_dim), out.shape
    assert bool(jnp.all(jnp.isfinite(out)))
    print("KERNEL_OK")
</pallas_src>

<mosaic_0001>
module attributes {stable_mosaic.version = 11 : i64} {
  func.func @_generator_kernel(%arg0: memref<80x128xbf16, #tpu.memory_space<vmem>>, %arg1: memref<128x512xbf16, #tpu.memory_space<vmem>>, %arg2: memref<128x512xbf16, #tpu.memory_space<vmem>>, %arg3: memref<1x512xf32, #tpu.memory_space<vmem>>, %arg4: memref<128x512xbf16, #tpu.memory_space<vmem>>, %arg5: memref<128x512xbf16, #tpu.memory_space<vmem>>, %arg6: memref<1x512xf32, #tpu.memory_space<vmem>>, %arg7: memref<1x256xf32, #tpu.memory_space<vmem>>, %arg8: memref<1x256xf32, #tpu.memory_space<vmem>>, %arg9: memref<1x256xf32, #tpu.memory_space<vmem>>, %arg10: memref<1x128xf32, #tpu.memory_space<vmem>>, %arg11: memref<1x128xf32, #tpu.memory_space<vmem>>, %arg12: memref<1x128xf32, #tpu.memory_space<vmem>>, %arg13: memref<1x128xf32, #tpu.memory_space<vmem>>, %arg14: memref<3x128x256xbf16, #tpu.memory_space<any>>, %arg15: memref<3x256x128xbf16, #tpu.memory_space<any>>, %arg16: memref<128x128xbf16, #tpu.memory_space<any>>, %arg17: memref<80x128xf32, #tpu.memory_space<vmem>>, %arg18: memref<80x512xf32, #tpu.memory_space<vmem>>, %arg19: memref<96x128xf32, #tpu.memory_space<vmem>>, %arg20: memref<96x256xf32, #tpu.memory_space<vmem>>, %arg21: memref<3x128x256xbf16, #tpu.memory_space<vmem>>, %arg22: memref<3x256x128xbf16, #tpu.memory_space<vmem>>, %arg23: memref<128x128xbf16, #tpu.memory_space<vmem>>, %arg24: memref<3x!tpu.dma_semaphore, #tpu.memory_space<semaphore_mem>>) attributes {dimension_semantics = [], scalar_prefetch = 0 : i64, scratch_operands = 7 : i64, tpu.core_type = #tpu.core_type<tc>} {
    %c0_i32 = arith.constant 0 : i32
    %0 = tpu.memref_slice %arg24[%c0_i32] : memref<3x!tpu.dma_semaphore, #tpu.memory_space<semaphore_mem>> -> memref<1x!tpu.dma_semaphore, #tpu.memory_space<semaphore_mem>>
    %1 = tpu.memref_squeeze %0 : memref<1x!tpu.dma_semaphore, #tpu.memory_space<semaphore_mem>> -> memref<!tpu.dma_semaphore, #tpu.memory_space<semaphore_mem>>
    tpu.enqueue_dma source(%arg14 : memref<3x128x256xbf16, #tpu.memory_space<any>>) target(%arg21 : memref<3x128x256xbf16, #tpu.memory_space<vmem>>) target_semaphore(%1 : memref<!tpu.dma_semaphore, #tpu.memory_space<semaphore_mem>>)
    %c1_i32 = arith.constant 1 : i32
    %2 = tpu.memref_slice %arg24[%c1_i32] : memref<3x!tpu.dma_semaphore, #tpu.memory_space<semaphore_mem>> -> memref<1x!tpu.dma_semaphore, #tpu.memory_space<semaphore_mem>>
    %3 = tpu.memref_squeeze %2 : memref<1x!tpu.dma_semaphore, #tpu.memory_space<semaphore_mem>> -> memref<!tpu.dma_semaphore, #tpu.memory_space<semaphore_mem>>
    tpu.enqueue_dma source(%arg15 : memref<3x256x128xbf16, #tpu.memory_space<any>>) target(%arg22 : memref<3x256x128xbf16, #tpu.memory_space<vmem>>) target_semaphore(%3 : memref<!tpu.dma_semaphore, #tpu.memory_space<semaphore_mem>>)
    %c2_i32 = arith.constant 2 : i32
    %4 = tpu.memref_slice %arg24[%c2_i32] : memref<3x!tpu.dma_semaphore, #tpu.memory_space<semaphore_mem>> -> memref<1x!tpu.dma_semaphore, #tpu.memory_space<semaphore_mem>>
    %5 = tpu.memref_squeeze %4 : memref<1x!tpu.dma_semaphore, #tpu.memory_space<semaphore_mem>> -> memref<!tpu.dma_semaphore, #tpu.memory_space<semaphore_mem>>
    tpu.enqueue_dma source(%arg16 : memref<128x128xbf16, #tpu.memory_space<any>>) target(%arg23 : memref<128x128xbf16, #tpu.memory_space<vmem>>) target_semaphore(%5 : memref<!tpu.dma_semaphore, #tpu.memory_space<semaphore_mem>>)
    %c0 = arith.constant 0 : index
    %c0_0 = arith.constant 0 : index
    %6 = vector.load %arg0[%c0, %c0_0] : memref<80x128xbf16, #tpu.memory_space<vmem>>, vector<80x128xbf16>
    %c0_1 = arith.constant 0 : index
    %c0_2 = arith.constant 0 : index
    %7 = vector.load %arg1[%c0_1, %c0_2] : memref<128x512xbf16, #tpu.memory_space<vmem>>, vector<128x512xbf16>
    %cst = arith.constant dense<0.000000e+00> : vector<80x512xf32>
    %8 = tpu.matmul %6, %7, %cst {dimension_numbers = #tpu.dot_dimension_numbers<[1], [0], [0], [1], [0, 0, 1, 1], [], []>} : vector<80x128xbf16>, vector<128x512xbf16>, vector<80x512xf32> -> vector<80x512xf32>
    %c0_3 = arith.constant 0 : index
    %c0_4 = arith.constant 0 : index
    %9 = vector.load %arg3[%c0_3, %c0_4] : memref<1x512xf32, #tpu.memory_space<vmem>>, vector<1x512xf32>
    %10 = vector.broadcast %9 : vector<1x512xf32> to vector<80x512xf32>
    %11 = arith.addf %8, %10 : vector<80x512xf32>
    %c0_5 = arith.constant 0 : index
    %c0_6 = arith.constant 0 : index
    %12 = vector.load %arg18[%c0_5, %c0_6] : memref<80x512xf32, #tpu.memory_space<vmem>>, vector<80x512xf32>
    tpu.vector_store %arg18[%c0_5, %c0_6], %11 {strides = array<i32>} : memref<80x512xf32, #tpu.memory_space<vmem>>, vector<80x512xf32>,
    %cst_7 = arith.constant 0.000000e+00 : f32
    %13 = vector.broadcast %cst_7 : f32 to vector<8x128xf32>
    %c0_8 = arith.constant 0 : index
    %c0_9 = arith.constant 0 : index
    %14 = vector.load %arg19[%c0_8, %c0_9] : memref<96x128xf32, #tpu.memory_space<vmem>>, vector<8x128xf32>
    tpu.vector_store %arg19[%c0_8, %c0_9], %13 {strides = array<i32>} : memref<96x128xf32, #tpu.memory_space<vmem>>, vector<8x128xf32>,
    %cst_10 = arith.constant 0.000000e+00 : f32
    %15 = vector.broadcast %cst_10 : f32 to vector<8x128xf32>
    %c88 = arith.constant 88 : index
    %c0_11 = arith.constant 0 : index
    %16 = vector.load %arg19[%c88, %c0_11] : memref<96x128xf32, #tpu.memory_space<vmem>>, vector<8x128xf32>
    tpu.vector_store %arg19[%c88, %c0_11], %15 {strides = array<i32>} : memref<96x128xf32, #tpu.memory_space<vmem>>, vector<8x128xf32>,
    %c0_12 = arith.constant 0 : index
    %c0_13 = arith.constant 0 : index
    %17 = vector.load %arg2[%c0_12, %c0_13] : memref<128x512xbf16, #tpu.memory_space<vmem>>, vector<128x512xbf16>
    %c0_14 = arith.constant 0 : index
    %c0_15 = arith.constant 0 : index
    %18 = vector.load %arg4[%c0_14, %c0_15] : memref<128x512xbf16, #tpu.memory_space<vmem>>, vector<128x512xbf16>
    %c0_16 = arith.constant 0 : index
    %c0_17 = arith.constant 0 : index
    %19 = vector.load %arg5[%c0_16, %c0_17] : memref<128x512xbf16, #tpu.memory_space<vmem>>, vector<128x512xbf16>
    %c0_18 = arith.constant 0 : index
    %c0_19 = arith.constant 0 : index
    %20 = vector.load %arg6[%c0_18, %c0_19] : memref<1x512xf32, #tpu.memory_space<vmem>>, vector<1x512xf32>
    %cst_20 = arith.constant 0.000000e+00 : f32
    %21 = vector.broadcast %cst_20 : f32 to vector<8x128xf32>
    %cst_21 = arith.constant 0.000000e+00 : f32
    %22 = vector.broadcast %cst_21 : f32 to vector<8x128xf32>
    %cst_22 = arith.constant 0.000000e+00 : f32
    %23 = vector.broadcast %cst_22 : f32 to vector<8x128xf32>
    %cst_23 = arith.constant 0.000000e+00 : f32
    %24 = vector.broadcast %cst_23 : f32 to vector<8x128xf32>
    %c0_24 = arith.constant 0 : index
    %c0_25 = arith.constant 0 : index
    %25 = vector.load %arg18[%c0_24, %c0_25] : memref<80x512xf32, #tpu.memory_space<vmem>>, vector<8x512xf32>
    %26 = arith.truncf %21 : vector<8x128xf32> to vector<8x128xbf16>
    %cst_26 = arith.constant dense<0.000000e+00> : vector<8x512xf32>
    %27 = tpu.matmul %26, %17, %cst_26 {dimension_numbers = #tpu.dot_dimension_numbers<[1], [0], [0], [1], [0, 0, 1, 1], [], []>} : vector<8x128xbf16>, vector<128x512xbf16>, vector<8x512xf32> -> vector<8x512xf32>
    %28 = arith.addf %25, %27 : vector<8x512xf32>
    %29 = vector.extract_strided_slice %28 {offsets = [0, 0], sizes = [8, 128], strides = [1, 1]} : vector<8x512xf32> to vector<8x128xf32>
    %30 = arith.negf %29 : vector<8x128xf32>
    %31 = math.exp %30 : vector<8x128xf32>
    %cst_27 = arith.constant 1.000000e+00 : f32
    %32 = vector.broadcast %cst_27 : f32 to vector<8x128xf32>
    %33 = arith.addf %32, %31 : vector<8x128xf32>
    %34 = arith.divf %32, %33 : vector<8x128xf32>
    %35 = vector.extract_strided_slice %28 {offsets = [0, 128], sizes = [8, 128], strides = [1, 1]} : vector<8x512xf32> to vector<8x128xf32>
    %36 = arith.negf %35 : vector<8x128xf32>
    %37 = math.exp %36 : vector<8x128xf32>
    %cst_28 = arith.constant 1.000000e+00 : f32
    %38 = vector.broadcast %cst_28 : f32 to vector<8x128xf32>
    %39 = arith.addf %38, %37 : vector<8x128xf32>
    %40 = arith.divf %38, %39 : vector<8x128xf32>
    %41 = vector.extract_strided_slice %28 {offsets = [0, 256], sizes = [8, 128], strides = [1, 1]} : vector<8x512xf32> to vector<8x128xf32>
    %42 = math.tanh %41 : vector<8x128xf32>
    %43 = vector.extract_strided_slice %28 {offsets = [0, 384], sizes = [8, 128], strides = [1, 1]} : vector<8x512xf32> to vector<8x128xf32>
    %44 = arith.negf %43 : vector<8x128xf32>
    %45 = math.exp %44 : vector<8x128xf32>
    %cst_29 = arith.constant 1.000000e+00 : f32
    %46 = vector.broadcast %cst_29 : f32 to vector<8x128xf32>
    %47 = arith.addf %46, %45 : vector<8x128xf32>
    %48 = arith.divf %46, %47 : vector<8x128xf32>
    %49 = arith.mulf %40, %22 : vector<8x128xf32>
    %50 = arith.mulf %34, %42 : vector<8x128xf32>
    %51 = arith.addf %49, %50 : vector<8x128xf32>
    %52 = math.tanh %51 : vector<8x128xf32>
    %53 = arith.mulf %48, %52 : vector<8x128xf32>
    %54 = arith.truncf %53 : vector<8x128xf32> to vector<8x128xbf16>
    %cst_30 = arith.constant dense<0.000000e+00> : vector<8x512xf32>
    %55 = tpu.matmul %54, %18, %cst_30 {dimension_numbers = #tpu.dot_dimension_numbers<[1], [0], [0], [1], [0, 0, 1, 1], [], []>} : vector<8x128xbf16>, vector<128x512xbf16>, vector<8x512xf32> -> vector<8x512xf32>
    %56 = vector.broadcast %20 : vector<1x512xf32> to vector<8x512xf32>
    %57 = arith.addf %55, %56 : vector<8x512xf32>
    %58 = arith.truncf %23 : vector<8x128xf32> to vector<8x128xbf16>
    %cst_31 = arith.constant dense<0.000000e+00> : vector<8x512xf32>
    %59 = tpu.matmul %58, %19, %cst_31 {dimension_numbers = #tpu.dot_dimension_numbers<[1], [0], [0], [1], [0, 0, 1, 1], [], []>} : vector<8x128xbf16>, vector<128x512xbf16>, vector<8x512xf32> -> vector<8x512xf32>
    %60 = arith.addf %57, %59 : vector<8x512xf32>
    %61 = vector.extract_strided_slice %60 {offsets = [0, 0], sizes = [8, 128], strides = [1, 1]} : vector<8x512xf32> to vector<8x128xf32>
    %62 = arith.negf %61 : vector<8x128xf32>
    %63 = math.exp %62 : vector<8x128xf32>
    %cst_32 = arith.constant 1.000000e+00 : f32
    %64 = vector.broadcast %cst_32 : f32 to vector<8x128xf32>
    %65 = arith.addf %64, %63 : vector<8x128xf32>
    %66 = arith.divf %64, %65 : vector<8x128xf32>
    %67 = vector.extract_strided_slice %60 {offsets = [0, 128], sizes = [8, 128], strides = [1, 1]} : vector<8x512xf32> to vector<8x128xf32>
    %68 = arith.negf %67 : vector<8x128xf32>
    %69 = math.exp %68 : vector<8x128xf32>
    %cst_33 = arith.constant 1.000000e+00 : f32
    %70 = vector.broadcast %cst_33 : f32 to vector<8x128xf32>
    %71 = arith.addf %70, %69 : vector<8x128xf32>
    %72 = arith.divf %70, %71 : vector<8x128xf32>
    %73 = vector.extract_strided_slice %60 {offsets = [0, 256], sizes = [8, 128], strides = [1, 1]} : vector<8x512xf32> to vector<8x128xf32>
    %74 = math.tanh %73 : vector<8x128xf32>
    %75 = vector.extract_strided_slice %60 {offsets = [0, 384], sizes = [8, 128], strides = [1, 1]} : vector<8x512xf32> to vector<8x128xf32>
    %76 = arith.negf %75 : vector<8x128xf32>
    %77 = math.exp %76 : vector<8x128xf32>
    %cst_34 = arith.constant 1.000000e+00 : f32
    %78 = vector.broadcast %cst_34 : f32 to vector<8x128xf32>
    %79 = arith.addf %78, %77 : vector<8x128xf32>
    %80 = arith.divf %78, %79 : vector<8x128xf32>
    %81 = arith.mulf %72, %24 : vector<8x128xf32>
    %82 = arith.mulf %66, %74 : vector<8x128xf32>
    %83 = arith.addf %81, %82 : vector<8x128xf32>
    %84 = math.tanh %83 : vector<8x128xf32>
    %85 = arith.mulf %80, %84 : vector<8x128xf32>
    %c8 = arith.constant 8 : index
    %c0_35 = arith.constant 0 : index
    %86 = vector.load %arg19[%c8, %c0_35] : memref<96x128xf32, #tpu.memory_space<vmem>>, vector<8x128xf32>
    tpu.vector_store %arg19[%c8, %c0_35], %85 {strides = array<i32>} : memref<96x128xf32, #tpu.memory_space<vmem>>, vector<8x128xf32>,
    %c8_36 = arith.constant 8 : index
    %c0_37 = arith.constant 0 : index
    %87 = vector.load %arg18[%c8_36, %c0_37] : memref<80x512xf32, #tpu.memory_space<vmem>>, vector<8x512xf32>
    %88 = arith.truncf %53 : vector<8x128xf32> to vector<8x128xbf16>
    %cst_38 = arith.constant dense<0.000000e+00> : vector<8x512xf32>
    %89 = tpu.matmul %88, %17, %cst_38 {dimension_numbers = #tpu.dot_dimension_numbers<[1], [0], [0], [1], [0, 0, 1, 1], [], []>} : vector<8x128xbf16>, vector<128x512xbf16>, vector<8x512xf32> -> vector<8x512xf32>
    %90 = arith.addf %87, %89 : vector<8x512xf32>
    %91 = vector.extract_strided_slice %90 {offsets = [0, 0], sizes = [8, 128], strides = [1, 1]} : vector<8x512xf32> to vector<8x128xf32>
    %92 = arith.negf %91 : vector<8x128xf32>
    %93 = math.exp %92 : vector<8x128xf32>
    %cst_39 = arith.constant 1.000000e+00 : f32
    %94 = vector.broadcast %cst_39 : f32 to vector<8x128xf32>
    %95 = arith.addf %94, %93 : vector<8x128xf32>
    %96 = arith.divf %94, %95 : vector<8x128xf32>
    %97 = vector.extract_strided_slice %90 {offsets = [0, 128], sizes = [8, 128], strides = [1, 1]} : vector<8x512xf32> to vector<8x128xf32>
    %98 = arith.negf %97 : vector<8x128xf32>
    %99 = math.exp %98 : vector<8x128xf32>
    %cst_40 = arith.constant 1.000000e+00 : f32
    %100 = vector.broadcast %cst_40 : f32 to vector<8x128xf32>
    %101 = arith.addf %100, %99 : vector<8x128xf32>
    %102 = arith.divf %100, %101 : vector<8x128xf32>
    %103 = vector.extract_strided_slice %90 {offsets = [0, 256], sizes = [8, 128], strides = [1, 1]} : vector<8x512xf32> to vector<8x128xf32>
    %104 = math.tanh %103 : vector<8x128xf32>
    %105 = vector.extract_strided_slice %90 {offsets = [0, 384], sizes = [8, 128], strides = [1, 1]} : vector<8x512xf32> to vector<8x128xf32>
    %106 = arith.negf %105 : vector<8x128xf32>
    %107 = math.exp %106 : vector<8x128xf32>
    %cst_41 = arith.constant 1.000000e+00 : f32
    %108 = vector.broadcast %cst_41 : f32 to vector<8x128xf32>
    %109 = arith.addf %108, %107 : vector<8x128xf32>
    %110 = arith.divf %108, %109 : vector<8x128xf32>
    %111 = arith.mulf %102, %51 : vector<8x128xf32>
    %112 = arith.mulf %96, %104 : vector<8x128xf32>
    %113 = arith.addf %111, %112 : vector<8x128xf32>
    %114 = math.tanh %113 : vector<8x128xf32>
    %115 = arith.mulf %110, %114 : vector<8x128xf32>
    %116 = arith.truncf %115 : vector<8x128xf32> to vector<8x128xbf16>
    %cst_42 = arith.constant dense<0.000000e+00> : vector<8x512xf32>
    %117 = tpu.matmul %116, %18, %cst_42 {dimension_numbers = #tpu.dot_dimension_numbers<[1], [0], [0], [1], [0, 0, 1, 1], [], []>} : vector<8x128xbf16>, vector<128x512xbf16>, vector<8x512xf32> -> vector<8x512xf32>
    %118 = vector.broadcast %20 : vector<1x512xf32> to vector<8x512xf32>
    %119 = arith.addf %117, %118 : vector<8x512xf32>
    %120 = arith.truncf %85 : vector<8x128xf32> to vector<8x128xbf16>
    %cst_43 = arith.constant dense<0.000000e+00> : vector<8x512xf32>
    %121 = tpu.matmul %120, %19, %cst_43 {dimension_numbers = #tpu.dot_dimension_numbers<[1], [0], [0], [1], [0, 0, 1, 1], [], []>} : vector<8x128xbf16>, vector<128x512xbf16>, vector<8x512xf32> -> vector<8x512xf32>
    %122 = arith.addf %119, %121 : vector<8x512xf32>
    %123 = vector.extract_strided_slice %122 {offsets = [0, 0], sizes = [8, 128], strides = [1, 1]} : vector<8x512xf32> to vector<8x128xf32>
    %124 = arith.negf %123 : vector<8x128xf32>
    %125 = math.exp %124 : vector<8x128xf32>
    %cst_44 = arith.constant 1.000000e+00 : f32
    %126 = vector.broadcast %cst_44 : f32 to vector<8x128xf32>
    %127 = arith.addf %126, %125 : vector<8x128xf32>
    %128 = arith.divf %126, %127 : vector<8x128xf32>
    %129 = vector.extract_strided_slice %122 {offsets = [0, 128], sizes = [8, 128], strides = [1, 1]} : vector<8x512xf32> to vector<8x128xf32>
    %130 = arith.negf %129 : vector<8x128xf32>
    %131 = math.exp %130 : vector<8x128xf32>
    %cst_45 = arith.constant 1.000000e+00 : f32
    %132 = vector.broadcast %cst_45 : f32 to vector<8x128xf32>
    %133 = arith.addf %132, %131 : vector<8x128xf32>
    %134 = arith.divf %132, %133 : vector<8x128xf32>
    %135 = vector.extract_strided_slice %122 {offsets = [0, 256], sizes = [8, 128], strides = [1, 1]} : vector<8x512xf32> to vector<8x128xf32>
    %136 = math.tanh %135 : vector<8x128xf32>
    %137 = vector.extract_strided_slice %122 {offsets = [0, 384], sizes = [8, 128], strides = [1, 1]} : vector<8x512xf32> to vector<8x128xf32>
    %138 = arith.negf %137 : vector<8x128xf32>
    %139 = math.exp %138 : vector<8x128xf32>
    %cst_46 = arith.constant 1.000000e+00 : f32
    %140 = vector.broadcast %cst_46 : f32 to vector<8x128xf32>
    %141 = arith.addf %140, %139 : vector<8x128xf32>
    %142 = arith.divf %140, %141 : vector<8x128xf32>
    %143 = arith.mulf %134, %83 : vector<8x128xf32>
    %144 = arith.mulf %128, %136 : vector<8x128xf32>
    %145 = arith.addf %143, %144 : vector<8x128xf32>
    %146 = math.tanh %145 : vector<8x128xf32>
    %147 = arith.mulf %142, %146 : vector<8x128xf32>
    %c16 = arith.constant 16 : index
    %c0_47 = arith.constant 0 : index
    %148 = vector.load %arg19[%c16, %c0_47] : memref<96x128xf32, #tpu.memory_space<vmem>>, vector<8x128xf32>
    tpu.vector_store %arg19[%c16, %c0_47], %147 {strides = array<i32>} : memref<96x128xf32, #tpu.memory_space<vmem>>, vector<8x128xf32>,
    %c16_48 = arith.constant 16 : index
    %c0_49 = arith.constant 0 : index
    %149 = vector.load %arg18[%c16_48, %c0_49] : memref<80x512xf32, #tpu.memory_space<vmem>>, vector<8x512xf32>
    %150 = arith.truncf %115 : vector<8x128xf32> to vector<8x128xbf16>
    %cst_50 = arith.constant dense<0.000000e+00> : vector<8x512xf32>
    %151 = tpu.matmul %150, %17, %cst_50 {dimension_numbers = #tpu.dot_dimension_numbers<[1], [0], [0], [1], [0, 0, 1, 1], [], []>} : vector<8x128xbf16>, vector<128x512xbf16>, vector<8x512xf32> -> vector<8x512xf32>
    %152 = arith.addf %149, %151 : vector<8x512xf32>
    %153 = vector.extract_strided_slice %152 {offsets = [0, 0], sizes = [8, 128], strides = [1, 1]} : vector<8x512xf32> to vector<8x128xf32>
    %154 = arith.negf %153 : vector<8x128xf32>
    %155 = math.exp %154 : vector<8x128xf32>
    %cst_51 = arith.constant 1.000000e+00 : f32
    %156 = vector.broadcast %cst_51 : f32 to vector<8x128xf32>
    %157 = arith.addf %156, %155 : vector<8x128xf32>
    %158 = arith.divf %156, %157 : vector<8x128xf32>
    %159 = vector.extract_strided_slice %152 {offsets = [0, 128], sizes = [8, 128], strides = [1, 1]} : vector<8x512xf32> to vector<8x128xf32>
    %160 = arith.negf %159 : vector<8x128xf32>
    %161 = math.exp %160 : vector<8x128xf32>
    %cst_52 = arith.constant 1.000000e+00 : f32
    %162 = vector.broadcast %cst_52 : f32 to vector<8x128xf32>
    %163 = arith.addf %162, %161 : vector<8x128xf32>
    %164 = arith.divf %162, %163 : vector<8x128xf32>
    %165 = vector.extract_strided_slice %152 {offsets = [0, 256], sizes = [8, 128], strides = [1, 1]} : vector<8x512xf32> to vector<8x128xf32>
    %166 = math.tanh %165 : vector<8x128xf32>
    %167 = vector.extract_strided_slice %152 {offsets = [0, 384], sizes = [8, 128], strides = [1, 1]} : vector<8x512xf32> to vector<8x128xf32>
    %168 = arith.negf %167 : vector<8x128xf32>
    %169 = math.exp %168 : vector<8x128xf32>
    %cst_53 = arith.constant 1.000000e+00 : f32
    %170 = vector.broadcast %cst_53 : f32 to vector<8x128xf32>
    %171 = arith.addf %170, %169 : vector<8x128xf32>
    %172 = arith.divf %170, %171 : vector<8x128xf32>
    %173 = arith.mulf %164, %113 : vector<8x128xf32>
    %174 = arith.mulf %158, %166 : vector<8x128xf32>
    %175 = arith.addf %173, %174 : vector<8x128xf32>
    %176 = math.tanh %175 : vector<8x128xf32>
    %177 = arith.mulf %172, %176 : vector<8x128xf32>
    %178 = arith.truncf %177 : vector<8x128xf32> to vector<8x128xbf16>
    %cst_54 = arith.constant dense<0.000000e+00> : vector<8x512xf32>
    %179 = tpu.matmul %178, %18, %cst_54 {dimension_numbers = #tpu.dot_dimension_numbers<[1], [0], [0], [1], [0, 0, 1, 1], [], []>} : vector<8x128xbf16>, vector<128x512xbf16>, vector<8x512xf32> -> vector<8x512xf32>
    %180 = vector.broadcast %20 : vector<1x512xf32> to vector<8x512xf32>
    %181 = arith.addf %179, %180 : vector<8x512xf32>
    %182 = arith.truncf %147 : vector<8x128xf32> to vector<8x128xbf16>
    %cst_55 = arith.constant dense<0.000000e+00> : vector<8x512xf32>
    %183 = tpu.matmul %182, %19, %cst_55 {dimension_numbers = #tpu.dot_dimension_numbers<[1], [0], [0], [1], [0, 0, 1, 1], [], []>} : vector<8x128xbf16>, vector<128x512xbf16>, vector<8x512xf32> -> vector<8x512xf32>
    %184 = arith.addf %181, %183 : vector<8x512xf32>
    %185 = vector.extract_strided_slice %184 {offsets = [0, 0], sizes = [8, 128], strides = [1, 1]} : vector<8x512xf32> to vector<8x128xf32>
    %186 = arith.negf %185 : vector<8x128xf32>
    %187 = math.exp %186 : vector<8x128xf32>
    %cst_56 = arith.constant 1.000000e+00 : f32
    %188 = vector.broadcast %cst_56 : f32 to vector<8x128xf32>
    %189 = arith.addf %188, %187 : vector<8x128xf32>
    %190 = arith.divf %188, %189 : vector<8x128xf32>
    %191 = vector.extract_strided_slice %184 {offsets = [0, 128], sizes = [8, 128], strides = [1, 1]} : vector<8x512xf32> to vector<8x128xf32>
    %192 = arith.negf %191 : vector<8x128xf32>
    %193 = math.exp %192 : vector<8x128xf32>
    %cst_57 = arith.constant 1.000000e+00 : f32
    %194 = vector.broadcast %cst_57 : f32 to vector<8x128xf32>
    %195 = arith.addf %194, %193 : vector<8x128xf32>
    %196 = arith.divf %194, %195 : vector<8x128xf32>
    %197 = vector.extract_strided_slice %184 {offsets = [0, 256], sizes = [8, 128], strides = [1, 1]} : vector<8x512xf32> to vector<8x128xf32>
    %198 = math.tanh %197 : vector<8x128xf32>
    %199 = vector.extract_strided_slice %184 {offsets = [0, 384], sizes = [8, 128], strides = [1, 1]} : vector<8x512xf32> to vector<8x128xf32>
    %200 = arith.negf %199 : vector<8x128xf32>
    %201 = math.exp %200 : vector<8x128xf32>
    %cst_58 = arith.constant 1.000000e+00 : f32
    %202 = vector.broadcast %cst_58 : f32 to vector<8x128xf32>
    %203 = arith.addf %202, %201 : vector<8x128xf32>
    %204 = arith.divf %202, %203 : vector<8x128xf32>
    %205 = arith.mulf %196, %145 : vector<8x128xf32>
    %206 = arith.mulf %190, %198 : vector<8x128xf32>
    %207 = arith.addf %205, %206 : vector<8x128xf32>
    %208 = math.tanh %207 : vector<8x128xf32>
    %209 = arith.mulf %204, %208 : vector<8x128xf32>
    %c24 = arith.constant 24 : index
    %c0_59 = arith.constant 0 : index
    %210 = vector.load %arg19[%c24, %c0_59] : memref<96x128xf32, #tpu.memory_space<vmem>>, vector<8x128xf32>
    tpu.vector_store %arg19[%c24, %c0_59], %209 {strides = array<i32>} : memref<96x128xf32, #tpu.memory_space<vmem>>, vector<8x128xf32>,
    %c24_60 = arith.constant 24 : index
    %c0_61 = arith.constant 0 : index
    %211 = vector.load %arg18[%c24_60, %c0_61] : memref<80x512xf32, #tpu.memory_space<vmem>>, vector<8x512xf32>
    %212 = arith.truncf %177 : vector<8x128xf32> to vector<8x128xbf16>
    %cst_62 = arith.constant dense<0.000000e+00> : vector<8x512xf32>
    %213 = tpu.matmul %212, %17, %cst_62 {dimension_numbers = #tpu.dot_dimension_numbers<[1], [0], [0], [1], [0, 0, 1, 1], [], []>} : vector<8x128xbf16>, vector<128x512xbf16>, vector<8x512xf32> -> vector<8x512xf32>
    %214 = arith.addf %211, %213 : vector<8x512xf32>
    %215 = vector.extract_strided_slice %214 {offsets = [0, 0], sizes = [8, 128], strides = [1, 1]} : vector<8x512xf32> to vector<8x128xf32>
    %216 = arith.negf %215 : vector<8x128xf32>
    %217 = math.exp %216 : vector<8x128xf32>
    %cst_63 = arith.constant 1.000000e+00 : f32
    %218 = vector.broadcast %cst_63 : f32 to vector<8x128xf32>
    %219 = arith.addf %218, %217 : vector<8x128xf32>
    %220 = arith.divf %218, %219 : vector<8x128xf32>
    %221 = vector.extract_strided_slice %214 {offsets = [0, 128], sizes = [8, 128], strides = [1, 1]} : vector<8x512xf32> to vector<8x128xf32>
    %222 = arith.negf %221 : vector<8x128xf32>
    %223 = math.exp %222 : vector<8x128xf32>
    %cst_64 = arith.constant 1.000000e+00 : f32
    %224 = vector.broadcast %cst_64 : f32 to vector<8x128xf32>
    %225 = arith.addf %224, %223 : vector<8x128xf32>
    %226 = arith.divf %224, %225 : vector<8x128xf32>
    %227 = vector.extract_strided_slice %214 {offsets = [0, 256], sizes = [8, 128], strides = [1, 1]} : vector<8x512xf32> to vector<8x128xf32>
    %228 = math.tanh %227 : vector<8x128xf32>
    %229 = vector.extract_strided_slice %214 {offsets = [0, 384], sizes = [8, 128], strides = [1, 1]} : vector<8x512xf32> to vector<8x128xf32>
    %230 = arith.negf %229 : vector<8x128xf32>
    %231 = math.exp %230 : vector<8x128xf32>
    %cst_65 = arith.constant 1.000000e+00 : f32
    %232 = vector.broadcast %cst_65 : f32 to vector<8x128xf32>
    %233 = arith.addf %232, %231 : vector<8x128xf32>
    %234 = arith.divf %232, %233 : vector<8x128xf32>
    %235 = arith.mulf %226, %175 : vector<8x128xf32>
    %236 = arith.mulf %220, %228 : vector<8x128xf32>
    %237 = arith.addf %235, %236 : vector<8x128xf32>
    %238 = math.tanh %237 : vector<8x128xf32>
    %239 = arith.mulf %234, %238 : vector<8x128xf32>
    %240 = arith.truncf %239 : vector<8x128xf32> to vector<8x128xbf16>
    %cst_66 = arith.constant dense<0.000000e+00> : vector<8x512xf32>
    %241 = tpu.matmul %240, %18, %cst_66 {dimension_numbers = #tpu.dot_dimension_numbers<[1], [0], [0], [1], [0, 0, 1, 1], [], []>} : vector<8x128xbf16>, vector<128x512xbf16>, vector<8x512xf32> -> vector<8x512xf32>
    %242 = vector.broadcast %20 : vector<1x512xf32> to vector<8x512xf32>
    %243 = arith.addf %241, %242 : vector<8x512xf32>
    %244 = arith.truncf %209 : vector<8x128xf32> to vector<8x128xbf16>
    %cst_67 = arith.constant dense<0.000000e+00> : vector<8x512xf32>
    %245 = tpu.matmul %244, %19, %cst_67 {dimension_numbers = #tpu.dot_dimension_numbers<[1], [0], [0], [1], [0, 0, 1, 1], [], []>} : vector<8x128xbf16>, vector<128x512xbf16>, vector<8x512xf32> -> vector<8x512xf32>
    %246 = arith.addf %243, %245 : vector<8x512xf32>
    %247 = vector.extract_strided_slice %246 {offsets = [0, 0], sizes = [8, 128], strides = [1, 1]} : vector<8x512xf32> to vector<8x128xf32>
    %248 = arith.negf %247 : vector<8x128xf32>
    %249 = math.exp %248 : vector<8x128xf32>
    %cst_68 = arith.constant 1.000000e+00 : f32
    %250 = vector.broadcast %cst_68 : f32 to vector<8x128xf32>
    %251 = arith.addf %250, %249 : vector<8x128xf32>
    %252 = arith.divf %250, %251 : vector<8x128xf32>
    %253 = vector.extract_strided_slice %246 {offsets = [0, 128], sizes = [8, 128], strides = [1, 1]} : vector<8x512xf32> to vector<8x128xf32>
    %254 = arith.negf %253 : vector<8x128xf32>
    %255 = math.exp %254 : vector<8x128xf32>
    %cst_69 = arith.constant 1.000000e+00 : f32
    %256 = vector.broadcast %cst_69 : f32 to vector<8x128xf32>
    %257 = arith.addf %256, %255 : vector<8x128xf32>
    %258 = arith.divf %256, %257 : vector<8x128xf32>
    %259 = vector.extract_strided_slice %246 {offsets = [0, 256], sizes = [8, 128], strides = [1, 1]} : vector<8x512xf32> to vector<8x128xf32>
    %260 = math.tanh %259 : vector<8x128xf32>
    %261 = vector.extract_strided_slice %246 {offsets = [0, 384], sizes = [8, 128], strides = [1, 1]} : vector<8x512xf32> to vector<8x128xf32>
    %262 = arith.negf %261 : vector<8x128xf32>
    %263 = math.exp %262 : vector<8x128xf32>
    %cst_70 = arith.constant 1.000000e+00 : f32
    %264 = vector.broadcast %cst_70 : f32 to vector<8x128xf32>
    %265 = arith.addf %264, %263 : vector<8x128xf32>
    %266 = arith.divf %264, %265 : vector<8x128xf32>
    %267 = arith.mulf %258, %207 : vector<8x128xf32>
    %268 = arith.mulf %252, %260 : vector<8x128xf32>
    %269 = arith.addf %267, %268 : vector<8x128xf32>
    %270 = math.tanh %269 : vector<8x128xf32>
    %271 = arith.mulf %266, %270 : vector<8x128xf32>
    %c32 = arith.constant 32 : index
    %c0_71 = arith.constant 0 : index
    %272 = vector.load %arg19[%c32, %c0_71] : memref<96x128xf32, #tpu.memory_space<vmem>>, vector<8x128xf32>
    tpu.vector_store %arg19[%c32, %c0_71], %271 {strides = array<i32>} : memref<96x128xf32, #tpu.memory_space<vmem>>, vector<8x128xf32>,
    %c32_72 = arith.constant 32 : index
    %c0_73 = arith.constant 0 : index
    %273 = vector.load %arg18[%c32_72, %c0_73] : memref<80x512xf32, #tpu.memory_space<vmem>>, vector<8x512xf32>
    %274 = arith.truncf %239 : vector<8x128xf32> to vector<8x128xbf16>
    %cst_74 = arith.constant dense<0.000000e+00> : vector<8x512xf32>
    %275 = tpu.matmul %274, %17, %cst_74 {dimension_numbers = #tpu.dot_dimension_numbers<[1], [0], [0], [1], [0, 0, 1, 1], [], []>} : vector<8x128xbf16>, vector<128x512xbf16>, vector<8x512xf32> -> vector<8x512xf32>
    %276 = arith.addf %273, %275 : vector<8x512xf32>
    %277 = vector.extract_strided_slice %276 {offsets = [0, 0], sizes = [8, 128], strides = [1, 1]} : vector<8x512xf32> to vector<8x128xf32>
    %278 = arith.negf %277 : vector<8x128xf32>
    %279 = math.exp %278 : vector<8x128xf32>
    %cst_75 = arith.constant 1.000000e+00 : f32
    %280 = vector.broadcast %cst_75 : f32 to vector<8x128xf32>
    %281 = arith.addf %280, %279 : vector<8x128xf32>
    %282 = arith.divf %280, %281 : vector<8x128xf32>
    %283 = vector.extract_strided_slice %276 {offsets = [0, 128], sizes = [8, 128], strides = [1, 1]} : vector<8x512xf32> to vector<8x128xf32>
    %284 = arith.negf %283 : vector<8x128xf32>
    %285 = math.exp %284 : vector<8x128xf32>
    %cst_76 = arith.constant 1.000000e+00 : f32
    %286 = vector.broadcast %cst_76 : f32 to vector<8x128xf32>
    %287 = arith.addf %286, %285 : vector<8x128xf32>
    %288 = arith.divf %286, %287 : vector<8x128xf32>
    %289 = vector.extract_strided_slice %276 {offsets = [0, 256], sizes = [8, 128], strides = [1, 1]} : vector<8x512xf32> to vector<8x128xf32>
    %290 = math.tanh %289 : vector<8x128xf32>
    %291 = vector.extract_strided_slice %276 {offsets = [0, 384], sizes = [8, 128], strides = [1, 1]} : vector<8x512xf32> to vector<8x128xf32>
    %292 = arith.negf %291 : vector<8x128xf32>
    %293 = math.exp %292 : vector<8x128xf32>
    %cst_77 = arith.constant 1.000000e+00 : f32
    %294 = vector.broadcast %cst_77 : f32 to vector<8x128xf32>
    %295 = arith.addf %294, %293 : vector<8x128xf32>
    %296 = arith.divf %294, %295 : vector<8x128xf32>
    %297 = arith.mulf %288, %237 : vector<8x128xf32>
    %298 = arith.mulf %282, %290 : vector<8x128xf32>
    %299 = arith.addf %297, %298 : vector<8x128xf32>
    %300 = math.tanh %299 : vector<8x128xf32>
    %301 = arith.mulf %296, %300 : vector<8x128xf32>
    %302 = arith.truncf %301 : vector<8x128xf32> to vector<8x128xbf16>
    %cst_78 = arith.constant dense<0.000000e+00> : vector<8x512xf32>
    %303 = tpu.matmul %302, %18, %cst_78 {dimension_numbers = #tpu.dot_dimension_numbers<[1], [0], [0], [1], [0, 0, 1, 1], [], []>} : vector<8x128xbf16>, vector<128x512xbf16>, vector<8x512xf32> -> vector<8x512xf32>
    %304 = vector.broadcast %20 : vector<1x512xf32> to vector<8x512xf32>
    %305 = arith.addf %303, %304 : vector<8x512xf32>
    %306 = arith.truncf %271 : vector<8x128xf32> to vector<8x128xbf16>
    %cst_79 = arith.constant dense<0.000000e+00> : vector<8x512xf32>
    %307 = tpu.matmul %306, %19, %cst_79 {dimension_numbers = #tpu.dot_dimension_numbers<[1], [0], [0], [1], [0, 0, 1, 1], [], []>} : vector<8x128xbf16>, vector<128x512xbf16>, vector<8x512xf32> -> vector<8x512xf32>
    %308 = arith.addf %305, %307 : vector<8x512xf32>
    %309 = vector.extract_strided_slice %308 {offsets = [0, 0], sizes = [8, 128], strides = [1, 1]} : vector<8x512xf32> to vector<8x128xf32>
    %310 = arith.negf %309 : vector<8x128xf32>
    %311 = math.exp %310 : vector<8x128xf32>
    %cst_80 = arith.constant 1.000000e+00 : f32
    %312 = vector.broadcast %cst_80 : f32 to vector<8x128xf32>
    %313 = arith.addf %312, %311 : vector<8x128xf32>
    %314 = arith.divf %312, %313 : vector<8x128xf32>
    %315 = vector.extract_strided_slice %308 {offsets = [0, 128], sizes = [8, 128], strides = [1, 1]} : vector<8x512xf32> to vector<8x128xf32>
    %316 = arith.negf %315 : vector<8x128xf32>
    %317 = math.exp %316 : vector<8x128xf32>
    %cst_81 = arith.constant 1.000000e+00 : f32
    %318 = vector.broadcast %cst_81 : f32 to vector<8x128xf32>
    %319 = arith.addf %318, %317 : vector<8x128xf32>
    %320 = arith.divf %318, %319 : vector<8x128xf32>
    %321 = vector.extract_strided_slice %308 {offsets = [0, 256], sizes = [8, 128], strides = [1, 1]} : vector<8x512xf32> to vector<8x128xf32>
    %322 = math.tanh %321 : vector<8x128xf32>
    %323 = vector.extract_strided_slice %308 {offsets = [0, 384], sizes = [8, 128], strides = [1, 1]} : vector<8x512xf32> to vector<8x128xf32>
    %324 = arith.negf %323 : vector<8x128xf32>
    %325 = math.exp %324 : vector<8x128xf32>
    %cst_82 = arith.constant 1.000000e+00 : f32
    %326 = vector.broadcast %cst_82 : f32 to vector<8x128xf32>
    %327 = arith.addf %326, %325 : vector<8x128xf32>
    %328 = arith.divf %326, %327 : vector<8x128xf32>
    %329 = arith.mulf %320, %269 : vector<8x128xf32>
    %330 = arith.mulf %314, %322 : vector<8x128xf32>
    %331 = arith.addf %329, %330 : vector<8x128xf32>
    %332 = math.tanh %331 : vector<8x128xf32>
    %333 = arith.mulf %328, %332 : vector<8x128xf32>
    %c40 = arith.constant 40 : index
    %c0_83 = arith.constant 0 : index
    %334 = vector.load %arg19[%c40, %c0_83] : memref<96x128xf32, #tpu.memory_space<vmem>>, vector<8x128xf32>
    tpu.vector_store %arg19[%c40, %c0_83], %333 {strides = array<i32>} : memref<96x128xf32, #tpu.memory_space<vmem>>, vector<8x128xf32>,
    %c40_84 = arith.constant 40 : index
    %c0_85 = arith.constant 0 : index
    %335 = vector.load %arg18[%c40_84, %c0_85] : memref<80x512xf32, #tpu.memory_space<vmem>>, vector<8x512xf32>
    %336 = arith.truncf %301 : vector<8x128xf32> to vector<8x128xbf16>
    %cst_86 = arith.constant dense<0.000000e+00> : vector<8x512xf32>
    %337 = tpu.matmul %336, %17, %cst_86 {dimension_numbers = #tpu.dot_dimension_numbers<[1], [0], [0], [1], [0, 0, 1, 1], [], []>} : vector<8x128xbf16>, vector<128x512xbf16>, vector<8x512xf32> -> vector<8x512xf32>
    %338 = arith.addf %335, %337 : vector<8x512xf32>
    %339 = vector.extract_strided_slice %338 {offsets = [0, 0], sizes = [8, 128], strides = [1, 1]} : vector<8x512xf32> to vector<8x128xf32>
    %340 = arith.negf %339 : vector<8x128xf32>
    %341 = math.exp %340 : vector<8x128xf32>
    %cst_87 = arith.constant 1.000000e+00 : f32
    %342 = vector.broadcast %cst_87 : f32 to vector<8x128xf32>
    %343 = arith.addf %342, %341 : vector<8x128xf32>
    %344 = arith.divf %342, %343 : vector<8x128xf32>
    %345 = vector.extract_strided_slice %338 {offsets = [0, 128], sizes = [8, 128], strides = [1, 1]} : vector<8x512xf32> to vector<8x128xf32>
    %346 = arith.negf %345 : vector<8x128xf32>
    %347 = math.exp %346 : vector<8x128xf32>
    %cst_88 = arith.constant 1.000000e+00 : f32
    %348 = vector.broadcast %cst_88 : f32 to vector<8x128xf32>
    %349 = arith.addf %348, %347 : vector<8x128xf32>
    %350 = arith.divf %348, %349 : vector<8x128xf32>
    %351 = vector.extract_strided_slice %338 {offsets = [0, 256], sizes = [8, 128], strides = [1, 1]} : vector<8x512xf32> to vector<8x128xf32>
    %352 = math.tanh %351 : vector<8x128xf32>
    %353 = vector.extract_strided_slice %338 {offsets = [0, 384], sizes = [8, 128], strides = [1, 1]} : vector<8x512xf32> to vector<8x128xf32>
    %354 = arith.negf %353 : vector<8x128xf32>
    %355 = math.exp %354 : vector<8x128xf32>
    %cst_89 = arith.constant 1.000000e+00 : f32
    %356 = vector.broadcast %cst_89 : f32 to vector<8x128xf32>
    %357 = arith.addf %356, %355 : vector<8x128xf32>
    %358 = arith.divf %356, %357 : vector<8x128xf32>
    %359 = arith.mulf %350, %299 : vector<8x128xf32>
    %360 = arith.mulf %344, %352 : vector<8x128xf32>
    %361 = arith.addf %359, %360 : vector<8x128xf32>
    %362 = math.tanh %361 : vector<8x128xf32>
    %363 = arith.mulf %358, %362 : vector<8x128xf32>
    %364 = arith.truncf %363 : vector<8x128xf32> to vector<8x128xbf16>
    %cst_90 = arith.constant dense<0.000000e+00> : vector<8x512xf32>
    %365 = tpu.matmul %364, %18, %cst_90 {dimension_numbers = #tpu.dot_dimension_numbers<[1], [0], [0], [1], [0, 0, 1, 1], [], []>} : vector<8x128xbf16>, vector<128x512xbf16>, vector<8x512xf32> -> vector<8x512xf32>
    %366 = vector.broadcast %20 : vector<1x512xf32> to vector<8x512xf32>
    %367 = arith.addf %365, %366 : vector<8x512xf32>
    %368 = arith.truncf %333 : vector<8x128xf32> to vector<8x128xbf16>
    %cst_91 = arith.constant dense<0.000000e+00> : vector<8x512xf32>
    %369 = tpu.matmul %368, %19, %cst_91 {dimension_numbers = #tpu.dot_dimension_numbers<[1], [0], [0], [1], [0, 0, 1, 1], [], []>} : vector<8x128xbf16>, vector<128x512xbf16>, vector<8x512xf32> -> vector<8x512xf32>
    %370 = arith.addf %367, %369 : vector<8x512xf32>
    %371 = vector.extract_strided_slice %370 {offsets = [0, 0], sizes = [8, 128], strides = [1, 1]} : vector<8x512xf32> to vector<8x128xf32>
    %372 = arith.negf %371 : vector<8x128xf32>
    %373 = math.exp %372 : vector<8x128xf32>
    %cst_92 = arith.constant 1.000000e+00 : f32
    %374 = vector.broadcast %cst_92 : f32 to vector<8x128xf32>
    %375 = arith.addf %374, %373 : vector<8x128xf32>
    %376 = arith.divf %374, %375 : vector<8x128xf32>
    %377 = vector.extract_strided_slice %370 {offsets = [0, 128], sizes = [8, 128], strides = [1, 1]} : vector<8x512xf32> to vector<8x128xf32>
    %378 = arith.negf %377 : vector<8x128xf32>
    %379 = math.exp %378 : vector<8x128xf32>
    %cst_93 = arith.constant 1.000000e+00 : f32
    %380 = vector.broadcast %cst_93 : f32 to vector<8x128xf32>
    %381 = arith.addf %380, %379 : vector<8x128xf32>
    %382 = arith.divf %380, %381 : vector<8x128xf32>
    %383 = vector.extract_strided_slice %370 {offsets = [0, 256], sizes = [8, 128], strides = [1, 1]} : vector<8x512xf32> to vector<8x128xf32>
    %384 = math.tanh %383 : vector<8x128xf32>
    %385 = vector.extract_strided_slice %370 {offsets = [0, 384], sizes = [8, 128], strides = [1, 1]} : vector<8x512xf32> to vector<8x128xf32>
    %386 = arith.negf %385 : vector<8x128xf32>
    %387 = math.exp %386 : vector<8x128xf32>
    %cst_94 = arith.constant 1.000000e+00 : f32
    %388 = vector.broadcast %cst_94 : f32 to vector<8x128xf32>
    %389 = arith.addf %388, %387 : vector<8x128xf32>
    %390 = arith.divf %388, %389 : vector<8x128xf32>
    %391 = arith.mulf %382, %331 : vector<8x128xf32>
    %392 = arith.mulf %376, %384 : vector<8x128xf32>
    %393 = arith.addf %391, %392 : vector<8x128xf32>
    %394 = math.tanh %393 : vector<8x128xf32>
    %395 = arith.mulf %390, %394 : vector<8x128xf32>
    %c48 = arith.constant 48 : index
    %c0_95 = arith.constant 0 : index
    %396 = vector.load %arg19[%c48, %c0_95] : memref<96x128xf32, #tpu.memory_space<vmem>>, vector<8x128xf32>
    tpu.vector_store %arg19[%c48, %c0_95], %395 {strides = array<i32>} : memref<96x128xf32, #tpu.memory_space<vmem>>, vector<8x128xf32>,
    %c48_96 = arith.constant 48 : index
    %c0_97 = arith.constant 0 : index
    %397 = vector.load %arg18[%c48_96, %c0_97] : memref<80x512xf32, #tpu.memory_space<vmem>>, vector<8x512xf32>
    %398 = arith.truncf %363 : vector<8x128xf32> to vector<8x128xbf16>
    %cst_98 = arith.constant dense<0.000000e+00> : vector<8x512xf32>
    %399 = tpu.matmul %398, %17, %cst_98 {dimension_numbers = #tpu.dot_dimension_numbers<[1], [0], [0], [1], [0, 0, 1, 1], [], []>} : vector<8x128xbf16>, vector<128x512xbf16>, vector<8x512xf32> -> vector<8x512xf32>
    %400 = arith.addf %397, %399 : vector<8x512xf32>
    %401 = vector.extract_strided_slice %400 {offsets = [0, 0], sizes = [8, 128], strides = [1, 1]} : vector<8x512xf32> to vector<8x128xf32>
    %402 = arith.negf %401 : vector<8x128xf32>
    %403 = math.exp %402 : vector<8x128xf32>
    %cst_99 = arith.constant 1.000000e+00 : f32
    %404 = vector.broadcast %cst_99 : f32 to vector<8x128xf32>
    %405 = arith.addf %404, %403 : vector<8x128xf32>
    %406 = arith.divf %404, %405 : vector<8x128xf32>
    %407 = vector.extract_strided_slice %400 {offsets = [0, 128], sizes = [8, 128], strides = [1, 1]} : vector<8x512xf32> to vector<8x128xf32>
    %408 = arith.negf %407 : vector<8x128xf32>
    %409 = math.exp %408 : vector<8x128xf32>
    %cst_100 = arith.constant 1.000000e+00 : f32
    %410 = vector.broadcast %cst_100 : f32 to vector<8x128xf32>
    %411 = arith.addf %410, %409 : vector<8x128xf32>
    %412 = arith.divf %410, %411 : vector<8x128xf32>
    %413 = vector.extract_strided_slice %400 {offsets = [0, 256], sizes = [8, 128], strides = [1, 1]} : vector<8x512xf32> to vector<8x128xf32>
    %414 = math.tanh %413 : vector<8x128xf32>
    %415 = vector.extract_strided_slice %400 {offsets = [0, 384], sizes = [8, 128], strides = [1, 1]} : vector<8x512xf32> to vector<8x128xf32>
    %416 = arith.negf %415 : vector<8x128xf32>
    %417 = math.exp %416 : vector<8x128xf32>
    %cst_101 = arith.constant 1.000000e+00 : f32
    %418 = vector.broadcast %cst_101 : f32 to vector<8x128xf32>
    %419 = arith.addf %418, %417 : vector<8x128xf32>
    %420 = arith.divf %418, %419 : vector<8x128xf32>
    %421 = arith.mulf %412, %361 : vector<8x128xf32>
    %422 = arith.mulf %406, %414 : vector<8x128xf32>
    %423 = arith.addf %421, %422 : vector<8x128xf32>
    %424 = math.tanh %423 : vector<8x128xf32>
    %425 = arith.mulf %420, %424 : vector<8x128xf32>
    %426 = arith.truncf %425 : vector<8x128xf32> to vector<8x128xbf16>
    %cst_102 = arith.constant dense<0.000000e+00> : vector<8x512xf32>
    %427 = tpu.matmul %426, %18, %cst_102 {dimension_numbers = #tpu.dot_dimension_numbers<[1], [0], [0], [1], [0, 0, 1, 1], [], []>} : vector<8x128xbf16>, vector<128x512xbf16>, vector<8x512xf32> -> vector<8x512xf32>
    %428 = vector.broadcast %20 : vector<1x512xf32> to vector<8x512xf32>
    %429 = arith.addf %427, %428 : vector<8x512xf32>
    %430 = arith.truncf %395 : vector<8x128xf32> to vector<8x128xbf16>
    %cst_103 = arith.constant dense<0.000000e+00> : vector<8x512xf32>
    %431 = tpu.matmul %430, %19, %cst_103 {dimension_numbers = #tpu.dot_dimension_numbers<[1], [0], [0], [1], [0, 0, 1, 1], [], []>} : vector<8x128xbf16>, vector<128x512xbf16>, vector<8x512xf32> -> vector<8x512xf32>
    %432 = arith.addf %429, %431 : vector<8x512xf32>
    %433 = vector.extract_strided_slice %432 {offsets = [0, 0], sizes = [8, 128], strides = [1, 1]} : vector<8x512xf32> to vector<8x128xf32>
    %434 = arith.negf %433 : vector<8x128xf32>
    %435 = math.exp %434 : vector<8x128xf32>
    %cst_104 = arith.constant 1.000000e+00 : f32
    %436 = vector.broadcast %cst_104 : f32 to vector<8x128xf32>
    %437 = arith.addf %436, %435 : vector<8x128xf32>
    %438 = arith.divf %436, %437 : vector<8x128xf32>
    %439 = vector.extract_strided_slice %432 {offsets = [0, 128], sizes = [8, 128], strides = [1, 1]} : vector<8x512xf32> to vector<8x128xf32>
    %440 = arith.negf %439 : vector<8x128xf32>
    %441 = math.exp %440 : vector<8x128xf32>
    %cst_105 = arith.constant 1.000000e+00 : f32
    %442 = vector.broadcast %cst_105 : f32 to vector<8x128xf32>
    %443 = arith.addf %442, %441 : vector<8x128xf32>
    %444 = arith.divf %442, %443 : vector<8x128xf32>
    %445 = vector.extract_strided_slice %432 {offsets = [0, 256], sizes = [8, 128], strides = [1, 1]} : vector<8x512xf32> to vector<8x128xf32>
    %446 = math.tanh %445 : vector<8x128xf32>
    %447 = vector.extract_strided_slice %432 {offsets = [0, 384], sizes = [8, 128], strides = [1, 1]} : vector<8x512xf32> to vector<8x128xf32>
    %448 = arith.negf %447 : vector<8x128xf32>
    %449 = math.exp %448 : vector<8x128xf32>
    %cst_106 = arith.constant 1.000000e+00 : f32
    %450 = vector.broadcast %cst_106 : f32 to vector<8x128xf32>
    %451 = arith.addf %450, %449 : vector<8x128xf32>
    %452 = arith.divf %450, %451 : vector<8x128xf32>
    %453 = arith.mulf %444, %393 : vector<8x128xf32>
    %454 = arith.mulf %438, %446 : vector<8x128xf32>
    %455 = arith.addf %453, %454 : vector<8x128xf32>
    %456 = math.tanh %455 : vector<8x128xf32>
    %457 = arith.mulf %452, %456 : vector<8x128xf32>
    %c56 = arith.constant 56 : index
    %c0_107 = arith.constant 0 : index
    %458 = vector.load %arg19[%c56, %c0_107] : memref<96x128xf32, #tpu.memory_space<vmem>>, vector<8x128xf32>
    tpu.vector_store %arg19[%c56, %c0_107], %457 {strides = array<i32>} : memref<96x128xf32, #tpu.memory_space<vmem>>, vector<8x128xf32>,
    %c56_108 = arith.constant 56 : index
    %c0_109 = arith.constant 0 : index
    %459 = vector.load %arg18[%c56_108, %c0_109] : memref<80x512xf32, #tpu.memory_space<vmem>>, vector<8x512xf32>
    %460 = arith.truncf %425 : vector<8x128xf32> to vector<8x128xbf16>
    %cst_110 = arith.constant dense<0.000000e+00> : vector<8x512xf32>
    %461 = tpu.matmul %460, %17, %cst_110 {dimension_numbers = #tpu.dot_dimension_numbers<[1], [0], [0], [1], [0, 0, 1, 1], [], []>} : vector<8x128xbf16>, vector<128x512xbf16>, vector<8x512xf32> -> vector<8x512xf32>
    %462 = arith.addf %459, %461 : vector<8x512xf32>
    %463 = vector.extract_strided_slice %462 {offsets = [0, 0], sizes = [8, 128], strides = [1, 1]} : vector<8x512xf32> to vector<8x128xf32>
    %464 = arith.negf %463 : vector<8x128xf32>
    %465 = math.exp %464 : vector<8x128xf32>
    %cst_111 = arith.constant 1.000000e+00 : f32
    %466 = vector.broadcast %cst_111 : f32 to vector<8x128xf32>
    %467 = arith.addf %466, %465 : vector<8x128xf32>
    %468 = arith.divf %466, %467 : vector<8x128xf32>
    %469 = vector.extract_strided_slice %462 {offsets = [0, 128], sizes = [8, 128], strides = [1, 1]} : vector<8x512xf32> to vector<8x128xf32>
    %470 = arith.negf %469 : vector<8x128xf32>
    %471 = math.exp %470 : vector<8x128xf32>
    %cst_112 = arith.constant 1.000000e+00 : f32
    %472 = vector.broadcast %cst_112 : f32 to vector<8x128xf32>
    %473 = arith.addf %472, %471 : vector<8x128xf32>
    %474 = arith.divf %472, %473 : vector<8x128xf32>
    %475 = vector.extract_strided_slice %462 {offsets = [0, 256], sizes = [8, 128], strides = [1, 1]} : vector<8x512xf32> to vector<8x128xf32>
    %476 = math.tanh %475 : vector<8x128xf32>
    %477 = vector.extract_strided_slice %462 {offsets = [0, 384], sizes = [8, 128], strides = [1, 1]} : vector<8x512xf32> to vector<8x128xf32>
    %478 = arith.negf %477 : vector<8x128xf32>
    %479 = math.exp %478 : vector<8x128xf32>
    %cst_113 = arith.constant 1.000000e+00 : f32
    %480 = vector.broadcast %cst_113 : f32 to vector<8x128xf32>
    %481 = arith.addf %480, %479 : vector<8x128xf32>
    %482 = arith.divf %480, %481 : vector<8x128xf32>
    %483 = arith.mulf %474, %423 : vector<8x128xf32>
    %484 = arith.mulf %468, %476 : vector<8x128xf32>
    %485 = arith.addf %483, %484 : vector<8x128xf32>
    %486 = math.tanh %485 : vector<8x128xf32>
    %487 = arith.mulf %482, %486 : vector<8x128xf32>
    %488 = arith.truncf %487 : vector<8x128xf32> to vector<8x128xbf16>
    %cst_114 = arith.constant dense<0.000000e+00> : vector<8x512xf32>
    %489 = tpu.matmul %488, %18, %cst_114 {dimension_numbers = #tpu.dot_dimension_numbers<[1], [0], [0], [1], [0, 0, 1, 1], [], []>} : vector<8x128xbf16>, vector<128x512xbf16>, vector<8x512xf32> -> vector<8x512xf32>
    %490 = vector.broadcast %20 : vector<1x512xf32> to vector<8x512xf32>
    %491 = arith.addf %489, %490 : vector<8x512xf32>
    %492 = arith.truncf %457 : vector<8x128xf32> to vector<8x128xbf16>
    %cst_115 = arith.constant dense<0.000000e+00> : vector<8x512xf32>
    %493 = tpu.matmul %492, %19, %cst_115 {dimension_numbers = #tpu.dot_dimension_numbers<[1], [0], [0], [1], [0, 0, 1, 1], [], []>} : vector<8x128xbf16>, vector<128x512xbf16>, vector<8x512xf32> -> vector<8x512xf32>
    %494 = arith.addf %491, %493 : vector<8x512xf32>
    %495 = vector.extract_strided_slice %494 {offsets = [0, 0], sizes = [8, 128], strides = [1, 1]} : vector<8x512xf32> to vector<8x128xf32>
    %496 = arith.negf %495 : vector<8x128xf32>
    %497 = math.exp %496 : vector<8x128xf32>
    %cst_116 = arith.constant 1.000000e+00 : f32
    %498 = vector.broadcast %cst_116 : f32 to vector<8x128xf32>
    %499 = arith.addf %498, %497 : vector<8x128xf32>
    %500 = arith.divf %498, %499 : vector<8x128xf32>
    %501 = vector.extract_strided_slice %494 {offsets = [0, 128], sizes = [8, 128], strides = [1, 1]} : vector<8x512xf32> to vector<8x128xf32>
    %502 = arith.negf %501 : vector<8x128xf32>
    %503 = math.exp %502 : vector<8x128xf32>
    %cst_117 = arith.constant 1.000000e+00 : f32
    %504 = vector.broadcast %cst_117 : f32 to vector<8x128xf32>
    %505 = arith.addf %504, %503 : vector<8x128xf32>
    %506 = arith.divf %504, %505 : vector<8x128xf32>
    %507 = vector.extract_strided_slice %494 {offsets = [0, 256], sizes = [8, 128], strides = [1, 1]} : vector<8x512xf32> to vector<8x128xf32>
    %508 = math.tanh %507 : vector<8x128xf32>
    %509 = vector.extract_strided_slice %494 {offsets = [0, 384], sizes = [8, 128], strides = [1, 1]} : vector<8x512xf32> to vector<8x128xf32>
    %510 = arith.negf %509 : vector<8x128xf32>
    %511 = math.exp %510 : vector<8x128xf32>
    %cst_118 = arith.constant 1.000000e+00 : f32
    %512 = vector.broadcast %cst_118 : f32 to vector<8x128xf32>
    %513 = arith.addf %512, %511 : vector<8x128xf32>
    %514 = arith.divf %512, %513 : vector<8x128xf32>
    %515 = arith.mulf %506, %455 : vector<8x128xf32>
    %516 = arith.mulf %500, %508 : vector<8x128xf32>
    %517 = arith.addf %515, %516 : vector<8x128xf32>
    %518 = math.tanh %517 : vector<8x128xf32>
    %519 = arith.mulf %514, %518 : vector<8x128xf32>
    %c64 = arith.constant 64 : index
    %c0_119 = arith.constant 0 : index
    %520 = vector.load %arg19[%c64, %c0_119] : memref<96x128xf32, #tpu.memory_space<vmem>>, vector<8x128xf32>
    tpu.vector_store %arg19[%c64, %c0_119], %519 {strides = array<i32>} : memref<96x128xf32, #tpu.memory_space<vmem>>, vector<8x128xf32>,
    %c64_120 = arith.constant 64 : index
    %c0_121 = arith.constant 0 : index
    %521 = vector.load %arg18[%c64_120, %c0_121] : memref<80x512xf32, #tpu.memory_space<vmem>>, vector<8x512xf32>
    %522 = arith.truncf %487 : vector<8x128xf32> to vector<8x128xbf16>
    %cst_122 = arith.constant dense<0.000000e+00> : vector<8x512xf32>
    %523 = tpu.matmul %522, %17, %cst_122 {dimension_numbers = #tpu.dot_dimension_numbers<[1], [0], [0], [1], [0, 0, 1, 1], [], []>} : vector<8x128xbf16>, vector<128x512xbf16>, vector<8x512xf32> -> vector<8x512xf32>
    %524 = arith.addf %521, %523 : vector<8x512xf32>
    %525 = vector.extract_strided_slice %524 {offsets = [0, 0], sizes = [8, 128], strides = [1, 1]} : vector<8x512xf32> to vector<8x128xf32>
    %526 = arith.negf %525 : vector<8x128xf32>
    %527 = math.exp %526 : vector<8x128xf32>
    %cst_123 = arith.constant 1.000000e+00 : f32
    %528 = vector.broadcast %cst_123 : f32 to vector<8x128xf32>
    %529 = arith.addf %528, %527 : vector<8x128xf32>
    %530 = arith.divf %528, %529 : vector<8x128xf32>
    %531 = vector.extract_strided_slice %524 {offsets = [0, 128], sizes = [8, 128], strides = [1, 1]} : vector<8x512xf32> to vector<8x128xf32>
    %532 = arith.negf %531 : vector<8x128xf32>
    %533 = math.exp %532 : vector<8x128xf32>
    %cst_124 = arith.constant 1.000000e+00 : f32
    %534 = vector.broadcast %cst_124 : f32 to vector<8x128xf32>
    %535 = arith.addf %534, %533 : vector<8x128xf32>
    %536 = arith.divf %534, %535 : vector<8x128xf32>
    %537 = vector.extract_strided_slice %524 {offsets = [0, 256], sizes = [8, 128], strides = [1, 1]} : vector<8x512xf32> to vector<8x128xf32>
    %538 = math.tanh %537 : vector<8x128xf32>
    %539 = vector.extract_strided_slice %524 {offsets = [0, 384], sizes = [8, 128], strides = [1, 1]} : vector<8x512xf32> to vector<8x128xf32>
    %540 = arith.negf %539 : vector<8x128xf32>
    %541 = math.exp %540 : vector<8x128xf32>
    %cst_125 = arith.constant 1.000000e+00 : f32
    %542 = vector.broadcast %cst_125 : f32 to vector<8x128xf32>
    %543 = arith.addf %542, %541 : vector<8x128xf32>
    %544 = arith.divf %542, %543 : vector<8x128xf32>
    %545 = arith.mulf %536, %485 : vector<8x128xf32>
    %546 = arith.mulf %530, %538 : vector<8x128xf32>
    %547 = arith.addf %545, %546 : vector<8x128xf32>
    %548 = math.tanh %547 : vector<8x128xf32>
    %549 = arith.mulf %544, %548 : vector<8x128xf32>
    %550 = arith.truncf %549 : vector<8x128xf32> to vector<8x128xbf16>
    %cst_126 = arith.constant dense<0.000000e+00> : vector<8x512xf32>
    %551 = tpu.matmul %550, %18, %cst_126 {dimension_numbers = #tpu.dot_dimension_numbers<[1], [0], [0], [1], [0, 0, 1, 1], [], []>} : vector<8x128xbf16>, vector<128x512xbf16>, vector<8x512xf32> -> vector<8x512xf32>
    %552 = vector.broadcast %20 : vector<1x512xf32> to vector<8x512xf32>
    %553 = arith.addf %551, %552 : vector<8x512xf32>
    %554 = arith.truncf %519 : vector<8x128xf32> to vector<8x128xbf16>
    %cst_127 = arith.constant dense<0.000000e+00> : vector<8x512xf32>
    %555 = tpu.matmul %554, %19, %cst_127 {dimension_numbers = #tpu.dot_dimension_numbers<[1], [0], [0], [1], [0, 0, 1, 1], [], []>} : vector<8x128xbf16>, vector<128x512xbf16>, vector<8x512xf32> -> vector<8x512xf32>
    %556 = arith.addf %553, %555 : vector<8x512xf32>
    %557 = vector.extract_strided_slice %556 {offsets = [0, 0], sizes = [8, 128], strides = [1, 1]} : vector<8x512xf32> to vector<8x128xf32>
    %558 = arith.negf %557 : vector<8x128xf32>
    %559 = math.exp %558 : vector<8x128xf32>
    %cst_128 = arith.constant 1.000000e+00 : f32
    %560 = vector.broadcast %cst_128 : f32 to vector<8x128xf32>
    %561 = arith.addf %560, %559 : vector<8x128xf32>
    %562 = arith.divf %560, %561 : vector<8x128xf32>
    %563 = vector.extract_strided_slice %556 {offsets = [0, 128], sizes = [8, 128], strides = [1, 1]} : vector<8x512xf32> to vector<8x128xf32>
    %564 = arith.negf %563 : vector<8x128xf32>
    %565 = math.exp %564 : vector<8x128xf32>
    %cst_129 = arith.constant 1.000000e+00 : f32
    %566 = vector.broadcast %cst_129 : f32 to vector<8x128xf32>
    %567 = arith.addf %566, %565 : vector<8x128xf32>
    %568 = arith.divf %566, %567 : vector<8x128xf32>
    %569 = vector.extract_strided_slice %556 {offsets = [0, 256], sizes = [8, 128], strides = [1, 1]} : vector<8x512xf32> to vector<8x128xf32>
    %570 = math.tanh %569 : vector<8x128xf32>
    %571 = vector.extract_strided_slice %556 {offsets = [0, 384], sizes = [8, 128], strides = [1, 1]} : vector<8x512xf32> to vector<8x128xf32>
    %572 = arith.negf %571 : vector<8x128xf32>
    %573 = math.exp %572 : vector<8x128xf32>
    %cst_130 = arith.constant 1.000000e+00 : f32
    %574 = vector.broadcast %cst_130 : f32 to vector<8x128xf32>
    %575 = arith.addf %574, %573 : vector<8x128xf32>
    %576 = arith.divf %574, %575 : vector<8x128xf32>
    %577 = arith.mulf %568, %517 : vector<8x128xf32>
    %578 = arith.mulf %562, %570 : vector<8x128xf32>
    %579 = arith.addf %577, %578 : vector<8x128xf32>
    %580 = math.tanh %579 : vector<8x128xf32>
    %581 = arith.mulf %576, %580 : vector<8x128xf32>
    %c72 = arith.constant 72 : index
    %c0_131 = arith.constant 0 : index
    %582 = vector.load %arg19[%c72, %c0_131] : memref<96x128xf32, #tpu.memory_space<vmem>>, vector<8x128xf32>
    tpu.vector_store %arg19[%c72, %c0_131], %581 {strides = array<i32>} : memref<96x128xf32, #tpu.memory_space<vmem>>, vector<8x128xf32>,
    %c72_132 = arith.constant 72 : index
    %c0_133 = arith.constant 0 : index
    %583 = vector.load %arg18[%c72_132, %c0_133] : memref<80x512xf32, #tpu.memory_space<vmem>>, vector<8x512xf32>
    %584 = arith.truncf %549 : vector<8x128xf32> to vector<8x128xbf16>
    %cst_134 = arith.constant dense<0.000000e+00> : vector<8x512xf32>
    %585 = tpu.matmul %584, %17, %cst_134 {dimension_numbers = #tpu.dot_dimension_numbers<[1], [0], [0], [1], [0, 0, 1, 1], [], []>} : vector<8x128xbf16>, vector<128x512xbf16>, vector<8x512xf32> -> vector<8x512xf32>
    %586 = arith.addf %583, %585 : vector<8x512xf32>
    %587 = vector.extract_strided_slice %586 {offsets = [0, 0], sizes = [8, 128], strides = [1, 1]} : vector<8x512xf32> to vector<8x128xf32>
    %588 = arith.negf %587 : vector<8x128xf32>
    %589 = math.exp %588 : vector<8x128xf32>
    %cst_135 = arith.constant 1.000000e+00 : f32
    %590 = vector.broadcast %cst_135 : f32 to vector<8x128xf32>
    %591 = arith.addf %590, %589 : vector<8x128xf32>
    %592 = arith.divf %590, %591 : vector<8x128xf32>
    %593 = vector.extract_strided_slice %586 {offsets = [0, 128], sizes = [8, 128], strides = [1, 1]} : vector<8x512xf32> to vector<8x128xf32>
    %594 = arith.negf %593 : vector<8x128xf32>
    %595 = math.exp %594 : vector<8x128xf32>
    %cst_136 = arith.constant 1.000000e+00 : f32
    %596 = vector.broadcast %cst_136 : f32 to vector<8x128xf32>
    %597 = arith.addf %596, %595 : vector<8x128xf32>
    %598 = arith.divf %596, %597 : vector<8x128xf32>
    %599 = vector.extract_strided_slice %586 {offsets = [0, 256], sizes = [8, 128], strides = [1, 1]} : vector<8x512xf32> to vector<8x128xf32>
    %600 = math.tanh %599 : vector<8x128xf32>
    %601 = vector.extract_strided_slice %586 {offsets = [0, 384], sizes = [8, 128], strides = [1, 1]} : vector<8x512xf32> to vector<8x128xf32>
    %602 = arith.negf %601 : vector<8x128xf32>
    %603 = math.exp %602 : vector<8x128xf32>
    %cst_137 = arith.constant 1.000000e+00 : f32
    %604 = vector.broadcast %cst_137 : f32 to vector<8x128xf32>
    %605 = arith.addf %604, %603 : vector<8x128xf32>
    %606 = arith.divf %604, %605 : vector<8x128xf32>
    %607 = arith.mulf %598, %547 : vector<8x128xf32>
    %608 = arith.mulf %592, %600 : vector<8x128xf32>
    %609 = arith.addf %607, %608 : vector<8x128xf32>
    %610 = math.tanh %609 : vector<8x128xf32>
    %611 = arith.mulf %606, %610 : vector<8x128xf32>
    %612 = arith.truncf %611 : vector<8x128xf32> to vector<8x128xbf16>
    %cst_138 = arith.constant dense<0.000000e+00> : vector<8x512xf32>
    %613 = tpu.matmul %612, %18, %cst_138 {dimension_numbers = #tpu.dot_dimension_numbers<[1], [0], [0], [1], [0, 0, 1, 1], [], []>} : vector<8x128xbf16>, vector<128x512xbf16>, vector<8x512xf32> -> vector<8x512xf32>
    %614 = vector.broadcast %20 : vector<1x512xf32> to vector<8x512xf32>
    %615 = arith.addf %613, %614 : vector<8x512xf32>
    %616 = arith.truncf %581 : vector<8x128xf32> to vector<8x128xbf16>
    %cst_139 = arith.constant dense<0.000000e+00> : vector<8x512xf32>
    %617 = tpu.matmul %616, %19, %cst_139 {dimension_numbers = #tpu.dot_dimension_numbers<[1], [0], [0], [1], [0, 0, 1, 1], [], []>} : vector<8x128xbf16>, vector<128x512xbf16>, vector<8x512xf32> -> vector<8x512xf32>
    %618 = arith.addf %615, %617 : vector<8x512xf32>
    %619 = vector.extract_strided_slice %618 {offsets = [0, 0], sizes = [8, 128], strides = [1, 1]} : vector<8x512xf32> to vector<8x128xf32>
    %620 = arith.negf %619 : vector<8x128xf32>
    %621 = math.exp %620 : vector<8x128xf32>
    %cst_140 = arith.constant 1.000000e+00 : f32
    %622 = vector.broadcast %cst_140 : f32 to vector<8x128xf32>
    %623 = arith.addf %622, %621 : vector<8x128xf32>
    %624 = arith.divf %622, %623 : vector<8x128xf32>
    %625 = vector.extract_strided_slice %618 {offsets = [0, 128], sizes = [8, 128], strides = [1, 1]} : vector<8x512xf32> to vector<8x128xf32>
    %626 = arith.negf %625 : vector<8x128xf32>
    %627 = math.exp %626 : vector<8x128xf32>
    %cst_141 = arith.constant 1.000000e+00 : f32
    %628 = vector.broadcast %cst_141 : f32 to vector<8x128xf32>
    %629 = arith.addf %628, %627 : vector<8x128xf32>
    %630 = arith.divf %628, %629 : vector<8x128xf32>
    %631 = vector.extract_strided_slice %618 {offsets = [0, 256], sizes = [8, 128], strides = [1, 1]} : vector<8x512xf32> to vector<8x128xf32>
    %632 = math.tanh %631 : vector<8x128xf32>
    %633 = vector.extract_strided_slice %618 {offsets = [0, 384], sizes = [8, 128], strides = [1, 1]} : vector<8x512xf32> to vector<8x128xf32>
    %634 = arith.negf %633 : vector<8x128xf32>
    %635 = math.exp %634 : vector<8x128xf32>
    %cst_142 = arith.constant 1.000000e+00 : f32
    %636 = vector.broadcast %cst_142 : f32 to vector<8x128xf32>
    %637 = arith.addf %636, %635 : vector<8x128xf32>
    %638 = arith.divf %636, %637 : vector<8x128xf32>
    %639 = arith.mulf %630, %579 : vector<8x128xf32>
    %640 = arith.mulf %624, %632 : vector<8x128xf32>
    %641 = arith.addf %639, %640 : vector<8x128xf32>
    %642 = math.tanh %641 : vector<8x128xf32>
    %643 = arith.mulf %638, %642 : vector<8x128xf32>
    %c80 = arith.constant 80 : index
    %c0_143 = arith.constant 0 : index
    %644 = vector.load %arg19[%c80, %c0_143] : memref<96x128xf32, #tpu.memory_space<vmem>>, vector<8x128xf32>
    tpu.vector_store %arg19[%c80, %c0_143], %643 {strides = array<i32>} : memref<96x128xf32, #tpu.memory_space<vmem>>, vector<8x128xf32>,
    %645 = tpu.iota {dimensions = array<i32: 0>} : vector<80x1xi32>
    %c8_i32 = arith.constant 8 : i32
    %c0_i32_144 = arith.constant 0 : i32
    %646 = arith.cmpi eq, %c8_i32, %c0_i32_144 : i32
    %c1_i32_145 = arith.constant 1 : i32
    %647 = arith.select %646, %c1_i32_145, %c8_i32 : i32
    %648 = vector.broadcast %647 : i32 to vector<80x1xi32>
    %649 = arith.remsi %645, %648 : vector<80x1xi32>
    %c0_i32_146 = arith.constant 0 : i32
    %650 = vector.broadcast %c0_i32_146 : i32 to vector<80x1xi32>
    %651 = arith.cmpi ne, %649, %650 : vector<80x1xi32>
    %c0_i32_147 = arith.constant 0 : i32
    %652 = vector.broadcast %c0_i32_147 : i32 to vector<80x1xi32>
    %653 = arith.cmpi slt, %649, %652 : vector<80x1xi32>
    %c0_i32_148 = arith.constant 0 : i32
    %654 = arith.cmpi slt, %647, %c0_i32_148 : i32
    %655 = vector.broadcast %654 : i1 to vector<80x1xi1>
    %656 = vector.broadcast %655 : vector<80x1xi1> to vector<80x1xi1>
    %657 = arith.xori %653, %656 : vector<80x1xi1>
    %658 = arith.andi %657, %651 : vector<80x1xi1>
    %659 = vector.broadcast %647 : i32 to vector<80x1xi32>
    %660 = arith.addi %649, %659 : vector<80x1xi32>
    %661 = arith.select %658, %660, %649 : vector<80x1xi1>, vector<80x1xi32>
    %c2_i32_149 = arith.constant 2 : i32
    %662 = vector.broadcast %c2_i32_149 : i32 to vector<80x1xi32>
    %663 = arith.cmpi slt, %661, %662 : vector<80x1xi32>
    %664 = arith.extui %663 : vector<80x1xi1> to vector<80x1xi32>
    %665 = arith.sitofp %664 : vector<80x1xi32> to vector<80x1xf32>
    %c0_i32_150 = arith.constant 0 : i32
    %666 = tpu.memref_slice %arg24[%c0_i32_150] : memref<3x!tpu.dma_semaphore, #tpu.memory_space<semaphore_mem>> -> memref<1x!tpu.dma_semaphore, #tpu.memory_space<semaphore_mem>>
    %667 = tpu.memref_squeeze %666 : memref<1x!tpu.dma_semaphore, #tpu.memory_space<semaphore_mem>> -> memref<!tpu.dma_semaphore, #tpu.memory_space<semaphore_mem>>
    tpu.wait_dma2 semaphore(%667 : memref<!tpu.dma_semaphore, #tpu.memory_space<semaphore_mem>>) src(%arg14 : memref<3x128x256xbf16, #tpu.memory_space<any>>) dst(%arg21 : memref<3x128x256xbf16, #tpu.memory_space<vmem>>)
    %c0_151 = arith.constant 0 : index
    %c0_152 = arith.constant 0 : index
    %668 = vector.load %arg19[%c0_151, %c0_152] : memref<96x128xf32, #tpu.memory_space<vmem>>, vector<96x128xf32>
    %669 = arith.truncf %668 : vector<96x128xf32> to vector<96x128xbf16>
    %670 = vector.extract_strided_slice %669 {offsets = [0, 0], sizes = [80, 128], strides = [1, 1]} : vector<96x128xbf16> to vector<80x128xbf16>
    %c0_153 = arith.constant 0 : index
    %c0_154 = arith.constant 0 : index
    %c0_155 = arith.constant 0 : index
    %671 = vector.load %arg21[%c0_153, %c0_154, %c0_155] : memref<3x128x256xbf16, #tpu.memory_space<vmem>>, vector<1x128x256xbf16>
    %672 = vector.shape_cast %671 : vector<1x128x256xbf16> to vector<128x256xbf16>
    %cst_156 = arith.constant dense<0.000000e+00> : vector<80x256xf32>
    %673 = tpu.matmul %670, %672, %cst_156 {dimension_numbers = #tpu.dot_dimension_numbers<[1], [0], [0], [1], [0, 0, 1, 1], [], []>} : vector<80x128xbf16>, vector<128x256xbf16>, vector<80x256xf32> -> vector<80x256xf32>
    %674 = vector.extract_strided_slice %669 {offsets = [8, 0], sizes = [80, 128], strides = [1, 1]} : vector<96x128xbf16> to vector<80x128xbf16>
    %c1 = arith.constant 1 : index
    %c0_157 = arith.constant 0 : index
    %c0_158 = arith.constant 0 : index
    %675 = vector.load %arg21[%c1, %c0_157, %c0_158] : memref<3x128x256xbf16, #tpu.memory_space<vmem>>, vector<1x128x256xbf16>
    %676 = vector.shape_cast %675 : vector<1x128x256xbf16> to vector<128x256xbf16>
    %cst_159 = arith.constant dense<0.000000e+00> : vector<80x256xf32>
    %677 = tpu.matmul %674, %676, %cst_159 {dimension_numbers = #tpu.dot_dimension_numbers<[1], [0], [0], [1], [0, 0, 1, 1], [], []>} : vector<80x128xbf16>, vector<128x256xbf16>, vector<80x256xf32> -> vector<80x256xf32>
    %678 = arith.addf %673, %677 : vector<80x256xf32>
    %679 = vector.extract_strided_slice %669 {offsets = [16, 0], sizes = [80, 128], strides = [1, 1]} : vector<96x128xbf16> to vector<80x128xbf16>
    %c2 = arith.constant 2 : index
    %c0_160 = arith.constant 0 : index
    %c0_161 = arith.constant 0 : index
    %680 = vector.load %arg21[%c2, %c0_160, %c0_161] : memref<3x128x256xbf16, #tpu.memory_space<vmem>>, vector<1x128x256xbf16>
    %681 = vector.shape_cast %680 : vector<1x128x256xbf16> to vector<128x256xbf16>
    %cst_162 = arith.constant dense<0.000000e+00> : vector<80x256xf32>
    %682 = tpu.matmul %679, %681, %cst_162 {dimension_numbers = #tpu.dot_dimension_numbers<[1], [0], [0], [1], [0, 0, 1, 1], [], []>} : vector<80x128xbf16>, vector<128x256xbf16>, vector<80x256xf32> -> vector<80x256xf32>
    %683 = arith.addf %678, %682 : vector<80x256xf32>
    %c0_163 = arith.constant 0 : index
    %c0_164 = arith.constant 0 : index
    %684 = vector.load %arg7[%c0_163, %c0_164] : memref<1x256xf32, #tpu.memory_space<vmem>>, vector<1x256xf32>
    %685 = vector.broadcast %684 : vector<1x256xf32> to vector<80x256xf32>
    %686 = arith.addf %683, %685 : vector<80x256xf32>
    %687 = vector.broadcast %665 : vector<80x1xf32> to vector<80x256xf32>
    %688 = arith.mulf %686, %687 : vector<80x256xf32>
    %cst_165 = arith.constant dense<0.000000e+00> : vector<256xf32>
    %689 = vector.multi_reduction <add>, %688, %cst_165 [0] : vector<80x256xf32> to vector<256xf32>
    %690 = vector.shape_cast %689 : vector<256xf32> to vector<1x256xf32>
    %cst_166 = arith.constant 5.000000e-02 : f32
    %691 = vector.broadcast %cst_166 : f32 to vector<1x256xf32>
    %692 = arith.mulf %690, %691 : vector<1x256xf32>
    %693 = arith.mulf %688, %688 : vector<80x256xf32>
    %cst_167 = arith.constant dense<0.000000e+00> : vector<256xf32>
    %694 = vector.multi_reduction <add>, %693, %cst_167 [0] : vector<80x256xf32> to vector<256xf32>
    %695 = vector.shape_cast %694 : vector<256xf32> to vector<1x256xf32>
    %cst_168 = arith.constant 5.000000e-02 : f32
    %696 = vector.broadcast %cst_168 : f32 to vector<1x256xf32>
    %697 = arith.mulf %695, %696 : vector<1x256xf32>
    %698 = arith.mulf %692, %692 : vector<1x256xf32>
    %699 = arith.subf %697, %698 : vector<1x256xf32>
    %cst_169 = arith.constant 0.000000e+00 : f32
    %700 = vector.broadcast %cst_169 : f32 to vector<1x256xf32>
    %701 = arith.maximumf %699, %700 : vector<1x256xf32>
    %702 = vector.broadcast %692 : vector<1x256xf32> to vector<80x256xf32>
    %703 = arith.subf %686, %702 : vector<80x256xf32>
    %cst_170 = arith.constant 9.99999974E-6 : f32
    %704 = vector.broadcast %cst_170 : f32 to vector<1x256xf32>
    %705 = arith.addf %701, %704 : vector<1x256xf32>
    %706 = math.rsqrt %705 : vector<1x256xf32>
    %707 = vector.broadcast %706 : vector<1x256xf32> to vector<80x256xf32>
    %708 = arith.mulf %703, %707 : vector<80x256xf32>
    %c0_171 = arith.constant 0 : index
    %c0_172 = arith.constant 0 : index
    %709 = vector.load %arg8[%c0_171, %c0_172] : memref<1x256xf32, #tpu.memory_space<vmem>>, vector<1x256xf32>
    %710 = vector.broadcast %709 : vector<1x256xf32> to vector<80x256xf32>
    %711 = arith.mulf %708, %710 : vector<80x256xf32>
    %c0_173 = arith.constant 0 : index
    %c0_174 = arith.constant 0 : index
    %712 = vector.load %arg9[%c0_173, %c0_174] : memref<1x256xf32, #tpu.memory_space<vmem>>, vector<1x256xf32>
    %713 = vector.broadcast %712 : vector<1x256xf32> to vector<80x256xf32>
    %714 = arith.addf %711, %713 : vector<80x256xf32>
    %cst_175 = arith.constant 0.000000e+00 : f32
    %715 = vector.broadcast %cst_175 : f32 to vector<80x256xf32>
    %716 = arith.maximumf %714, %715 : vector<80x256xf32>
    %cst_176 = arith.constant 0.000000e+00 : f32
    %717 = vector.broadcast %cst_176 : f32 to vector<8x256xf32>
    %c0_177 = arith.constant 0 : index
    %c0_178 = arith.constant 0 : index
    %718 = vector.load %arg20[%c0_177, %c0_178] : memref<96x256xf32, #tpu.memory_space<vmem>>, vector<8x256xf32>
    tpu.vector_store %arg20[%c0_177, %c0_178], %717 {strides = array<i32>} : memref<96x256xf32, #tpu.memory_space<vmem>>, vector<8x256xf32>,
    %cst_179 = arith.constant 0.000000e+00 : f32
    %719 = vector.broadcast %cst_179 : f32 to vector<8x256xf32>
    %c88_180 = arith.constant 88 : index
    %c0_181 = arith.constant 0 : index
    %720 = vector.load %arg20[%c88_180, %c0_181] : memref<96x256xf32, #tpu.memory_space<vmem>>, vector<8x256xf32>
    tpu.vector_store %arg20[%c88_180, %c0_181], %719 {strides = array<i32>} : memref<96x256xf32, #tpu.memory_space<vmem>>, vector<8x256xf32>,
    %c8_182 = arith.constant 8 : index
    %c0_183 = arith.constant 0 : index
    %721 = vector.load %arg20[%c8_182, %c0_183] : memref<96x256xf32, #tpu.memory_space<vmem>>, vector<80x256xf32>
    tpu.vector_store %arg20[%c8_182, %c0_183], %716 {strides = array<i32>} : memref<96x256xf32, #tpu.memory_space<vmem>>, vector<80x256xf32>,
    %c1_i32_184 = arith.constant 1 : i32
    %722 = tpu.memref_slice %arg24[%c1_i32_184] : memref<3x!tpu.dma_semaphore, #tpu.memory_space<semaphore_mem>> -> memref<1x!tpu.dma_semaphore, #tpu.memory_space<semaphore_mem>>
    %723 = tpu.memref_squeeze %722 : memref<1x!tpu.dma_semaphore, #tpu.memory_space<semaphore_mem>> -> memref<!tpu.dma_semaphore, #tpu.memory_space<semaphore_mem>>
    tpu.wait_dma2 semaphore(%723 : memref<!tpu.dma_semaphore, #tpu.memory_space<semaphore_mem>>) src(%arg15 : memref<3x256x128xbf16, #tpu.memory_space<any>>) dst(%arg22 : memref<3x256x128xbf16, #tpu.memory_space<vmem>>)
    %c0_185 = arith.constant 0 : index
    %c0_186 = arith.constant 0 : index
    %724 = vector.load %arg20[%c0_185, %c0_186] : memref<96x256xf32, #tpu.memory_space<vmem>>, vector<96x256xf32>
    %725 = arith.truncf %724 : vector<96x256xf32> to vector<96x256xbf16>
    %726 = vector.extract_strided_slice %725 {offsets = [0, 0], sizes = [80, 256], strides = [1, 1]} : vector<96x256xbf16> to vector<80x256xbf16>
    %c0_187 = arith.constant 0 : index
    %c0_188 = arith.constant 0 : index
    %c0_189 = arith.constant 0 : index
    %727 = vector.load %arg22[%c0_187, %c0_188, %c0_189] : memref<3x256x128xbf16, #tpu.memory_space<vmem>>, vector<1x256x128xbf16>
    %728 = vector.shape_cast %727 : vector<1x256x128xbf16> to vector<256x128xbf16>
    %cst_190 = arith.constant dense<0.000000e+00> : vector<80x128xf32>
    %729 = tpu.matmul %726, %728, %cst_190 {dimension_numbers = #tpu.dot_dimension_numbers<[1], [0], [0], [1], [0, 0, 1, 1], [], []>} : vector<80x256xbf16>, vector<256x128xbf16>, vector<80x128xf32> -> vector<80x128xf32>
    %730 = vector.extract_strided_slice %725 {offsets = [8, 0], sizes = [80, 256], strides = [1, 1]} : vector<96x256xbf16> to vector<80x256xbf16>
    %c1_191 = arith.constant 1 : index
    %c0_192 = arith.constant 0 : index
    %c0_193 = arith.constant 0 : index
    %731 = vector.load %arg22[%c1_191, %c0_192, %c0_193] : memref<3x256x128xbf16, #tpu.memory_space<vmem>>, vector<1x256x128xbf16>
    %732 = vector.shape_cast %731 : vector<1x256x128xbf16> to vector<256x128xbf16>
    %cst_194 = arith.constant dense<0.000000e+00> : vector<80x128xf32>
    %733 = tpu.matmul %730, %732, %cst_194 {dimension_numbers = #tpu.dot_dimension_numbers<[1], [0], [0], [1], [0, 0, 1, 1], [], []>} : vector<80x256xbf16>, vector<256x128xbf16>, vector<80x128xf32> -> vector<80x128xf32>
    %734 = arith.addf %729, %733 : vector<80x128xf32>
    %735 = vector.extract_strided_slice %725 {offsets = [16, 0], sizes = [80, 256], strides = [1, 1]} : vector<96x256xbf16> to vector<80x256xbf16>
    %c2_195 = arith.constant 2 : index
    %c0_196 = arith.constant 0 : index
    %c0_197 = arith.constant 0 : index
    %736 = vector.load %arg22[%c2_195, %c0_196, %c0_197] : memref<3x256x128xbf16, #tpu.memory_space<vmem>>, vector<1x256x128xbf16>
    %737 = vector.shape_cast %736 : vector<1x256x128xbf16> to vector<256x128xbf16>
    %cst_198 = arith.constant dense<0.000000e+00> : vector<80x128xf32>
    %738 = tpu.matmul %735, %737, %cst_198 {dimension_numbers = #tpu.dot_dimension_numbers<[1], [0], [0], [1], [0, 0, 1, 1], [], []>} : vector<80x256xbf16>, vector<256x128xbf16>, vector<80x128xf32> -> vector<80x128xf32>
    %739 = arith.addf %734, %738 : vector<80x128xf32>
    %c0_199 = arith.constant 0 : index
    %c0_200 = arith.constant 0 : index
    %740 = vector.load %arg10[%c0_199, %c0_200] : memref<1x128xf32, #tpu.memory_space<vmem>>, vector<1x128xf32>
    %741 = vector.broadcast %740 : vector<1x128xf32> to vector<80x128xf32>
    %742 = arith.addf %739, %741 : vector<80x128xf32>
    %743 = vector.broadcast %665 : vector<80x1xf32> to vector<80x128xf32>
    %744 = arith.mulf %742, %743 : vector<80x128xf32>
    %cst_201 = arith.constant dense<0.000000e+00> : vector<128xf32>
    %745 = vector.multi_reduction <add>, %744, %cst_201 [0] : vector<80x128xf32> to vector<128xf32>
    %746 = vector.shape_cast %745 : vector<128xf32> to vector<1x128xf32>
    %cst_202 = arith.constant 5.000000e-02 : f32
    %747 = vector.broadcast %cst_202 : f32 to vector<1x128xf32>
    %748 = arith.mulf %746, %747 : vector<1x128xf32>
    %749 = arith.mulf %744, %744 : vector<80x128xf32>
    %cst_203 = arith.constant dense<0.000000e+00> : vector<128xf32>
    %750 = vector.multi_reduction <add>, %749, %cst_203 [0] : vector<80x128xf32> to vector<128xf32>
    %751 = vector.shape_cast %750 : vector<128xf32> to vector<1x128xf32>
    %cst_204 = arith.constant 5.000000e-02 : f32
    %752 = vector.broadcast %cst_204 : f32 to vector<1x128xf32>
    %753 = arith.mulf %751, %752 : vector<1x128xf32>
    %754 = arith.mulf %748, %748 : vector<1x128xf32>
    %755 = arith.subf %753, %754 : vector<1x128xf32>
    %cst_205 = arith.constant 0.000000e+00 : f32
    %756 = vector.broadcast %cst_205 : f32 to vector<1x128xf32>
    %757 = arith.maximumf %755, %756 : vector<1x128xf32>
    %758 = vector.broadcast %748 : vector<1x128xf32> to vector<80x128xf32>
    %759 = arith.subf %742, %758 : vector<80x128xf32>
    %cst_206 = arith.constant 9.99999974E-6 : f32
    %760 = vector.broadcast %cst_206 : f32 to vector<1x128xf32>
    %761 = arith.addf %757, %760 : vector<1x128xf32>
    %762 = math.rsqrt %761 : vector<1x128xf32>
    %763 = vector.broadcast %762 : vector<1x128xf32> to vector<80x128xf32>
    %764 = arith.mulf %759, %763 : vector<80x128xf32>
    %c0_207 = arith.constant 0 : index
    %c0_208 = arith.constant 0 : index
    %765 = vector.load %arg11[%c0_207, %c0_208] : memref<1x128xf32, #tpu.memory_space<vmem>>, vector<1x128xf32>
    %766 = vector.broadcast %765 : vector<1x128xf32> to vector<80x128xf32>
    %767 = arith.mulf %764, %766 : vector<80x128xf32>
    %c0_209 = arith.constant 0 : index
    %c0_210 = arith.constant 0 : index
    %768 = vector.load %arg12[%c0_209, %c0_210] : memref<1x128xf32, #tpu.memory_space<vmem>>, vector<1x128xf32>
    %769 = vector.broadcast %768 : vector<1x128xf32> to vector<80x128xf32>
    %770 = arith.addf %767, %769 : vector<80x128xf32>
    %cst_211 = arith.constant 0.000000e+00 : f32
    %771 = vector.broadcast %cst_211 : f32 to vector<80x128xf32>
    %772 = arith.maximumf %770, %771 : vector<80x128xf32>
    %c2_i32_212 = arith.constant 2 : i32
    %773 = tpu.memref_slice %arg24[%c2_i32_212] : memref<3x!tpu.dma_semaphore, #tpu.memory_space<semaphore_mem>> -> memref<1x!tpu.dma_semaphore, #tpu.memory_space<semaphore_mem>>
    %774 = tpu.memref_squeeze %773 : memref<1x!tpu.dma_semaphore, #tpu.memory_space<semaphore_mem>> -> memref<!tpu.dma_semaphore, #tpu.memory_space<semaphore_mem>>
    tpu.wait_dma2 semaphore(%774 : memref<!tpu.dma_semaphore, #tpu.memory_space<semaphore_mem>>) src(%arg16 : memref<128x128xbf16, #tpu.memory_space<any>>) dst(%arg23 : memref<128x128xbf16, #tpu.memory_space<vmem>>)
    %775 = arith.truncf %772 : vector<80x128xf32> to vector<80x128xbf16>
    %c0_213 = arith.constant 0 : index
    %c0_214 = arith.constant 0 : index
    %776 = vector.load %arg23[%c0_213, %c0_214] : memref<128x128xbf16, #tpu.memory_space<vmem>>, vector<128x128xbf16>
    %cst_215 = arith.constant dense<0.000000e+00> : vector<80x128xf32>
    %777 = tpu.matmul %775, %776, %cst_215 {dimension_numbers = #tpu.dot_dimension_numbers<[1], [0], [0], [1], [0, 0, 1, 1], [], []>} : vector<80x128xbf16>, vector<128x128xbf16>, vector<80x128xf32> -> vector<80x128xf32>
    %c0_216 = arith.constant 0 : index
    %c0_217 = arith.constant 0 : index
    %778 = vector.load %arg13[%c0_216, %c0_217] : memref<1x128xf32, #tpu.memory_space<vmem>>, vector<1x128xf32>
    %779 = vector.broadcast %778 : vector<1x128xf32> to vector<80x128xf32>
    %780 = arith.addf %777, %779 : vector<80x128xf32>
    %781 = math.tanh %780 : vector<80x128xf32>
    %c0_218 = arith.constant 0 : index
    %c0_219 = arith.constant 0 : index
    %782 = vector.load %arg17[%c0_218, %c0_219] : memref<80x128xf32, #tpu.memory_space<vmem>>, vector<80x128xf32>
    tpu.vector_store %arg17[%c0_218, %c0_219], %781 {strides = array<i32>} : memref<80x128xf32, #tpu.memory_space<vmem>>, vector<80x128xf32>,
    return
  }
}

</mosaic_0001>

<llo_original>
// kernel: generator_forward.1
$region0: #{generator_forward.1}
  #allocation0 [shape = 'u32[]', space=smem, size = 0x4, offset = 0x4, fixed_abs, tag = 'smem constant byte address 0x4 - core index']
  #allocation1 [shape = 'u32[144,128]{1,0:T(1,128)}', space=vmem, size = 0x12000, scoped, tag = 'internal scratch']
  #allocation2 [shape = 'f32[80,512]{1,0:T(8,128)}', space=vmem, size = 0x28000, scoped, tag = 'scratch operand']
  #allocation3 [shape = 'f32[96,128]{1,0:T(8,128)}', space=vmem, size = 0xc000, scoped, tag = 'scratch operand']
  #allocation4 [shape = 'f32[96,256]{1,0:T(8,128)}', space=vmem, size = 0x18000, scoped, tag = 'scratch operand']
  #allocation5 [shape = 'bf16[3,128,256]{2,1,0:T(16,128)(2,1)}', space=vmem, size = 0x30000, scoped, tag = 'scratch operand']
  #allocation6 [shape = 'bf16[3,256,128]{2,1,0:T(16,128)(2,1)}', space=vmem, size = 0x30000, scoped, tag = 'scratch operand']
  #allocation7 [shape = 'bf16[128,128]{1,0:T(16,128)(2,1)}', space=vmem, size = 0x8000, scoped, tag = 'scratch operand']
  #allocation8 [shape = 's32[3]{0}', space=sflag, size = 0xc, scoped, tag = 'scratch operand']
  #allocation16 [shape = 's32[]', space=sflag, size = 0x4, offset = 0, fixed_abs, tag = 'sflag constant byte address 0x0 - dummy sync flag']
  #allocation18 [shape = 's32[]', space=sflag, size = 0x4, offset = 0, fixed_abs, tag = 'sflag constant byte address 0x0 - dummy sync flag']
  #allocation19 [shape = 's32[]', space=sflag, size = 0x4, offset = 0, fixed_abs, tag = 'sflag constant byte address 0x0 - dummy sync flag']
  #allocation20 [shape = 'u32[]', space=smem, size = 0x4, offset = 0x44, fixed_abs, tag = 'smem constant byte address 0x44 - assertion arg 0']
  #allocation21 [shape = 'u32[]', space=smem, size = 0x4, offset = 0x48, fixed_abs, tag = 'smem constant byte address 0x48 - assertion arg 1']
  #allocation22 [shape = 's32[]', space=sflag, size = 0x4, offset = 0, fixed_abs, tag = 'sflag constant byte address 0x0 - dummy sync flag']
  %s0 = inlined_call_operand.vmem [shape: bf16[80,128], index: 0, kind: input, shape index: {}]
  %s1 = inlined_call_operand.hbm [shape: bf16[128,512], index: 1, kind: input, shape index: {}]
  %s2 = inlined_call_operand.hbm [shape: bf16[128,512], index: 2, kind: input, shape index: {}]
  %s3 = inlined_call_operand.vmem [shape: f32[1,512], index: 3, kind: input, shape index: {}]
  %s4 = inlined_call_operand.hbm [shape: bf16[128,512], index: 4, kind: input, shape index: {}]
  %s5 = inlined_call_operand.hbm [shape: bf16[128,512], index: 5, kind: input, shape index: {}]
  %s6 = inlined_call_operand.vmem [shape: f32[1,512], index: 6, kind: input, shape index: {}]
  %s7 = inlined_call_operand.vmem [shape: f32[1,256], index: 7, kind: input, shape index: {}]
  %s8 = inlined_call_operand.vmem [shape: f32[1,256], index: 8, kind: input, shape index: {}]
  %s9 = inlined_call_operand.vmem [shape: f32[1,256], index: 9, kind: input, shape index: {}]
  %s10 = inlined_call_operand.vmem [shape: f32[1,128], index: 10, kind: input, shape index: {}]
  %s11 = inlined_call_operand.vmem [shape: f32[1,128], index: 11, kind: input, shape index: {}]
  %s12 = inlined_call_operand.vmem [shape: f32[1,128], index: 12, kind: input, shape index: {}]
  %s13 = inlined_call_operand.vmem [shape: f32[1,128], index: 13, kind: input, shape index: {}]
  %s14 = inlined_call_operand.hbm [shape: bf16[3,128,256], index: 14, kind: input, shape index: {}]
  %s15 = inlined_call_operand.hbm [shape: bf16[3,256,128], index: 15, kind: input, shape index: {}]
  %s16 = inlined_call_operand.vmem [shape: bf16[128,128], index: 16, kind: input, shape index: {}]
  %s17 = inlined_call_operand.vmem [shape: f32[80,128], index: 17, kind: output, shape index: {}]
  %s18 = sld [smem:[#allocation0]]
  $region120: #{generator_forward.1} parent=0
    _
  %s20 = ssub.s32 1, %s18
  %s21 = scalar_select 0, %s20, %s18
  $region1: #{generator_forward.1} parent=0
    #allocation9 [shape = 'u8[131072]{0}', space=vmem, size = 0x20000, scoped, tag = 'input window, operand 1, single buffered']
    #allocation10 [shape = 's32[1]{0}', space=sflag, size = 0x4, scoped, tag = 'scoped memory for generator_forward.1']
    #allocation11 [shape = 'u8[131072]{0}', space=vmem, size = 0x20000, scoped, tag = 'input window, operand 2, single buffered']
    #allocation12 [shape = 's32[1]{0}', space=sflag, size = 0x4, scoped, tag = 'scoped memory for generator_forward.1']
    #allocation13 [shape = 'u8[131072]{0}', space=vmem, size = 0x20000, scoped, tag = 'input window, operand 4, single buffered']
    #allocation14 [shape = 'u8[131072]{0}', space=vmem, size = 0x20000, scoped, tag = 'input window, operand 5, single buffered']
    #allocation15 [shape = 's32[1]{0}', space=sflag, size = 0x4, scoped, tag = 'scoped memory for generator_forward.1']
    #allocation17 [shape = 'u32[9]{0}', space=smem, size = 0x24, scoped, tag = 'DMA stride descriptor']
    %22 = vsyncpa [#allocation10], 0
    %23 = vsyncpa [#allocation12], 0
    %24 = vsyncpa [#allocation15], 0
    // Predicated region
    $region2: #{generator_forward.1} parent=1 // pred_check
      _
    $region3: #{generator_forward.1} parent=1 // pred_check_branch
      %26 = sbr.rel (0) target = $region5
    $region4: #{generator_forward.1} parent=1 // pred_region
      _
    $region5: #{generator_forward.1} parent=1 // pred_fallthru
      _
    // Predicated region
    $region6: #{generator_forward.1} parent=1 // pred_check
      _
    $region7: #{generator_forward.1} parent=1 // pred_check_branch
      %28 = sbr.rel (0) target = $region9
    $region8: #{generator_forward.1} parent=1 // pred_region
      %s30 = ssub.s32 4096, 4096
      %31 = vsyncadd [#allocation10], %s30
      %s32 = sshll.u32 [#allocation9], 4
      %s33 = int_to_ptr.vmem [resolvable:$true] %s32
      %38 = dma.hbm_to_vmem [thread:$0]  %s1, 4096, %s33, [#allocation10], 256, 256, 16
    $region9: #{generator_forward.1} parent=1 // pred_fallthru
      _
    // Predicated region
    $region10: #{generator_forward.1} parent=1 // pred_check
      _
    $region11: #{generator_forward.1} parent=1 // pred_check_branch
      %40 = sbr.rel (0) target = $region13
    $region12: #{generator_forward.1} parent=1 // pred_region
      %s42 = ssub.s32 4096, 4096
      %43 = vsyncadd [#allocation12], %s42
      %s44 = sshll.u32 [#allocation11], 4
      %s45 = int_to_ptr.vmem [resolvable:$true] %s44
      %50 = dma.hbm_to_vmem [thread:$0]  %s2, 4096, %s45, [#allocation12], 256, 256, 16
    $region13: #{generator_forward.1} parent=1 // pred_fallthru
      _
    // Predicated region
    $region14: #{generator_forward.1} parent=1 // pred_check
      _
    $region15: #{generator_forward.1} parent=1 // pred_check_branch
      %52 = sbr.rel (0) target = $region17
    $region16: #{generator_forward.1} parent=1 // pred_region
      _
    $region17: #{generator_forward.1} parent=1 // pred_fallthru
      _
    // Predicated region
    $region18: #{generator_forward.1} parent=1 // pred_check
      _
    $region19: #{generator_forward.1} parent=1 // pred_check_branch
      %54 = sbr.rel (0) target = $region21
    $region20: #{generator_forward.1} parent=1 // pred_region
      %s56 = ssub.s32 4096, 4096
      %57 = vsyncadd [#allocation12], %s56
      %s58 = sshll.u32 [#allocation13], 4
      %s59 = int_to_ptr.vmem [resolvable:$true] %s58
      %64 = dma.hbm_to_vmem [thread:$0]  %s4, 4096, %s59, [#allocation12], 256, 256, 16
    $region21: #{generator_forward.1} parent=1 // pred_fallthru
      _
    // Predicated region
    $region22: #{generator_forward.1} parent=1 // pred_check
      _
    $region23: #{generator_forward.1} parent=1 // pred_check_branch
      %66 = sbr.rel (0) target = $region25
    $region24: #{generator_forward.1} parent=1 // pred_region
      %s68 = ssub.s32 4096, 4096
      %69 = vsyncadd [#allocation15], %s68
      %s70 = sshll.u32 [#allocation14], 4
      %s71 = int_to_ptr.vmem [resolvable:$true] %s70
      %76 = dma.hbm_to_vmem [thread:$0]  %s5, 4096, %s71, [#allocation15], 256, 256, 16
    $region25: #{generator_forward.1} parent=1 // pred_fallthru
      _
    // Predicated region
    $region26: #{generator_forward.1} parent=1 // pred_check
      _
    $region27: #{generator_forward.1} parent=1 // pred_check_branch
      %78 = sbr.rel (0) target = $region29
    $region28: #{generator_forward.1} parent=1 // pred_region
      _
    $region29: #{generator_forward.1} parent=1 // pred_fallthru
      _
    // Predicated region
    $region30: #{generator_forward.1} parent=1 // pred_check
      _
    $region31: #{generator_forward.1} parent=1 // pred_check_branch
      %80 = sbr.rel (0) target = $region33
    $region32: #{generator_forward.1} parent=1 // pred_region
      _
    $region33: #{generator_forward.1} parent=1 // pred_fallthru
      _
    // Predicated region
    $region34: #{generator_forward.1} parent=1 // pred_check
      _
    $region35: #{generator_forward.1} parent=1 // pred_check_branch
      %82 = sbr.rel (0) target = $region37
    $region36: #{generator_forward.1} parent=1 // pred_region
      _
    $region37: #{generator_forward.1} parent=1 // pred_fallthru
      _
    // Predicated region
    $region38: #{generator_forward.1} parent=1 // pred_check
      _
    $region39: #{generator_forward.1} parent=1 // pred_check_branch
      %84 = sbr.rel (0) target = $region41
    $region40: #{generator_forward.1} parent=1 // pred_region
      _
    $region41: #{generator_forward.1} parent=1 // pred_fallthru
      _
    // Predicated region
    $region42: #{generator_forward.1} parent=1 // pred_check
      _
    $region43: #{generator_forward.1} parent=1 // pred_check_branch
      %86 = sbr.rel (0) target = $region45
    $region44: #{generator_forward.1} parent=1 // pred_region
      _
    $region45: #{generator_forward.1} parent=1 // pred_fallthru
      _
    // Predicated region
    $region46: #{generator_forward.1} parent=1 // pred_check
      _
    $region47: #{generator_forward.1} parent=1 // pred_check_branch
      %88 = sbr.rel (0) target = $region49
    $region48: #{generator_forward.1} parent=1 // pred_region
      _
    $region49: #{generator_forward.1} parent=1 // pred_fallthru
      _
    // Predicated region
    $region50: #{generator_forward.1} parent=1 // pred_check
      _
    $region51: #{generator_forward.1} parent=1 // pred_check_branch
      %90 = sbr.rel (0) target = $region53
    $region52: #{generator_forward.1} parent=1 // pred_region
      _
    $region53: #{generator_forward.1} parent=1 // pred_fallthru
      _
    // Predicated region
    $region54: #{generator_forward.1} parent=1 // pred_check
      _
    $region55: #{generator_forward.1} parent=1 // pred_check_branch
      %92 = sbr.rel (0) target = $region57
    $region56: #{generator_forward.1} parent=1 // pred_region
      _
    $region57: #{generator_forward.1} parent=1 // pred_fallthru
      _
    // Predicated region
    $region58: #{generator_forward.1} parent=1 // pred_check
      _
    $region59: #{generator_forward.1} parent=1 // pred_check_branch
      %94 = sbr.rel (0) target = $region61
    $region60: #{generator_forward.1} parent=1 // pred_region
      %95 = dma.done [#allocation10], 4096
    $region61: #{generator_forward.1} parent=1 // pred_fallthru
      _
    // Predicated region
    $region62: #{generator_forward.1} parent=1 // pred_check
      _
    $region63: #{generator_forward.1} parent=1 // pred_check_branch
      %97 = sbr.rel (0) target = $region65
    $region64: #{generator_forward.1} parent=1 // pred_region
      %98 = dma.done [#allocation12], 4096
    $region65: #{generator_forward.1} parent=1 // pred_fallthru
      _
    // Predicated region
    $region66: #{generator_forward.1} parent=1 // pred_check
      _
    $region67: #{generator_forward.1} parent=1 // pred_check_branch
      %100 = sbr.rel (0) target = $region69
    $region68: #{generator_forward.1} parent=1 // pred_region
      %101 = dma.done [#allocation12], 4096
    $region69: #{generator_forward.1} parent=1 // pred_fallthru
      _
    // Predicated region
    $region70: #{generator_forward.1} parent=1 // pred_check
      _
    $region71: #{generator_forward.1} parent=1 // pred_check_branch
      %103 = sbr.rel (0) target = $region73
    $region72: #{generator_forward.1} parent=1 // pred_region
      %104 = dma.done [#allocation15], 4096
    $region73: #{generator_forward.1} parent=1 // pred_fallthru
      _
    %s107 = sshll.u32 1, 14
    %s108 = sxor.u32 4294967295, %s107
    %s110 = sld [smem:[#allocation0]]
    %s111 = sadd.s32 2, %s110
    %s113 = sshll.u32 7, 26
    %s114 = sxor.u32 4294967295, %s113
    %s115 = sand.u32 0, %s114
    %s116 = sshll.u32 %s111, 26
    %s117 = sor.u32 %s115, %s116
    %s118 = sshll.u32 [#allocation5], 4
    %s119 = int_to_ptr.vmem [resolvable:$true] %s118
    %122 = sst [smem:[#allocation17]] 256
    %s123 = scalar_lea.smem [#allocation17], 1
    %124 = sst [smem:[%s123]] 256
    %s125 = scalar_lea.smem [#allocation17], 2
    %126 = sst [smem:[%s125]] 2
    %s127 = scalar_lea.smem [#allocation17], 3
    %128 = sst [smem:[%s127]] 64
    %s129 = scalar_lea.smem [#allocation17], 4
    %130 = sst [smem:[%s129]] 128
    %s131 = scalar_lea.smem [#allocation17], 5
    %132 = sst [smem:[%s131]] 2
    %s133 = scalar_lea.smem [#allocation17], 6
    %134 = sst [smem:[%s133]] 128
    %s135 = scalar_lea.smem [#allocation17], 7
    %136 = sst [smem:[%s135]] 64
    %s137 = scalar_lea.smem [#allocation17], 8
    %138 = sst [smem:[%s137]] 4
    %140 = dma.general %s14, 6144, %s119, [#allocation8], [#allocation16], [#allocation17], %s117, 0
    %s141 = scalar_lea.sflag [#allocation8], 1
    // Predicated region
    $region74: #{generator_forward.1} parent=1 // pred_check
      _
    $region75: #{generator_forward.1} parent=1 // pred_check_branch
      %143 = sbr.rel target = $region77
    $region76: #{generator_forward.1} parent=1 // pred_region
      %144 = sst [smem:[#allocation20]] [#allocation19]
      %145 = sst [smem:[#allocation21]] [#allocation18]
    $region77: #{generator_forward.1} parent=1 // pred_fallthru
      _
    %147 = shalt.err (0)
    %s149 = sshll.u32 [#allocation6], 4
    %s150 = int_to_ptr.vmem [resolvable:$true] %s149
    %152 = dma.hbm_to_vmem [thread:$0]  %s15, 6144, %s150, %s141
    %s153 = scalar_lea.sflag [#allocation8], 2
    %p155 = scmp.lt.u32.totalorder 64, 8
    %p156 = pneg %p155
    // Predicated region
    $region78: #{generator_forward.1} parent=1 // pred_check
      _
    $region79: #{generator_forward.1} parent=1 // pred_check_branch
      %158 = sbr.rel (%p155) target = $region81
    $region80: #{generator_forward.1} parent=1 // pred_region
      %s173 = sand.u32 64, 7
      %p174 = scmp.eq.s32.totalorder %s173, 0
      // Predicated region
      $region93: #{generator_forward.1} parent=80 // pred_check
        %p175 = pneg %p174
      $region94: #{generator_forward.1} parent=80 // pred_check_branch
        %177 = sbr.rel (%p175) target = $region96
      $region95: #{generator_forward.1} parent=80 // pred_region
        loop: start=0, step=1, limit=1
        $region97: #{generator_forward.1} parent=95 // loop_pre_header
          _
        $region98: #{generator_forward.1} parent=95 // loop_header
          %s179 = sphi 0, %s183
          %p180 = scmp.ge.s32.totalorder %s179, 1
          %s184 = sphi %s16, %s16
          %s185 = sphi [#allocation7], [#allocation7]
        $region99: #{generator_forward.1} parent=95 // loop_header_branch
          %182 = sbr.rel (%p180) target = $region103
        $region100: #{generator_forward.1} parent=95 // loop_body
          %v186 = vld [vmem:[%s184] sm:$0xff]
          %187 = vst [vmem:[%s185] sm:$0xff] %v186
          %v188 = vld [vmem:[%s184 + $0x8] sm:$0xff]
          %189 = vst [vmem:[%s185 + $0x8] sm:$0xff] %v188
          %v190 = vld [vmem:[%s184 + $0x10] sm:$0xff]
          %191 = vst [vmem:[%s185 + $0x10] sm:$0xff] %v190
          %v192 = vld [vmem:[%s184 + $0x18] sm:$0xff]
          %193 = vst [vmem:[%s185 + $0x18] sm:$0xff] %v192
          %v194 = vld [vmem:[%s184 + $0x20] sm:$0xff]
          %195 = vst [vmem:[%s185 + $0x20] sm:$0xff] %v194
          %v196 = vld [vmem:[%s184 + $0x28] sm:$0xff]
          %197 = vst [vmem:[%s185 + $0x28] sm:$0xff] %v196
          %v198 = vld [vmem:[%s184 + $0x30] sm:$0xff]
          %199 = vst [vmem:[%s185 + $0x30] sm:$0xff] %v198
          %v200 = vld [vmem:[%s184 + $0x38] sm:$0xff]
          %201 = vst [vmem:[%s185 + $0x38] sm:$0xff] %v200
        $region101: #{generator_forward.1} parent=95 // loop_footer
          %s183 = sadd.s32 1, %s179
        $region102: #{generator_forward.1} parent=95 // loop_footer_branch
          %178 = sbr.rel target = $region98
        $region103: #{generator_forward.1} parent=95 // loop_exit
          _
      $region96: #{generator_forward.1} parent=80 // pred_fallthru
        _
      %p202 = pneg %p174
      // Predicated region
      $region104: #{generator_forward.1} parent=80 // pred_check
        _
      $region105: #{generator_forward.1} parent=80 // pred_check_branch
        %204 = sbr.rel (%p174) target = $region107
      $region106: #{generator_forward.1} parent=80 // pred_region
        %s205 = sand.u32 64, 7
      $region107: #{generator_forward.1} parent=80 // pred_fallthru
        _
    $region81: #{generator_forward.1} parent=1 // pred_fallthru
      _
    // Predicated region
    $region82: #{generator_forward.1} parent=1 // pred_check
      %p159 = pneg %p155
    $region83: #{generator_forward.1} parent=1 // pred_check_branch
      %161 = sbr.rel (%p159) target = $region85
    $region84: #{generator_forward.1} parent=1 // pred_region
      %s162 = sshllo.u32 0, 64
      loop: start=0, step=1, limit=1
      $region86: #{generator_forward.1} parent=84 // loop_pre_header
        _
      $region87: #{generator_forward.1} parent=84 // loop_header
        %s164 = sphi 0, %s168
        %p165 = scmp.ge.s32.totalorder %s164, 1
        %s169 = sphi %s16, %s16
        %s170 = sphi [#allocation7], [#allocation7]
      $region88: #{generator_forward.1} parent=84 // loop_header_branch
        %167 = sbr.rel (%p165) target = $region92
      $region89: #{generator_forward.1} parent=84 // loop_body
        %v171 = vld [vmem:[%s169] sm:%s162]
        %172 = vst [vmem:[%s170] sm:%s162] %v171
      $region90: #{generator_forward.1} parent=84 // loop_footer
        %s168 = sadd.s32 1, %s164
      $region91: #{generator_forward.1} parent=84 // loop_footer_branch
        %163 = sbr.rel target = $region87
      $region92: #{generator_forward.1} parent=84 // loop_exit
        _
    $region85: #{generator_forward.1} parent=1 // pred_fallthru
      _
    // Predicated region
    $region108: #{generator_forward.1} parent=1 // pred_check
      _
    $region109: #{generator_forward.1} parent=1 // pred_check_branch
      %208 = sbr.rel (0) target = $region111
    $region110: #{generator_forward.1} parent=1 // pred_region
      %209 = vsyncadd %s153, 1024
    $region111: #{generator_forward.1} parent=1 // pred_fallthru
      _
    %v210 = vld [vmem:[%s0] sm:$0xf]
    %v211 = vld [vmem:[%s0 + $0x4] sm:$0xf]
    %v212 = vld [vmem:[%s0 + $0x8] sm:$0xf]
    %v213 = vld [vmem:[%s0 + $0xc] sm:$0xf]
    %v214 = vld [vmem:[%s0 + $0x10] sm:$0xf]
    %v215 = vld [vmem:[%s0 + $0x14] sm:$0xf]
    %v216 = vld [vmem:[%s0 + $0x18] sm:$0xf]
    %v217 = vld [vmem:[%s0 + $0x1c] sm:$0xf]
    %v218 = vld [vmem:[%s0 + $0x20] sm:$0xf]
    %v219 = vld [vmem:[%s0 + $0x24] sm:$0xf]
    %v220 = vld [vmem:[#allocation9] sm:$0xff]
    %v221 = vld [vmem:[#allocation9 + $0x8] sm:$0xff]
    %v222 = vld [vmem:[#allocation9 + $0x10] sm:$0xff]
    %v223 = vld [vmem:[#allocation9 + $0x18] sm:$0xff]
    %v224 = vld [vmem:[#allocation9 + $0x20] sm:$0xff]
    %v225 = vld [vmem:[#allocation9 + $0x28] sm:$0xff]
    %v226 = vld [vmem:[#allocation9 + $0x30] sm:$0xff]
    %v227 = vld [vmem:[#allocation9 + $0x38] sm:$0xff]
    %v228 = vld [vmem:[#allocation9 + $0x40] sm:$0xff]
    %v229 = vld [vmem:[#allocation9 + $0x48] sm:$0xff]
    %v230 = vld [vmem:[#allocation9 + $0x50] sm:$0xff]
    %v231 = vld [vmem:[#allocation9 + $0x58] sm:$0xff]
    %v232 = vld [vmem:[#allocation9 + $0x60] sm:$0xff]
    %v233 = vld [vmem:[#allocation9 + $0x68] sm:$0xff]
    %v234 = vld [vmem:[#allocation9 + $0x70] sm:$0xff]
    %v235 = vld [vmem:[#allocation9 + $0x78] sm:$0xff]
    %v236 = vld [vmem:[#allocation9 + $0x80] sm:$0xff]
    %v237 = vld [vmem:[#allocation9 + $0x88] sm:$0xff]
    %v238 = vld [vmem:[#allocation9 + $0x90] sm:$0xff]
    %v239 = vld [vmem:[#allocation9 + $0x98] sm:$0xff]
    %v240 = vld [vmem:[#allocation9 + $0xa0] sm:$0xff]
    %v241 = vld [vmem:[#allocation9 + $0xa8] sm:$0xff]
    %v242 = vld [vmem:[#allocation9 + $0xb0] sm:$0xff]
    %v243 = vld [vmem:[#allocation9 + $0xb8] sm:$0xff]
    %v244 = vld [vmem:[#allocation9 + $0xc0] sm:$0xff]
    %v245 = vld [vmem:[#allocation9 + $0xc8] sm:$0xff]
    %v246 = vld [vmem:[#allocation9 + $0xd0] sm:$0xff]
    %v247 = vld [vmem:[#allocation9 + $0xd8] sm:$0xff]
    %v248 = vld [vmem:[#allocation9 + $0xe0] sm:$0xff]
    %v249 = vld [vmem:[#allocation9 + $0xe8] sm:$0xff]
    %v250 = vld [vmem:[#allocation9 + $0xf0] sm:$0xff]
    %v251 = vld [vmem:[#allocation9 + $0xf8] sm:$0xff]
    %v252 = vld [vmem:[%s3] sm:$0xf]
    %v254 = vlaneseq
    %v255 = vshrl.u32 %v254, 7
    %v256 = vsub.s32 0, %v255
    %v257 = vrot.slane %v252, %v256
    %v258 = vlaneseq
    %v259 = vshrl.u32 %v258, 7
    %v260 = vsub.s32 1, %v259
    %v261 = vrot.slane %v252, %v260
    %v262 = vlaneseq
    %v263 = vshrl.u32 %v262, 7
    %v264 = vsub.s32 2, %v263
    %v265 = vrot.slane %v252, %v264
    %v266 = vlaneseq
    %v267 = vshrl.u32 %v266, 7
    %v268 = vsub.s32 3, %v267
    %v269 = vrot.slane %v252, %v268
    %v284 = vunpack.c.l.b16 %v210
    %v285 = vunpack.c.l.b16 %v211
    %v286 = vunpack.c.l.b16 %v212
    %v287 = vunpack.c.l.b16 %v213
    %v288 = vunpack.c.l.b16 %v214
    %v289 = vunpack.c.l.b16 %v215
    %v290 = vunpack.c.l.b16 %v216
    %v291 = vunpack.c.l.b16 %v217
    %v292 = vunpack.c.l.b16 %v218
    %v293 = vunpack.c.l.b16 %v219
    %v294 = vpack.c.b16 %v285, %v284
    %v295 = vpack.c.b16 %v287, %v286
    %v296 = vpack.c.b16 %v289, %v288
    %v297 = vpack.c.b16 %v291, %v290
    %v298 = vpack.c.b16 %v293, %v292
    %v336 = vunpack.c.l.b16 %v220
    %v337 = vunpack.c.h.b16 %v220
    %v338 = vunpack.c.l.b16 %v221
    %v339 = vunpack.c.h.b16 %v221
    %v340 = vunpack.c.l.b16 %v222
    %v341 = vunpack.c.h.b16 %v222
    %v342 = vunpack.c.l.b16 %v223
    %v343 = vunpack.c.h.b16 %v223
    %v344 = vunpack.c.l.b16 %v224
    %v345 = vunpack.c.h.b16 %v224
    %v346 = vunpack.c.l.b16 %v225
    %v347 = vunpack.c.h.b16 %v225
    %v348 = vunpack.c.l.b16 %v226
    %v349 = vunpack.c.h.b16 %v226
    %v350 = vunpack.c.l.b16 %v227
    %v351 = vunpack.c.h.b16 %v227
    %v352 = vunpack.c.l.b16 %v228
    %v353 = vunpack.c.h.b16 %v228
    %v354 = vunpack.c.l.b16 %v229
    %v355 = vunpack.c.h.b16 %v229
    %v356 = vunpack.c.l.b16 %v230
    %v357 = vunpack.c.h.b16 %v230
    %v358 = vunpack.c.l.b16 %v231
    %v359 = vunpack.c.h.b16 %v231
    %v360 = vunpack.c.l.b16 %v232
    %v361 = vunpack.c.h.b16 %v232
    %v362 = vunpack.c.l.b16 %v233
    %v363 = vunpack.c.h.b16 %v233
    %v364 = vunpack.c.l.b16 %v234
    %v365 = vunpack.c.h.b16 %v234
    %v366 = vunpack.c.l.b16 %v235
    %v367 = vunpack.c.h.b16 %v235
    %v368 = vunpack.c.l.b16 %v236
    %v369 = vunpack.c.h.b16 %v236
    %v370 = vunpack.c.l.b16 %v237
    %v371 = vunpack.c.h.b16 %v237
    %v372 = vunpack.c.l.b16 %v238
    %v373 = vunpack.c.h.b16 %v238
    %v374 = vunpack.c.l.b16 %v239
    %v375 = vunpack.c.h.b16 %v239
    %v376 = vunpack.c.l.b16 %v240
    %v377 = vunpack.c.h.b16 %v240
    %v378 = vunpack.c.l.b16 %v241
    %v379 = vunpack.c.h.b16 %v241
    %v380 = vunpack.c.l.b16 %v242
    %v381 = vunpack.c.h.b16 %v242
    %v382 = vunpack.c.l.b16 %v243
    %v383 = vunpack.c.h.b16 %v243
    %v384 = vunpack.c.l.b16 %v244
    %v385 = vunpack.c.h.b16 %v244
    %v386 = vunpack.c.l.b16 %v245
    %v387 = vunpack.c.h.b16 %v245
    %v388 = vunpack.c.l.b16 %v246
    %v389 = vunpack.c.h.b16 %v246
    %v390 = vunpack.c.l.b16 %v247
    %v391 = vunpack.c.h.b16 %v247
    %v392 = vunpack.c.l.b16 %v248
    %v393 = vunpack.c.h.b16 %v248
    %v394 = vunpack.c.l.b16 %v249
    %v395 = vunpack.c.h.b16 %v249
    %v396 = vunpack.c.l.b16 %v250
    %v397 = vunpack.c.h.b16 %v250
    %v398 = vunpack.c.l.b16 %v251
    %v399 = vunpack.c.h.b16 %v251
    %v400 = vpack.c.b16 %v340, %v336
    %v401 = vpack.c.b16 %v341, %v337
    %v402 = vpack.c.b16 %v342, %v338
    %v403 = vpack.c.b16 %v343, %v339
    %v404 = vpack.c.b16 %v348, %v344
    %v405 = vpack.c.b16 %v349, %v345
    %v406 = vpack.c.b16 %v350, %v346
    %v407 = vpack.c.b16 %v351, %v347
    %v408 = vpack.c.b16 %v356, %v352
    %v409 = vpack.c.b16 %v357, %v353
    %v410 = vpack.c.b16 %v358, %v354
    %v411 = vpack.c.b16 %v359, %v355
    %v412 = vpack.c.b16 %v364, %v360
    %v413 = vpack.c.b16 %v365, %v361
    %v414 = vpack.c.b16 %v366, %v362
    %v415 = vpack.c.b16 %v367, %v363
    %v416 = vpack.c.b16 %v372, %v368
    %v417 = vpack.c.b16 %v373, %v369
    %v418 = vpack.c.b16 %v374, %v370
    %v419 = vpack.c.b16 %v375, %v371
    %v420 = vpack.c.b16 %v380, %v376
    %v421 = vpack.c.b16 %v381, %v377
    %v422 = vpack.c.b16 %v382, %v378
    %v423 = vpack.c.b16 %v383, %v379
    %v424 = vpack.c.b16 %v388, %v384
    %v425 = vpack.c.b16 %v389, %v385
    %v426 = vpack.c.b16 %v390, %v386
    %v427 = vpack.c.b16 %v391, %v387
    %v428 = vpack.c.b16 %v396, %v392
    %v429 = vpack.c.b16 %v397, %v393
    %v430 = vpack.c.b16 %v398, %v394
    %v431 = vpack.c.b16 %v399, %v395
    %464 = vmatprep.subr.bf16.mxu0 %v401
    %465 = vmatpush1.bf16.msra.mxu0 %v400
    %466 = vmatprep.subr.bf16.mxu0 %v405
    %467 = vmatpush1.bf16.msra.mxu0 %v404
    %468 = vmatprep.subr.bf16.mxu0 %v409
    %469 = vmatpush1.bf16.msra.mxu0 %v408
    %470 = vmatprep.subr.bf16.mxu0 %v413
    %471 = vmatpush1.bf16.msra.mxu0 %v412
    %472 = vmatprep.subr.bf16.mxu0 %v417
    %473 = vmatpush1.bf16.msra.mxu0 %v416
    %474 = vmatprep.subr.bf16.mxu0 %v421
    %475 = vmatpush1.bf16.msra.mxu0 %v420
    %476 = vmatprep.subr.bf16.mxu0 %v425
    %477 = vmatpush1.bf16.msra.mxu0 %v424
    %478 = vmatprep.subr.bf16.mxu0 %v429
    %479 = vmatpush1.bf16.msra.mxu0 %v428
    %480 = vmatprep.subr.bf16.mxu0 0
    %481 = vmatpush1.bf16.msra.mxu0 0
    %482 = vmatprep.subr.bf16.mxu0 0
    %483 = vmatpush1.bf16.msra.mxu0 0
    %484 = vmatprep.subr.bf16.mxu0 0
    %485 = vmatpush1.bf16.msra.mxu0 0
    %486 = vmatprep.subr.bf16.mxu0 0
    %487 = vmatpush1.bf16.msra.mxu0 0
    %488 = vmatprep.subr.bf16.mxu0 0
    %489 = vmatpush1.bf16.msra.mxu0 0
    %490 = vmatprep.subr.bf16.mxu0 0
    %491 = vmatpush1.bf16.msra.mxu0 0
    %492 = vmatprep.subr.bf16.mxu0 0
    %493 = vmatpush1.bf16.msra.mxu0 0
    %494 = vmatprep.subr.bf16.mxu0 0
    %495 = vmatpush1.bf16.msra.mxu0 0
    %496 = vmatprep.mubr.bf16.mxu0 0
    %497 = vmatmul.mubr.bf16.gmra.mrb[0].mxu0 %v294
    %v498 = vpop.f32.mrb[0].mxu0
    %v499 = vadd.f32 %v257, %v498
    %v500 = vpop.f32.mrb[0].mxu0
    %v501 = vadd.f32 %v261, %v500
    %v502 = vpop.f32.mrb[0].mxu0
    %v503 = vadd.f32 %v257, %v502
    %v504 = vpop.f32.mrb[0].mxu0
    %v505 = vadd.f32 %v261, %v504
    %506 = vmatprep.mubr.bf16.mxu0 0
    %507 = vmatmul.mubr.bf16.gmra.mrb[0].mxu0 %v295
    %v508 = vpop.f32.mrb[0].mxu0
    %v509 = vadd.f32 %v257, %v508
    %v510 = vpop.f32.mrb[0].mxu0
    %v511 = vadd.f32 %v261, %v510
    %v512 = vpop.f32.mrb[0].mxu0
    %v513 = vadd.f32 %v257, %v512
    %v514 = vpop.f32.mrb[0].mxu0
    %v515 = vadd.f32 %v261, %v514
    %516 = vmatprep.mubr.bf16.mxu0 0
    %517 = vmatmul.mubr.bf16.gmra.mrb[0].mxu0 %v296
    %v518 = vpop.f32.mrb[0].mxu0
    %v519 = vadd.f32 %v257, %v518
    %v520 = vpop.f32.mrb[0].mxu0
    %v521 = vadd.f32 %v261, %v520
    %v522 = vpop.f32.mrb[0].mxu0
    %v523 = vadd.f32 %v257, %v522
    %v524 = vpop.f32.mrb[0].mxu0
    %v525 = vadd.f32 %v261, %v524
    %526 = vmatprep.mubr.bf16.mxu0 0
    %527 = vmatmul.mubr.bf16.gmra.mrb[0].mxu0 %v297
    %v528 = vpop.f32.mrb[0].mxu0
    %v529 = vadd.f32 %v257, %v528
    %v530 = vpop.f32.mrb[0].mxu0
    %v531 = vadd.f32 %v261, %v530
    %v532 = vpop.f32.mrb[0].mxu0
    %v533 = vadd.f32 %v257, %v532
    %v534 = vpop.f32.mrb[0].mxu0
    %v535 = vadd.f32 %v261, %v534
    %536 = vmatprep.mubr.bf16.mxu0 0
    %537 = vmatmul.mubr.bf16.gmra.mrb[0].mxu0 %v298
    %v538 = vpop.f32.mrb[0].mxu0
    %v539 = vadd.f32 %v257, %v538
    %v540 = vpop.f32.mrb[0].mxu0
    %v541 = vadd.f32 %v261, %v540
    %v542 = vpop.f32.mrb[0].mxu0
    %v543 = vadd.f32 %v257, %v542
    %v544 = vpop.f32.mrb[0].mxu0
    %v545 = vadd.f32 %v261, %v544
    %546 = vdwg.mxu0
    %547 = vmatprep.subr.bf16.mxu0 %v403
    %548 = vmatpush1.bf16.msra.mxu0 %v402
    %549 = vmatprep.subr.bf16.mxu0 %v407
    %550 = vmatpush1.bf16.msra.mxu0 %v406
    %551 = vmatprep.subr.bf16.mxu0 %v411
    %552 = vmatpush1.bf16.msra.mxu0 %v410
    %553 = vmatprep.subr.bf16.mxu0 %v415
    %554 = vmatpush1.bf16.msra.mxu0 %v414
    %555 = vmatprep.subr.bf16.mxu0 %v419
    %556 = vmatpush1.bf16.msra.mxu0 %v418
    %557 = vmatprep.subr.bf16.mxu0 %v423
    %558 = vmatpush1.bf16.msra.mxu0 %v422
    %559 = vmatprep.subr.bf16.mxu0 %v427
    %560 = vmatpush1.bf16.msra.mxu0 %v426
    %561 = vmatprep.subr.bf16.mxu0 %v431
    %562 = vmatpush1.bf16.msra.mxu0 %v430
    %563 = vmatprep.subr.bf16.mxu0 0
    %564 = vmatpush1.bf16.msra.mxu0 0
    %565 = vmatprep.subr.bf16.mxu0 0
    %566 = vmatpush1.bf16.msra.mxu0 0
    %567 = vmatprep.subr.bf16.mxu0 0
    %568 = vmatpush1.bf16.msra.mxu0 0
    %569 = vmatprep.subr.bf16.mxu0 0
    %570 = vmatpush1.bf16.msra.mxu0 0
    %571 = vmatprep.subr.bf16.mxu0 0
    %572 = vmatpush1.bf16.msra.mxu0 0
    %573 = vmatprep.subr.bf16.mxu0 0
    %574 = vmatpush1.bf16.msra.mxu0 0
    %575 = vmatprep.subr.bf16.mxu0 0
    %576 = vmatpush1.bf16.msra.mxu0 0
    %577 = vmatprep.subr.bf16.mxu0 0
    %578 = vmatpush1.bf16.msra.mxu0 0
    %579 = vmatprep.mubr.bf16.mxu0 0
    %580 = vmatmul.mubr.bf16.gmra.mrb[0].mxu0 %v294
    %v581 = vpop.f32.mrb[0].mxu0
    %v582 = vadd.f32 %v265, %v581
    %v583 = vpop.f32.mrb[0].mxu0
    %v584 = vadd.f32 %v269, %v583
    %v585 = vpop.f32.mrb[0].mxu0
    %v586 = vadd.f32 %v265, %v585
    %v587 = vpop.f32.mrb[0].mxu0
    %v588 = vadd.f32 %v269, %v587
    %589 = vmatprep.mubr.bf16.mxu0 0
    %590 = vmatmul.mubr.bf16.gmra.mrb[0].mxu0 %v295
    %v591 = vpop.f32.mrb[0].mxu0
    %v592 = vadd.f32 %v265, %v591
    %v593 = vpop.f32.mrb[0].mxu0
    %v594 = vadd.f32 %v269, %v593
    %v595 = vpop.f32.mrb[0].mxu0
    %v596 = vadd.f32 %v265, %v595
    %v597 = vpop.f32.mrb[0].mxu0
    %v598 = vadd.f32 %v269, %v597
    %599 = vmatprep.mubr.bf16.mxu0 0
    %600 = vmatmul.mubr.bf16.gmra.mrb[0].mxu0 %v296
    %v601 = vpop.f32.mrb[0].mxu0
    %v602 = vadd.f32 %v265, %v601
    %v603 = vpop.f32.mrb[0].mxu0
    %v604 = vadd.f32 %v269, %v603
    %v605 = vpop.f32.mrb[0].mxu0
    %v606 = vadd.f32 %v265, %v605
    %v607 = vpop.f32.mrb[0].mxu0
    %v608 = vadd.f32 %v269, %v607
    %609 = vmatprep.mubr.bf16.mxu0 0
    %610 = vmatmul.mubr.bf16.gmra.mrb[0].mxu0 %v297
    %v611 = vpop.f32.mrb[0].mxu0
    %v612 = vadd.f32 %v265, %v611
    %v613 = vpop.f32.mrb[0].mxu0
    %v614 = vadd.f32 %v269, %v613
    %v615 = vpop.f32.mrb[0].mxu0
    %v616 = vadd.f32 %v265, %v615
    %v617 = vpop.f32.mrb[0].mxu0
    %v618 = vadd.f32 %v269, %v617
    %619 = vmatprep.mubr.bf16.mxu0 0
    %620 = vmatmul.mubr.bf16.gmra.mrb[0].mxu0 %v298
    %v621 = vpop.f32.mrb[0].mxu0
    %v622 = vadd.f32 %v265, %v621
    %v623 = vpop.f32.mrb[0].mxu0
    %v624 = vadd.f32 %v269, %v623
    %v625 = vpop.f32.mrb[0].mxu0
    %v626 = vadd.f32 %v265, %v625
    %v627 = vpop.f32.mrb[0].mxu0
    %v628 = vadd.f32 %v269, %v627
    %629 = vdwg.mxu0
    %630 = vst [vmem:[#allocation2] sm:$0xff] %v499
    %631 = vst [vmem:[#allocation2 + $0x8] sm:$0xff] %v501
    %632 = vst [vmem:[#allocation2 + $0x10] sm:$0xff] %v582
    %633 = vst [vmem:[#allocation2 + $0x18] sm:$0xff] %v584
    %634 = vst [vmem:[#allocation2 + $0x20] sm:$0xff] %v503
    %635 = vst [vmem:[#allocation2 + $0x28] sm:$0xff] %v505
    %636 = vst [vmem:[#allocation2 + $0x30] sm:$0xff] %v586
    %637 = vst [vmem:[#allocation2 + $0x38] sm:$0xff] %v588
    %638 = vst [vmem:[#allocation2 + $0x40] sm:$0xff] %v509
    %639 = vst [vmem:[#allocation2 + $0x48] sm:$0xff] %v511
    %640 = vst [vmem:[#allocation2 + $0x50] sm:$0xff] %v592
    %641 = vst [vmem:[#allocation2 + $0x58] sm:$0xff] %v594
    %642 = vst [vmem:[#allocation2 + $0x60] sm:$0xff] %v513
    %643 = vst [vmem:[#allocation2 + $0x68] sm:$0xff] %v515
    %644 = vst [vmem:[#allocation2 + $0x70] sm:$0xff] %v596
    %645 = vst [vmem:[#allocation2 + $0x78] sm:$0xff] %v598
    %646 = vst [vmem:[#allocation2 + $0x80] sm:$0xff] %v519
    %647 = vst [vmem:[#allocation2 + $0x88] sm:$0xff] %v521
    %648 = vst [vmem:[#allocation2 + $0x90] sm:$0xff] %v602
    %649 = vst [vmem:[#allocation2 + $0x98] sm:$0xff] %v604
    %650 = vst [vmem:[#allocation2 + $0xa0] sm:$0xff] %v523
    %651 = vst [vmem:[#allocation2 + $0xa8] sm:$0xff] %v525
    %652 = vst [vmem:[#allocation2 + $0xb0] sm:$0xff] %v606
    %653 = vst [vmem:[#allocation2 + $0xb8] sm:$0xff] %v608
    %654 = vst [vmem:[#allocation2 + $0xc0] sm:$0xff] %v529
    %655 = vst [vmem:[#allocation2 + $0xc8] sm:$0xff] %v531
    %656 = vst [vmem:[#allocation2 + $0xd0] sm:$0xff] %v612
    %657 = vst [vmem:[#allocation2 + $0xd8] sm:$0xff] %v614
    %658 = vst [vmem:[#allocation2 + $0xe0] sm:$0xff] %v533
    %659 = vst [vmem:[#allocation2 + $0xe8] sm:$0xff] %v535
    %660 = vst [vmem:[#allocation2 + $0xf0] sm:$0xff] %v616
    %661 = vst [vmem:[#allocation2 + $0xf8] sm:$0xff] %v618
    %662 = vst [vmem:[#allocation2 + $0x100] sm:$0xff] %v539
    %663 = vst [vmem:[#allocation2 + $0x108] sm:$0xff] %v541
    %664 = vst [vmem:[#allocation2 + $0x110] sm:$0xff] %v622
    %665 = vst [vmem:[#allocation2 + $0x118] sm:$0xff] %v624
    %666 = vst [vmem:[#allocation2 + $0x120] sm:$0xff] %v543
    %667 = vst [vmem:[#allocation2 + $0x128] sm:$0xff] %v545
    %668 = vst [vmem:[#allocation2 + $0x130] sm:$0xff] %v626
    %669 = vst [vmem:[#allocation2 + $0x138] sm:$0xff] %v628
    %670 = vst [vmem:[#allocation3] sm:$0xff] 0.0
    %671 = vst [vmem:[#allocation3 + $0x58] sm:$0xff] 0.0
    %v672 = vld [vmem:[#allocation11] sm:$0xff]
    %v673 = vld [vmem:[#allocation11 + $0x8] sm:$0xff]
    %v674 = vld [vmem:[#allocation11 + $0x10] sm:$0xff]
    %v675 = vld [vmem:[#allocation11 + $0x18] sm:$0xff]
    %v676 = vld [vmem:[#allocation11 + $0x20] sm:$0xff]
    %v677 = vld [vmem:[#allocation11 + $0x28] sm:$0xff]
    %v678 = vld [vmem:[#allocation11 + $0x30] sm:$0xff]
    %v679 = vld [vmem:[#allocation11 + $0x38] sm:$0xff]
    %v680 = vld [vmem:[#allocation11 + $0x40] sm:$0xff]
    %v681 = vld [vmem:[#allocation11 + $0x48] sm:$0xff]
    %v682 = vld [vmem:[#allocation11 + $0x50] sm:$0xff]
    %v683 = vld [vmem:[#allocation11 + $0x58] sm:$0xff]
    %v684 = vld [vmem:[#allocation11 + $0x60] sm:$0xff]
    %v685 = vld [vmem:[#allocation11 + $0x68] sm:$0xff]
    %v686 = vld [vmem:[#allocation11 + $0x70] sm:$0xff]
    %v687 = vld [vmem:[#allocation11 + $0x78] sm:$0xff]
    %v688 = vld [vmem:[#allocation11 + $0x80] sm:$0xff]
    %v689 = vld [vmem:[#allocation11 + $0x88] sm:$0xff]
    %v690 = vld [vmem:[#allocation11 + $0x90] sm:$0xff]
    %v691 = vld [vmem:[#allocation11 + $0x98] sm:$0xff]
    %v692 = vld [vmem:[#allocation11 + $0xa0] sm:$0xff]
    %v693 = vld [vmem:[#allocation11 + $0xa8] sm:$0xff]
    %v694 = vld [vmem:[#allocation11 + $0xb0] sm:$0xff]
    %v695 = vld [vmem:[#allocation11 + $0xb8] sm:$0xff]
    %v696 = vld [vmem:[#allocation11 + $0xc0] sm:$0xff]
    %v697 = vld [vmem:[#allocation11 + $0xc8] sm:$0xff]
    %v698 = vld [vmem:[#allocation11 + $0xd0] sm:$0xff]
    %v699 = vld [vmem:[#allocation11 + $0xd8] sm:$0xff]
    %v700 = vld [vmem:[#allocation11 + $0xe0] sm:$0xff]
    %v701 = vld [vmem:[#allocation11 + $0xe8] sm:$0xff]
    %v702 = vld [vmem:[#allocation11 + $0xf0] sm:$0xff]
    %v703 = vld [vmem:[#allocation11 + $0xf8] sm:$0xff]
    %v704 = vld [vmem:[#allocation13] sm:$0xff]
    %v705 = vld [vmem:[#allocation13 + $0x8] sm:$0xff]
    %v706 = vld [vmem:[#allocation13 + $0x10] sm:$0xff]
    %v707 = vld [vmem:[#allocation13 + $0x18] sm:$0xff]
    %v708 = vld [vmem:[#allocation13 + $0x20] sm:$0xff]
    %v709 = vld [vmem:[#allocation13 + $0x28] sm:$0xff]
    %v710 = vld [vmem:[#allocation13 + $0x30] sm:$0xff]
    %v711 = vld [vmem:[#allocation13 + $0x38] sm:$0xff]
    %v712 = vld [vmem:[#allocation13 + $0x40] sm:$0xff]
    %v713 = vld [vmem:[#allocation13 + $0x48] sm:$0xff]
    %v714 = vld [vmem:[#allocation13 + $0x50] sm:$0xff]
    %v715 = vld [vmem:[#allocation13 + $0x58] sm:$0xff]
    %v716 = vld [vmem:[#allocation13 + $0x60] sm:$0xff]
    %v717 = vld [vmem:[#allocation13 + $0x68] sm:$0xff]
    %v718 = vld [vmem:[#allocation13 + $0x70] sm:$0xff]
    %v719 = vld [vmem:[#allocation13 + $0x78] sm:$0xff]
    %v720 = vld [vmem:[#allocation13 + $0x80] sm:$0xff]
    %v721 = vld [vmem:[#allocation13 + $0x88] sm:$0xff]
    %v722 = vld [vmem:[#allocation13 + $0x90] sm:$0xff]
    %v723 = vld [vmem:[#allocation13 + $0x98] sm:$0xff]
    %v724 = vld [vmem:[#allocation13 + $0xa0] sm:$0xff]
    %v725 = vld [vmem:[#allocation13 + $0xa8] sm:$0xff]
    %v726 = vld [vmem:[#allocation13 + $0xb0] sm:$0xff]
    %v727 = vld [vmem:[#allocation13 + $0xb8] sm:$0xff]
    %v728 = vld [vmem:[#allocation13 + $0xc0] sm:$0xff]
    %v729 = vld [vmem:[#allocation13 + $0xc8] sm:$0xff]
    %v730 = vld [vmem:[#allocation13 + $0xd0] sm:$0xff]
    %v731 = vld [vmem:[#allocation13 + $0xd8] sm:$0xff]
    %v732 = vld [vmem:[#allocation13 + $0xe0] sm:$0xff]
    %v733 = vld [vmem:[#allocation13 + $0xe8] sm:$0xff]
    %v734 = vld [vmem:[#allocation13 + $0xf0] sm:$0xff]
    %v735 = vld [vmem:[#allocation13 + $0xf8] sm:$0xff]
    %v736 = vld [vmem:[#allocation14] sm:$0xff]
    %v737 = vld [vmem:[#allocation14 + $0x8] sm:$0xff]
    %v738 = vld [vmem:[#allocation14 + $0x10] sm:$0xff]
    %v739 = vld [vmem:[#allocation14 + $0x18] sm:$0xff]
    %v740 = vld [vmem:[#allocation14 + $0x20] sm:$0xff]
    %v741 = vld [vmem:[#allocation14 + $0x28] sm:$0xff]
    %v742 = vld [vmem:[#allocation14 + $0x30] sm:$0xff]
    %v743 = vld [vmem:[#allocation14 + $0x38] sm:$0xff]
    %v744 = vld [vmem:[#allocation14 + $0x40] sm:$0xff]
    %v745 = vld [vmem:[#allocation14 + $0x48] sm:$0xff]
    %v746 = vld [vmem:[#allocation14 + $0x50] sm:$0xff]
    %v747 = vld [vmem:[#allocation14 + $0x58] sm:$0xff]
    %v748 = vld [vmem:[#allocation14 + $0x60] sm:$0xff]
    %v749 = vld [vmem:[#allocation14 + $0x68] sm:$0xff]
    %v750 = vld [vmem:[#allocation14 + $0x70] sm:$0xff]
    %v751 = vld [vmem:[#allocation14 + $0x78] sm:$0xff]
    %v752 = vld [vmem:[#allocation14 + $0x80] sm:$0xff]
    %v753 = vld [vmem:[#allocation14 + $0x88] sm:$0xff]
    %v754 = vld [vmem:[#allocation14 + $0x90] sm:$0xff]
    %v755 = vld [vmem:[#allocation14 + $0x98] sm:$0xff]
    %v756 = vld [vmem:[#allocation14 + $0xa0] sm:$0xff]
    %v757 = vld [vmem:[#allocation14 + $0xa8] sm:$0xff]
    %v758 = vld [vmem:[#allocation14 + $0xb0] sm:$0xff]
    %v759 = vld [vmem:[#allocation14 + $0xb8] sm:$0xff]
    %v760 = vld [vmem:[#allocation14 + $0xc0] sm:$0xff]
    %v761 = vld [vmem:[#allocation14 + $0xc8] sm:$0xff]
    %v762 = vld [vmem:[#allocation14 + $0xd0] sm:$0xff]
    %v763 = vld [vmem:[#allocation14 + $0xd8] sm:$0xff]
    %v764 = vld [vmem:[#allocation14 + $0xe0] sm:$0xff]
    %v765 = vld [vmem:[#allocation14 + $0xe8] sm:$0xff]
    %v766 = vld [vmem:[#allocation14 + $0xf0] sm:$0xff]
    %v767 = vld [vmem:[#allocation14 + $0xf8] sm:$0xff]
    %v768 = vld [vmem:[%s6] sm:$0xf]
    %v769 = vld [vmem:[#allocation2] sm:$0xff]
    %v770 = vld [vmem:[#allocation2 + $0x8] sm:$0xff]
    %v771 = vld [vmem:[#allocation2 + $0x10] sm:$0xff]
    %v772 = vld [vmem:[#allocation2 + $0x18] sm:$0xff]
    %v805 = vunpack.c.l.b16 %v672
    %v806 = vunpack.c.h.b16 %v672
    %v807 = vunpack.c.l.b16 %v673
    %v808 = vunpack.c.h.b16 %v673
    %v809 = vunpack.c.l.b16 %v674
    %v810 = vunpack.c.h.b16 %v674
    %v811 = vunpack.c.l.b16 %v675
    %v812 = vunpack.c.h.b16 %v675
    %v813 = vunpack.c.l.b16 %v676
    %v814 = vunpack.c.h.b16 %v676
    %v815 = vunpack.c.l.b16 %v677
    %v816 = vunpack.c.h.b16 %v677
    %v817 = vunpack.c.l.b16 %v678
    %v818 = vunpack.c.h.b16 %v678
    %v819 = vunpack.c.l.b16 %v679
    %v820 = vunpack.c.h.b16 %v679
    %v821 = vunpack.c.l.b16 %v680
    %v822 = vunpack.c.h.b16 %v680
    %v823 = vunpack.c.l.b16 %v681
    %v824 = vunpack.c.h.b16 %v681
    %v825 = vunpack.c.l.b16 %v682
    %v826 = vunpack.c.h.b16 %v682
    %v827 = vunpack.c.l.b16 %v683
    %v828 = vunpack.c.h.b16 %v683
    %v829 = vunpack.c.l.b16 %v684
    %v830 = vunpack.c.h.b16 %v684
    %v831 = vunpack.c.l.b16 %v685
    %v832 = vunpack.c.h.b16 %v685
    %v833 = vunpack.c.l.b16 %v686
    %v834 = vunpack.c.h.b16 %v686
    %v835 = vunpack.c.l.b16 %v687
    %v836 = vunpack.c.h.b16 %v687
    %v837 = vunpack.c.l.b16 %v688
    %v838 = vunpack.c.h.b16 %v688
    %v839 = vunpack.c.l.b16 %v689
    %v840 = vunpack.c.h.b16 %v689
    %v841 = vunpack.c.l.b16 %v690
    %v842 = vunpack.c.h.b16 %v690
    %v843 = vunpack.c.l.b16 %v691
    %v844 = vunpack.c.h.b16 %v691
    %v845 = vunpack.c.l.b16 %v692
    %v846 = vunpack.c.h.b16 %v692
    %v847 = vunpack.c.l.b16 %v693
    %v848 = vunpack.c.h.b16 %v693
    %v849 = vunpack.c.l.b16 %v694
    %v850 = vunpack.c.h.b16 %v694
    %v851 = vunpack.c.l.b16 %v695
    %v852 = vunpack.c.h.b16 %v695
    %v853 = vunpack.c.l.b16 %v696
    %v854 = vunpack.c.h.b16 %v696
    %v855 = vunpack.c.l.b16 %v697
    %v856 = vunpack.c.h.b16 %v697
    %v857 = vunpack.c.l.b16 %v698
    %v858 = vunpack.c.h.b16 %v698
    %v859 = vunpack.c.l.b16 %v699
    %v860 = vunpack.c.h.b16 %v699
    %v861 = vunpack.c.l.b16 %v700
    %v862 = vunpack.c.h.b16 %v700
    %v863 = vunpack.c.l.b16 %v701
    %v864 = vunpack.c.h.b16 %v701
    %v865 = vunpack.c.l.b16 %v702
    %v866 = vunpack.c.h.b16 %v702
    %v867 = vunpack.c.l.b16 %v703
    %v868 = vunpack.c.h.b16 %v703
    %v869 = vpack.c.b16 %v809, %v805
    %v870 = vpack.c.b16 %v810, %v806
    %v871 = vpack.c.b16 %v811, %v807
    %v872 = vpack.c.b16 %v812, %v808
    %v873 = vpack.c.b16 %v817, %v813
    %v874 = vpack.c.b16 %v818, %v814
    %v875 = vpack.c.b16 %v819, %v815
    %v876 = vpack.c.b16 %v820, %v816
    %v877 = vpack.c.b16 %v825, %v821
    %v878 = vpack.c.b16 %v826, %v822
    %v879 = vpack.c.b16 %v827, %v823
    %v880 = vpack.c.b16 %v828, %v824
    %v881 = vpack.c.b16 %v833, %v829
    %v882 = vpack.c.b16 %v834, %v830
    %v883 = vpack.c.b16 %v835, %v831
    %v884 = vpack.c.b16 %v836, %v832
    %v885 = vpack.c.b16 %v841, %v837
    %v886 = vpack.c.b16 %v842, %v838
    %v887 = vpack.c.b16 %v843, %v839
    %v888 = vpack.c.b16 %v844, %v840
    %v889 = vpack.c.b16 %v849, %v845
    %v890 = vpack.c.b16 %v850, %v846
    %v891 = vpack.c.b16 %v851, %v847
    %v892 = vpack.c.b16 %v852, %v848
    %v893 = vpack.c.b16 %v857, %v853
    %v894 = vpack.c.b16 %v858, %v854
    %v895 = vpack.c.b16 %v859, %v855
    %v896 = vpack.c.b16 %v860, %v856
    %v897 = vpack.c.b16 %v865, %v861
    %v898 = vpack.c.b16 %v866, %v862
    %v899 = vpack.c.b16 %v867, %v863
    %v900 = vpack.c.b16 %v868, %v864
    %933 = vmatprep.subr.bf16.mxu0 %v870
    %934 = vmatpush1.bf16.msra.mxu0 %v869
    %935 = vmatprep.subr.bf16.mxu0 %v874
    %936 = vmatpush1.bf16.msra.mxu0 %v873
    %937 = vmatprep.subr.bf16.mxu0 %v878
    %938 = vmatpush1.bf16.msra.mxu0 %v877
    %939 = vmatprep.subr.bf16.mxu0 %v882
    %940 = vmatpush1.bf16.msra.mxu0 %v881
    %941 = vmatprep.subr.bf16.mxu0 %v886
    %942 = vmatpush1.bf16.msra.mxu0 %v885
    %943 = vmatprep.subr.bf16.mxu0 %v890
    %944 = vmatpush1.bf16.msra.mxu0 %v889
    %945 = vmatprep.subr.bf16.mxu0 %v894
    %946 = vmatpush1.bf16.msra.mxu0 %v893
    %947 = vmatprep.subr.bf16.mxu0 %v898
    %948 = vmatpush1.bf16.msra.mxu0 %v897
    %949 = vmatprep.subr.bf16.mxu0 0
    %950 = vmatpush1.bf16.msra.mxu0 0
    %951 = vmatprep.subr.bf16.mxu0 0
    %952 = vmatpush1.bf16.msra.mxu0 0
    %953 = vmatprep.subr.bf16.mxu0 0
    %954 = vmatpush1.bf16.msra.mxu0 0
    %955 = vmatprep.subr.bf16.mxu0 0
    %956 = vmatpush1.bf16.msra.mxu0 0
    %957 = vmatprep.subr.bf16.mxu0 0
    %958 = vmatpush1.bf16.msra.mxu0 0
    %959 = vmatprep.subr.bf16.mxu0 0
    %960 = vmatpush1.bf16.msra.mxu0 0
    %961 = vmatprep.subr.bf16.mxu0 0
    %962 = vmatpush1.bf16.msra.mxu0 0
    %963 = vmatprep.subr.bf16.mxu0 0
    %964 = vmatpush1.bf16.msra.mxu0 0
    %965 = vmatprep.mubr.bf16.mxu0 0
    %966 = vmatmul.mubr.bf16.gmra.mrb[0].mxu0 0
    %v967 = vpop.f32.mrb[0].mxu0
    %v968 = vadd.f32 0.0, %v967
    %v969 = vpop.f32.mrb[0].mxu0
    %v970 = vadd.f32 0.0, %v969
    %v971 = vpop.f32.mrb[0].mxu0
    %v972 = vpop.f32.mrb[0].mxu0
    %973 = vdwg.mxu0
    %974 = vmatprep.subr.bf16.mxu0 %v872
    %975 = vmatpush1.bf16.msra.mxu0 %v871
    %976 = vmatprep.subr.bf16.mxu0 %v876
    %977 = vmatpush1.bf16.msra.mxu0 %v875
    %978 = vmatprep.subr.bf16.mxu0 %v880
    %979 = vmatpush1.bf16.msra.mxu0 %v879
    %980 = vmatprep.subr.bf16.mxu0 %v884
    %981 = vmatpush1.bf16.msra.mxu0 %v883
    %982 = vmatprep.subr.bf16.mxu0 %v888
    %983 = vmatpush1.bf16.msra.mxu0 %v887
    %984 = vmatprep.subr.bf16.mxu0 %v892
    %985 = vmatpush1.bf16.msra.mxu0 %v891
    %986 = vmatprep.subr.bf16.mxu0 %v896
    %987 = vmatpush1.bf16.msra.mxu0 %v895
    %988 = vmatprep.subr.bf16.mxu0 %v900
    %989 = vmatpush1.bf16.msra.mxu0 %v899
    %990 = vmatprep.subr.bf16.mxu0 0
    %991 = vmatpush1.bf16.msra.mxu0 0
    %992 = vmatprep.subr.bf16.mxu0 0
    %993 = vmatpush1.bf16.msra.mxu0 0
    %994 = vmatprep.subr.bf16.mxu0 0
    %995 = vmatpush1.bf16.msra.mxu0 0
    %996 = vmatprep.subr.bf16.mxu0 0
    %997 = vmatpush1.bf16.msra.mxu0 0
    %998 = vmatprep.subr.bf16.mxu0 0
    %999 = vmatpush1.bf16.msra.mxu0 0
    %1000 = vmatprep.subr.bf16.mxu0 0
    %1001 = vmatpush1.bf16.msra.mxu0 0
    %1002 = vmatprep.subr.bf16.mxu0 0
    %1003 = vmatpush1.bf16.msra.mxu0 0
    %1004 = vmatprep.subr.bf16.mxu0 0
    %1005 = vmatpush1.bf16.msra.mxu0 0
    %1006 = vmatprep.mubr.bf16.mxu0 0
    %1007 = vmatmul.mubr.bf16.gmra.mrb[0].mxu0 0
    %v1008 = vpop.f32.mrb[0].mxu0
    %v1009 = vadd.f32 0.0, %v1008
    %v1010 = vpop.f32.mrb[0].mxu0
    %v1011 = vadd.f32 0.0, %v1010
    %v1012 = vpop.f32.mrb[0].mxu0
    %v1013 = vpop.f32.mrb[0].mxu0
    %1014 = vdwg.mxu0
    %v1015 = vadd.f32 %v769, %v968
    %v1016 = vadd.f32 %v770, %v970
    %v1017 = vadd.f32 %v771, %v1009
    %v1018 = vadd.f32 %v772, %v1011
    %v1019 = vxor.u32 %v1015, 2147483648
    %v1020 = vmul.f32 %v1019, 1.442695
    %v1021 = vpow.pop %v1020
    %v1022 = vadd.f32 %v1021, 1.0
    %v1023 = vrcp.pop %v1022
    %v1024 = vmul.f32 1.0, %v1023
    %v1025 = vxor.u32 %v1016, 2147483648
    %v1026 = vmul.f32 %v1025, 1.442695
    %v1027 = vpow.pop %v1026
    %v1028 = vadd.f32 %v1027, 1.0
    %v1029 = vrcp.pop %v1028
    %v1030 = vmul.f32 1.0, %v1029
    %v1031 = vtanh.pop %v1017
    %v1032 = vxor.u32 %v1018, 2147483648
    %v1033 = vmul.f32 %v1032, 1.442695
    %v1034 = vpow.pop %v1033
    %v1035 = vadd.f32 %v1034, 1.0
    %v1036 = vrcp.pop %v1035
    %v1037 = vmul.f32 1.0, %v1036
    %v1038 = vmul.f32 %v1030, 0.0
    %v1039 = vmul.f32 %v1024, %v1031
    %v1040 = vadd.f32 %v1038, %v1039
    %v1041 = vtanh.pop %v1040
    %v1042 = vmul.f32 %v1037, %v1041
    %v1043 = vpack.c.bf16 %v1042, %v1042
    %v1045 = vlaneseq
    %v1046 = vshrl.u32 %v1045, 7
    %v1047 = vsub.s32 0, %v1046
    %v1048 = vrot.slane %v768, %v1047
    %v1049 = vlaneseq
    %v1050 = vshrl.u32 %v1049, 7
    %v1051 = vsub.s32 1, %v1050
    %v1052 = vrot.slane %v768, %v1051
    %v1053 = vlaneseq
    %v1054 = vshrl.u32 %v1053, 7
    %v1055 = vsub.s32 2, %v1054
    %v1056 = vrot.slane %v768, %v1055
    %v1057 = vlaneseq
    %v1058 = vshrl.u32 %v1057, 7
    %v1059 = vsub.s32 3, %v1058
    %v1060 = vrot.slane %v768, %v1059
    %v1097 = vunpack.c.l.b16 %v704
    %v1098 = vunpack.c.h.b16 %v704
    %v1099 = vunpack.c.l.b16 %v705
    %v1100 = vunpack.c.h.b16 %v705
    %v1101 = vunpack.c.l.b16 %v706
    %v1102 = vunpack.c.h.b16 %v706
    %v1103 = vunpack.c.l.b16 %v707
    %v1104 = vunpack.c.h.b16 %v707
    %v1105 = vunpack.c.l.b16 %v708
    %v1106 = vunpack.c.h.b16 %v708
    %v1107 = vunpack.c.l.b16 %v709
    %v1108 = vunpack.c.h.b16 %v709
    %v1109 = vunpack.c.l.b16 %v710
    %v1110 = vunpack.c.h.b16 %v710
    %v1111 = vunpack.c.l.b16 %v711
    %v1112 = vunpack.c.h.b16 %v711
    %v1113 = vunpack.c.l.b16 %v712
    %v1114 = vunpack.c.h.b16 %v712
    %v1115 = vunpack.c.l.b16 %v713
    %v1116 = vunpack.c.h.b16 %v713
    %v1117 = vunpack.c.l.b16 %v714
    %v1118 = vunpack.c.h.b16 %v714
    %v1119 = vunpack.c.l.b16 %v715
    %v1120 = vunpack.c.h.b16 %v715
    %v1121 = vunpack.c.l.b16 %v716
    %v1122 = vunpack.c.h.b16 %v716
    %v1123 = vunpack.c.l.b16 %v717
    %v1124 = vunpack.c.h.b16 %v717
    %v1125 = vunpack.c.l.b16 %v718
    %v1126 = vunpack.c.h.b16 %v718
    %v1127 = vunpack.c.l.b16 %v719
    %v1128 = vunpack.c.h.b16 %v719
    %v1129 = vunpack.c.l.b16 %v720
    %v1130 = vunpack.c.h.b16 %v720
    %v1131 = vunpack.c.l.b16 %v721
    %v1132 = vunpack.c.h.b16 %v721
    %v1133 = vunpack.c.l.b16 %v722
    %v1134 = vunpack.c.h.b16 %v722
    %v1135 = vunpack.c.l.b16 %v723
    %v1136 = vunpack.c.h.b16 %v723
    %v1137 = vunpack.c.l.b16 %v724
    %v1138 = vunpack.c.h.b16 %v724
    %v1139 = vunpack.c.l.b16 %v725
    %v1140 = vunpack.c.h.b16 %v725
    %v1141 = vunpack.c.l.b16 %v726
    %v1142 = vunpack.c.h.b16 %v726
    %v1143 = vunpack.c.l.b16 %v727
    %v1144 = vunpack.c.h.b16 %v727
    %v1145 = vunpack.c.l.b16 %v728
    %v1146 = vunpack.c.h.b16 %v728
    %v1147 = vunpack.c.l.b16 %v729
    %v1148 = vunpack.c.h.b16 %v729
    %v1149 = vunpack.c.l.b16 %v730
    %v1150 = vunpack.c.h.b16 %v730
    %v1151 = vunpack.c.l.b16 %v731
    %v1152 = vunpack.c.h.b16 %v731
    %v1153 = vunpack.c.l.b16 %v732
    %v1154 = vunpack.c.h.b16 %v732
    %v1155 = vunpack.c.l.b16 %v733
    %v1156 = vunpack.c.h.b16 %v733
    %v1157 = vunpack.c.l.b16 %v734
    %v1158 = vunpack.c.h.b16 %v734
    %v1159 = vunpack.c.l.b16 %v735
    %v1160 = vunpack.c.h.b16 %v735
    %v1161 = vpack.c.b16 %v1101, %v1097
    %v1162 = vpack.c.b16 %v1102, %v1098
    %v1163 = vpack.c.b16 %v1103, %v1099
    %v1164 = vpack.c.b16 %v1104, %v1100
    %v1165 = vpack.c.b16 %v1109, %v1105
    %v1166 = vpack.c.b16 %v1110, %v1106
    %v1167 = vpack.c.b16 %v1111, %v1107
    %v1168 = vpack.c.b16 %v1112, %v1108
    %v1169 = vpack.c.b16 %v1117, %v1113
    %v1170 = vpack.c.b16 %v1118, %v1114
    %v1171 = vpack.c.b16 %v1119, %v1115
    %v1172 = vpack.c.b16 %v1120, %v1116
    %v1173 = vpack.c.b16 %v1125, %v1121
    %v1174 = vpack.c.b16 %v1126, %v1122
    %v1175 = vpack.c.b16 %v1127, %v1123
    %v1176 = vpack.c.b16 %v1128, %v1124
    %v1177 = vpack.c.b16 %v1133, %v1129
    %v1178 = vpack.c.b16 %v1134, %v1130
    %v1179 = vpack.c.b16 %v1135, %v1131
    %v1180 = vpack.c.b16 %v1136, %v1132
    %v1181 = vpack.c.b16 %v1141, %v1137
    %v1182 = vpack.c.b16 %v1142, %v1138
    %v1183 = vpack.c.b16 %v1143, %v1139
    %v1184 = vpack.c.b16 %v1144, %v1140
    %v1185 = vpack.c.b16 %v1149, %v1145
    %v1186 = vpack.c.b16 %v1150, %v1146
    %v1187 = vpack.c.b16 %v1151, %v1147
    %v1188 = vpack.c.b16 %v1152, %v1148
    %v1189 = vpack.c.b16 %v1157, %v1153
    %v1190 = vpack.c.b16 %v1158, %v1154
    %v1191 = vpack.c.b16 %v1159, %v1155
    %v1192 = vpack.c.b16 %v1160, %v1156
    %1225 = vmatprep.subr.bf16.mxu0 %v1162
    %1226 = vmatpush1.bf16.msra.mxu0 %v1161
    %1227 = vmatprep.subr.bf16.mxu0 %v1166
    %1228 = vmatpush1.bf16.msra.mxu0 %v1165
    %1229 = vmatprep.subr.bf16.mxu0 %v1170
    %1230 = vmatpush1.bf16.msra.mxu0 %v1169
    %1231 = vmatprep.subr.bf16.mxu0 %v1174
    %1232 = vmatpush1.bf16.msra.mxu0 %v1173
    %1233 = vmatprep.subr.bf16.mxu0 %v1178
    %1234 = vmatpush1.bf16.msra.mxu0 %v1177
    %1235 = vmatprep.subr.bf16.mxu0 %v1182
    %1236 = vmatpush1.bf16.msra.mxu0 %v1181
    %1237 = vmatprep.subr.bf16.mxu0 %v1186
    %1238 = vmatpush1.bf16.msra.mxu0 %v1185
    %1239 = vmatprep.subr.bf16.mxu0 %v1190
    %1240 = vmatpush1.bf16.msra.mxu0 %v1189
    %1241 = vmatprep.subr.bf16.mxu0 0
    %1242 = vmatpush1.bf16.msra.mxu0 0
    %1243 = vmatprep.subr.bf16.mxu0 0
    %1244 = vmatpush1.bf16.msra.mxu0 0
    %1245 = vmatprep.subr.bf16.mxu0 0
    %1246 = vmatpush1.bf16.msra.mxu0 0
    %1247 = vmatprep.subr.bf16.mxu0 0
    %1248 = vmatpush1.bf16.msra.mxu0 0
    %1249 = vmatprep.subr.bf16.mxu0 0
    %1250 = vmatpush1.bf16.msra.mxu0 0
    %1251 = vmatprep.subr.bf16.mxu0 0
    %1252 = vmatpush1.bf16.msra.mxu0 0
    %1253 = vmatprep.subr.bf16.mxu0 0
    %1254 = vmatpush1.bf16.msra.mxu0 0
    %1255 = vmatprep.subr.bf16.mxu0 0
    %1256 = vmatpush1.bf16.msra.mxu0 0
    %1257 = vmatprep.mubr.bf16.mxu0 0
    %1258 = vmatmul.mubr.bf16.gmra.mrb[0].mxu0 %v1043
    %v1259 = vpop.f32.mrb[0].mxu0
    %v1260 = vadd.f32 %v1048, %v1259
    %v1261 = vpop.f32.mrb[0].mxu0
    %v1262 = vadd.f32 %v1052, %v1261
    %v1263 = vpop.f32.mrb[0].mxu0
    %v1264 = vpop.f32.mrb[0].mxu0
    %1265 = vdwg.mxu0
    %1266 = vmatprep.subr.bf16.mxu0 %v1164
    %1267 = vmatpush1.bf16.msra.mxu0 %v1163
    %1268 = vmatprep.subr.bf16.mxu0 %v1168
    %1269 = vmatpush1.bf16.msra.mxu0 %v1167
    %1270 = vmatprep.subr.bf16.mxu0 %v1172
    %1271 = vmatpush1.bf16.msra.mxu0 %v1171
    %1272 = vmatprep.subr.bf16.mxu0 %v1176
    %1273 = vmatpush1.bf16.msra.mxu0 %v1175
    %1274 = vmatprep.subr.bf16.mxu0 %v1180
    %1275 = vmatpush1.bf16.msra.mxu0 %v1179
    %1276 = vmatprep.subr.bf16.mxu0 %v1184
    %1277 = vmatpush1.bf16.msra.mxu0 %v1183
    %1278 = vmatprep.subr.bf16.mxu0 %v1188
    %1279 = vmatpush1.bf16.msra.mxu0 %v1187
    %1280 = vmatprep.subr.bf16.mxu0 %v1192
    %1281 = vmatpush1.bf16.msra.mxu0 %v1191
    %1282 = vmatprep.subr.bf16.mxu0 0
    %1283 = vmatpush1.bf16.msra.mxu0 0
    %1284 = vmatprep.subr.bf16.mxu0 0
    %1285 = vmatpush1.bf16.msra.mxu0 0
    %1286 = vmatprep.subr.bf16.mxu0 0
    %1287 = vmatpush1.bf16.msra.mxu0 0
    %1288 = vmatprep.subr.bf16.mxu0 0
    %1289 = vmatpush1.bf16.msra.mxu0 0
    %1290 = vmatprep.subr.bf16.mxu0 0
    %1291 = vmatpush1.bf16.msra.mxu0 0
    %1292 = vmatprep.subr.bf16.mxu0 0
    %1293 = vmatpush1.bf16.msra.mxu0 0
    %1294 = vmatprep.subr.bf16.mxu0 0
    %1295 = vmatpush1.bf16.msra.mxu0 0
    %1296 = vmatprep.subr.bf16.mxu0 0
    %1297 = vmatpush1.bf16.msra.mxu0 0
    %1298 = vmatprep.mubr.bf16.mxu0 0
    %1299 = vmatmul.mubr.bf16.gmra.mrb[0].mxu0 %v1043
    %v1300 = vpop.f32.mrb[0].mxu0
    %v1301 = vadd.f32 %v1056, %v1300
    %v1302 = vpop.f32.mrb[0].mxu0
    %v1303 = vadd.f32 %v1060, %v1302
    %v1304 = vpop.f32.mrb[0].mxu0
    %v1305 = vpop.f32.mrb[0].mxu0
    %1306 = vdwg.mxu0
    %v1339 = vunpack.c.l.b16 %v736
    %v1340 = vunpack.c.h.b16 %v736
    %v1341 = vunpack.c.l.b16 %v737
    %v1342 = vunpack.c.h.b16 %v737
    %v1343 = vunpack.c.l.b16 %v738
    %v1344 = vunpack.c.h.b16 %v738
    %v1345 = vunpack.c.l.b16 %v739
    %v1346 = vunpack.c.h.b16 %v739
    %v1347 = vunpack.c.l.b16 %v740
    %v1348 = vunpack.c.h.b16 %v740
    %v1349 = vunpack.c.l.b16 %v741
    %v1350 = vunpack.c.h.b16 %v741
    %v1351 = vunpack.c.l.b16 %v742
    %v1352 = vunpack.c.h.b16 %v742
    %v1353 = vunpack.c.l.b16 %v743
    %v1354 = vunpack.c.h.b16 %v743
    %v1355 = vunpack.c.l.b16 %v744
    %v1356 = vunpack.c.h.b16 %v744
    %v1357 = vunpack.c.l.b16 %v745
    %v1358 = vunpack.c.h.b16 %v745
    %v1359 = vunpack.c.l.b16 %v746
    %v1360 = vunpack.c.h.b16 %v746
    %v1361 = vunpack.c.l.b16 %v747
    %v1362 = vunpack.c.h.b16 %v747
    %v1363 = vunpack.c.l.b16 %v748
    %v1364 = vunpack.c.h.b16 %v748
    %v1365 = vunpack.c.l.b16 %v749
    %v1366 = vunpack.c.h.b16 %v749
    %v1367 = vunpack.c.l.b16 %v750
    %v1368 = vunpack.c.h.b16 %v750
    %v1369 = vunpack.c.l.b16 %v751
    %v1370 = vunpack.c.h.b16 %v751
    %v1371 = vunpack.c.l.b16 %v752
    %v1372 = vunpack.c.h.b16 %v752
    %v1373 = vunpack.c.l.b16 %v753
    %v1374 = vunpack.c.h.b16 %v753
    %v1375 = vunpack.c.l.b16 %v754
    %v1376 = vunpack.c.h.b16 %v754
    %v1377 = vunpack.c.l.b16 %v755
    %v1378 = vunpack.c.h.b16 %v755
    %v1379 = vunpack.c.l.b16 %v756
    %v1380 = vunpack.c.h.b16 %v756
    %v1381 = vunpack.c.l.b16 %v757
    %v1382 = vunpack.c.h.b16 %v757
    %v1383 = vunpack.c.l.b16 %v758
    %v1384 = vunpack.c.h.b16 %v758
    %v1385 = vunpack.c.l.b16 %v759
    %v1386 = vunpack.c.h.b16 %v759
    %v1387 = vunpack.c.l.b16 %v760
    %v1388 = vunpack.c.h.b16 %v760
    %v1389 = vunpack.c.l.b16 %v761
    %v1390 = vunpack.c.h.b16 %v761
    %v1391 = vunpack.c.l.b16 %v762
    %v1392 = vunpack.c.h.b16 %v762
    %v1393 = vunpack.c.l.b16 %v763
    %v1394 = vunpack.c.h.b16 %v763
    %v1395 = vunpack.c.l.b16 %v764
    %v1396 = vunpack.c.h.b16 %v764
    %v1397 = vunpack.c.l.b16 %v765
    %v1398 = vunpack.c.h.b16 %v765
    %v1399 = vunpack.c.l.b16 %v766
    %v1400 = vunpack.c.h.b16 %v766
    %v1401 = vunpack.c.l.b16 %v767
    %v1402 = vunpack.c.h.b16 %v767
    %v1403 = vpack.c.b16 %v1343, %v1339
    %v1404 = vpack.c.b16 %v1344, %v1340
    %v1405 = vpack.c.b16 %v1345, %v1341
    %v1406 = vpack.c.b16 %v1346, %v1342
    %v1407 = vpack.c.b16 %v1351, %v1347
    %v1408 = vpack.c.b16 %v1352, %v1348
    %v1409 = vpack.c.b16 %v1353, %v1349
    %v1410 = vpack.c.b16 %v1354, %v1350
    %v1411 = vpack.c.b16 %v1359, %v1355
    %v1412 = vpack.c.b16 %v1360, %v1356
    %v1413 = vpack.c.b16 %v1361, %v1357
    %v1414 = vpack.c.b16 %v1362, %v1358
    %v1415 = vpack.c.b16 %v1367, %v1363
    %v1416 = vpack.c.b16 %v1368, %v1364
    %v1417 = vpack.c.b16 %v1369, %v1365
    %v1418 = vpack.c.b16 %v1370, %v1366
    %v1419 = vpack.c.b16 %v1375, %v1371
    %v1420 = vpack.c.b16 %v1376, %v1372
    %v1421 = vpack.c.b16 %v1377, %v1373
    %v1422 = vpack.c.b16 %v1378, %v1374
    %v1423 = vpack.c.b16 %v1383, %v1379
    %v1424 = vpack.c.b16 %v1384, %v1380
    %v1425 = vpack.c.b16 %v1385, %v1381
    %v1426 = vpack.c.b16 %v1386, %v1382
    %v1427 = vpack.c.b16 %v1391, %v1387
    %v1428 = vpack.c.b16 %v1392, %v1388
    %v1429 = vpack.c.b16 %v1393, %v1389
    %v1430 = vpack.c.b16 %v1394, %v1390
    %v1431 = vpack.c.b16 %v1399, %v1395
    %v1432 = vpack.c.b16 %v1400, %v1396
    %v1433 = vpack.c.b16 %v1401, %v1397
    %v1434 = vpack.c.b16 %v1402, %v1398
    %1467 = vmatprep.subr.bf16.mxu0 %v1404
    %1468 = vmatpush1.bf16.msra.mxu0 %v1403
    %1469 = vmatprep.subr.bf16.mxu0 %v1408
    %1470 = vmatpush1.bf16.msra.mxu0 %v1407
    %1471 = vmatprep.subr.bf16.mxu0 %v1412
    %1472 = vmatpush1.bf16.msra.mxu0 %v1411
    %1473 = vmatprep.subr.bf16.mxu0 %v1416
    %1474 = vmatpush1.bf16.msra.mxu0 %v1415
    %1475 = vmatprep.subr.bf16.mxu0 %v1420
    %1476 = vmatpush1.bf16.msra.mxu0 %v1419
    %1477 = vmatprep.subr.bf16.mxu0 %v1424
    %1478 = vmatpush1.bf16.msra.mxu0 %v1423
    %1479 = vmatprep.subr.bf16.mxu0 %v1428
    %1480 = vmatpush1.bf16.msra.mxu0 %v1427
    %1481 = vmatprep.subr.bf16.mxu0 %v1432
    %1482 = vmatpush1.bf16.msra.mxu0 %v1431
    %1483 = vmatprep.subr.bf16.mxu0 0
    %1484 = vmatpush1.bf16.msra.mxu0 0
    %1485 = vmatprep.subr.bf16.mxu0 0
    %1486 = vmatpush1.bf16.msra.mxu0 0
    %1487 = vmatprep.subr.bf16.mxu0 0
    %1488 = vmatpush1.bf16.msra.mxu0 0
    %1489 = vmatprep.subr.bf16.mxu0 0
    %1490 = vmatpush1.bf16.msra.mxu0 0
    %1491 = vmatprep.subr.bf16.mxu0 0
    %1492 = vmatpush1.bf16.msra.mxu0 0
    %1493 = vmatprep.subr.bf16.mxu0 0
    %1494 = vmatpush1.bf16.msra.mxu0 0
    %1495 = vmatprep.subr.bf16.mxu0 0
    %1496 = vmatpush1.bf16.msra.mxu0 0
    %1497 = vmatprep.subr.bf16.mxu0 0
    %1498 = vmatpush1.bf16.msra.mxu0 0
    %1499 = vmatprep.mubr.bf16.mxu0 0
    %1500 = vmatmul.mubr.bf16.gmra.mrb[0].mxu0 0
    %v1501 = vpop.f32.mrb[0].mxu0
    %v1502 = vadd.f32 0.0, %v1501
    %v1503 = vpop.f32.mrb[0].mxu0
    %v1504 = vadd.f32 0.0, %v1503
    %v1505 = vpop.f32.mrb[0].mxu0
    %v1506 = vpop.f32.mrb[0].mxu0
    %1507 = vdwg.mxu0
    %1508 = vmatprep.subr.bf16.mxu0 %v1406
    %1509 = vmatpush1.bf16.msra.mxu0 %v1405
    %1510 = vmatprep.subr.bf16.mxu0 %v1410
    %1511 = vmatpush1.bf16.msra.mxu0 %v1409
    %1512 = vmatprep.subr.bf16.mxu0 %v1414
    %1513 = vmatpush1.bf16.msra.mxu0 %v1413
    %1514 = vmatprep.subr.bf16.mxu0 %v1418
    %1515 = vmatpush1.bf16.msra.mxu0 %v1417
    %1516 = vmatprep.subr.bf16.mxu0 %v1422
    %1517 = vmatpush1.bf16.msra.mxu0 %v1421
    %1518 = vmatprep.subr.bf16.mxu0 %v1426
    %1519 = vmatpush1.bf16.msra.mxu0 %v1425
    %1520 = vmatprep.subr.bf16.mxu0 %v1430
    %1521 = vmatpush1.bf16.msra.mxu0 %v1429
    %1522 = vmatprep.subr.bf16.mxu0 %v1434
    %1523 = vmatpush1.bf16.msra.mxu0 %v1433
    %1524 = vmatprep.subr.bf16.mxu0 0
    %1525 = vmatpush1.bf16.msra.mxu0 0
    %1526 = vmatprep.subr.bf16.mxu0 0
    %1527 = vmatpush1.bf16.msra.mxu0 0
    %1528 = vmatprep.subr.bf16.mxu0 0
    %1529 = vmatpush1.bf16.msra.mxu0 0
    %1530 = vmatprep.subr.bf16.mxu0 0
    %1531 = vmatpush1.bf16.msra.mxu0 0
    %1532 = vmatprep.subr.bf16.mxu0 0
    %1533 = vmatpush1.bf16.msra.mxu0 0
    %1534 = vmatprep.subr.bf16.mxu0 0
    %1535 = vmatpush1.bf16.msra.mxu0 0
    %1536 = vmatprep.subr.bf16.mxu0 0
    %1537 = vmatpush1.bf16.msra.mxu0 0
    %1538 = vmatprep.subr.bf16.mxu0 0
    %1539 = vmatpush1.bf16.msra.mxu0 0
    %1540 = vmatprep.mubr.bf16.mxu0 0
    %1541 = vmatmul.mubr.bf16.gmra.mrb[0].mxu0 0
    %v1542 = vpop.f32.mrb[0].mxu0
    %v1543 = vadd.f32 0.0, %v1542
    %v1544 = vpop.f32.mrb[0].mxu0
    %v1545 = vadd.f32 0.0, %v1544
    %v1546 = vpop.f32.mrb[0].mxu0
    %v1547 = vpop.f32.mrb[0].mxu0
    %1548 = vdwg.mxu0
    %v1549 = vadd.f32 %v1260, %v1502
    %v1550 = vadd.f32 %v1262, %v1504
    %v1551 = vadd.f32 %v1301, %v1543
    %v1552 = vadd.f32 %v1303, %v1545
    %v1553 = vxor.u32 %v1549, 2147483648
    %v1554 = vmul.f32 %v1553, 1.442695
    %v1555 = vpow.pop %v1554
    %v1556 = vadd.f32 %v1555, 1.0
    %v1557 = vrcp.pop %v1556
    %v1558 = vmul.f32 1.0, %v1557
    %v1559 = vxor.u32 %v1550, 2147483648
    %v1560 = vmul.f32 %v1559, 1.442695
    %v1561 = vpow.pop %v1560
    %v1562 = vadd.f32 %v1561, 1.0
    %v1563 = vrcp.pop %v1562
    %v1564 = vmul.f32 1.0, %v1563
    %v1565 = vtanh.pop %v1551
    %v1566 = vxor.u32 %v1552, 2147483648
    %v1567 = vmul.f32 %v1566, 1.442695
    %v1568 = vpow.pop %v1567
    %v1569 = vadd.f32 %v1568, 1.0
    %v1570 = vrcp.pop %v1569
    %v1571 = vmul.f32 1.0, %v1570
    %v1572 = vmul.f32 %v1564, 0.0
    %v1573 = vmul.f32 %v1558, %v1565
    %v1574 = vadd.f32 %v1572, %v1573
    %v1575 = vtanh.pop %v1574
    %v1576 = vmul.f32 %v1571, %v1575
    %1577 = vst [vmem:[#allocation3 + $0x8] sm:$0xff] %v1576
    %v1578 = vld [vmem:[#allocation2 + $0x20] sm:$0xff]
    %v1579 = vld [vmem:[#allocation2 + $0x28] sm:$0xff]
    %v1580 = vld [vmem:[#allocation2 + $0x30] sm:$0xff]
    %v1581 = vld [vmem:[#allocation2 + $0x38] sm:$0xff]
    %1582 = vmatprep.subr.bf16.mxu0 %v870
    %1583 = vmatpush1.bf16.msra.mxu0 %v869
    %1584 = vmatprep.subr.bf16.mxu0 %v874
    %1585 = vmatpush1.bf16.msra.mxu0 %v873
    %1586 = vmatprep.subr.bf16.mxu0 %v878
    %1587 = vmatpush1.bf16.msra.mxu0 %v877
    %1588 = vmatprep.subr.bf16.mxu0 %v882
    %1589 = vmatpush1.bf16.msra.mxu0 %v881
    %1590 = vmatprep.subr.bf16.mxu0 %v886
    %1591 = vmatpush1.bf16.msra.mxu0 %v885
    %1592 = vmatprep.subr.bf16.mxu0 %v890
    %1593 = vmatpush1.bf16.msra.mxu0 %v889
    %1594 = vmatprep.subr.bf16.mxu0 %v894
    %1595 = vmatpush1.bf16.msra.mxu0 %v893
    %1596 = vmatprep.subr.bf16.mxu0 %v898
    %1597 = vmatpush1.bf16.msra.mxu0 %v897
    %1598 = vmatprep.subr.bf16.mxu0 0
    %1599 = vmatpush1.bf16.msra.mxu0 0
    %1600 = vmatprep.subr.bf16.mxu0 0
    %1601 = vmatpush1.bf16.msra.mxu0 0
    %1602 = vmatprep.subr.bf16.mxu0 0
    %1603 = vmatpush1.bf16.msra.mxu0 0
    %1604 = vmatprep.subr.bf16.mxu0 0
    %1605 = vmatpush1.bf16.msra.mxu0 0
    %1606 = vmatprep.subr.bf16.mxu0 0
    %1607 = vmatpush1.bf16.msra.mxu0 0
    %1608 = vmatprep.subr.bf16.mxu0 0
    %1609 = vmatpush1.bf16.msra.mxu0 0
    %1610 = vmatprep.subr.bf16.mxu0 0
    %1611 = vmatpush1.bf16.msra.mxu0 0
    %1612 = vmatprep.subr.bf16.mxu0 0
    %1613 = vmatpush1.bf16.msra.mxu0 0
    %1614 = vmatprep.mubr.bf16.mxu0 0
    %1615 = vmatmul.mubr.bf16.gmra.mrb[0].mxu0 %v1043
    %v1616 = vpop.f32.mrb[0].mxu0
    %v1617 = vadd.f32 0.0, %v1616
    %v1618 = vpop.f32.mrb[0].mxu0
    %v1619 = vadd.f32 0.0, %v1618
    %v1620 = vpop.f32.mrb[0].mxu0
    %v1621 = vpop.f32.mrb[0].mxu0
    %1622 = vdwg.mxu0
    %1623 = vmatprep.subr.bf16.mxu0 %v872
    %1624 = vmatpush1.bf16.msra.mxu0 %v871
    %1625 = vmatprep.subr.bf16.mxu0 %v876
    %1626 = vmatpush1.bf16.msra.mxu0 %v875
    %1627 = vmatprep.subr.bf16.mxu0 %v880
    %1628 = vmatpush1.bf16.msra.mxu0 %v879
    %1629 = vmatprep.subr.bf16.mxu0 %v884
    %1630 = vmatpush1.bf16.msra.mxu0 %v883
    %1631 = vmatprep.subr.bf16.mxu0 %v888
    %1632 = vmatpush1.bf16.msra.mxu0 %v887
    %1633 = vmatprep.subr.bf16.mxu0 %v892
    %1634 = vmatpush1.bf16.msra.mxu0 %v891
    %1635 = vmatprep.subr.bf16.mxu0 %v896
    %1636 = vmatpush1.bf16.msra.mxu0 %v895
    %1637 = vmatprep.subr.bf16.mxu0 %v900
    %1638 = vmatpush1.bf16.msra.mxu0 %v899
    %1639 = vmatprep.subr.bf16.mxu0 0
    %1640 = vmatpush1.bf16.msra.mxu0 0
    %1641 = vmatprep.subr.bf16.mxu0 0
    %1642 = vmatpush1.bf16.msra.mxu0 0
    %1643 = vmatprep.subr.bf16.mxu0 0
    %1644 = vmatpush1.bf16.msra.mxu0 0
    %1645 = vmatprep.subr.bf16.mxu0 0
    %1646 = vmatpush1.bf16.msra.mxu0 0
    %1647 = vmatprep.subr.bf16.mxu0 0
    %1648 = vmatpush1.bf16.msra.mxu0 0
    %1649 = vmatprep.subr.bf16.mxu0 0
    %1650 = vmatpush1.bf16.msra.mxu0 0
    %1651 = vmatprep.subr.bf16.mxu0 0
    %1652 = vmatpush1.bf16.msra.mxu0 0
    %1653 = vmatprep.subr.bf16.mxu0 0
    %1654 = vmatpush1.bf16.msra.mxu0 0
    %1655 = vmatprep.mubr.bf16.mxu0 0
    %1656 = vmatmul.mubr.bf16.gmra.mrb[0].mxu0 %v1043
    %v1657 = vpop.f32.mrb[0].mxu0
    %v1658 = vadd.f32 0.0, %v1657
    %v1659 = vpop.f32.mrb[0].mxu0
    %v1660 = vadd.f32 0.0, %v1659
    %v1661 = vpop.f32.mrb[0].mxu0
    %v1662 = vpop.f32.mrb[0].mxu0
    %1663 = vdwg.mxu0
    %v1664 = vadd.f32 %v1578, %v1617
    %v1665 = vadd.f32 %v1579, %v1619
    %v1666 = vadd.f32 %v1580, %v1658
    %v1667 = vadd.f32 %v1581, %v1660
    %v1668 = vxor.u32 %v1664, 2147483648
    %v1669 = vmul.f32 %v1668, 1.442695
    %v1670 = vpow.pop %v1669
    %v1671 = vadd.f32 %v1670, 1.0
    %v1672 = vrcp.pop %v1671
    %v1673 = vmul.f32 1.0, %v1672
    %v1674 = vxor.u32 %v1665, 2147483648
    %v1675 = vmul.f32 %v1674, 1.442695
    %v1676 = vpow.pop %v1675
    %v1677 = vadd.f32 %v1676, 1.0
    %v1678 = vrcp.pop %v1677
    %v1679 = vmul.f32 1.0, %v1678
    %v1680 = vtanh.pop %v1666
    %v1681 = vxor.u32 %v1667, 2147483648
    %v1682 = vmul.f32 %v1681, 1.442695
    %v1683 = vpow.pop %v1682
    %v1684 = vadd.f32 %v1683, 1.0
    %v1685 = vrcp.pop %v1684
    %v1686 = vmul.f32 1.0, %v1685
    %v1687 = vmul.f32 %v1679, %v1040
    %v1688 = vmul.f32 %v1673, %v1680
    %v1689 = vadd.f32 %v1687, %v1688
    %v1690 = vtanh.pop %v1689
    %v1691 = vmul.f32 %v1686, %v1690
    %v1692 = vpack.c.bf16 %v1691, %v1691
    %1693 = vmatprep.subr.bf16.mxu0 %v1162
    %1694 = vmatpush1.bf16.msra.mxu0 %v1161
    %1695 = vmatprep.subr.bf16.mxu0 %v1166
    %1696 = vmatpush1.bf16.msra.mxu0 %v1165
    %1697 = vmatprep.subr.bf16.mxu0 %v1170
    %1698 = vmatpush1.bf16.msra.mxu0 %v1169
    %1699 = vmatprep.subr.bf16.mxu0 %v1174
    %1700 = vmatpush1.bf16.msra.mxu0 %v1173
    %1701 = vmatprep.subr.bf16.mxu0 %v1178
    %1702 = vmatpush1.bf16.msra.mxu0 %v1177
    %1703 = vmatprep.subr.bf16.mxu0 %v1182
    %1704 = vmatpush1.bf16.msra.mxu0 %v1181
    %1705 = vmatprep.subr.bf16.mxu0 %v1186
    %1706 = vmatpush1.bf16.msra.mxu0 %v1185
    %1707 = vmatprep.subr.bf16.mxu0 %v1190
    %1708 = vmatpush1.bf16.msra.mxu0 %v1189
    %1709 = vmatprep.subr.bf16.mxu0 0
    %1710 = vmatpush1.bf16.msra.mxu0 0
    %1711 = vmatprep.subr.bf16.mxu0 0
    %1712 = vmatpush1.bf16.msra.mxu0 0
    %1713 = vmatprep.subr.bf16.mxu0 0
    %1714 = vmatpush1.bf16.msra.mxu0 0
    %1715 = vmatprep.subr.bf16.mxu0 0
    %1716 = vmatpush1.bf16.msra.mxu0 0
    %1717 = vmatprep.subr.bf16.mxu0 0
    %1718 = vmatpush1.bf16.msra.mxu0 0
    %1719 = vmatprep.subr.bf16.mxu0 0
    %1720 = vmatpush1.bf16.msra.mxu0 0
    %1721 = vmatprep.subr.bf16.mxu0 0
    %1722 = vmatpush1.bf16.msra.mxu0 0
    %1723 = vmatprep.subr.bf16.mxu0 0
    %1724 = vmatpush1.bf16.msra.mxu0 0
    %1725 = vmatprep.mubr.bf16.mxu0 0
    %1726 = vmatmul.mubr.bf16.gmra.mrb[0].mxu0 %v1692
    %v1727 = vpop.f32.mrb[0].mxu0
    %v1728 = vadd.f32 %v1048, %v1727
    %v1729 = vpop.f32.mrb[0].mxu0
    %v1730 = vadd.f32 %v1052, %v1729
    %v1731 = vpop.f32.mrb[0].mxu0
    %v1732 = vpop.f32.mrb[0].mxu0
    %1733 = vdwg.mxu0
    %1734 = vmatprep.subr.bf16.mxu0 %v1164
    %1735 = vmatpush1.bf16.msra.mxu0 %v1163
    %1736 = vmatprep.subr.bf16.mxu0 %v1168
    %1737 = vmatpush1.bf16.msra.mxu0 %v1167
    %1738 = vmatprep.subr.bf16.mxu0 %v1172
    %1739 = vmatpush1.bf16.msra.mxu0 %v1171
    %1740 = vmatprep.subr.bf16.mxu0 %v1176
    %1741 = vmatpush1.bf16.msra.mxu0 %v1175
    %1742 = vmatprep.subr.bf16.mxu0 %v1180
    %1743 = vmatpush1.bf16.msra.mxu0 %v1179
    %1744 = vmatprep.subr.bf16.mxu0 %v1184
    %1745 = vmatpush1.bf16.msra.mxu0 %v1183
    %1746 = vmatprep.subr.bf16.mxu0 %v1188
    %1747 = vmatpush1.bf16.msra.mxu0 %v1187
    %1748 = vmatprep.subr.bf16.mxu0 %v1192
    %1749 = vmatpush1.bf16.msra.mxu0 %v1191
    %1750 = vmatprep.subr.bf16.mxu0 0
    %1751 = vmatpush1.bf16.msra.mxu0 0
    %1752 = vmatprep.subr.bf16.mxu0 0
    %1753 = vmatpush1.bf16.msra.mxu0 0
    %1754 = vmatprep.subr.bf16.mxu0 0
    %1755 = vmatpush1.bf16.msra.mxu0 0
    %1756 = vmatprep.subr.bf16.mxu0 0
    %1757 = vmatpush1.bf16.msra.mxu0 0
    %1758 = vmatprep.subr.bf16.mxu0 0
    %1759 = vmatpush1.bf16.msra.mxu0 0
    %1760 = vmatprep.subr.bf16.mxu0 0
    %1761 = vmatpush1.bf16.msra.mxu0 0
    %1762 = vmatprep.subr.bf16.mxu0 0
    %1763 = vmatpush1.bf16.msra.mxu0 0
    %1764 = vmatprep.subr.bf16.mxu0 0
    %1765 = vmatpush1.bf16.msra.mxu0 0
    %1766 = vmatprep.mubr.bf16.mxu0 0
    %1767 = vmatmul.mubr.bf16.gmra.mrb[0].mxu0 %v1692
    %v1768 = vpop.f32.mrb[0].mxu0
    %v1769 = vadd.f32 %v1056, %v1768
    %v1770 = vpop.f32.mrb[0].mxu0
    %v1771 = vadd.f32 %v1060, %v1770
    %v1772 = vpop.f32.mrb[0].mxu0
    %v1773 = vpop.f32.mrb[0].mxu0
    %1774 = vdwg.mxu0
    %v1775 = vpack.c.bf16 %v1576, %v1576
    %1776 = vmatprep.subr.bf16.mxu0 %v1404
    %1777 = vmatpush1.bf16.msra.mxu0 %v1403
    %1778 = vmatprep.subr.bf16.mxu0 %v1408
    %1779 = vmatpush1.bf16.msra.mxu0 %v1407
    %1780 = vmatprep.subr.bf16.mxu0 %v1412
    %1781 = vmatpush1.bf16.msra.mxu0 %v1411
    %1782 = vmatprep.subr.bf16.mxu0 %v1416
    %1783 = vmatpush1.bf16.msra.mxu0 %v1415
    %1784 = vmatprep.subr.bf16.mxu0 %v1420
    %1785 = vmatpush1.bf16.msra.mxu0 %v1419
    %1786 = vmatprep.subr.bf16.mxu0 %v1424
    %1787 = vmatpush1.bf16.msra.mxu0 %v1423
    %1788 = vmatprep.subr.bf16.mxu0 %v1428
    %1789 = vmatpush1.bf16.msra.mxu0 %v1427
    %1790 = vmatprep.subr.bf16.mxu0 %v1432
    %1791 = vmatpush1.bf16.msra.mxu0 %v1431
    %1792 = vmatprep.subr.bf16.mxu0 0
    %1793 = vmatpush1.bf16.msra.mxu0 0
    %1794 = vmatprep.subr.bf16.mxu0 0
    %1795 = vmatpush1.bf16.msra.mxu0 0
    %1796 = vmatprep.subr.bf16.mxu0 0
    %1797 = vmatpush1.bf16.msra.mxu0 0
    %1798 = vmatprep.subr.bf16.mxu0 0
    %1799 = vmatpush1.bf16.msra.mxu0 0
    %1800 = vmatprep.subr.bf16.mxu0 0
    %1801 = vmatpush1.bf16.msra.mxu0 0
    %1802 = vmatprep.subr.bf16.mxu0 0
    %1803 = vmatpush1.bf16.msra.mxu0 0
    %1804 = vmatprep.subr.bf16.mxu0 0
    %1805 = vmatpush1.bf16.msra.mxu0 0
    %1806 = vmatprep.subr.bf16.mxu0 0
    %1807 = vmatpush1.bf16.msra.mxu0 0
    %1808 = vmatprep.mubr.bf16.mxu0 0
    %1809 = vmatmul.mubr.bf16.gmra.mrb[0].mxu0 %v1775
    %v1810 = vpop.f32.mrb[0].mxu0
    %v1811 = vadd.f32 0.0, %v1810
    %v1812 = vpop.f32.mrb[0].mxu0
    %v1813 = vadd.f32 0.0, %v1812
    %v1814 = vpop.f32.mrb[0].mxu0
    %v1815 = vpop.f32.mrb[0].mxu0
    %1816 = vdwg.mxu0
    %1817 = vmatprep.subr.bf16.mxu0 %v1406
    %1818 = vmatpush1.bf16.msra.mxu0 %v1405
    %1819 = vmatprep.subr.bf16.mxu0 %v1410
    %1820 = vmatpush1.bf16.msra.mxu0 %v1409
    %1821 = vmatprep.subr.bf16.mxu0 %v1414
    %1822 = vmatpush1.bf16.msra.mxu0 %v1413
    %1823 = vmatprep.subr.bf16.mxu0 %v1418
    %1824 = vmatpush1.bf16.msra.mxu0 %v1417
    %1825 = vmatprep.subr.bf16.mxu0 %v1422
    %1826 = vmatpush1.bf16.msra.mxu0 %v1421
    %1827 = vmatprep.subr.bf16.mxu0 %v1426
    %1828 = vmatpush1.bf16.msra.mxu0 %v1425
    %1829 = vmatprep.subr.bf16.mxu0 %v1430
    %1830 = vmatpush1.bf16.msra.mxu0 %v1429
    %1831 = vmatprep.subr.bf16.mxu0 %v1434
    %1832 = vmatpush1.bf16.msra.mxu0 %v1433
    %1833 = vmatprep.subr.bf16.mxu0 0
    %1834 = vmatpush1.bf16.msra.mxu0 0
    %1835 = vmatprep.subr.bf16.mxu0 0
    %1836 = vmatpush1.bf16.msra.mxu0 0
    %1837 = vmatprep.subr.bf16.mxu0 0
    %1838 = vmatpush1.bf16.msra.mxu0 0
    %1839 = vmatprep.subr.bf16.mxu0 0
    %1840 = vmatpush1.bf16.msra.mxu0 0
    %1841 = vmatprep.subr.bf16.mxu0 0
    %1842 = vmatpush1.bf16.msra.mxu0 0
    %1843 = vmatprep.subr.bf16.mxu0 0
    %1844 = vmatpush1.bf16.msra.mxu0 0
    %1845 = vmatprep.subr.bf16.mxu0 0
    %1846 = vmatpush1.bf16.msra.mxu0 0
    %1847 = vmatprep.subr.bf16.mxu0 0
    %1848 = vmatpush1.bf16.msra.mxu0 0
    %1849 = vmatprep.mubr.bf16.mxu0 0
    %1850 = vmatmul.mubr.bf16.gmra.mrb[0].mxu0 %v1775
    %v1851 = vpop.f32.mrb[0].mxu0
    %v1852 = vadd.f32 0.0, %v1851
    %v1853 = vpop.f32.mrb[0].mxu0
    %v1854 = vadd.f32 0.0, %v1853
    %v1855 = vpop.f32.mrb[0].mxu0
    %v1856 = vpop.f32.mrb[0].mxu0
    %1857 = vdwg.mxu0
    %v1858 = vadd.f32 %v1728, %v1811
    %v1859 = vadd.f32 %v1730, %v1813
    %v1860 = vadd.f32 %v1769, %v1852
    %v1861 = vadd.f32 %v1771, %v1854
    %v1862 = vxor.u32 %v1858, 2147483648
    %v1863 = vmul.f32 %v1862, 1.442695
    %v1864 = vpow.pop %v1863
    %v1865 = vadd.f32 %v1864, 1.0
    %v1866 = vrcp.pop %v1865
    %v1867 = vmul.f32 1.0, %v1866
    %v1868 = vxor.u32 %v1859, 2147483648
    %v1869 = vmul.f32 %v1868, 1.442695
    %v1870 = vpow.pop %v1869
    %v1871 = vadd.f32 %v1870, 1.0
    %v1872 = vrcp.pop %v1871
    %v1873 = vmul.f32 1.0, %v1872
    %v1874 = vtanh.pop %v1860
    %v1875 = vxor.u32 %v1861, 2147483648
    %v1876 = vmul.f32 %v1875, 1.442695
    %v1877 = vpow.pop %v1876
    %v1878 = vadd.f32 %v1877, 1.0
    %v1879 = vrcp.pop %v1878
    %v1880 = vmul.f32 1.0, %v1879
    %v1881 = vmul.f32 %v1873, %v1574
    %v1882 = vmul.f32 %v1867, %v1874
    %v1883 = vadd.f32 %v1881, %v1882
    %v1884 = vtanh.pop %v1883
    %v1885 = vmul.f32 %v1880, %v1884
    %1886 = vst [vmem:[#allocation3 + $0x10] sm:$0xff] %v1885
    %v1887 = vld [vmem:[#allocation2 + $0x40] sm:$0xff]
    %v1888 = vld [vmem:[#allocation2 + $0x48] sm:$0xff]
    %v1889 = vld [vmem:[#allocation2 + $0x50] sm:$0xff]
    %v1890 = vld [vmem:[#allocation2 + $0x58] sm:$0xff]
    %1891 = vmatprep.subr.bf16.mxu0 %v870
    %1892 = vmatpush1.bf16.msra.mxu0 %v869
    %1893 = vmatprep.subr.bf16.mxu0 %v874
    %1894 = vmatpush1.bf16.msra.mxu0 %v873
    %1895 = vmatprep.subr.bf16.mxu0 %v878
    %1896 = vmatpush1.bf16.msra.mxu0 %v877
    %1897 = vmatprep.subr.bf16.mxu0 %v882
    %1898 = vmatpush1.bf16.msra.mxu0 %v881
    %1899 = vmatprep.subr.bf16.mxu0 %v886
    %1900 = vmatpush1.bf16.msra.mxu0 %v885
    %1901 = vmatprep.subr.bf16.mxu0 %v890
    %1902 = vmatpush1.bf16.msra.mxu0 %v889
    %1903 = vmatprep.subr.bf16.mxu0 %v894
    %1904 = vmatpush1.bf16.msra.mxu0 %v893
    %1905 = vmatprep.subr.bf16.mxu0 %v898
    %1906 = vmatpush1.bf16.msra.mxu0 %v897
    %1907 = vmatprep.subr.bf16.mxu0 0
    %1908 = vmatpush1.bf16.msra.mxu0 0
    %1909 = vmatprep.subr.bf16.mxu0 0
    %1910 = vmatpush1.bf16.msra.mxu0 0
    %1911 = vmatprep.subr.bf16.mxu0 0
    %1912 = vmatpush1.bf16.msra.mxu0 0
    %1913 = vmatprep.subr.bf16.mxu0 0
    %1914 = vmatpush1.bf16.msra.mxu0 0
    %1915 = vmatprep.subr.bf16.mxu0 0
    %1916 = vmatpush1.bf16.msra.mxu0 0
    %1917 = vmatprep.subr.bf16.mxu0 0
    %1918 = vmatpush1.bf16.msra.mxu0 0
    %1919 = vmatprep.subr.bf16.mxu0 0
    %1920 = vmatpush1.bf16.msra.mxu0 0
    %1921 = vmatprep.subr.bf16.mxu0 0
    %1922 = vmatpush1.bf16.msra.mxu0 0
    %1923 = vmatprep.mubr.bf16.mxu0 0
    %1924 = vmatmul.mubr.bf16.gmra.mrb[0].mxu0 %v1692
    %v1925 = vpop.f32.mrb[0].mxu0
    %v1926 = vadd.f32 0.0, %v1925
    %v1927 = vpop.f32.mrb[0].mxu0
    %v1928 = vadd.f32 0.0, %v1927
    %v1929 = vpop.f32.mrb[0].mxu0
    %v1930 = vpop.f32.mrb[0].mxu0
    %1931 = vdwg.mxu0
    %1932 = vmatprep.subr.bf16.mxu0 %v872
    %1933 = vmatpush1.bf16.msra.mxu0 %v871
    %1934 = vmatprep.subr.bf16.mxu0 %v876
    %1935 = vmatpush1.bf16.msra.mxu0 %v875
    %1936 = vmatprep.subr.bf16.mxu0 %v880
    %1937 = vmatpush1.bf16.msra.mxu0 %v879
    %1938 = vmatprep.subr.bf16.mxu0 %v884
    %1939 = vmatpush1.bf16.msra.mxu0 %v883
    %1940 = vmatprep.subr.bf16.mxu0 %v888
    %1941 = vmatpush1.bf16.msra.mxu0 %v887
    %1942 = vmatprep.subr.bf16.mxu0 %v892
    %1943 = vmatpush1.bf16.msra.mxu0 %v891
    %1944 = vmatprep.subr.bf16.mxu0 %v896
    %1945 = vmatpush1.bf16.msra.mxu0 %v895
    %1946 = vmatprep.subr.bf16.mxu0 %v900
    %1947 = vmatpush1.bf16.msra.mxu0 %v899
    %1948 = vmatprep.subr.bf16.mxu0 0
    %1949 = vmatpush1.bf16.msra.mxu0 0
    %1950 = vmatprep.subr.bf16.mxu0 0
    %1951 = vmatpush1.bf16.msra.mxu0 0
    %1952 = vmatprep.subr.bf16.mxu0 0
    %1953 = vmatpush1.bf16.msra.mxu0 0
    %1954 = vmatprep.subr.bf16.mxu0 0
    %1955 = vmatpush1.bf16.msra.mxu0 0
    %1956 = vmatprep.subr.bf16.mxu0 0
    %1957 = vmatpush1.bf16.msra.mxu0 0
    %1958 = vmatprep.subr.bf16.mxu0 0
    %1959 = vmatpush1.bf16.msra.mxu0 0
    %1960 = vmatprep.subr.bf16.mxu0 0
    %1961 = vmatpush1.bf16.msra.mxu0 0
    %1962 = vmatprep.subr.bf16.mxu0 0
    %1963 = vmatpush1.bf16.msra.mxu0 0
    %1964 = vmatprep.mubr.bf16.mxu0 0
    %1965 = vmatmul.mubr.bf16.gmra.mrb[0].mxu0 %v1692
    %v1966 = vpop.f32.mrb[0].mxu0
    %v1967 = vadd.f32 0.0, %v1966
    %v1968 = vpop.f32.mrb[0].mxu0
    %v1969 = vadd.f32 0.0, %v1968
    %v1970 = vpop.f32.mrb[0].mxu0
    %v1971 = vpop.f32.mrb[0].mxu0
    %1972 = vdwg.mxu0
    %v1973 = vadd.f32 %v1887, %v1926
    %v1974 = vadd.f32 %v1888, %v1928
    %v1975 = vadd.f32 %v1889, %v1967
    %v1976 = vadd.f32 %v1890, %v1969
    %v1977 = vxor.u32 %v1973, 2147483648
    %v1978 = vmul.f32 %v1977, 1.442695
    %v1979 = vpow.pop %v1978
    %v1980 = vadd.f32 %v1979, 1.0
    %v1981 = vrcp.pop %v1980
    %v1982 = vmul.f32 1.0, %v1981
    %v1983 = vxor.u32 %v1974, 2147483648
    %v1984 = vmul.f32 %v1983, 1.442695
    %v1985 = vpow.pop %v1984
    %v1986 = vadd.f32 %v1985, 1.0
    %v1987 = vrcp.pop %v1986
    %v1988 = vmul.f32 1.0, %v1987
    %v1989 = vtanh.pop %v1975
    %v1990 = vxor.u32 %v1976, 2147483648
    %v1991 = vmul.f32 %v1990, 1.442695
    %v1992 = vpow.pop %v1991
    %v1993 = vadd.f32 %v1992, 1.0
    %v1994 = vrcp.pop %v1993
    %v1995 = vmul.f32 1.0, %v1994
    %v1996 = vmul.f32 %v1988, %v1689
    %v1997 = vmul.f32 %v1982, %v1989
    %v1998 = vadd.f32 %v1996, %v1997
    %v1999 = vtanh.pop %v1998
    %v2000 = vmul.f32 %v1995, %v1999
    %v2001 = vpack.c.bf16 %v2000, %v2000
    %2002 = vmatprep.subr.bf16.mxu0 %v1162
    %2003 = vmatpush1.bf16.msra.mxu0 %v1161
    %2004 = vmatprep.subr.bf16.mxu0 %v1166
    %2005 = vmatpush1.bf16.msra.mxu0 %v1165
    %2006 = vmatprep.subr.bf16.mxu0 %v1170
    %2007 = vmatpush1.bf16.msra.mxu0 %v1169
    %2008 = vmatprep.subr.bf16.mxu0 %v1174
    %2009 = vmatpush1.bf16.msra.mxu0 %v1173
    %2010 = vmatprep.subr.bf16.mxu0 %v1178
    %2011 = vmatpush1.bf16.msra.mxu0 %v1177
    %2012 = vmatprep.subr.bf16.mxu0 %v1182
    %2013 = vmatpush1.bf16.msra.mxu0 %v1181
    %2014 = vmatprep.subr.bf16.mxu0 %v1186
    %2015 = vmatpush1.bf16.msra.mxu0 %v1185
    %2016 = vmatprep.subr.bf16.mxu0 %v1190
    %2017 = vmatpush1.bf16.msra.mxu0 %v1189
    %2018 = vmatprep.subr.bf16.mxu0 0
    %2019 = vmatpush1.bf16.msra.mxu0 0
    %2020 = vmatprep.subr.bf16.mxu0 0
    %2021 = vmatpush1.bf16.msra.mxu0 0
    %2022 = vmatprep.subr.bf16.mxu0 0
    %2023 = vmatpush1.bf16.msra.mxu0 0
    %2024 = vmatprep.subr.bf16.mxu0 0
    %2025 = vmatpush1.bf16.msra.mxu0 0
    %2026 = vmatprep.subr.bf16.mxu0 0
    %2027 = vmatpush1.bf16.msra.mxu0 0
    %2028 = vmatprep.subr.bf16.mxu0 0
    %2029 = vmatpush1.bf16.msra.mxu0 0
    %2030 = vmatprep.subr.bf16.mxu0 0
    %2031 = vmatpush1.bf16.msra.mxu0 0
    %2032 = vmatprep.subr.bf16.mxu0 0
    %2033 = vmatpush1.bf16.msra.mxu0 0
    %2034 = vmatprep.mubr.bf16.mxu0 0
    %2035 = vmatmul.mubr.bf16.gmra.mrb[0].mxu0 %v2001
    %v2036 = vpop.f32.mrb[0].mxu0
    %v2037 = vadd.f32 %v1048, %v2036
    %v2038 = vpop.f32.mrb[0].mxu0
    %v2039 = vadd.f32 %v1052, %v2038
    %v2040 = vpop.f32.mrb[0].mxu0
    %v2041 = vpop.f32.mrb[0].mxu0
    %2042 = vdwg.mxu0
    %2043 = vmatprep.subr.bf16.mxu0 %v1164
    %2044 = vmatpush1.bf16.msra.mxu0 %v1163
    %2045 = vmatprep.subr.bf16.mxu0 %v1168
    %2046 = vmatpush1.bf16.msra.mxu0 %v1167
    %2047 = vmatprep.subr.bf16.mxu0 %v1172
    %2048 = vmatpush1.bf16.msra.mxu0 %v1171
    %2049 = vmatprep.subr.bf16.mxu0 %v1176
    %2050 = vmatpush1.bf16.msra.mxu0 %v1175
    %2051 = vmatprep.subr.bf16.mxu0 %v1180
    %2052 = vmatpush1.bf16.msra.mxu0 %v1179
    %2053 = vmatprep.subr.bf16.mxu0 %v1184
    %2054 = vmatpush1.bf16.msra.mxu0 %v1183
    %2055 = vmatprep.subr.bf16.mxu0 %v1188
    %2056 = vmatpush1.bf16.msra.mxu0 %v1187
    %2057 = vmatprep.subr.bf16.mxu0 %v1192
    %2058 = vmatpush1.bf16.msra.mxu0 %v1191
    %2059 = vmatprep.subr.bf16.mxu0 0
    %2060 = vmatpush1.bf16.msra.mxu0 0
    %2061 = vmatprep.subr.bf16.mxu0 0
    %2062 = vmatpush1.bf16.msra.mxu0 0
    %2063 = vmatprep.subr.bf16.mxu0 0
    %2064 = vmatpush1.bf16.msra.mxu0 0
    %2065 = vmatprep.subr.bf16.mxu0 0
    %2066 = vmatpush1.bf16.msra.mxu0 0
    %2067 = vmatprep.subr.bf16.mxu0 0
    %2068 = vmatpush1.bf16.msra.mxu0 0
    %2069 = vmatprep.subr.bf16.mxu0 0
    %2070 = vmatpush1.bf16.msra.mxu0 0
    %2071 = vmatprep.subr.bf16.mxu0 0
    %2072 = vmatpush1.bf16.msra.mxu0 0
    %2073 = vmatprep.subr.bf16.mxu0 0
    %2074 = vmatpush1.bf16.msra.mxu0 0
    %2075 = vmatprep.mubr.bf16.mxu0 0
    %2076 = vmatmul.mubr.bf16.gmra.mrb[0].mxu0 %v2001
    %v2077 = vpop.f32.mrb[0].mxu0
    %v2078 = vadd.f32 %v1056, %v2077
    %v2079 = vpop.f32.mrb[0].mxu0
    %v2080 = vadd.f32 %v1060, %v2079
    %v2081 = vpop.f32.mrb[0].mxu0
    %v2082 = vpop.f32.mrb[0].mxu0
    %2083 = vdwg.mxu0
    %v2084 = vpack.c.bf16 %v1885, %v1885
    %2085 = vmatprep.subr.bf16.mxu0 %v1404
    %2086 = vmatpush1.bf16.msra.mxu0 %v1403
    %2087 = vmatprep.subr.bf16.mxu0 %v1408
    %2088 = vmatpush1.bf16.msra.mxu0 %v1407
    %2089 = vmatprep.subr.bf16.mxu0 %v1412
    %2090 = vmatpush1.bf16.msra.mxu0 %v1411
    %2091 = vmatprep.subr.bf16.mxu0 %v1416
    %2092 = vmatpush1.bf16.msra.mxu0 %v1415
    %2093 = vmatprep.subr.bf16.mxu0 %v1420
    %2094 = vmatpush1.bf16.msra.mxu0 %v1419
    %2095 = vmatprep.subr.bf16.mxu0 %v1424
    %2096 = vmatpush1.bf16.msra.mxu0 %v1423
    %2097 = vmatprep.subr.bf16.mxu0 %v1428
    %2098 = vmatpush1.bf16.msra.mxu0 %v1427
    %2099 = vmatprep.subr.bf16.mxu0 %v1432
    %2100 = vmatpush1.bf16.msra.mxu0 %v1431
    %2101 = vmatprep.subr.bf16.mxu0 0
    %2102 = vmatpush1.bf16.msra.mxu0 0
    %2103 = vmatprep.subr.bf16.mxu0 0
    %2104 = vmatpush1.bf16.msra.mxu0 0
    %2105 = vmatprep.subr.bf16.mxu0 0
    %2106 = vmatpush1.bf16.msra.mxu0 0
    %2107 = vmatprep.subr.bf16.mxu0 0
    %2108 = vmatpush1.bf16.msra.mxu0 0
    %2109 = vmatprep.subr.bf16.mxu0 0
    %2110 = vmatpush1.bf16.msra.mxu0 0
    %2111 = vmatprep.subr.bf16.mxu0 0
    %2112 = vmatpush1.bf16.msra.mxu0 0
    %2113 = vmatprep.subr.bf16.mxu0 0
    %2114 = vmatpush1.bf16.msra.mxu0 0
    %2115 = vmatprep.subr.bf16.mxu0 0
    %2116 = vmatpush1.bf16.msra.mxu0 0
    %2117 = vmatprep.mubr.bf16.mxu0 0
    %2118 = vmatmul.mubr.bf16.gmra.mrb[0].mxu0 %v2084
    %v2119 = vpop.f32.mrb[0].mxu0
    %v2120 = vadd.f32 0.0, %v2119
    %v2121 = vpop.f32.mrb[0].mxu0
    %v2122 = vadd.f32 0.0, %v2121
    %v2123 = vpop.f32.mrb[0].mxu0
    %v2124 = vpop.f32.mrb[0].mxu0
    %2125 = vdwg.mxu0
    %2126 = vmatprep.subr.bf16.mxu0 %v1406
    %2127 = vmatpush1.bf16.msra.mxu0 %v1405
    %2128 = vmatprep.subr.bf16.mxu0 %v1410
    %2129 = vmatpush1.bf16.msra.mxu0 %v1409
    %2130 = vmatprep.subr.bf16.mxu0 %v1414
    %2131 = vmatpush1.bf16.msra.mxu0 %v1413
    %2132 = vmatprep.subr.bf16.mxu0 %v1418
    %2133 = vmatpush1.bf16.msra.mxu0 %v1417
    %2134 = vmatprep.subr.bf16.mxu0 %v1422
    %2135 = vmatpush1.bf16.msra.mxu0 %v1421
    %2136 = vmatprep.subr.bf16.mxu0 %v1426
    %2137 = vmatpush1.bf16.msra.mxu0 %v1425
    %2138 = vmatprep.subr.bf16.mxu0 %v1430
    %2139 = vmatpush1.bf16.msra.mxu0 %v1429
    %2140 = vmatprep.subr.bf16.mxu0 %v1434
    %2141 = vmatpush1.bf16.msra.mxu0 %v1433
    %2142 = vmatprep.subr.bf16.mxu0 0
    %2143 = vmatpush1.bf16.msra.mxu0 0
    %2144 = vmatprep.subr.bf16.mxu0 0
    %2145 = vmatpush1.bf16.msra.mxu0 0
    %2146 = vmatprep.subr.bf16.mxu0 0
    %2147 = vmatpush1.bf16.msra.mxu0 0
    %2148 = vmatprep.subr.bf16.mxu0 0
    %2149 = vmatpush1.bf16.msra.mxu0 0
    %2150 = vmatprep.subr.bf16.mxu0 0
    %2151 = vmatpush1.bf16.msra.mxu0 0
    %2152 = vmatprep.subr.bf16.mxu0 0
    %2153 = vmatpush1.bf16.msra.mxu0 0
    %2154 = vmatprep.subr.bf16.mxu0 0
    %2155 = vmatpush1.bf16.msra.mxu0 0
    %2156 = vmatprep.subr.bf16.mxu0 0
    %2157 = vmatpush1.bf16.msra.mxu0 0
    %2158 = vmatprep.mubr.bf16.mxu0 0
    %2159 = vmatmul.mubr.bf16.gmra.mrb[0].mxu0 %v2084
    %v2160 = vpop.f32.mrb[0].mxu0
    %v2161 = vadd.f32 0.0, %v2160
    %v2162 = vpop.f32.mrb[0].mxu0
    %v2163 = vadd.f32 0.0, %v2162
    %v2164 = vpop.f32.mrb[0].mxu0
    %v2165 = vpop.f32.mrb[0].mxu0
    %2166 = vdwg.mxu0
    %v2167 = vadd.f32 %v2037, %v2120
    %v2168 = vadd.f32 %v2039, %v2122
    %v2169 = vadd.f32 %v2078, %v2161
    %v2170 = vadd.f32 %v2080, %v2163
    %v2171 = vxor.u32 %v2167, 2147483648
    %v2172 = vmul.f32 %v2171, 1.442695
    %v2173 = vpow.pop %v2172
    %v2174 = vadd.f32 %v2173, 1.0
    %v2175 = vrcp.pop %v2174
    %v2176 = vmul.f32 1.0, %v2175
    %v2177 = vxor.u32 %v2168, 2147483648
    %v2178 = vmul.f32 %v2177, 1.442695
    %v2179 = vpow.pop %v2178
    %v2180 = vadd.f32 %v2179, 1.0
    %v2181 = vrcp.pop %v2180
    %v2182 = vmul.f32 1.0, %v2181
    %v2183 = vtanh.pop %v2169
    %v2184 = vxor.u32 %v2170, 2147483648
    %v2185 = vmul.f32 %v2184, 1.442695
    %v2186 = vpow.pop %v2185
    %v2187 = vadd.f32 %v2186, 1.0
    %v2188 = vrcp.pop %v2187
    %v2189 = vmul.f32 1.0, %v2188
    %v2190 = vmul.f32 %v2182, %v1883
    %v2191 = vmul.f32 %v2176, %v2183
    %v2192 = vadd.f32 %v2190, %v2191
    %v2193 = vtanh.pop %v2192
    %v2194 = vmul.f32 %v2189, %v2193
    %2195 = vst [vmem:[#allocation3 + $0x18] sm:$0xff] %v2194
    %v2196 = vld [vmem:[#allocation2 + $0x60] sm:$0xff]
    %v2197 = vld [vmem:[#allocation2 + $0x68] sm:$0xff]
    %v2198 = vld [vmem:[#allocation2 + $0x70] sm:$0xff]
    %v2199 = vld [vmem:[#allocation2 + $0x78] sm:$0xff]
    %2200 = vmatprep.subr.bf16.mxu0 %v870
    %2201 = vmatpush1.bf16.msra.mxu0 %v869
    %2202 = vmatprep.subr.bf16.mxu0 %v874
    %2203 = vmatpush1.bf16.msra.mxu0 %v873
    %2204 = vmatprep.subr.bf16.mxu0 %v878
    %2205 = vmatpush1.bf16.msra.mxu0 %v877
    %2206 = vmatprep.subr.bf16.mxu0 %v882
    %2207 = vmatpush1.bf16.msra.mxu0 %v881
    %2208 = vmatprep.subr.bf16.mxu0 %v886
    %2209 = vmatpush1.bf16.msra.mxu0 %v885
    %2210 = vmatprep.subr.bf16.mxu0 %v890
    %2211 = vmatpush1.bf16.msra.mxu0 %v889
    %2212 = vmatprep.subr.bf16.mxu0 %v894
    %2213 = vmatpush1.bf16.msra.mxu0 %v893
    %2214 = vmatprep.subr.bf16.mxu0 %v898
    %2215 = vmatpush1.bf16.msra.mxu0 %v897
    %2216 = vmatprep.subr.bf16.mxu0 0
    %2217 = vmatpush1.bf16.msra.mxu0 0
    %2218 = vmatprep.subr.bf16.mxu0 0
    %2219 = vmatpush1.bf16.msra.mxu0 0
    %2220 = vmatprep.subr.bf16.mxu0 0
    %2221 = vmatpush1.bf16.msra.mxu0 0
    %2222 = vmatprep.subr.bf16.mxu0 0
    %2223 = vmatpush1.bf16.msra.mxu0 0
    %2224 = vmatprep.subr.bf16.mxu0 0
    %2225 = vmatpush1.bf16.msra.mxu0 0
    %2226 = vmatprep.subr.bf16.mxu0 0
    %2227 = vmatpush1.bf16.msra.mxu0 0
    %2228 = vmatprep.subr.bf16.mxu0 0
    %2229 = vmatpush1.bf16.msra.mxu0 0
    %2230 = vmatprep.subr.bf16.mxu0 0
    %2231 = vmatpush1.bf16.msra.mxu0 0
    %2232 = vmatprep.mubr.bf16.mxu0 0
    %2233 = vmatmul.mubr.bf16.gmra.mrb[0].mxu0 %v2001
    %v2234 = vpop.f32.mrb[0].mxu0
    %v2235 = vadd.f32 0.0, %v2234
    %v2236 = vpop.f32.mrb[0].mxu0
    %v2237 = vadd.f32 0.0, %v2236
    %v2238 = vpop.f32.mrb[0].mxu0
    %v2239 = vpop.f32.mrb[0].mxu0
    %2240 = vdwg.mxu0
    %2241 = vmatprep.subr.bf16.mxu0 %v872
    %2242 = vmatpush1.bf16.msra.mxu0 %v871
    %2243 = vmatprep.subr.bf16.mxu0 %v876
    %2244 = vmatpush1.bf16.msra.mxu0 %v875
    %2245 = vmatprep.subr.bf16.mxu0 %v880
    %2246 = vmatpush1.bf16.msra.mxu0 %v879
    %2247 = vmatprep.subr.bf16.mxu0 %v884
    %2248 = vmatpush1.bf16.msra.mxu0 %v883
    %2249 = vmatprep.subr.bf16.mxu0 %v888
    %2250 = vmatpush1.bf16.msra.mxu0 %v887
    %2251 = vmatprep.subr.bf16.mxu0 %v892
    %2252 = vmatpush1.bf16.msra.mxu0 %v891
    %2253 = vmatprep.subr.bf16.mxu0 %v896
    %2254 = vmatpush1.bf16.msra.mxu0 %v895
    %2255 = vmatprep.subr.bf16.mxu0 %v900
    %2256 = vmatpush1.bf16.msra.mxu0 %v899
    %2257 = vmatprep.subr.bf16.mxu0 0
    %2258 = vmatpush1.bf16.msra.mxu0 0
    %2259 = vmatprep.subr.bf16.mxu0 0
    %2260 = vmatpush1.bf16.msra.mxu0 0
    %2261 = vmatprep.subr.bf16.mxu0 0
    %2262 = vmatpush1.bf16.msra.mxu0 0
    %2263 = vmatprep.subr.bf16.mxu0 0
    %2264 = vmatpush1.bf16.msra.mxu0 0
    %2265 = vmatprep.subr.bf16.mxu0 0
    %2266 = vmatpush1.bf16.msra.mxu0 0
    %2267 = vmatprep.subr.bf16.mxu0 0
    %2268 = vmatpush1.bf16.msra.mxu0 0
    %2269 = vmatprep.subr.bf16.mxu0 0
    %2270 = vmatpush1.bf16.msra.mxu0 0
    %2271 = vmatprep.subr.bf16.mxu0 0
    %2272 = vmatpush1.bf16.msra.mxu0 0
    %2273 = vmatprep.mubr.bf16.mxu0 0
    %2274 = vmatmul.mubr.bf16.gmra.mrb[0].mxu0 %v2001
    %v2275 = vpop.f32.mrb[0].mxu0
    %v2276 = vadd.f32 0.0, %v2275
    %v2277 = vpop.f32.mrb[0].mxu0
    %v2278 = vadd.f32 0.0, %v2277
    %v2279 = vpop.f32.mrb[0].mxu0
    %v2280 = vpop.f32.mrb[0].mxu0
    %2281 = vdwg.mxu0
    %v2282 = vadd.f32 %v2196, %v2235
    %v2283 = vadd.f32 %v2197, %v2237
    %v2284 = vadd.f32 %v2198, %v2276
    %v2285 = vadd.f32 %v2199, %v2278
    %v2286 = vxor.u32 %v2282, 2147483648
    %v2287 = vmul.f32 %v2286, 1.442695
    %v2288 = vpow.pop %v2287
    %v2289 = vadd.f32 %v2288, 1.0
    %v2290 = vrcp.pop %v2289
    %v2291 = vmul.f32 1.0, %v2290
    %v2292 = vxor.u32 %v2283, 2147483648
    %v2293 = vmul.f32 %v2292, 1.442695
    %v2294 = vpow.pop %v2293
    %v2295 = vadd.f32 %v2294, 1.0
    %v2296 = vrcp.pop %v2295
    %v2297 = vmul.f32 1.0, %v2296
    %v2298 = vtanh.pop %v2284
    %v2299 = vxor.u32 %v2285, 2147483648
    %v2300 = vmul.f32 %v2299, 1.442695
    %v2301 = vpow.pop %v2300
    %v2302 = vadd.f32 %v2301, 1.0
    %v2303 = vrcp.pop %v2302
    %v2304 = vmul.f32 1.0, %v2303
    %v2305 = vmul.f32 %v2297, %v1998
    %v2306 = vmul.f32 %v2291, %v2298
    %v2307 = vadd.f32 %v2305, %v2306
    %v2308 = vtanh.pop %v2307
    %v2309 = vmul.f32 %v2304, %v2308
    %v2310 = vpack.c.bf16 %v2309, %v2309
    %2311 = vmatprep.subr.bf16.mxu0 %v1162
    %2312 = vmatpush1.bf16.msra.mxu0 %v1161
    %2313 = vmatprep.subr.bf16.mxu0 %v1166
    %2314 = vmatpush1.bf16.msra.mxu0 %v1165
    %2315 = vmatprep.subr.bf16.mxu0 %v1170
    %2316 = vmatpush1.bf16.msra.mxu0 %v1169
    %2317 = vmatprep.subr.bf16.mxu0 %v1174
    %2318 = vmatpush1.bf16.msra.mxu0 %v1173
    %2319 = vmatprep.subr.bf16.mxu0 %v1178
    %2320 = vmatpush1.bf16.msra.mxu0 %v1177
    %2321 = vmatprep.subr.bf16.mxu0 %v1182
    %2322 = vmatpush1.bf16.msra.mxu0 %v1181
    %2323 = vmatprep.subr.bf16.mxu0 %v1186
    %2324 = vmatpush1.bf16.msra.mxu0 %v1185
    %2325 = vmatprep.subr.bf16.mxu0 %v1190
    %2326 = vmatpush1.bf16.msra.mxu0 %v1189
    %2327 = vmatprep.subr.bf16.mxu0 0
    %2328 = vmatpush1.bf16.msra.mxu0 0
    %2329 = vmatprep.subr.bf16.mxu0 0
    %2330 = vmatpush1.bf16.msra.mxu0 0
    %2331 = vmatprep.subr.bf16.mxu0 0
    %2332 = vmatpush1.bf16.msra.mxu0 0
    %2333 = vmatprep.subr.bf16.mxu0 0
    %2334 = vmatpush1.bf16.msra.mxu0 0
    %2335 = vmatprep.subr.bf16.mxu0 0
    %2336 = vmatpush1.bf16.msra.mxu0 0
    %2337 = vmatprep.subr.bf16.mxu0 0
    %2338 = vmatpush1.bf16.msra.mxu0 0
    %2339 = vmatprep.subr.bf16.mxu0 0
    %2340 = vmatpush1.bf16.msra.mxu0 0
    %2341 = vmatprep.subr.bf16.mxu0 0
    %2342 = vmatpush1.bf16.msra.mxu0 0
    %2343 = vmatprep.mubr.bf16.mxu0 0
    %2344 = vmatmul.mubr.bf16.gmra.mrb[0].mxu0 %v2310
    %v2345 = vpop.f32.mrb[0].mxu0
    %v2346 = vadd.f32 %v1048, %v2345
    %v2347 = vpop.f32.mrb[0].mxu0
    %v2348 = vadd.f32 %v1052, %v2347
    %v2349 = vpop.f32.mrb[0].mxu0
    %v2350 = vpop.f32.mrb[0].mxu0
    %2351 = vdwg.mxu0
    %2352 = vmatprep.subr.bf16.mxu0 %v1164
    %2353 = vmatpush1.bf16.msra.mxu0 %v1163
    %2354 = vmatprep.subr.bf16.mxu0 %v1168
    %2355 = vmatpush1.bf16.msra.mxu0 %v1167
    %2356 = vmatprep.subr.bf16.mxu0 %v1172
    %2357 = vmatpush1.bf16.msra.mxu0 %v1171
    %2358 = vmatprep.subr.bf16.mxu0 %v1176
    %2359 = vmatpush1.bf16.msra.mxu0 %v1175
    %2360 = vmatprep.subr.bf16.mxu0 %v1180
    %2361 = vmatpush1.bf16.msra.mxu0 %v1179
    %2362 = vmatprep.subr.bf16.mxu0 %v1184
    %2363 = vmatpush1.bf16.msra.mxu0 %v1183
    %2364 = vmatprep.subr.bf16.mxu0 %v1188
    %2365 = vmatpush1.bf16.msra.mxu0 %v1187
    %2366 = vmatprep.subr.bf16.mxu0 %v1192
    %2367 = vmatpush1.bf16.msra.mxu0 %v1191
    %2368 = vmatprep.subr.bf16.mxu0 0
    %2369 = vmatpush1.bf16.msra.mxu0 0
    %2370 = vmatprep.subr.bf16.mxu0 0
    %2371 = vmatpush1.bf16.msra.mxu0 0
    %2372 = vmatprep.subr.bf16.mxu0 0
    %2373 = vmatpush1.bf16.msra.mxu0 0
    %2374 = vmatprep.subr.bf16.mxu0 0
    %2375 = vmatpush1.bf16.msra.mxu0 0
    %2376 = vmatprep.subr.bf16.mxu0 0
    %2377 = vmatpush1.bf16.msra.mxu0 0
    %2378 = vmatprep.subr.bf16.mxu0 0
    %2379 = vmatpush1.bf16.msra.mxu0 0
    %2380 = vmatprep.subr.bf16.mxu0 0
    %2381 = vmatpush1.bf16.msra.mxu0 0
    %2382 = vmatprep.subr.bf16.mxu0 0
    %2383 = vmatpush1.bf16.msra.mxu0 0
    %2384 = vmatprep.mubr.bf16.mxu0 0
    %2385 = vmatmul.mubr.bf16.gmra.mrb[0].mxu0 %v2310
    %v2386 = vpop.f32.mrb[0].mxu0
    %v2387 = vadd.f32 %v1056, %v2386
    %v2388 = vpop.f32.mrb[0].mxu0
    %v2389 = vadd.f32 %v1060, %v2388
    %v2390 = vpop.f32.mrb[0].mxu0
    %v2391 = vpop.f32.mrb[0].mxu0
    %2392 = vdwg.mxu0
    %v2393 = vpack.c.bf16 %v2194, %v2194
    %2394 = vmatprep.subr.bf16.mxu0 %v1404
    %2395 = vmatpush1.bf16.msra.mxu0 %v1403
    %2396 = vmatprep.subr.bf16.mxu0 %v1408
    %2397 = vmatpush1.bf16.msra.mxu0 %v1407
    %2398 = vmatprep.subr.bf16.mxu0 %v1412
    %2399 = vmatpush1.bf16.msra.mxu0 %v1411
    %2400 = vmatprep.subr.bf16.mxu0 %v1416
    %2401 = vmatpush1.bf16.msra.mxu0 %v1415
    %2402 = vmatprep.subr.bf16.mxu0 %v1420
    %2403 = vmatpush1.bf16.msra.mxu0 %v1419
    %2404 = vmatprep.subr.bf16.mxu0 %v1424
    %2405 = vmatpush1.bf16.msra.mxu0 %v1423
    %2406 = vmatprep.subr.bf16.mxu0 %v1428
    %2407 = vmatpush1.bf16.msra.mxu0 %v1427
    %2408 = vmatprep.subr.bf16.mxu0 %v1432
    %2409 = vmatpush1.bf16.msra.mxu0 %v1431
    %2410 = vmatprep.subr.bf16.mxu0 0
    %2411 = vmatpush1.bf16.msra.mxu0 0
    %2412 = vmatprep.subr.bf16.mxu0 0
    %2413 = vmatpush1.bf16.msra.mxu0 0
    %2414 = vmatprep.subr.bf16.mxu0 0
    %2415 = vmatpush1.bf16.msra.mxu0 0
    %2416 = vmatprep.subr.bf16.mxu0 0
    %2417 = vmatpush1.bf16.msra.mxu0 0
    %2418 = vmatprep.subr.bf16.mxu0 0
    %2419 = vmatpush1.bf16.msra.mxu0 0
    %2420 = vmatprep.subr.bf16.mxu0 0
    %2421 = vmatpush1.bf16.msra.mxu0 0
    %2422 = vmatprep.subr.bf16.mxu0 0
    %2423 = vmatpush1.bf16.msra.mxu0 0
    %2424 = vmatprep.subr.bf16.mxu0 0
    %2425 = vmatpush1.bf16.msra.mxu0 0
    %2426 = vmatprep.mubr.bf16.mxu0 0
    %2427 = vmatmul.mubr.bf16.gmra.mrb[0].mxu0 %v2393
    %v2428 = vpop.f32.mrb[0].mxu0
    %v2429 = vadd.f32 0.0, %v2428
    %v2430 = vpop.f32.mrb[0].mxu0
    %v2431 = vadd.f32 0.0, %v2430
    %v2432 = vpop.f32.mrb[0].mxu0
    %v2433 = vpop.f32.mrb[0].mxu0
    %2434 = vdwg.mxu0
    %2435 = vmatprep.subr.bf16.mxu0 %v1406
    %2436 = vmatpush1.bf16.msra.mxu0 %v1405
    %2437 = vmatprep.subr.bf16.mxu0 %v1410
    %2438 = vmatpush1.bf16.msra.mxu0 %v1409
    %2439 = vmatprep.subr.bf16.mxu0 %v1414
    %2440 = vmatpush1.bf16.msra.mxu0 %v1413
    %2441 = vmatprep.subr.bf16.mxu0 %v1418
    %2442 = vmatpush1.bf16.msra.mxu0 %v1417
    %2443 = vmatprep.subr.bf16.mxu0 %v1422
    %2444 = vmatpush1.bf16.msra.mxu0 %v1421
    %2445 = vmatprep.subr.bf16.mxu0 %v1426
    %2446 = vmatpush1.bf16.msra.mxu0 %v1425
    %2447 = vmatprep.subr.bf16.mxu0 %v1430
    %2448 = vmatpush1.bf16.msra.mxu0 %v1429
    %2449 = vmatprep.subr.bf16.mxu0 %v1434
    %2450 = vmatpush1.bf16.msra.mxu0 %v1433
    %2451 = vmatprep.subr.bf16.mxu0 0
    %2452 = vmatpush1.bf16.msra.mxu0 0
    %2453 = vmatprep.subr.bf16.mxu0 0
    %2454 = vmatpush1.bf16.msra.mxu0 0
    %2455 = vmatprep.subr.bf16.mxu0 0
    %2456 = vmatpush1.bf16.msra.mxu0 0
    %2457 = vmatprep.subr.bf16.mxu0 0
    %2458 = vmatpush1.bf16.msra.mxu0 0
    %2459 = vmatprep.subr.bf16.mxu0 0
    %2460 = vmatpush1.bf16.msra.mxu0 0
    %2461 = vmatprep.subr.bf16.mxu0 0
    %2462 = vmatpush1.bf16.msra.mxu0 0
    %2463 = vmatprep.subr.bf16.mxu0 0
    %2464 = vmatpush1.bf16.msra.mxu0 0
    %2465 = vmatprep.subr.bf16.mxu0 0
    %2466 = vmatpush1.bf16.msra.mxu0 0
    %2467 = vmatprep.mubr.bf16.mxu0 0
    %2468 = vmatmul.mubr.bf16.gmra.mrb[0].mxu0 %v2393
    %v2469 = vpop.f32.mrb[0].mxu0
    %v2470 = vadd.f32 0.0, %v2469
    %v2471 = vpop.f32.mrb[0].mxu0
    %v2472 = vadd.f32 0.0, %v2471
    %v2473 = vpop.f32.mrb[0].mxu0
    %v2474 = vpop.f32.mrb[0].mxu0
    %2475 = vdwg.mxu0
    %v2476 = vadd.f32 %v2346, %v2429
    %v2477 = vadd.f32 %v2348, %v2431
    %v2478 = vadd.f32 %v2387, %v2470
    %v2479 = vadd.f32 %v2389, %v2472
    %v2480 = vxor.u32 %v2476, 2147483648
    %v2481 = vmul.f32 %v2480, 1.442695
    %v2482 = vpow.pop %v2481
    %v2483 = vadd.f32 %v2482, 1.0
    %v2484 = vrcp.pop %v2483
    %v2485 = vmul.f32 1.0, %v2484
    %v2486 = vxor.u32 %v2477, 2147483648
    %v2487 = vmul.f32 %v2486, 1.442695
    %v2488 = vpow.pop %v2487
    %v2489 = vadd.f32 %v2488, 1.0
    %v2490 = vrcp.pop %v2489
    %v2491 = vmul.f32 1.0, %v2490
    %v2492 = vtanh.pop %v2478
    %v2493 = vxor.u32 %v2479, 2147483648
    %v2494 = vmul.f32 %v2493, 1.442695
    %v2495 = vpow.pop %v2494
    %v2496 = vadd.f32 %v2495, 1.0
    %v2497 = vrcp.pop %v2496
    %v2498 = vmul.f32 1.0, %v2497
    %v2499 = vmul.f32 %v2491, %v2192
    %v2500 = vmul.f32 %v2485, %v2492
    %v2501 = vadd.f32 %v2499, %v2500
    %v2502 = vtanh.pop %v2501
    %v2503 = vmul.f32 %v2498, %v2502
    %2504 = vst [vmem:[#allocation3 + $0x20] sm:$0xff] %v2503
    %v2505 = vld [vmem:[#allocation2 + $0x80] sm:$0xff]
    %v2506 = vld [vmem:[#allocation2 + $0x88] sm:$0xff]
    %v2507 = vld [vmem:[#allocation2 + $0x90] sm:$0xff]
    %v2508 = vld [vmem:[#allocation2 + $0x98] sm:$0xff]
    %2509 = vmatprep.subr.bf16.mxu0 %v870
    %2510 = vmatpush1.bf16.msra.mxu0 %v869
    %2511 = vmatprep.subr.bf16.mxu0 %v874
    %2512 = vmatpush1.bf16.msra.mxu0 %v873
    %2513 = vmatprep.subr.bf16.mxu0 %v878
    %2514 = vmatpush1.bf16.msra.mxu0 %v877
    %2515 = vmatprep.subr.bf16.mxu0 %v882
    %2516 = vmatpush1.bf16.msra.mxu0 %v881
    %2517 = vmatprep.subr.bf16.mxu0 %v886
    %2518 = vmatpush1.bf16.msra.mxu0 %v885
    %2519 = vmatprep.subr.bf16.mxu0 %v890
    %2520 = vmatpush1.bf16.msra.mxu0 %v889
    %2521 = vmatprep.subr.bf16.mxu0 %v894
    %2522 = vmatpush1.bf16.msra.mxu0 %v893
    %2523 = vmatprep.subr.bf16.mxu0 %v898
    %2524 = vmatpush1.bf16.msra.mxu0 %v897
    %2525 = vmatprep.subr.bf16.mxu0 0
    %2526 = vmatpush1.bf16.msra.mxu0 0
    %2527 = vmatprep.subr.bf16.mxu0 0
    %2528 = vmatpush1.bf16.msra.mxu0 0
    %2529 = vmatprep.subr.bf16.mxu0 0
    %2530 = vmatpush1.bf16.msra.mxu0 0
    %2531 = vmatprep.subr.bf16.mxu0 0
    %2532 = vmatpush1.bf16.msra.mxu0 0
    %2533 = vmatprep.subr.bf16.mxu0 0
    %2534 = vmatpush1.bf16.msra.mxu0 0
    %2535 = vmatprep.subr.bf16.mxu0 0
    %2536 = vmatpush1.bf16.msra.mxu0 0
    %2537 = vmatprep.subr.bf16.mxu0 0
    %2538 = vmatpush1.bf16.msra.mxu0 0
    %2539 = vmatprep.subr.bf16.mxu0 0
    %2540 = vmatpush1.bf16.msra.mxu0 0
    %2541 = vmatprep.mubr.bf16.mxu0 0
    %2542 = vmatmul.mubr.bf16.gmra.mrb[0].mxu0 %v2310
    %v2543 = vpop.f32.mrb[0].mxu0
    %v2544 = vadd.f32 0.0, %v2543
    %v2545 = vpop.f32.mrb[0].mxu0
    %v2546 = vadd.f32 0.0, %v2545
    %v2547 = vpop.f32.mrb[0].mxu0
    %v2548 = vpop.f32.mrb[0].mxu0
    %2549 = vdwg.mxu0
    %2550 = vmatprep.subr.bf16.mxu0 %v872
    %2551 = vmatpush1.bf16.msra.mxu0 %v871
    %2552 = vmatprep.subr.bf16.mxu0 %v876
    %2553 = vmatpush1.bf16.msra.mxu0 %v875
    %2554 = vmatprep.subr.bf16.mxu0 %v880
    %2555 = vmatpush1.bf16.msra.mxu0 %v879
    %2556 = vmatprep.subr.bf16.mxu0 %v884
    %2557 = vmatpush1.bf16.msra.mxu0 %v883
    %2558 = vmatprep.subr.bf16.mxu0 %v888
    %2559 = vmatpush1.bf16.msra.mxu0 %v887
    %2560 = vmatprep.subr.bf16.mxu0 %v892
    %2561 = vmatpush1.bf16.msra.mxu0 %v891
    %2562 = vmatprep.subr.bf16.mxu0 %v896
    %2563 = vmatpush1.bf16.msra.mxu0 %v895
    %2564 = vmatprep.subr.bf16.mxu0 %v900
    %2565 = vmatpush1.bf16.msra.mxu0 %v899
    %2566 = vmatprep.subr.bf16.mxu0 0
    %2567 = vmatpush1.bf16.msra.mxu0 0
    %2568 = vmatprep.subr.bf16.mxu0 0
    %2569 = vmatpush1.bf16.msra.mxu0 0
    %2570 = vmatprep.subr.bf16.mxu0 0
    %2571 = vmatpush1.bf16.msra.mxu0 0
    %2572 = vmatprep.subr.bf16.mxu0 0
    %2573 = vmatpush1.bf16.msra.mxu0 0
    %2574 = vmatprep.subr.bf16.mxu0 0
    %2575 = vmatpush1.bf16.msra.mxu0 0
    %2576 = vmatprep.subr.bf16.mxu0 0
    %2577 = vmatpush1.bf16.msra.mxu0 0
    %2578 = vmatprep.subr.bf16.mxu0 0
    %2579 = vmatpush1.bf16.msra.mxu0 0
    %2580 = vmatprep.subr.bf16.mxu0 0
    %2581 = vmatpush1.bf16.msra.mxu0 0
    %2582 = vmatprep.mubr.bf16.mxu0 0
    %2583 = vmatmul.mubr.bf16.gmra.mrb[0].mxu0 %v2310
    %v2584 = vpop.f32.mrb[0].mxu0
    %v2585 = vadd.f32 0.0, %v2584
    %v2586 = vpop.f32.mrb[0].mxu0
    %v2587 = vadd.f32 0.0, %v2586
    %v2588 = vpop.f32.mrb[0].mxu0
    %v2589 = vpop.f32.mrb[0].mxu0
    %2590 = vdwg.mxu0
    %v2591 = vadd.f32 %v2505, %v2544
    %v2592 = vadd.f32 %v2506, %v2546
    %v2593 = vadd.f32 %v2507, %v2585
    %v2594 = vadd.f32 %v2508, %v2587
    %v2595 = vxor.u32 %v2591, 2147483648
    %v2596 = vmul.f32 %v2595, 1.442695
    %v2597 = vpow.pop %v2596
    %v2598 = vadd.f32 %v2597, 1.0
    %v2599 = vrcp.pop %v2598
    %v2600 = vmul.f32 1.0, %v2599
    %v2601 = vxor.u32 %v2592, 2147483648
    %v2602 = vmul.f32 %v2601, 1.442695
    %v2603 = vpow.pop %v2602
    %v2604 = vadd.f32 %v2603, 1.0
    %v2605 = vrcp.pop %v2604
    %v2606 = vmul.f32 1.0, %v2605
    %v2607 = vtanh.pop %v2593
    %v2608 = vxor.u32 %v2594, 2147483648
    %v2609 = vmul.f32 %v2608, 1.442695
    %v2610 = vpow.pop %v2609
    %v2611 = vadd.f32 %v2610, 1.0
    %v2612 = vrcp.pop %v2611
    %v2613 = vmul.f32 1.0, %v2612
    %v2614 = vmul.f32 %v2606, %v2307
    %v2615 = vmul.f32 %v2600, %v2607
    %v2616 = vadd.f32 %v2614, %v2615
    %v2617 = vtanh.pop %v2616
    %v2618 = vmul.f32 %v2613, %v2617
    %v2619 = vpack.c.bf16 %v2618, %v2618
    %2620 = vmatprep.subr.bf16.mxu0 %v1162
    %2621 = vmatpush1.bf16.msra.mxu0 %v1161
    %2622 = vmatprep.subr.bf16.mxu0 %v1166
    %2623 = vmatpush1.bf16.msra.mxu0 %v1165
    %2624 = vmatprep.subr.bf16.mxu0 %v1170
    %2625 = vmatpush1.bf16.msra.mxu0 %v1169
    %2626 = vmatprep.subr.bf16.mxu0 %v1174
    %2627 = vmatpush1.bf16.msra.mxu0 %v1173
    %2628 = vmatprep.subr.bf16.mxu0 %v1178
    %2629 = vmatpush1.bf16.msra.mxu0 %v1177
    %2630 = vmatprep.subr.bf16.mxu0 %v1182
    %2631 = vmatpush1.bf16.msra.mxu0 %v1181
    %2632 = vmatprep.subr.bf16.mxu0 %v1186
    %2633 = vmatpush1.bf16.msra.mxu0 %v1185
    %2634 = vmatprep.subr.bf16.mxu0 %v1190
    %2635 = vmatpush1.bf16.msra.mxu0 %v1189
    %2636 = vmatprep.subr.bf16.mxu0 0
    %2637 = vmatpush1.bf16.msra.mxu0 0
    %2638 = vmatprep.subr.bf16.mxu0 0
    %2639 = vmatpush1.bf16.msra.mxu0 0
    %2640 = vmatprep.subr.bf16.mxu0 0
    %2641 = vmatpush1.bf16.msra.mxu0 0
    %2642 = vmatprep.subr.bf16.mxu0 0
    %2643 = vmatpush1.bf16.msra.mxu0 0
    %2644 = vmatprep.subr.bf16.mxu0 0
    %2645 = vmatpush1.bf16.msra.mxu0 0
    %2646 = vmatprep.subr.bf16.mxu0 0
    %2647 = vmatpush1.bf16.msra.mxu0 0
    %2648 = vmatprep.subr.bf16.mxu0 0
    %2649 = vmatpush1.bf16.msra.mxu0 0
    %2650 = vmatprep.subr.bf16.mxu0 0
    %2651 = vmatpush1.bf16.msra.mxu0 0
    %2652 = vmatprep.mubr.bf16.mxu0 0
    %2653 = vmatmul.mubr.bf16.gmra.mrb[0].mxu0 %v2619
    %v2654 = vpop.f32.mrb[0].mxu0
    %v2655 = vadd.f32 %v1048, %v2654
    %v2656 = vpop.f32.mrb[0].mxu0
    %v2657 = vadd.f32 %v1052, %v2656
    %v2658 = vpop.f32.mrb[0].mxu0
    %v2659 = vpop.f32.mrb[0].mxu0
    %2660 = vdwg.mxu0
    %2661 = vmatprep.subr.bf16.mxu0 %v1164
    %2662 = vmatpush1.bf16.msra.mxu0 %v1163
    %2663 = vmatprep.subr.bf16.mxu0 %v1168
    %2664 = vmatpush1.bf16.msra.mxu0 %v1167
    %2665 = vmatprep.subr.bf16.mxu0 %v1172
    %2666 = vmatpush1.bf16.msra.mxu0 %v1171
    %2667 = vmatprep.subr.bf16.mxu0 %v1176
    %2668 = vmatpush1.bf16.msra.mxu0 %v1175
    %2669 = vmatprep.subr.bf16.mxu0 %v1180
    %2670 = vmatpush1.bf16.msra.mxu0 %v1179
    %2671 = vmatprep.subr.bf16.mxu0 %v1184
    %2672 = vmatpush1.bf16.msra.mxu0 %v1183
    %2673 = vmatprep.subr.bf16.mxu0 %v1188
    %2674 = vmatpush1.bf16.msra.mxu0 %v1187
    %2675 = vmatprep.subr.bf16.mxu0 %v1192
    %2676 = vmatpush1.bf16.msra.mxu0 %v1191
    %2677 = vmatprep.subr.bf16.mxu0 0
    %2678 = vmatpush1.bf16.msra.mxu0 0
    %2679 = vmatprep.subr.bf16.mxu0 0
    %2680 = vmatpush1.bf16.msra.mxu0 0
    %2681 = vmatprep.subr.bf16.mxu0 0
    %2682 = vmatpush1.bf16.msra.mxu0 0
    %2683 = vmatprep.subr.bf16.mxu0 0
    %2684 = vmatpush1.bf16.msra.mxu0 0
    %2685 = vmatprep.subr.bf16.mxu0 0
    %2686 = vmatpush1.bf16.msra.mxu0 0
    %2687 = vmatprep.subr.bf16.mxu0 0
    %2688 = vmatpush1.bf16.msra.mxu0 0
    %2689 = vmatprep.subr.bf16.mxu0 0
    %2690 = vmatpush1.bf16.msra.mxu0 0
    %2691 = vmatprep.subr.bf16.mxu0 0
    %2692 = vmatpush1.bf16.msra.mxu0 0
    %2693 = vmatprep.mubr.bf16.mxu0 0
    %2694 = vmatmul.mubr.bf16.gmra.mrb[0].mxu0 %v2619
    %v2695 = vpop.f32.mrb[0].mxu0
    %v2696 = vadd.f32 %v1056, %v2695
    %v2697 = vpop.f32.mrb[0].mxu0
    %v2698 = vadd.f32 %v1060, %v2697
    %v2699 = vpop.f32.mrb[0].mxu0
    %v2700 = vpop.f32.mrb[0].mxu0
    %2701 = vdwg.mxu0
    %v2702 = vpack.c.bf16 %v2503, %v2503
    %2703 = vmatprep.subr.bf16.mxu0 %v1404
    %2704 = vmatpush1.bf16.msra.mxu0 %v1403
    %2705 = vmatprep.subr.bf16.mxu0 %v1408
    %2706 = vmatpush1.bf16.msra.mxu0 %v1407
    %2707 = vmatprep.subr.bf16.mxu0 %v1412
    %2708 = vmatpush1.bf16.msra.mxu0 %v1411
    %2709 = vmatprep.subr.bf16.mxu0 %v1416
    %2710 = vmatpush1.bf16.msra.mxu0 %v1415
    %2711 = vmatprep.subr.bf16.mxu0 %v1420
    %2712 = vmatpush1.bf16.msra.mxu0 %v1419
    %2713 = vmatprep.subr.bf16.mxu0 %v1424
    %2714 = vmatpush1.bf16.msra.mxu0 %v1423
    %2715 = vmatprep.subr.bf16.mxu0 %v1428
    %2716 = vmatpush1.bf16.msra.mxu0 %v1427
    %2717 = vmatprep.subr.bf16.mxu0 %v1432
    %2718 = vmatpush1.bf16.msra.mxu0 %v1431
    %2719 = vmatprep.subr.bf16.mxu0 0
    %2720 = vmatpush1.bf16.msra.mxu0 0
    %2721 = vmatprep.subr.bf16.mxu0 0
    %2722 = vmatpush1.bf16.msra.mxu0 0
    %2723 = vmatprep.subr.bf16.mxu0 0
    %2724 = vmatpush1.bf16.msra.mxu0 0
    %2725 = vmatprep.subr.bf16.mxu0 0
    %2726 = vmatpush1.bf16.msra.mxu0 0
    %2727 = vmatprep.subr.bf16.mxu0 0
    %2728 = vmatpush1.bf16.msra.mxu0 0
    %2729 = vmatprep.subr.bf16.mxu0 0
    %2730 = vmatpush1.bf16.msra.mxu0 0
    %2731 = vmatprep.subr.bf16.mxu0 0
    %2732 = vmatpush1.bf16.msra.mxu0 0
    %2733 = vmatprep.subr.bf16.mxu0 0
    %2734 = vmatpush1.bf16.msra.mxu0 0
    %2735 = vmatprep.mubr.bf16.mxu0 0
    %2736 = vmatmul.mubr.bf16.gmra.mrb[0].mxu0 %v2702
    %v2737 = vpop.f32.mrb[0].mxu0
    %v2738 = vadd.f32 0.0, %v2737
    %v2739 = vpop.f32.mrb[0].mxu0
    %v2740 = vadd.f32 0.0, %v2739
    %v2741 = vpop.f32.mrb[0].mxu0
    %v2742 = vpop.f32.mrb[0].mxu0
    %2743 = vdwg.mxu0
    %2744 = vmatprep.subr.bf16.mxu0 %v1406
    %2745 = vmatpush1.bf16.msra.mxu0 %v1405
    %2746 = vmatprep.subr.bf16.mxu0 %v1410
    %2747 = vmatpush1.bf16.msra.mxu0 %v1409
    %2748 = vmatprep.subr.bf16.mxu0 %v1414
    %2749 = vmatpush1.bf16.msra.mxu0 %v1413
    %2750 = vmatprep.subr.bf16.mxu0 %v1418
    %2751 = vmatpush1.bf16.msra.mxu0 %v1417
    %2752 = vmatprep.subr.bf16.mxu0 %v1422
    %2753 = vmatpush1.bf16.msra.mxu0 %v1421
    %2754 = vmatprep.subr.bf16.mxu0 %v1426
    %2755 = vmatpush1.bf16.msra.mxu0 %v1425
    %2756 = vmatprep.subr.bf16.mxu0 %v1430
    %2757 = vmatpush1.bf16.msra.mxu0 %v1429
    %2758 = vmatprep.subr.bf16.mxu0 %v1434
    %2759 = vmatpush1.bf16.msra.mxu0 %v1433
    %2760 = vmatprep.subr.bf16.mxu0 0
    %2761 = vmatpush1.bf16.msra.mxu0 0
    %2762 = vmatprep.subr.bf16.mxu0 0
    %2763 = vmatpush1.bf16.msra.mxu0 0
    %2764 = vmatprep.subr.bf16.mxu0 0
    %2765 = vmatpush1.bf16.msra.mxu0 0
    %2766 = vmatprep.subr.bf16.mxu0 0
    %2767 = vmatpush1.bf16.msra.mxu0 0
    %2768 = vmatprep.subr.bf16.mxu0 0
    %2769 = vmatpush1.bf16.msra.mxu0 0
    %2770 = vmatprep.subr.bf16.mxu0 0
    %2771 = vmatpush1.bf16.msra.mxu0 0
    %2772 = vmatprep.subr.bf16.mxu0 0
    %2773 = vmatpush1.bf16.msra.mxu0 0
    %2774 = vmatprep.subr.bf16.mxu0 0
    %2775 = vmatpush1.bf16.msra.mxu0 0
    %2776 = vmatprep.mubr.bf16.mxu0 0
    %2777 = vmatmul.mubr.bf16.gmra.mrb[0].mxu0 %v2702
    %v2778 = vpop.f32.mrb[0].mxu0
    %v2779 = vadd.f32 0.0, %v2778
    %v2780 = vpop.f32.mrb[0].mxu0
    %v2781 = vadd.f32 0.0, %v2780
    %v2782 = vpop.f32.mrb[0].mxu0
    %v2783 = vpop.f32.mrb[0].mxu0
    %2784 = vdwg.mxu0
    %v2785 = vadd.f32 %v2655, %v2738
    %v2786 = vadd.f32 %v2657, %v2740
    %v2787 = vadd.f32 %v2696, %v2779
    %v2788 = vadd.f32 %v2698, %v2781
    %v2789 = vxor.u32 %v2785, 2147483648
    %v2790 = vmul.f32 %v2789, 1.442695
    %v2791 = vpow.pop %v2790
    %v2792 = vadd.f32 %v2791, 1.0
    %v2793 = vrcp.pop %v2792
    %v2794 = vmul.f32 1.0, %v2793
    %v2795 = vxor.u32 %v2786, 2147483648
    %v2796 = vmul.f32 %v2795, 1.442695
    %v2797 = vpow.pop %v2796
    %v2798 = vadd.f32 %v2797, 1.0
    %v2799 = vrcp.pop %v2798
    %v2800 = vmul.f32 1.0, %v2799
    %v2801 = vtanh.pop %v2787
    %v2802 = vxor.u32 %v2788, 2147483648
    %v2803 = vmul.f32 %v2802, 1.442695
    %v2804 = vpow.pop %v2803
    %v2805 = vadd.f32 %v2804, 1.0
    %v2806 = vrcp.pop %v2805
    %v2807 = vmul.f32 1.0, %v2806
    %v2808 = vmul.f32 %v2800, %v2501
    %v2809 = vmul.f32 %v2794, %v2801
    %v2810 = vadd.f32 %v2808, %v2809
    %v2811 = vtanh.pop %v2810
    %v2812 = vmul.f32 %v2807, %v2811
    %2813 = vst [vmem:[#allocation3 + $0x28] sm:$0xff] %v2812
    %v2814 = vld [vmem:[#allocation2 + $0xa0] sm:$0xff]
    %v2815 = vld [vmem:[#allocation2 + $0xa8] sm:$0xff]
    %v2816 = vld [vmem:[#allocation2 + $0xb0] sm:$0xff]
    %v2817 = vld [vmem:[#allocation2 + $0xb8] sm:$0xff]
    %2818 = vmatprep.subr.bf16.mxu0 %v870
    %2819 = vmatpush1.bf16.msra.mxu0 %v869
    %2820 = vmatprep.subr.bf16.mxu0 %v874
    %2821 = vmatpush1.bf16.msra.mxu0 %v873
    %2822 = vmatprep.subr.bf16.mxu0 %v878
    %2823 = vmatpush1.bf16.msra.mxu0 %v877
    %2824 = vmatprep.subr.bf16.mxu0 %v882
    %2825 = vmatpush1.bf16.msra.mxu0 %v881
    %2826 = vmatprep.subr.bf16.mxu0 %v886
    %2827 = vmatpush1.bf16.msra.mxu0 %v885
    %2828 = vmatprep.subr.bf16.mxu0 %v890
    %2829 = vmatpush1.bf16.msra.mxu0 %v889
    %2830 = vmatprep.subr.bf16.mxu0 %v894
    %2831 = vmatpush1.bf16.msra.mxu0 %v893
    %2832 = vmatprep.subr.bf16.mxu0 %v898
    %2833 = vmatpush1.bf16.msra.mxu0 %v897
    %2834 = vmatprep.subr.bf16.mxu0 0
    %2835 = vmatpush1.bf16.msra.mxu0 0
    %2836 = vmatprep.subr.bf16.mxu0 0
    %2837 = vmatpush1.bf16.msra.mxu0 0
    %2838 = vmatprep.subr.bf16.mxu0 0
    %2839 = vmatpush1.bf16.msra.mxu0 0
    %2840 = vmatprep.subr.bf16.mxu0 0
    %2841 = vmatpush1.bf16.msra.mxu0 0
    %2842 = vmatprep.subr.bf16.mxu0 0
    %2843 = vmatpush1.bf16.msra.mxu0 0
    %2844 = vmatprep.subr.bf16.mxu0 0
    %2845 = vmatpush1.bf16.msra.mxu0 0
    %2846 = vmatprep.subr.bf16.mxu0 0
    %2847 = vmatpush1.bf16.msra.mxu0 0
    %2848 = vmatprep.subr.bf16.mxu0 0
    %2849 = vmatpush1.bf16.msra.mxu0 0
    %2850 = vmatprep.mubr.bf16.mxu0 0
    %2851 = vmatmul.mubr.bf16.gmra.mrb[0].mxu0 %v2619
    %v2852 = vpop.f32.mrb[0].mxu0
    %v2853 = vadd.f32 0.0, %v2852
    %v2854 = vpop.f32.mrb[0].mxu0
    %v2855 = vadd.f32 0.0, %v2854
    %v2856 = vpop.f32.mrb[0].mxu0
    %v2857 = vpop.f32.mrb[0].mxu0
    %2858 = vdwg.mxu0
    %2859 = vmatprep.subr.bf16.mxu0 %v872
    %2860 = vmatpush1.bf16.msra.mxu0 %v871
    %2861 = vmatprep.subr.bf16.mxu0 %v876
    %2862 = vmatpush1.bf16.msra.mxu0 %v875
    %2863 = vmatprep.subr.bf16.mxu0 %v880
    %2864 = vmatpush1.bf16.msra.mxu0 %v879
    %2865 = vmatprep.subr.bf16.mxu0 %v884
    %2866 = vmatpush1.bf16.msra.mxu0 %v883
    %2867 = vmatprep.subr.bf16.mxu0 %v888
    %2868 = vmatpush1.bf16.msra.mxu0 %v887
    %2869 = vmatprep.subr.bf16.mxu0 %v892
    %2870 = vmatpush1.bf16.msra.mxu0 %v891
    %2871 = vmatprep.subr.bf16.mxu0 %v896
    %2872 = vmatpush1.bf16.msra.mxu0 %v895
    %2873 = vmatprep.subr.bf16.mxu0 %v900
    %2874 = vmatpush1.bf16.msra.mxu0 %v899
    %2875 = vmatprep.subr.bf16.mxu0 0
    %2876 = vmatpush1.bf16.msra.mxu0 0
    %2877 = vmatprep.subr.bf16.mxu0 0
    %2878 = vmatpush1.bf16.msra.mxu0 0
    %2879 = vmatprep.subr.bf16.mxu0 0
    %2880 = vmatpush1.bf16.msra.mxu0 0
    %2881 = vmatprep.subr.bf16.mxu0 0
    %2882 = vmatpush1.bf16.msra.mxu0 0
    %2883 = vmatprep.subr.bf16.mxu0 0
    %2884 = vmatpush1.bf16.msra.mxu0 0
    %2885 = vmatprep.subr.bf16.mxu0 0
    %2886 = vmatpush1.bf16.msra.mxu0 0
    %2887 = vmatprep.subr.bf16.mxu0 0
    %2888 = vmatpush1.bf16.msra.mxu0 0
    %2889 = vmatprep.subr.bf16.mxu0 0
    %2890 = vmatpush1.bf16.msra.mxu0 0
    %2891 = vmatprep.mubr.bf16.mxu0 0
    %2892 = vmatmul.mubr.bf16.gmra.mrb[0].mxu0 %v2619
    %v2893 = vpop.f32.mrb[0].mxu0
    %v2894 = vadd.f32 0.0, %v2893
    %v2895 = vpop.f32.mrb[0].mxu0
    %v2896 = vadd.f32 0.0, %v2895
    %v2897 = vpop.f32.mrb[0].mxu0
    %v2898 = vpop.f32.mrb[0].mxu0
    %2899 = vdwg.mxu0
    %v2900 = vadd.f32 %v2814, %v2853
    %v2901 = vadd.f32 %v2815, %v2855
    %v2902 = vadd.f32 %v2816, %v2894
    %v2903 = vadd.f32 %v2817, %v2896
    %v2904 = vxor.u32 %v2900, 2147483648
    %v2905 = vmul.f32 %v2904, 1.442695
    %v2906 = vpow.pop %v2905
    %v2907 = vadd.f32 %v2906, 1.0
    %v2908 = vrcp.pop %v2907
    %v2909 = vmul.f32 1.0, %v2908
    %v2910 = vxor.u32 %v2901, 2147483648
    %v2911 = vmul.f32 %v2910, 1.442695
    %v2912 = vpow.pop %v2911
    %v2913 = vadd.f32 %v2912, 1.0
    %v2914 = vrcp.pop %v2913
    %v2915 = vmul.f32 1.0, %v2914
    %v2916 = vtanh.pop %v2902
    %v2917 = vxor.u32 %v2903, 2147483648
    %v2918 = vmul.f32 %v2917, 1.442695
    %v2919 = vpow.pop %v2918
    %v2920 = vadd.f32 %v2919, 1.0
    %v2921 = vrcp.pop %v2920
    %v2922 = vmul.f32 1.0, %v2921
    %v2923 = vmul.f32 %v2915, %v2616
    %v2924 = vmul.f32 %v2909, %v2916
    %v2925 = vadd.f32 %v2923, %v2924
    %v2926 = vtanh.pop %v2925
    %v2927 = vmul.f32 %v2922, %v2926
    %v2928 = vpack.c.bf16 %v2927, %v2927
    %2929 = vmatprep.subr.bf16.mxu0 %v1162
    %2930 = vmatpush1.bf16.msra.mxu0 %v1161
    %2931 = vmatprep.subr.bf16.mxu0 %v1166
    %2932 = vmatpush1.bf16.msra.mxu0 %v1165
    %2933 = vmatprep.subr.bf16.mxu0 %v1170
    %2934 = vmatpush1.bf16.msra.mxu0 %v1169
    %2935 = vmatprep.subr.bf16.mxu0 %v1174
    %2936 = vmatpush1.bf16.msra.mxu0 %v1173
    %2937 = vmatprep.subr.bf16.mxu0 %v1178
    %2938 = vmatpush1.bf16.msra.mxu0 %v1177
    %2939 = vmatprep.subr.bf16.mxu0 %v1182
    %2940 = vmatpush1.bf16.msra.mxu0 %v1181
    %2941 = vmatprep.subr.bf16.mxu0 %v1186
    %2942 = vmatpush1.bf16.msra.mxu0 %v1185
    %2943 = vmatprep.subr.bf16.mxu0 %v1190
    %2944 = vmatpush1.bf16.msra.mxu0 %v1189
    %2945 = vmatprep.subr.bf16.mxu0 0
    %2946 = vmatpush1.bf16.msra.mxu0 0
    %2947 = vmatprep.subr.bf16.mxu0 0
    %2948 = vmatpush1.bf16.msra.mxu0 0
    %2949 = vmatprep.subr.bf16.mxu0 0
    %2950 = vmatpush1.bf16.msra.mxu0 0
    %2951 = vmatprep.subr.bf16.mxu0 0
    %2952 = vmatpush1.bf16.msra.mxu0 0
    %2953 = vmatprep.subr.bf16.mxu0 0
    %2954 = vmatpush1.bf16.msra.mxu0 0
    %2955 = vmatprep.subr.bf16.mxu0 0
    %2956 = vmatpush1.bf16.msra.mxu0 0
    %2957 = vmatprep.subr.bf16.mxu0 0
    %2958 = vmatpush1.bf16.msra.mxu0 0
    %2959 = vmatprep.subr.bf16.mxu0 0
    %2960 = vmatpush1.bf16.msra.mxu0 0
    %2961 = vmatprep.mubr.bf16.mxu0 0
    %2962 = vmatmul.mubr.bf16.gmra.mrb[0].mxu0 %v2928
    %v2963 = vpop.f32.mrb[0].mxu0
    %v2964 = vadd.f32 %v1048, %v2963
    %v2965 = vpop.f32.mrb[0].mxu0
    %v2966 = vadd.f32 %v1052, %v2965
    %v2967 = vpop.f32.mrb[0].mxu0
    %v2968 = vpop.f32.mrb[0].mxu0
    %2969 = vdwg.mxu0
    %2970 = vmatprep.subr.bf16.mxu0 %v1164
    %2971 = vmatpush1.bf16.msra.mxu0 %v1163
    %2972 = vmatprep.subr.bf16.mxu0 %v1168
    %2973 = vmatpush1.bf16.msra.mxu0 %v1167
    %2974 = vmatprep.subr.bf16.mxu0 %v1172
    %2975 = vmatpush1.bf16.msra.mxu0 %v1171
    %2976 = vmatprep.subr.bf16.mxu0 %v1176
    %2977 = vmatpush1.bf16.msra.mxu0 %v1175
    %2978 = vmatprep.subr.bf16.mxu0 %v1180
    %2979 = vmatpush1.bf16.msra.mxu0 %v1179
    %2980 = vmatprep.subr.bf16.mxu0 %v1184
    %2981 = vmatpush1.bf16.msra.mxu0 %v1183
    %2982 = vmatprep.subr.bf16.mxu0 %v1188
    %2983 = vmatpush1.bf16.msra.mxu0 %v1187
    %2984 = vmatprep.subr.bf16.mxu0 %v1192
    %2985 = vmatpush1.bf16.msra.mxu0 %v1191
    %2986 = vmatprep.subr.bf16.mxu0 0
    %2987 = vmatpush1.bf16.msra.mxu0 0
    %2988 = vmatprep.subr.bf16.mxu0 0
    %2989 = vmatpush1.bf16.msra.mxu0 0
    %2990 = vmatprep.subr.bf16.mxu0 0
    %2991 = vmatpush1.bf16.msra.mxu0 0
    %2992 = vmatprep.subr.bf16.mxu0 0
    %2993 = vmatpush1.bf16.msra.mxu0 0
    %2994 = vmatprep.subr.bf16.mxu0 0
    %2995 = vmatpush1.bf16.msra.mxu0 0
    %2996 = vmatprep.subr.bf16.mxu0 0
    %2997 = vmatpush1.bf16.msra.mxu0 0
    %2998 = vmatprep.subr.bf16.mxu0 0
    %2999 = vmatpush1.bf16.msra.mxu0 0
    %3000 = vmatprep.subr.bf16.mxu0 0
    %3001 = vmatpush1.bf16.msra.mxu0 0
    %3002 = vmatprep.mubr.bf16.mxu0 0
    %3003 = vmatmul.mubr.bf16.gmra.mrb[0].mxu0 %v2928
    %v3004 = vpop.f32.mrb[0].mxu0
    %v3005 = vadd.f32 %v1056, %v3004
    %v3006 = vpop.f32.mrb[0].mxu0
    %v3007 = vadd.f32 %v1060, %v3006
    %v3008 = vpop.f32.mrb[0].mxu0
    %v3009 = vpop.f32.mrb[0].mxu0
    %3010 = vdwg.mxu0
    %v3011 = vpack.c.bf16 %v2812, %v2812
    %3012 = vmatprep.subr.bf16.mxu0 %v1404
    %3013 = vmatpush1.bf16.msra.mxu0 %v1403
    %3014 = vmatprep.subr.bf16.mxu0 %v1408
    %3015 = vmatpush1.bf16.msra.mxu0 %v1407
    %3016 = vmatprep.subr.bf16.mxu0 %v1412
    %3017 = vmatpush1.bf16.msra.mxu0 %v1411
    %3018 = vmatprep.subr.bf16.mxu0 %v1416
    %3019 = vmatpush1.bf16.msra.mxu0 %v1415
    %3020 = vmatprep.subr.bf16.mxu0 %v1420
    %3021 = vmatpush1.bf16.msra.mxu0 %v1419
    %3022 = vmatprep.subr.bf16.mxu0 %v1424
    %3023 = vmatpush1.bf16.msra.mxu0 %v1423
    %3024 = vmatprep.subr.bf16.mxu0 %v1428
    %3025 = vmatpush1.bf16.msra.mxu0 %v1427
    %3026 = vmatprep.subr.bf16.mxu0 %v1432
    %3027 = vmatpush1.bf16.msra.mxu0 %v1431
    %3028 = vmatprep.subr.bf16.mxu0 0
    %3029 = vmatpush1.bf16.msra.mxu0 0
    %3030 = vmatprep.subr.bf16.mxu0 0
    %3031 = vmatpush1.bf16.msra.mxu0 0
    %3032 = vmatprep.subr.bf16.mxu0 0
    %3033 = vmatpush1.bf16.msra.mxu0 0
    %3034 = vmatprep.subr.bf16.mxu0 0
    %3035 = vmatpush1.bf16.msra.mxu0 0
    %3036 = vmatprep.subr.bf16.mxu0 0
    %3037 = vmatpush1.bf16.msra.mxu0 0
    %3038 = vmatprep.subr.bf16.mxu0 0
    %3039 = vmatpush1.bf16.msra.mxu0 0
    %3040 = vmatprep.subr.bf16.mxu0 0
    %3041 = vmatpush1.bf16.msra.mxu0 0
    %3042 = vmatprep.subr.bf16.mxu0 0
    %3043 = vmatpush1.bf16.msra.mxu0 0
    %3044 = vmatprep.mubr.bf16.mxu0 0
    %3045 = vmatmul.mubr.bf16.gmra.mrb[0].mxu0 %v3011
    %v3046 = vpop.f32.mrb[0].mxu0
    %v3047 = vadd.f32 0.0, %v3046
    %v3048 = vpop.f32.mrb[0].mxu0
    %v3049 = vadd.f32 0.0, %v3048
    %v3050 = vpop.f32.mrb[0].mxu0
    %v3051 = vpop.f32.mrb[0].mxu0
    %3052 = vdwg.mxu0
    %3053 = vmatprep.subr.bf16.mxu0 %v1406
    %3054 = vmatpush1.bf16.msra.mxu0 %v1405
    %3055 = vmatprep.subr.bf16.mxu0 %v1410
    %3056 = vmatpush1.bf16.msra.mxu0 %v1409
    %3057 = vmatprep.subr.bf16.mxu0 %v1414
    %3058 = vmatpush1.bf16.msra.mxu0 %v1413
    %3059 = vmatprep.subr.bf16.mxu0 %v1418
    %3060 = vmatpush1.bf16.msra.mxu0 %v1417
    %3061 = vmatprep.subr.bf16.mxu0 %v1422
    %3062 = vmatpush1.bf16.msra.mxu0 %v1421
    %3063 = vmatprep.subr.bf16.mxu0 %v1426
    %3064 = vmatpush1.bf16.msra.mxu0 %v1425
    %3065 = vmatprep.subr.bf16.mxu0 %v1430
    %3066 = vmatpush1.bf16.msra.mxu0 %v1429
    %3067 = vmatprep.subr.bf16.mxu0 %v1434
    %3068 = vmatpush1.bf16.msra.mxu0 %v1433
    %3069 = vmatprep.subr.bf16.mxu0 0
    %3070 = vmatpush1.bf16.msra.mxu0 0
    %3071 = vmatprep.subr.bf16.mxu0 0
    %3072 = vmatpush1.bf16.msra.mxu0 0
    %3073 = vmatprep.subr.bf16.mxu0 0
    %3074 = vmatpush1.bf16.msra.mxu0 0
    %3075 = vmatprep.subr.bf16.mxu0 0
    %3076 = vmatpush1.bf16.msra.mxu0 0
    %3077 = vmatprep.subr.bf16.mxu0 0
    %3078 = vmatpush1.bf16.msra.mxu0 0
    %3079 = vmatprep.subr.bf16.mxu0 0
    %3080 = vmatpush1.bf16.msra.mxu0 0
    %3081 = vmatprep.subr.bf16.mxu0 0
    %3082 = vmatpush1.bf16.msra.mxu0 0
    %3083 = vmatprep.subr.bf16.mxu0 0
    %3084 = vmatpush1.bf16.msra.mxu0 0
    %3085 = vmatprep.mubr.bf16.mxu0 0
    %3086 = vmatmul.mubr.bf16.gmra.mrb[0].mxu0 %v3011
    %v3087 = vpop.f32.mrb[0].mxu0
    %v3088 = vadd.f32 0.0, %v3087
    %v3089 = vpop.f32.mrb[0].mxu0
    %v3090 = vadd.f32 0.0, %v3089
    %v3091 = vpop.f32.mrb[0].mxu0
    %v3092 = vpop.f32.mrb[0].mxu0
    %3093 = vdwg.mxu0
    %v3094 = vadd.f32 %v2964, %v3047
    %v3095 = vadd.f32 %v2966, %v3049
    %v3096 = vadd.f32 %v3005, %v3088
    %v3097 = vadd.f32 %v3007, %v3090
    %v3098 = vxor.u32 %v3094, 2147483648
    %v3099 = vmul.f32 %v3098, 1.442695
    %v3100 = vpow.pop %v3099
    %v3101 = vadd.f32 %v3100, 1.0
    %v3102 = vrcp.pop %v3101
    %v3103 = vmul.f32 1.0, %v3102
    %v3104 = vxor.u32 %v3095, 2147483648
    %v3105 = vmul.f32 %v3104, 1.442695
    %v3106 = vpow.pop %v3105
    %v3107 = vadd.f32 %v3106, 1.0
    %v3108 = vrcp.pop %v3107
    %v3109 = vmul.f32 1.0, %v3108
    %v3110 = vtanh.pop %v3096
    %v3111 = vxor.u32 %v3097, 2147483648
    %v3112 = vmul.f32 %v3111, 1.442695
    %v3113 = vpow.pop %v3112
    %v3114 = vadd.f32 %v3113, 1.0
    %v3115 = vrcp.pop %v3114
    %v3116 = vmul.f32 1.0, %v3115
    %v3117 = vmul.f32 %v3109, %v2810
    %v3118 = vmul.f32 %v3103, %v3110
    %v3119 = vadd.f32 %v3117, %v3118
    %v3120 = vtanh.pop %v3119
    %v3121 = vmul.f32 %v3116, %v3120
    %3122 = vst [vmem:[#allocation3 + $0x30] sm:$0xff] %v3121
    %v3123 = vld [vmem:[#allocation2 + $0xc0] sm:$0xff]
    %v3124 = vld [vmem:[#allocation2 + $0xc8] sm:$0xff]
    %v3125 = vld [vmem:[#allocation2 + $0xd0] sm:$0xff]
    %v3126 = vld [vmem:[#allocation2 + $0xd8] sm:$0xff]
    %3127 = vmatprep.subr.bf16.mxu0 %v870
    %3128 = vmatpush1.bf16.msra.mxu0 %v869
    %3129 = vmatprep.subr.bf16.mxu0 %v874
    %3130 = vmatpush1.bf16.msra.mxu0 %v873
    %3131 = vmatprep.subr.bf16.mxu0 %v878
    %3132 = vmatpush1.bf16.msra.mxu0 %v877
    %3133 = vmatprep.subr.bf16.mxu0 %v882
    %3134 = vmatpush1.bf16.msra.mxu0 %v881
    %3135 = vmatprep.subr.bf16.mxu0 %v886
    %3136 = vmatpush1.bf16.msra.mxu0 %v885
    %3137 = vmatprep.subr.bf16.mxu0 %v890
    %3138 = vmatpush1.bf16.msra.mxu0 %v889
    %3139 = vmatprep.subr.bf16.mxu0 %v894
    %3140 = vmatpush1.bf16.msra.mxu0 %v893
    %3141 = vmatprep.subr.bf16.mxu0 %v898
    %3142 = vmatpush1.bf16.msra.mxu0 %v897
    %3143 = vmatprep.subr.bf16.mxu0 0
    %3144 = vmatpush1.bf16.msra.mxu0 0
    %3145 = vmatprep.subr.bf16.mxu0 0
    %3146 = vmatpush1.bf16.msra.mxu0 0
    %3147 = vmatprep.subr.bf16.mxu0 0
    %3148 = vmatpush1.bf16.msra.mxu0 0
    %3149 = vmatprep.subr.bf16.mxu0 0
    %3150 = vmatpush1.bf16.msra.mxu0 0
    %3151 = vmatprep.subr.bf16.mxu0 0
    %3152 = vmatpush1.bf16.msra.mxu0 0
    %3153 = vmatprep.subr.bf16.mxu0 0
    %3154 = vmatpush1.bf16.msra.mxu0 0
    %3155 = vmatprep.subr.bf16.mxu0 0
    %3156 = vmatpush1.bf16.msra.mxu0 0
    %3157 = vmatprep.subr.bf16.mxu0 0
    %3158 = vmatpush1.bf16.msra.mxu0 0
    %3159 = vmatprep.mubr.bf16.mxu0 0
    %3160 = vmatmul.mubr.bf16.gmra.mrb[0].mxu0 %v2928
    %v3161 = vpop.f32.mrb[0].mxu0
    %v3162 = vadd.f32 0.0, %v3161
    %v3163 = vpop.f32.mrb[0].mxu0
    %v3164 = vadd.f32 0.0, %v3163
    %v3165 = vpop.f32.mrb[0].mxu0
    %v3166 = vpop.f32.mrb[0].mxu0
    %3167 = vdwg.mxu0
    %3168 = vmatprep.subr.bf16.mxu0 %v872
    %3169 = vmatpush1.bf16.msra.mxu0 %v871
    %3170 = vmatprep.subr.bf16.mxu0 %v876
    %3171 = vmatpush1.bf16.msra.mxu0 %v875
    %3172 = vmatprep.subr.bf16.mxu0 %v880
    %3173 = vmatpush1.bf16.msra.mxu0 %v879
    %3174 = vmatprep.subr.bf16.mxu0 %v884
    %3175 = vmatpush1.bf16.msra.mxu0 %v883
    %3176 = vmatprep.subr.bf16.mxu0 %v888
    %3177 = vmatpush1.bf16.msra.mxu0 %v887
    %3178 = vmatprep.subr.bf16.mxu0 %v892
    %3179 = vmatpush1.bf16.msra.mxu0 %v891
    %3180 = vmatprep.subr.bf16.mxu0 %v896
    %3181 = vmatpush1.bf16.msra.mxu0 %v895
    %3182 = vmatprep.subr.bf16.mxu0 %v900
    %3183 = vmatpush1.bf16.msra.mxu0 %v899
    %3184 = vmatprep.subr.bf16.mxu0 0
    %3185 = vmatpush1.bf16.msra.mxu0 0
    %3186 = vmatprep.subr.bf16.mxu0 0
    %3187 = vmatpush1.bf16.msra.mxu0 0
    %3188 = vmatprep.subr.bf16.mxu0 0
    %3189 = vmatpush1.bf16.msra.mxu0 0
    %3190 = vmatprep.subr.bf16.mxu0 0
    %3191 = vmatpush1.bf16.msra.mxu0 0
    %3192 = vmatprep.subr.bf16.mxu0 0
    %3193 = vmatpush1.bf16.msra.mxu0 0
    %3194 = vmatprep.subr.bf16.mxu0 0
    %3195 = vmatpush1.bf16.msra.mxu0 0
    %3196 = vmatprep.subr.bf16.mxu0 0
    %3197 = vmatpush1.bf16.msra.mxu0 0
    %3198 = vmatprep.subr.bf16.mxu0 0
    %3199 = vmatpush1.bf16.msra.mxu0 0
    %3200 = vmatprep.mubr.bf16.mxu0 0
    %3201 = vmatmul.mubr.bf16.gmra.mrb[0].mxu0 %v2928
    %v3202 = vpop.f32.mrb[0].mxu0
    %v3203 = vadd.f32 0.0, %v3202
    %v3204 = vpop.f32.mrb[0].mxu0
    %v3205 = vadd.f32 0.0, %v3204
    %v3206 = vpop.f32.mrb[0].mxu0
    %v3207 = vpop.f32.mrb[0].mxu0
    %3208 = vdwg.mxu0
    %v3209 = vadd.f32 %v3123, %v3162
    %v3210 = vadd.f32 %v3124, %v3164
    %v3211 = vadd.f32 %v3125, %v3203
    %v3212 = vadd.f32 %v3126, %v3205
    %v3213 = vxor.u32 %v3209, 2147483648
    %v3214 = vmul.f32 %v3213, 1.442695
    %v3215 = vpow.pop %v3214
    %v3216 = vadd.f32 %v3215, 1.0
    %v3217 = vrcp.pop %v3216
    %v3218 = vmul.f32 1.0, %v3217
    %v3219 = vxor.u32 %v3210, 2147483648
    %v3220 = vmul.f32 %v3219, 1.442695
    %v3221 = vpow.pop %v3220
    %v3222 = vadd.f32 %v3221, 1.0
    %v3223 = vrcp.pop %v3222
    %v3224 = vmul.f32 1.0, %v3223
    %v3225 = vtanh.pop %v3211
    %v3226 = vxor.u32 %v3212, 2147483648
    %v3227 = vmul.f32 %v3226, 1.442695
    %v3228 = vpow.pop %v3227
    %v3229 = vadd.f32 %v3228, 1.0
    %v3230 = vrcp.pop %v3229
    %v3231 = vmul.f32 1.0, %v3230
    %v3232 = vmul.f32 %v3224, %v2925
    %v3233 = vmul.f32 %v3218, %v3225
    %v3234 = vadd.f32 %v3232, %v3233
    %v3235 = vtanh.pop %v3234
    %v3236 = vmul.f32 %v3231, %v3235
    %v3237 = vpack.c.bf16 %v3236, %v3236
    %3238 = vmatprep.subr.bf16.mxu0 %v1162
    %3239 = vmatpush1.bf16.msra.mxu0 %v1161
    %3240 = vmatprep.subr.bf16.mxu0 %v1166
    %3241 = vmatpush1.bf16.msra.mxu0 %v1165
    %3242 = vmatprep.subr.bf16.mxu0 %v1170
    %3243 = vmatpush1.bf16.msra.mxu0 %v1169
    %3244 = vmatprep.subr.bf16.mxu0 %v1174
    %3245 = vmatpush1.bf16.msra.mxu0 %v1173
    %3246 = vmatprep.subr.bf16.mxu0 %v1178
    %3247 = vmatpush1.bf16.msra.mxu0 %v1177
    %3248 = vmatprep.subr.bf16.mxu0 %v1182
    %3249 = vmatpush1.bf16.msra.mxu0 %v1181
    %3250 = vmatprep.subr.bf16.mxu0 %v1186
    %3251 = vmatpush1.bf16.msra.mxu0 %v1185
    %3252 = vmatprep.subr.bf16.mxu0 %v1190
    %3253 = vmatpush1.bf16.msra.mxu0 %v1189
    %3254 = vmatprep.subr.bf16.mxu0 0
    %3255 = vmatpush1.bf16.msra.mxu0 0
    %3256 = vmatprep.subr.bf16.mxu0 0
    %3257 = vmatpush1.bf16.msra.mxu0 0
    %3258 = vmatprep.subr.bf16.mxu0 0
    %3259 = vmatpush1.bf16.msra.mxu0 0
    %3260 = vmatprep.subr.bf16.mxu0 0
    %3261 = vmatpush1.bf16.msra.mxu0 0
    %3262 = vmatprep.subr.bf16.mxu0 0
    %3263 = vmatpush1.bf16.msra.mxu0 0
    %3264 = vmatprep.subr.bf16.mxu0 0
    %3265 = vmatpush1.bf16.msra.mxu0 0
    %3266 = vmatprep.subr.bf16.mxu0 0
    %3267 = vmatpush1.bf16.msra.mxu0 0
    %3268 = vmatprep.subr.bf16.mxu0 0
    %3269 = vmatpush1.bf16.msra.mxu0 0
    %3270 = vmatprep.mubr.bf16.mxu0 0
    %3271 = vmatmul.mubr.bf16.gmra.mrb[0].mxu0 %v3237
    %v3272 = vpop.f32.mrb[0].mxu0
    %v3273 = vadd.f32 %v1048, %v3272
    %v3274 = vpop.f32.mrb[0].mxu0
    %v3275 = vadd.f32 %v1052, %v3274
    %v3276 = vpop.f32.mrb[0].mxu0
    %v3277 = vpop.f32.mrb[0].mxu0
    %3278 = vdwg.mxu0
    %3279 = vmatprep.subr.bf16.mxu0 %v1164
    %3280 = vmatpush1.bf16.msra.mxu0 %v1163
    %3281 = vmatprep.subr.bf16.mxu0 %v1168
    %3282 = vmatpush1.bf16.msra.mxu0 %v1167
    %3283 = vmatprep.subr.bf16.mxu0 %v1172
    %3284 = vmatpush1.bf16.msra.mxu0 %v1171
    %3285 = vmatprep.subr.bf16.mxu0 %v1176
    %3286 = vmatpush1.bf16.msra.mxu0 %v1175
    %3287 = vmatprep.subr.bf16.mxu0 %v1180
    %3288 = vmatpush1.bf16.msra.mxu0 %v1179
    %3289 = vmatprep.subr.bf16.mxu0 %v1184
    %3290 = vmatpush1.bf16.msra.mxu0 %v1183
    %3291 = vmatprep.subr.bf16.mxu0 %v1188
    %3292 = vmatpush1.bf16.msra.mxu0 %v1187
    %3293 = vmatprep.subr.bf16.mxu0 %v1192
    %3294 = vmatpush1.bf16.msra.mxu0 %v1191
    %3295 = vmatprep.subr.bf16.mxu0 0
    %3296 = vmatpush1.bf16.msra.mxu0 0
    %3297 = vmatprep.subr.bf16.mxu0 0
    %3298 = vmatpush1.bf16.msra.mxu0 0
    %3299 = vmatprep.subr.bf16.mxu0 0
    %3300 = vmatpush1.bf16.msra.mxu0 0
    %3301 = vmatprep.subr.bf16.mxu0 0
    %3302 = vmatpush1.bf16.msra.mxu0 0
    %3303 = vmatprep.subr.bf16.mxu0 0
    %3304 = vmatpush1.bf16.msra.mxu0 0
    %3305 = vmatprep.subr.bf16.mxu0 0
    %3306 = vmatpush1.bf16.msra.mxu0 0
    %3307 = vmatprep.subr.bf16.mxu0 0
    %3308 = vmatpush1.bf16.msra.mxu0 0
    %3309 = vmatprep.subr.bf16.mxu0 0
    %3310 = vmatpush1.bf16.msra.mxu0 0
    %3311 = vmatprep.mubr.bf16.mxu0 0
    %3312 = vmatmul.mubr.bf16.gmra.mrb[0].mxu0 %v3237
    %v3313 = vpop.f32.mrb[0].mxu0
    %v3314 = vadd.f32 %v1056, %v3313
    %v3315 = vpop.f32.mrb[0].mxu0
    %v3316 = vadd.f32 %v1060, %v3315
    %v3317 = vpop.f32.mrb[0].mxu0
    %v3318 = vpop.f32.mrb[0].mxu0
    %3319 = vdwg.mxu0
    %v3320 = vpack.c.bf16 %v3121, %v3121
    %3321 = vmatprep.subr.bf16.mxu0 %v1404
    %3322 = vmatpush1.bf16.msra.mxu0 %v1403
    %3323 = vmatprep.subr.bf16.mxu0 %v1408
    %3324 = vmatpush1.bf16.msra.mxu0 %v1407
    %3325 = vmatprep.subr.bf16.mxu0 %v1412
    %3326 = vmatpush1.bf16.msra.mxu0 %v1411
    %3327 = vmatprep.subr.bf16.mxu0 %v1416
    %3328 = vmatpush1.bf16.msra.mxu0 %v1415
    %3329 = vmatprep.subr.bf16.mxu0 %v1420
    %3330 = vmatpush1.bf16.msra.mxu0 %v1419
    %3331 = vmatprep.subr.bf16.mxu0 %v1424
    %3332 = vmatpush1.bf16.msra.mxu0 %v1423
    %3333 = vmatprep.subr.bf16.mxu0 %v1428
    %3334 = vmatpush1.bf16.msra.mxu0 %v1427
    %3335 = vmatprep.subr.bf16.mxu0 %v1432
    %3336 = vmatpush1.bf16.msra.mxu0 %v1431
    %3337 = vmatprep.subr.bf16.mxu0 0
    %3338 = vmatpush1.bf16.msra.mxu0 0
    %3339 = vmatprep.subr.bf16.mxu0 0
    %3340 = vmatpush1.bf16.msra.mxu0 0
    %3341 = vmatprep.subr.bf16.mxu0 0
    %3342 = vmatpush1.bf16.msra.mxu0 0
    %3343 = vmatprep.subr.bf16.mxu0 0
    %3344 = vmatpush1.bf16.msra.mxu0 0
    %3345 = vmatprep.subr.bf16.mxu0 0
    %3346 = vmatpush1.bf16.msra.mxu0 0
    %3347 = vmatprep.subr.bf16.mxu0 0
    %3348 = vmatpush1.bf16.msra.mxu0 0
    %3349 = vmatprep.subr.bf16.mxu0 0
    %3350 = vmatpush1.bf16.msra.mxu0 0
    %3351 = vmatprep.subr.bf16.mxu0 0
    %3352 = vmatpush1.bf16.msra.mxu0 0
    %3353 = vmatprep.mubr.bf16.mxu0 0
    %3354 = vmatmul.mubr.bf16.gmra.mrb[0].mxu0 %v3320
    %v3355 = vpop.f32.mrb[0].mxu0
    %v3356 = vadd.f32 0.0, %v3355
    %v3357 = vpop.f32.mrb[0].mxu0
    %v3358 = vadd.f32 0.0, %v3357
    %v3359 = vpop.f32.mrb[0].mxu0
    %v3360 = vpop.f32.mrb[0].mxu0
    %3361 = vdwg.mxu0
    %3362 = vmatprep.subr.bf16.mxu0 %v1406
    %3363 = vmatpush1.bf16.msra.mxu0 %v1405
    %3364 = vmatprep.subr.bf16.mxu0 %v1410
    %3365 = vmatpush1.bf16.msra.mxu0 %v1409
    %3366 = vmatprep.subr.bf16.mxu0 %v1414
    %3367 = vmatpush1.bf16.msra.mxu0 %v1413
    %3368 = vmatprep.subr.bf16.mxu0 %v1418
    %3369 = vmatpush1.bf16.msra.mxu0 %v1417
    %3370 = vmatprep.subr.bf16.mxu0 %v1422
    %3371 = vmatpush1.bf16.msra.mxu0 %v1421
    %3372 = vmatprep.subr.bf16.mxu0 %v1426
    %3373 = vmatpush1.bf16.msra.mxu0 %v1425
    %3374 = vmatprep.subr.bf16.mxu0 %v1430
    %3375 = vmatpush1.bf16.msra.mxu0 %v1429
    %3376 = vmatprep.subr.bf16.mxu0 %v1434
    %3377 = vmatpush1.bf16.msra.mxu0 %v1433
    %3378 = vmatprep.subr.bf16.mxu0 0
    %3379 = vmatpush1.bf16.msra.mxu0 0
    %3380 = vmatprep.subr.bf16.mxu0 0
    %3381 = vmatpush1.bf16.msra.mxu0 0
    %3382 = vmatprep.subr.bf16.mxu0 0
    %3383 = vmatpush1.bf16.msra.mxu0 0
    %3384 = vmatprep.subr.bf16.mxu0 0
    %3385 = vmatpush1.bf16.msra.mxu0 0
    %3386 = vmatprep.subr.bf16.mxu0 0
    %3387 = vmatpush1.bf16.msra.mxu0 0
    %3388 = vmatprep.subr.bf16.mxu0 0
    %3389 = vmatpush1.bf16.msra.mxu0 0
    %3390 = vmatprep.subr.bf16.mxu0 0
    %3391 = vmatpush1.bf16.msra.mxu0 0
    %3392 = vmatprep.subr.bf16.mxu0 0
    %3393 = vmatpush1.bf16.msra.mxu0 0
    %3394 = vmatprep.mubr.bf16.mxu0 0
    %3395 = vmatmul.mubr.bf16.gmra.mrb[0].mxu0 %v3320
    %v3396 = vpop.f32.mrb[0].mxu0
    %v3397 = vadd.f32 0.0, %v3396
    %v3398 = vpop.f32.mrb[0].mxu0
    %v3399 = vadd.f32 0.0, %v3398
    %v3400 = vpop.f32.mrb[0].mxu0
    %v3401 = vpop.f32.mrb[0].mxu0
    %3402 = vdwg.mxu0
    %v3403 = vadd.f32 %v3273, %v3356
    %v3404 = vadd.f32 %v3275, %v3358
    %v3405 = vadd.f32 %v3314, %v3397
    %v3406 = vadd.f32 %v3316, %v3399
    %v3407 = vxor.u32 %v3403, 2147483648
    %v3408 = vmul.f32 %v3407, 1.442695
    %v3409 = vpow.pop %v3408
    %v3410 = vadd.f32 %v3409, 1.0
    %v3411 = vrcp.pop %v3410
    %v3412 = vmul.f32 1.0, %v3411
    %v3413 = vxor.u32 %v3404, 2147483648
    %v3414 = vmul.f32 %v3413, 1.442695
    %v3415 = vpow.pop %v3414
    %v3416 = vadd.f32 %v3415, 1.0
    %v3417 = vrcp.pop %v3416
    %v3418 = vmul.f32 1.0, %v3417
    %v3419 = vtanh.pop %v3405
    %v3420 = vxor.u32 %v3406, 2147483648
    %v3421 = vmul.f32 %v3420, 1.442695
    %v3422 = vpow.pop %v3421
    %v3423 = vadd.f32 %v3422, 1.0
    %v3424 = vrcp.pop %v3423
    %v3425 = vmul.f32 1.0, %v3424
    %v3426 = vmul.f32 %v3418, %v3119
    %v3427 = vmul.f32 %v3412, %v3419
    %v3428 = vadd.f32 %v3426, %v3427
    %v3429 = vtanh.pop %v3428
    %v3430 = vmul.f32 %v3425, %v3429
    %3431 = vst [vmem:[#allocation3 + $0x38] sm:$0xff] %v3430
    %v3432 = vld [vmem:[#allocation2 + $0xe0] sm:$0xff]
    %v3433 = vld [vmem:[#allocation2 + $0xe8] sm:$0xff]
    %v3434 = vld [vmem:[#allocation2 + $0xf0] sm:$0xff]
    %v3435 = vld [vmem:[#allocation2 + $0xf8] sm:$0xff]
    %3436 = vmatprep.subr.bf16.mxu0 %v870
    %3437 = vmatpush1.bf16.msra.mxu0 %v869
    %3438 = vmatprep.subr.bf16.mxu0 %v874
    %3439 = vmatpush1.bf16.msra.mxu0 %v873
    %3440 = vmatprep.subr.bf16.mxu0 %v878
    %3441 = vmatpush1.bf16.msra.mxu0 %v877
    %3442 = vmatprep.subr.bf16.mxu0 %v882
    %3443 = vmatpush1.bf16.msra.mxu0 %v881
    %3444 = vmatprep.subr.bf16.mxu0 %v886
    %3445 = vmatpush1.bf16.msra.mxu0 %v885
    %3446 = vmatprep.subr.bf16.mxu0 %v890
    %3447 = vmatpush1.bf16.msra.mxu0 %v889
    %3448 = vmatprep.subr.bf16.mxu0 %v894
    %3449 = vmatpush1.bf16.msra.mxu0 %v893
    %3450 = vmatprep.subr.bf16.mxu0 %v898
    %3451 = vmatpush1.bf16.msra.mxu0 %v897
    %3452 = vmatprep.subr.bf16.mxu0 0
    %3453 = vmatpush1.bf16.msra.mxu0 0
    %3454 = vmatprep.subr.bf16.mxu0 0
    %3455 = vmatpush1.bf16.msra.mxu0 0
    %3456 = vmatprep.subr.bf16.mxu0 0
    %3457 = vmatpush1.bf16.msra.mxu0 0
    %3458 = vmatprep.subr.bf16.mxu0 0
    %3459 = vmatpush1.bf16.msra.mxu0 0
    %3460 = vmatprep.subr.bf16.mxu0 0
    %3461 = vmatpush1.bf16.msra.mxu0 0
    %3462 = vmatprep.subr.bf16.mxu0 0
    %3463 = vmatpush1.bf16.msra.mxu0 0
    %3464 = vmatprep.subr.bf16.mxu0 0
    %3465 = vmatpush1.bf16.msra.mxu0 0
    %3466 = vmatprep.subr.bf16.mxu0 0
    %3467 = vmatpush1.bf16.msra.mxu0 0
    %3468 = vmatprep.mubr.bf16.mxu0 0
    %3469 = vmatmul.mubr.bf16.gmra.mrb[0].mxu0 %v3237
    %v3470 = vpop.f32.mrb[0].mxu0
    %v3471 = vadd.f32 0.0, %v3470
    %v3472 = vpop.f32.mrb[0].mxu0
    %v3473 = vadd.f32 0.0, %v3472
    %v3474 = vpop.f32.mrb[0].mxu0
    %v3475 = vpop.f32.mrb[0].mxu0
    %3476 = vdwg.mxu0
    %3477 = vmatprep.subr.bf16.mxu0 %v872
    %3478 = vmatpush1.bf16.msra.mxu0 %v871
    %3479 = vmatprep.subr.bf16.mxu0 %v876
    %3480 = vmatpush1.bf16.msra.mxu0 %v875
    %3481 = vmatprep.subr.bf16.mxu0 %v880
    %3482 = vmatpush1.bf16.msra.mxu0 %v879
    %3483 = vmatprep.subr.bf16.mxu0 %v884
    %3484 = vmatpush1.bf16.msra.mxu0 %v883
    %3485 = vmatprep.subr.bf16.mxu0 %v888
    %3486 = vmatpush1.bf16.msra.mxu0 %v887
    %3487 = vmatprep.subr.bf16.mxu0 %v892
    %3488 = vmatpush1.bf16.msra.mxu0 %v891
    %3489 = vmatprep.subr.bf16.mxu0 %v896
    %3490 = vmatpush1.bf16.msra.mxu0 %v895
    %3491 = vmatprep.subr.bf16.mxu0 %v900
    %3492 = vmatpush1.bf16.msra.mxu0 %v899
    %3493 = vmatprep.subr.bf16.mxu0 0
    %3494 = vmatpush1.bf16.msra.mxu0 0
    %3495 = vmatprep.subr.bf16.mxu0 0
    %3496 = vmatpush1.bf16.msra.mxu0 0
    %3497 = vmatprep.subr.bf16.mxu0 0
    %3498 = vmatpush1.bf16.msra.mxu0 0
    %3499 = vmatprep.subr.bf16.mxu0 0
    %3500 = vmatpush1.bf16.msra.mxu0 0
    %3501 = vmatprep.subr.bf16.mxu0 0
    %3502 = vmatpush1.bf16.msra.mxu0 0
    %3503 = vmatprep.subr.bf16.mxu0 0
    %3504 = vmatpush1.bf16.msra.mxu0 0
    %3505 = vmatprep.subr.bf16.mxu0 0
    %3506 = vmatpush1.bf16.msra.mxu0 0
    %3507 = vmatprep.subr.bf16.mxu0 0
    %3508 = vmatpush1.bf16.msra.mxu0 0
    %3509 = vmatprep.mubr.bf16.mxu0 0
    %3510 = vmatmul.mubr.bf16.gmra.mrb[0].mxu0 %v3237
    %v3511 = vpop.f32.mrb[0].mxu0
    %v3512 = vadd.f32 0.0, %v3511
    %v3513 = vpop.f32.mrb[0].mxu0
    %v3514 = vadd.f32 0.0, %v3513
    %v3515 = vpop.f32.mrb[0].mxu0
    %v3516 = vpop.f32.mrb[0].mxu0
    %3517 = vdwg.mxu0
    %v3518 = vadd.f32 %v3432, %v3471
    %v3519 = vadd.f32 %v3433, %v3473
    %v3520 = vadd.f32 %v3434, %v3512
    %v3521 = vadd.f32 %v3435, %v3514
    %v3522 = vxor.u32 %v3518, 2147483648
    %v3523 = vmul.f32 %v3522, 1.442695
    %v3524 = vpow.pop %v3523
    %v3525 = vadd.f32 %v3524, 1.0
    %v3526 = vrcp.pop %v3525
    %v3527 = vmul.f32 1.0, %v3526
    %v3528 = vxor.u32 %v3519, 2147483648
    %v3529 = vmul.f32 %v3528, 1.442695
    %v3530 = vpow.pop %v3529
    %v3531 = vadd.f32 %v3530, 1.0
    %v3532 = vrcp.pop %v3531
    %v3533 = vmul.f32 1.0, %v3532
    %v3534 = vtanh.pop %v3520
    %v3535 = vxor.u32 %v3521, 2147483648
    %v3536 = vmul.f32 %v3535, 1.442695
    %v3537 = vpow.pop %v3536
    %v3538 = vadd.f32 %v3537, 1.0
    %v3539 = vrcp.pop %v3538
    %v3540 = vmul.f32 1.0, %v3539
    %v3541 = vmul.f32 %v3533, %v3234
    %v3542 = vmul.f32 %v3527, %v3534
    %v3543 = vadd.f32 %v3541, %v3542
    %v3544 = vtanh.pop %v3543
    %v3545 = vmul.f32 %v3540, %v3544
    %v3546 = vpack.c.bf16 %v3545, %v3545
    %3547 = vmatprep.subr.bf16.mxu0 %v1162
    %3548 = vmatpush1.bf16.msra.mxu0 %v1161
    %3549 = vmatprep.subr.bf16.mxu0 %v1166
    %3550 = vmatpush1.bf16.msra.mxu0 %v1165
    %3551 = vmatprep.subr.bf16.mxu0 %v1170
    %3552 = vmatpush1.bf16.msra.mxu0 %v1169
    %3553 = vmatprep.subr.bf16.mxu0 %v1174
    %3554 = vmatpush1.bf16.msra.mxu0 %v1173
    %3555 = vmatprep.subr.bf16.mxu0 %v1178
    %3556 = vmatpush1.bf16.msra.mxu0 %v1177
    %3557 = vmatprep.subr.bf16.mxu0 %v1182
    %3558 = vmatpush1.bf16.msra.mxu0 %v1181
    %3559 = vmatprep.subr.bf16.mxu0 %v1186
    %3560 = vmatpush1.bf16.msra.mxu0 %v1185
    %3561 = vmatprep.subr.bf16.mxu0 %v1190
    %3562 = vmatpush1.bf16.msra.mxu0 %v1189
    %3563 = vmatprep.subr.bf16.mxu0 0
    %3564 = vmatpush1.bf16.msra.mxu0 0
    %3565 = vmatprep.subr.bf16.mxu0 0
    %3566 = vmatpush1.bf16.msra.mxu0 0
    %3567 = vmatprep.subr.bf16.mxu0 0
    %3568 = vmatpush1.bf16.msra.mxu0 0
    %3569 = vmatprep.subr.bf16.mxu0 0
    %3570 = vmatpush1.bf16.msra.mxu0 0
    %3571 = vmatprep.subr.bf16.mxu0 0
    %3572 = vmatpush1.bf16.msra.mxu0 0
    %3573 = vmatprep.subr.bf16.mxu0 0
    %3574 = vmatpush1.bf16.msra.mxu0 0
    %3575 = vmatprep.subr.bf16.mxu0 0
    %3576 = vmatpush1.bf16.msra.mxu0 0
    %3577 = vmatprep.subr.bf16.mxu0 0
    %3578 = vmatpush1.bf16.msra.mxu0 0
    %3579 = vmatprep.mubr.bf16.mxu0 0
    %3580 = vmatmul.mubr.bf16.gmra.mrb[0].mxu0 %v3546
    %v3581 = vpop.f32.mrb[0].mxu0
    %v3582 = vadd.f32 %v1048, %v3581
    %v3583 = vpop.f32.mrb[0].mxu0
    %v3584 = vadd.f32 %v1052, %v3583
    %v3585 = vpop.f32.mrb[0].mxu0
    %v3586 = vpop.f32.mrb[0].mxu0
    %3587 = vdwg.mxu0
    %3588 = vmatprep.subr.bf16.mxu0 %v1164
    %3589 = vmatpush1.bf16.msra.mxu0 %v1163
    %3590 = vmatprep.subr.bf16.mxu0 %v1168
    %3591 = vmatpush1.bf16.msra.mxu0 %v1167
    %3592 = vmatprep.subr.bf16.mxu0 %v1172
    %3593 = vmatpush1.bf16.msra.mxu0 %v1171
    %3594 = vmatprep.subr.bf16.mxu0 %v1176
    %3595 = vmatpush1.bf16.msra.mxu0 %v1175
    %3596 = vmatprep.subr.bf16.mxu0 %v1180
    %3597 = vmatpush1.bf16.msra.mxu0 %v1179
    %3598 = vmatprep.subr.bf16.mxu0 %v1184
    %3599 = vmatpush1.bf16.msra.mxu0 %v1183
    %3600 = vmatprep.subr.bf16.mxu0 %v1188
    %3601 = vmatpush1.bf16.msra.mxu0 %v1187
    %3602 = vmatprep.subr.bf16.mxu0 %v1192
    %3603 = vmatpush1.bf16.msra.mxu0 %v1191
    %3604 = vmatprep.subr.bf16.mxu0 0
    %3605 = vmatpush1.bf16.msra.mxu0 0
    %3606 = vmatprep.subr.bf16.mxu0 0
    %3607 = vmatpush1.bf16.msra.mxu0 0
    %3608 = vmatprep.subr.bf16.mxu0 0
    %3609 = vmatpush1.bf16.msra.mxu0 0
    %3610 = vmatprep.subr.bf16.mxu0 0
    %3611 = vmatpush1.bf16.msra.mxu0 0
    %3612 = vmatprep.subr.bf16.mxu0 0
    %3613 = vmatpush1.bf16.msra.mxu0 0
    %3614 = vmatprep.subr.bf16.mxu0 0
    %3615 = vmatpush1.bf16.msra.mxu0 0
    %3616 = vmatprep.subr.bf16.mxu0 0
    %3617 = vmatpush1.bf16.msra.mxu0 0
    %3618 = vmatprep.subr.bf16.mxu0 0
    %3619 = vmatpush1.bf16.msra.mxu0 0
    %3620 = vmatprep.mubr.bf16.mxu0 0
    %3621 = vmatmul.mubr.bf16.gmra.mrb[0].mxu0 %v3546
    %v3622 = vpop.f32.mrb[0].mxu0
    %v3623 = vadd.f32 %v1056, %v3622
    %v3624 = vpop.f32.mrb[0].mxu0
    %v3625 = vadd.f32 %v1060, %v3624
    %v3626 = vpop.f32.mrb[0].mxu0
    %v3627 = vpop.f32.mrb[0].mxu0
    %3628 = vdwg.mxu0
    %v3629 = vpack.c.bf16 %v3430, %v3430
    %3630 = vmatprep.subr.bf16.mxu0 %v1404
    %3631 = vmatpush1.bf16.msra.mxu0 %v1403
    %3632 = vmatprep.subr.bf16.mxu0 %v1408
    %3633 = vmatpush1.bf16.msra.mxu0 %v1407
    %3634 = vmatprep.subr.bf16.mxu0 %v1412
    %3635 = vmatpush1.bf16.msra.mxu0 %v1411
    %3636 = vmatprep.subr.bf16.mxu0 %v1416
    %3637 = vmatpush1.bf16.msra.mxu0 %v1415
    %3638 = vmatprep.subr.bf16.mxu0 %v1420
    %3639 = vmatpush1.bf16.msra.mxu0 %v1419
    %3640 = vmatprep.subr.bf16.mxu0 %v1424
    %3641 = vmatpush1.bf16.msra.mxu0 %v1423
    %3642 = vmatprep.subr.bf16.mxu0 %v1428
    %3643 = vmatpush1.bf16.msra.mxu0 %v1427
    %3644 = vmatprep.subr.bf16.mxu0 %v1432
    %3645 = vmatpush1.bf16.msra.mxu0 %v1431
    %3646 = vmatprep.subr.bf16.mxu0 0
    %3647 = vmatpush1.bf16.msra.mxu0 0
    %3648 = vmatprep.subr.bf16.mxu0 0
    %3649 = vmatpush1.bf16.msra.mxu0 0
    %3650 = vmatprep.subr.bf16.mxu0 0
    %3651 = vmatpush1.bf16.msra.mxu0 0
    %3652 = vmatprep.subr.bf16.mxu0 0
    %3653 = vmatpush1.bf16.msra.mxu0 0
    %3654 = vmatprep.subr.bf16.mxu0 0
    %3655 = vmatpush1.bf16.msra.mxu0 0
    %3656 = vmatprep.subr.bf16.mxu0 0
    %3657 = vmatpush1.bf16.msra.mxu0 0
    %3658 = vmatprep.subr.bf16.mxu0 0
    %3659 = vmatpush1.bf16.msra.mxu0 0
    %3660 = vmatprep.subr.bf16.mxu0 0
    %3661 = vmatpush1.bf16.msra.mxu0 0
    %3662 = vmatprep.mubr.bf16.mxu0 0
    %3663 = vmatmul.mubr.bf16.gmra.mrb[0].mxu0 %v3629
    %v3664 = vpop.f32.mrb[0].mxu0
    %v3665 = vadd.f32 0.0, %v3664
    %v3666 = vpop.f32.mrb[0].mxu0
    %v3667 = vadd.f32 0.0, %v3666
    %v3668 = vpop.f32.mrb[0].mxu0
    %v3669 = vpop.f32.mrb[0].mxu0
    %3670 = vdwg.mxu0
    %3671 = vmatprep.subr.bf16.mxu0 %v1406
    %3672 = vmatpush1.bf16.msra.mxu0 %v1405
    %3673 = vmatprep.subr.bf16.mxu0 %v1410
    %3674 = vmatpush1.bf16.msra.mxu0 %v1409
    %3675 = vmatprep.subr.bf16.mxu0 %v1414
    %3676 = vmatpush1.bf16.msra.mxu0 %v1413
    %3677 = vmatprep.subr.bf16.mxu0 %v1418
    %3678 = vmatpush1.bf16.msra.mxu0 %v1417
    %3679 = vmatprep.subr.bf16.mxu0 %v1422
    %3680 = vmatpush1.bf16.msra.mxu0 %v1421
    %3681 = vmatprep.subr.bf16.mxu0 %v1426
    %3682 = vmatpush1.bf16.msra.mxu0 %v1425
    %3683 = vmatprep.subr.bf16.mxu0 %v1430
    %3684 = vmatpush1.bf16.msra.mxu0 %v1429
    %3685 = vmatprep.subr.bf16.mxu0 %v1434
    %3686 = vmatpush1.bf16.msra.mxu0 %v1433
    %3687 = vmatprep.subr.bf16.mxu0 0
    %3688 = vmatpush1.bf16.msra.mxu0 0
    %3689 = vmatprep.subr.bf16.mxu0 0
    %3690 = vmatpush1.bf16.msra.mxu0 0
    %3691 = vmatprep.subr.bf16.mxu0 0
    %3692 = vmatpush1.bf16.msra.mxu0 0
    %3693 = vmatprep.subr.bf16.mxu0 0
    %3694 = vmatpush1.bf16.msra.mxu0 0
    %3695 = vmatprep.subr.bf16.mxu0 0
    %3696 = vmatpush1.bf16.msra.mxu0 0
    %3697 = vmatprep.subr.bf16.mxu0 0
    %3698 = vmatpush1.bf16.msra.mxu0 0
    %3699 = vmatprep.subr.bf16.mxu0 0
    %3700 = vmatpush1.bf16.msra.mxu0 0
    %3701 = vmatprep.subr.bf16.mxu0 0
    %3702 = vmatpush1.bf16.msra.mxu0 0
    %3703 = vmatprep.mubr.bf16.mxu0 0
    %3704 = vmatmul.mubr.bf16.gmra.mrb[0].mxu0 %v3629
    %v3705 = vpop.f32.mrb[0].mxu0
    %v3706 = vadd.f32 0.0, %v3705
    %v3707 = vpop.f32.mrb[0].mxu0
    %v3708 = vadd.f32 0.0, %v3707
    %v3709 = vpop.f32.mrb[0].mxu0
    %v3710 = vpop.f32.mrb[0].mxu0
    %3711 = vdwg.mxu0
    %v3712 = vadd.f32 %v3582, %v3665
    %v3713 = vadd.f32 %v3584, %v3667
    %v3714 = vadd.f32 %v3623, %v3706
    %v3715 = vadd.f32 %v3625, %v3708
    %v3716 = vxor.u32 %v3712, 2147483648
    %v3717 = vmul.f32 %v3716, 1.442695
    %v3718 = vpow.pop %v3717
    %v3719 = vadd.f32 %v3718, 1.0
    %v3720 = vrcp.pop %v3719
    %v3721 = vmul.f32 1.0, %v3720
    %v3722 = vxor.u32 %v3713, 2147483648
    %v3723 = vmul.f32 %v3722, 1.442695
    %v3724 = vpow.pop %v3723
    %v3725 = vadd.f32 %v3724, 1.0
    %v3726 = vrcp.pop %v3725
    %v3727 = vmul.f32 1.0, %v3726
    %v3728 = vtanh.pop %v3714
    %v3729 = vxor.u32 %v3715, 2147483648
    %v3730 = vmul.f32 %v3729, 1.442695
    %v3731 = vpow.pop %v3730
    %v3732 = vadd.f32 %v3731, 1.0
    %v3733 = vrcp.pop %v3732
    %v3734 = vmul.f32 1.0, %v3733
    %v3735 = vmul.f32 %v3727, %v3428
    %v3736 = vmul.f32 %v3721, %v3728
    %v3737 = vadd.f32 %v3735, %v3736
    %v3738 = vtanh.pop %v3737
    %v3739 = vmul.f32 %v3734, %v3738
    %3740 = vst [vmem:[#allocation3 + $0x40] sm:$0xff] %v3739
    %v3741 = vld [vmem:[#allocation2 + $0x100] sm:$0xff]
    %v3742 = vld [vmem:[#allocation2 + $0x108] sm:$0xff]
    %v3743 = vld [vmem:[#allocation2 + $0x110] sm:$0xff]
    %v3744 = vld [vmem:[#allocation2 + $0x118] sm:$0xff]
    %3745 = vmatprep.subr.bf16.mxu0 %v870
    %3746 = vmatpush1.bf16.msra.mxu0 %v869
    %3747 = vmatprep.subr.bf16.mxu0 %v874
    %3748 = vmatpush1.bf16.msra.mxu0 %v873
    %3749 = vmatprep.subr.bf16.mxu0 %v878
    %3750 = vmatpush1.bf16.msra.mxu0 %v877
    %3751 = vmatprep.subr.bf16.mxu0 %v882
    %3752 = vmatpush1.bf16.msra.mxu0 %v881
    %3753 = vmatprep.subr.bf16.mxu0 %v886
    %3754 = vmatpush1.bf16.msra.mxu0 %v885
    %3755 = vmatprep.subr.bf16.mxu0 %v890
    %3756 = vmatpush1.bf16.msra.mxu0 %v889
    %3757 = vmatprep.subr.bf16.mxu0 %v894
    %3758 = vmatpush1.bf16.msra.mxu0 %v893
    %3759 = vmatprep.subr.bf16.mxu0 %v898
    %3760 = vmatpush1.bf16.msra.mxu0 %v897
    %3761 = vmatprep.subr.bf16.mxu0 0
    %3762 = vmatpush1.bf16.msra.mxu0 0
    %3763 = vmatprep.subr.bf16.mxu0 0
    %3764 = vmatpush1.bf16.msra.mxu0 0
    %3765 = vmatprep.subr.bf16.mxu0 0
    %3766 = vmatpush1.bf16.msra.mxu0 0
    %3767 = vmatprep.subr.bf16.mxu0 0
    %3768 = vmatpush1.bf16.msra.mxu0 0
    %3769 = vmatprep.subr.bf16.mxu0 0
    %3770 = vmatpush1.bf16.msra.mxu0 0
    %3771 = vmatprep.subr.bf16.mxu0 0
    %3772 = vmatpush1.bf16.msra.mxu0 0
    %3773 = vmatprep.subr.bf16.mxu0 0
    %3774 = vmatpush1.bf16.msra.mxu0 0
    %3775 = vmatprep.subr.bf16.mxu0 0
    %3776 = vmatpush1.bf16.msra.mxu0 0
    %3777 = vmatprep.mubr.bf16.mxu0 0
    %3778 = vmatmul.mubr.bf16.gmra.mrb[0].mxu0 %v3546
    %v3779 = vpop.f32.mrb[0].mxu0
    %v3780 = vadd.f32 0.0, %v3779
    %v3781 = vpop.f32.mrb[0].mxu0
    %v3782 = vadd.f32 0.0, %v3781
    %v3783 = vpop.f32.mrb[0].mxu0
    %v3784 = vpop.f32.mrb[0].mxu0
    %3785 = vdwg.mxu0
    %3786 = vmatprep.subr.bf16.mxu0 %v872
    %3787 = vmatpush1.bf16.msra.mxu0 %v871
    %3788 = vmatprep.subr.bf16.mxu0 %v876
    %3789 = vmatpush1.bf16.msra.mxu0 %v875
    %3790 = vmatprep.subr.bf16.mxu0 %v880
    %3791 = vmatpush1.bf16.msra.mxu0 %v879
    %3792 = vmatprep.subr.bf16.mxu0 %v884
    %3793 = vmatpush1.bf16.msra.mxu0 %v883
    %3794 = vmatprep.subr.bf16.mxu0 %v888
    %3795 = vmatpush1.bf16.msra.mxu0 %v887
    %3796 = vmatprep.subr.bf16.mxu0 %v892
    %3797 = vmatpush1.bf16.msra.mxu0 %v891
    %3798 = vmatprep.subr.bf16.mxu0 %v896
    %3799 = vmatpush1.bf16.msra.mxu0 %v895
    %3800 = vmatprep.subr.bf16.mxu0 %v900
    %3801 = vmatpush1.bf16.msra.mxu0 %v899
    %3802 = vmatprep.subr.bf16.mxu0 0
    %3803 = vmatpush1.bf16.msra.mxu0 0
    %3804 = vmatprep.subr.bf16.mxu0 0
    %3805 = vmatpush1.bf16.msra.mxu0 0
    %3806 = vmatprep.subr.bf16.mxu0 0
    %3807 = vmatpush1.bf16.msra.mxu0 0
    %3808 = vmatprep.subr.bf16.mxu0 0
    %3809 = vmatpush1.bf16.msra.mxu0 0
    %3810 = vmatprep.subr.bf16.mxu0 0
    %3811 = vmatpush1.bf16.msra.mxu0 0
    %3812 = vmatprep.subr.bf16.mxu0 0
    %3813 = vmatpush1.bf16.msra.mxu0 0
    %3814 = vmatprep.subr.bf16.mxu0 0
    %3815 = vmatpush1.bf16.msra.mxu0 0
    %3816 = vmatprep.subr.bf16.mxu0 0
    %3817 = vmatpush1.bf16.msra.mxu0 0
    %3818 = vmatprep.mubr.bf16.mxu0 0
    %3819 = vmatmul.mubr.bf16.gmra.mrb[0].mxu0 %v3546
    %v3820 = vpop.f32.mrb[0].mxu0
    %v3821 = vadd.f32 0.0, %v3820
    %v3822 = vpop.f32.mrb[0].mxu0
    %v3823 = vadd.f32 0.0, %v3822
    %v3824 = vpop.f32.mrb[0].mxu0
    %v3825 = vpop.f32.mrb[0].mxu0
    %3826 = vdwg.mxu0
    %v3827 = vadd.f32 %v3741, %v3780
    %v3828 = vadd.f32 %v3742, %v3782
    %v3829 = vadd.f32 %v3743, %v3821
    %v3830 = vadd.f32 %v3744, %v3823
    %v3831 = vxor.u32 %v3827, 2147483648
    %v3832 = vmul.f32 %v3831, 1.442695
    %v3833 = vpow.pop %v3832
    %v3834 = vadd.f32 %v3833, 1.0
    %v3835 = vrcp.pop %v3834
    %v3836 = vmul.f32 1.0, %v3835
    %v3837 = vxor.u32 %v3828, 2147483648
    %v3838 = vmul.f32 %v3837, 1.442695
    %v3839 = vpow.pop %v3838
    %v3840 = vadd.f32 %v3839, 1.0
    %v3841 = vrcp.pop %v3840
    %v3842 = vmul.f32 1.0, %v3841
    %v3843 = vtanh.pop %v3829
    %v3844 = vxor.u32 %v3830, 2147483648
    %v3845 = vmul.f32 %v3844, 1.442695
    %v3846 = vpow.pop %v3845
    %v3847 = vadd.f32 %v3846, 1.0
    %v3848 = vrcp.pop %v3847
    %v3849 = vmul.f32 1.0, %v3848
    %v3850 = vmul.f32 %v3842, %v3543
    %v3851 = vmul.f32 %v3836, %v3843
    %v3852 = vadd.f32 %v3850, %v3851
    %v3853 = vtanh.pop %v3852
    %v3854 = vmul.f32 %v3849, %v3853
    %v3855 = vpack.c.bf16 %v3854, %v3854
    %3856 = vmatprep.subr.bf16.mxu0 %v1162
    %3857 = vmatpush1.bf16.msra.mxu0 %v1161
    %3858 = vmatprep.subr.bf16.mxu0 %v1166
    %3859 = vmatpush1.bf16.msra.mxu0 %v1165
    %3860 = vmatprep.subr.bf16.mxu0 %v1170
    %3861 = vmatpush1.bf16.msra.mxu0 %v1169
    %3862 = vmatprep.subr.bf16.mxu0 %v1174
    %3863 = vmatpush1.bf16.msra.mxu0 %v1173
    %3864 = vmatprep.subr.bf16.mxu0 %v1178
    %3865 = vmatpush1.bf16.msra.mxu0 %v1177
    %3866 = vmatprep.subr.bf16.mxu0 %v1182
    %3867 = vmatpush1.bf16.msra.mxu0 %v1181
    %3868 = vmatprep.subr.bf16.mxu0 %v1186
    %3869 = vmatpush1.bf16.msra.mxu0 %v1185
    %3870 = vmatprep.subr.bf16.mxu0 %v1190
    %3871 = vmatpush1.bf16.msra.mxu0 %v1189
    %3872 = vmatprep.subr.bf16.mxu0 0
    %3873 = vmatpush1.bf16.msra.mxu0 0
    %3874 = vmatprep.subr.bf16.mxu0 0
    %3875 = vmatpush1.bf16.msra.mxu0 0
    %3876 = vmatprep.subr.bf16.mxu0 0
    %3877 = vmatpush1.bf16.msra.mxu0 0
    %3878 = vmatprep.subr.bf16.mxu0 0
    %3879 = vmatpush1.bf16.msra.mxu0 0
    %3880 = vmatprep.subr.bf16.mxu0 0
    %3881 = vmatpush1.bf16.msra.mxu0 0
    %3882 = vmatprep.subr.bf16.mxu0 0
    %3883 = vmatpush1.bf16.msra.mxu0 0
    %3884 = vmatprep.subr.bf16.mxu0 0
    %3885 = vmatpush1.bf16.msra.mxu0 0
    %3886 = vmatprep.subr.bf16.mxu0 0
    %3887 = vmatpush1.bf16.msra.mxu0 0
    %3888 = vmatprep.mubr.bf16.mxu0 0
    %3889 = vmatmul.mubr.bf16.gmra.mrb[0].mxu0 %v3855
    %v3890 = vpop.f32.mrb[0].mxu0
    %v3891 = vadd.f32 %v1048, %v3890
    %v3892 = vpop.f32.mrb[0].mxu0
    %v3893 = vadd.f32 %v1052, %v3892
    %v3894 = vpop.f32.mrb[0].mxu0
    %v3895 = vpop.f32.mrb[0].mxu0
    %3896 = vdwg.mxu0
    %3897 = vmatprep.subr.bf16.mxu0 %v1164
    %3898 = vmatpush1.bf16.msra.mxu0 %v1163
    %3899 = vmatprep.subr.bf16.mxu0 %v1168
    %3900 = vmatpush1.bf16.msra.mxu0 %v1167
    %3901 = vmatprep.subr.bf16.mxu0 %v1172
    %3902 = vmatpush1.bf16.msra.mxu0 %v1171
    %3903 = vmatprep.subr.bf16.mxu0 %v1176
    %3904 = vmatpush1.bf16.msra.mxu0 %v1175
    %3905 = vmatprep.subr.bf16.mxu0 %v1180
    %3906 = vmatpush1.bf16.msra.mxu0 %v1179
    %3907 = vmatprep.subr.bf16.mxu0 %v1184
    %3908 = vmatpush1.bf16.msra.mxu0 %v1183
    %3909 = vmatprep.subr.bf16.mxu0 %v1188
    %3910 = vmatpush1.bf16.msra.mxu0 %v1187
    %3911 = vmatprep.subr.bf16.mxu0 %v1192
    %3912 = vmatpush1.bf16.msra.mxu0 %v1191
    %3913 = vmatprep.subr.bf16.mxu0 0
    %3914 = vmatpush1.bf16.msra.mxu0 0
    %3915 = vmatprep.subr.bf16.mxu0 0
    %3916 = vmatpush1.bf16.msra.mxu0 0
    %3917 = vmatprep.subr.bf16.mxu0 0
    %3918 = vmatpush1.bf16.msra.mxu0 0
    %3919 = vmatprep.subr.bf16.mxu0 0
    %3920 = vmatpush1.bf16.msra.mxu0 0
    %3921 = vmatprep.subr.bf16.mxu0 0
    %3922 = vmatpush1.bf16.msra.mxu0 0
    %3923 = vmatprep.subr.bf16.mxu0 0
    %3924 = vmatpush1.bf16.msra.mxu0 0
    %3925 = vmatprep.subr.bf16.mxu0 0
    %3926 = vmatpush1.bf16.msra.mxu0 0
    %3927 = vmatprep.subr.bf16.mxu0 0
    %3928 = vmatpush1.bf16.msra.mxu0 0
    %3929 = vmatprep.mubr.bf16.mxu0 0
    %3930 = vmatmul.mubr.bf16.gmra.mrb[0].mxu0 %v3855
    %v3931 = vpop.f32.mrb[0].mxu0
    %v3932 = vadd.f32 %v1056, %v3931
    %v3933 = vpop.f32.mrb[0].mxu0
    %v3934 = vadd.f32 %v1060, %v3933
    %v3935 = vpop.f32.mrb[0].mxu0
    %v3936 = vpop.f32.mrb[0].mxu0
    %3937 = vdwg.mxu0
    %v3938 = vpack.c.bf16 %v3739, %v3739
    %3939 = vmatprep.subr.bf16.mxu0 %v1404
    %3940 = vmatpush1.bf16.msra.mxu0 %v1403
    %3941 = vmatprep.subr.bf16.mxu0 %v1408
    %3942 = vmatpush1.bf16.msra.mxu0 %v1407
    %3943 = vmatprep.subr.bf16.mxu0 %v1412
    %3944 = vmatpush1.bf16.msra.mxu0 %v1411
    %3945 = vmatprep.subr.bf16.mxu0 %v1416
    %3946 = vmatpush1.bf16.msra.mxu0 %v1415
    %3947 = vmatprep.subr.bf16.mxu0 %v1420
    %3948 = vmatpush1.bf16.msra.mxu0 %v1419
    %3949 = vmatprep.subr.bf16.mxu0 %v1424
    %3950 = vmatpush1.bf16.msra.mxu0 %v1423
    %3951 = vmatprep.subr.bf16.mxu0 %v1428
    %3952 = vmatpush1.bf16.msra.mxu0 %v1427
    %3953 = vmatprep.subr.bf16.mxu0 %v1432
    %3954 = vmatpush1.bf16.msra.mxu0 %v1431
    %3955 = vmatprep.subr.bf16.mxu0 0
    %3956 = vmatpush1.bf16.msra.mxu0 0
    %3957 = vmatprep.subr.bf16.mxu0 0
    %3958 = vmatpush1.bf16.msra.mxu0 0
    %3959 = vmatprep.subr.bf16.mxu0 0
    %3960 = vmatpush1.bf16.msra.mxu0 0
    %3961 = vmatprep.subr.bf16.mxu0 0
    %3962 = vmatpush1.bf16.msra.mxu0 0
    %3963 = vmatprep.subr.bf16.mxu0 0
    %3964 = vmatpush1.bf16.msra.mxu0 0
    %3965 = vmatprep.subr.bf16.mxu0 0
    %3966 = vmatpush1.bf16.msra.mxu0 0
    %3967 = vmatprep.subr.bf16.mxu0 0
    %3968 = vmatpush1.bf16.msra.mxu0 0
    %3969 = vmatprep.subr.bf16.mxu0 0
    %3970 = vmatpush1.bf16.msra.mxu0 0
    %3971 = vmatprep.mubr.bf16.mxu0 0
    %3972 = vmatmul.mubr.bf16.gmra.mrb[0].mxu0 %v3938
    %v3973 = vpop.f32.mrb[0].mxu0
    %v3974 = vadd.f32 0.0, %v3973
    %v3975 = vpop.f32.mrb[0].mxu0
    %v3976 = vadd.f32 0.0, %v3975
    %v3977 = vpop.f32.mrb[0].mxu0
    %v3978 = vpop.f32.mrb[0].mxu0
    %3979 = vdwg.mxu0
    %3980 = vmatprep.subr.bf16.mxu0 %v1406
    %3981 = vmatpush1.bf16.msra.mxu0 %v1405
    %3982 = vmatprep.subr.bf16.mxu0 %v1410
    %3983 = vmatpush1.bf16.msra.mxu0 %v1409
    %3984 = vmatprep.subr.bf16.mxu0 %v1414
    %3985 = vmatpush1.bf16.msra.mxu0 %v1413
    %3986 = vmatprep.subr.bf16.mxu0 %v1418
    %3987 = vmatpush1.bf16.msra.mxu0 %v1417
    %3988 = vmatprep.subr.bf16.mxu0 %v1422
    %3989 = vmatpush1.bf16.msra.mxu0 %v1421
    %3990 = vmatprep.subr.bf16.mxu0 %v1426
    %3991 = vmatpush1.bf16.msra.mxu0 %v1425
    %3992 = vmatprep.subr.bf16.mxu0 %v1430
    %3993 = vmatpush1.bf16.msra.mxu0 %v1429
    %3994 = vmatprep.subr.bf16.mxu0 %v1434
    %3995 = vmatpush1.bf16.msra.mxu0 %v1433
    %3996 = vmatprep.subr.bf16.mxu0 0
    %3997 = vmatpush1.bf16.msra.mxu0 0
    %3998 = vmatprep.subr.bf16.mxu0 0
    %3999 = vmatpush1.bf16.msra.mxu0 0
    %4000 = vmatprep.subr.bf16.mxu0 0
    %4001 = vmatpush1.bf16.msra.mxu0 0
    %4002 = vmatprep.subr.bf16.mxu0 0
    %4003 = vmatpush1.bf16.msra.mxu0 0
    %4004 = vmatprep.subr.bf16.mxu0 0
    %4005 = vmatpush1.bf16.msra.mxu0 0
    %4006 = vmatprep.subr.bf16.mxu0 0
    %4007 = vmatpush1.bf16.msra.mxu0 0
    %4008 = vmatprep.subr.bf16.mxu0 0
    %4009 = vmatpush1.bf16.msra.mxu0 0
    %4010 = vmatprep.subr.bf16.mxu0 0
    %4011 = vmatpush1.bf16.msra.mxu0 0
    %4012 = vmatprep.mubr.bf16.mxu0 0
    %4013 = vmatmul.mubr.bf16.gmra.mrb[0].mxu0 %v3938
    %v4014 = vpop.f32.mrb[0].mxu0
    %v4015 = vadd.f32 0.0, %v4014
    %v4016 = vpop.f32.mrb[0].mxu0
    %v4017 = vadd.f32 0.0, %v4016
    %v4018 = vpop.f32.mrb[0].mxu0
    %v4019 = vpop.f32.mrb[0].mxu0
    %4020 = vdwg.mxu0
    %v4021 = vadd.f32 %v3891, %v3974
    %v4022 = vadd.f32 %v3893, %v3976
    %v4023 = vadd.f32 %v3932, %v4015
    %v4024 = vadd.f32 %v3934, %v4017
    %v4025 = vxor.u32 %v4021, 2147483648
    %v4026 = vmul.f32 %v4025, 1.442695
    %v4027 = vpow.pop %v4026
    %v4028 = vadd.f32 %v4027, 1.0
    %v4029 = vrcp.pop %v4028
    %v4030 = vmul.f32 1.0, %v4029
    %v4031 = vxor.u32 %v4022, 2147483648
    %v4032 = vmul.f32 %v4031, 1.442695
    %v4033 = vpow.pop %v4032
    %v4034 = vadd.f32 %v4033, 1.0
    %v4035 = vrcp.pop %v4034
    %v4036 = vmul.f32 1.0, %v4035
    %v4037 = vtanh.pop %v4023
    %v4038 = vxor.u32 %v4024, 2147483648
    %v4039 = vmul.f32 %v4038, 1.442695
    %v4040 = vpow.pop %v4039
    %v4041 = vadd.f32 %v4040, 1.0
    %v4042 = vrcp.pop %v4041
    %v4043 = vmul.f32 1.0, %v4042
    %v4044 = vmul.f32 %v4036, %v3737
    %v4045 = vmul.f32 %v4030, %v4037
    %v4046 = vadd.f32 %v4044, %v4045
    %v4047 = vtanh.pop %v4046
    %v4048 = vmul.f32 %v4043, %v4047
    %4049 = vst [vmem:[#allocation3 + $0x48] sm:$0xff] %v4048
    %v4050 = vld [vmem:[#allocation2 + $0x120] sm:$0xff]
    %v4051 = vld [vmem:[#allocation2 + $0x128] sm:$0xff]
    %v4052 = vld [vmem:[#allocation2 + $0x130] sm:$0xff]
    %v4053 = vld [vmem:[#allocation2 + $0x138] sm:$0xff]
    %4054 = vmatprep.subr.bf16.mxu0 %v870
    %4055 = vmatpush1.bf16.msra.mxu0 %v869
    %4056 = vmatprep.subr.bf16.mxu0 %v874
    %4057 = vmatpush1.bf16.msra.mxu0 %v873
    %4058 = vmatprep.subr.bf16.mxu0 %v878
    %4059 = vmatpush1.bf16.msra.mxu0 %v877
    %4060 = vmatprep.subr.bf16.mxu0 %v882
    %4061 = vmatpush1.bf16.msra.mxu0 %v881
    %4062 = vmatprep.subr.bf16.mxu0 %v886
    %4063 = vmatpush1.bf16.msra.mxu0 %v885
    %4064 = vmatprep.subr.bf16.mxu0 %v890
    %4065 = vmatpush1.bf16.msra.mxu0 %v889
    %4066 = vmatprep.subr.bf16.mxu0 %v894
    %4067 = vmatpush1.bf16.msra.mxu0 %v893
    %4068 = vmatprep.subr.bf16.mxu0 %v898
    %4069 = vmatpush1.bf16.msra.mxu0 %v897
    %4070 = vmatprep.subr.bf16.mxu0 0
    %4071 = vmatpush1.bf16.msra.mxu0 0
    %4072 = vmatprep.subr.bf16.mxu0 0
    %4073 = vmatpush1.bf16.msra.mxu0 0
    %4074 = vmatprep.subr.bf16.mxu0 0
    %4075 = vmatpush1.bf16.msra.mxu0 0
    %4076 = vmatprep.subr.bf16.mxu0 0
    %4077 = vmatpush1.bf16.msra.mxu0 0
    %4078 = vmatprep.subr.bf16.mxu0 0
    %4079 = vmatpush1.bf16.msra.mxu0 0
    %4080 = vmatprep.subr.bf16.mxu0 0
    %4081 = vmatpush1.bf16.msra.mxu0 0
    %4082 = vmatprep.subr.bf16.mxu0 0
    %4083 = vmatpush1.bf16.msra.mxu0 0
    %4084 = vmatprep.subr.bf16.mxu0 0
    %4085 = vmatpush1.bf16.msra.mxu0 0
    %4086 = vmatprep.mubr.bf16.mxu0 0
    %4087 = vmatmul.mubr.bf16.gmra.mrb[0].mxu0 %v3855
    %v4088 = vpop.f32.mrb[0].mxu0
    %v4089 = vadd.f32 0.0, %v4088
    %v4090 = vpop.f32.mrb[0].mxu0
    %v4091 = vadd.f32 0.0, %v4090
    %v4092 = vpop.f32.mrb[0].mxu0
    %v4093 = vpop.f32.mrb[0].mxu0
    %4094 = vdwg.mxu0
    %4095 = vmatprep.subr.bf16.mxu0 %v872
    %4096 = vmatpush1.bf16.msra.mxu0 %v871
    %4097 = vmatprep.subr.bf16.mxu0 %v876
    %4098 = vmatpush1.bf16.msra.mxu0 %v875
    %4099 = vmatprep.subr.bf16.mxu0 %v880
    %4100 = vmatpush1.bf16.msra.mxu0 %v879
    %4101 = vmatprep.subr.bf16.mxu0 %v884
    %4102 = vmatpush1.bf16.msra.mxu0 %v883
    %4103 = vmatprep.subr.bf16.mxu0 %v888
    %4104 = vmatpush1.bf16.msra.mxu0 %v887
    %4105 = vmatprep.subr.bf16.mxu0 %v892
    %4106 = vmatpush1.bf16.msra.mxu0 %v891
    %4107 = vmatprep.subr.bf16.mxu0 %v896
    %4108 = vmatpush1.bf16.msra.mxu0 %v895
    %4109 = vmatprep.subr.bf16.mxu0 %v900
    %4110 = vmatpush1.bf16.msra.mxu0 %v899
    %4111 = vmatprep.subr.bf16.mxu0 0
    %4112 = vmatpush1.bf16.msra.mxu0 0
    %4113 = vmatprep.subr.bf16.mxu0 0
    %4114 = vmatpush1.bf16.msra.mxu0 0
    %4115 = vmatprep.subr.bf16.mxu0 0
    %4116 = vmatpush1.bf16.msra.mxu0 0
    %4117 = vmatprep.subr.bf16.mxu0 0
    %4118 = vmatpush1.bf16.msra.mxu0 0
    %4119 = vmatprep.subr.bf16.mxu0 0
    %4120 = vmatpush1.bf16.msra.mxu0 0
    %4121 = vmatprep.subr.bf16.mxu0 0
    %4122 = vmatpush1.bf16.msra.mxu0 0
    %4123 = vmatprep.subr.bf16.mxu0 0
    %4124 = vmatpush1.bf16.msra.mxu0 0
    %4125 = vmatprep.subr.bf16.mxu0 0
    %4126 = vmatpush1.bf16.msra.mxu0 0
    %4127 = vmatprep.mubr.bf16.mxu0 0
    %4128 = vmatmul.mubr.bf16.gmra.mrb[0].mxu0 %v3855
    %v4129 = vpop.f32.mrb[0].mxu0
    %v4130 = vadd.f32 0.0, %v4129
    %v4131 = vpop.f32.mrb[0].mxu0
    %v4132 = vadd.f32 0.0, %v4131
    %v4133 = vpop.f32.mrb[0].mxu0
    %v4134 = vpop.f32.mrb[0].mxu0
    %4135 = vdwg.mxu0
    %v4136 = vadd.f32 %v4050, %v4089
    %v4137 = vadd.f32 %v4051, %v4091
    %v4138 = vadd.f32 %v4052, %v4130
    %v4139 = vadd.f32 %v4053, %v4132
    %v4140 = vxor.u32 %v4136, 2147483648
    %v4141 = vmul.f32 %v4140, 1.442695
    %v4142 = vpow.pop %v4141
    %v4143 = vadd.f32 %v4142, 1.0
    %v4144 = vrcp.pop %v4143
    %v4145 = vmul.f32 1.0, %v4144
    %v4146 = vxor.u32 %v4137, 2147483648
    %v4147 = vmul.f32 %v4146, 1.442695
    %v4148 = vpow.pop %v4147
    %v4149 = vadd.f32 %v4148, 1.0
    %v4150 = vrcp.pop %v4149
    %v4151 = vmul.f32 1.0, %v4150
    %v4152 = vtanh.pop %v4138
    %v4153 = vxor.u32 %v4139, 2147483648
    %v4154 = vmul.f32 %v4153, 1.442695
    %v4155 = vpow.pop %v4154
    %v4156 = vadd.f32 %v4155, 1.0
    %v4157 = vrcp.pop %v4156
    %v4158 = vmul.f32 1.0, %v4157
    %v4159 = vmul.f32 %v4151, %v3852
    %v4160 = vmul.f32 %v4145, %v4152
    %v4161 = vadd.f32 %v4159, %v4160
    %v4162 = vtanh.pop %v4161
    %v4163 = vmul.f32 %v4158, %v4162
    %v4164 = vpack.c.bf16 %v4163, %v4163
    %4165 = vmatprep.subr.bf16.mxu0 %v1162
    %4166 = vmatpush1.bf16.msra.mxu0 %v1161
    %4167 = vmatprep.subr.bf16.mxu0 %v1166
    %4168 = vmatpush1.bf16.msra.mxu0 %v1165
    %4169 = vmatprep.subr.bf16.mxu0 %v1170
    %4170 = vmatpush1.bf16.msra.mxu0 %v1169
    %4171 = vmatprep.subr.bf16.mxu0 %v1174
    %4172 = vmatpush1.bf16.msra.mxu0 %v1173
    %4173 = vmatprep.subr.bf16.mxu0 %v1178
    %4174 = vmatpush1.bf16.msra.mxu0 %v1177
    %4175 = vmatprep.subr.bf16.mxu0 %v1182
    %4176 = vmatpush1.bf16.msra.mxu0 %v1181
    %4177 = vmatprep.subr.bf16.mxu0 %v1186
    %4178 = vmatpush1.bf16.msra.mxu0 %v1185
    %4179 = vmatprep.subr.bf16.mxu0 %v1190
    %4180 = vmatpush1.bf16.msra.mxu0 %v1189
    %4181 = vmatprep.subr.bf16.mxu0 0
    %4182 = vmatpush1.bf16.msra.mxu0 0
    %4183 = vmatprep.subr.bf16.mxu0 0
    %4184 = vmatpush1.bf16.msra.mxu0 0
    %4185 = vmatprep.subr.bf16.mxu0 0
    %4186 = vmatpush1.bf16.msra.mxu0 0
    %4187 = vmatprep.subr.bf16.mxu0 0
    %4188 = vmatpush1.bf16.msra.mxu0 0
    %4189 = vmatprep.subr.bf16.mxu0 0
    %4190 = vmatpush1.bf16.msra.mxu0 0
    %4191 = vmatprep.subr.bf16.mxu0 0
    %4192 = vmatpush1.bf16.msra.mxu0 0
    %4193 = vmatprep.subr.bf16.mxu0 0
    %4194 = vmatpush1.bf16.msra.mxu0 0
    %4195 = vmatprep.subr.bf16.mxu0 0
    %4196 = vmatpush1.bf16.msra.mxu0 0
    %4197 = vmatprep.mubr.bf16.mxu0 0
    %4198 = vmatmul.mubr.bf16.gmra.mrb[0].mxu0 %v4164
    %v4199 = vpop.f32.mrb[0].mxu0
    %v4200 = vadd.f32 %v1048, %v4199
    %v4201 = vpop.f32.mrb[0].mxu0
    %v4202 = vadd.f32 %v1052, %v4201
    %v4203 = vpop.f32.mrb[0].mxu0
    %v4204 = vpop.f32.mrb[0].mxu0
    %4205 = vdwg.mxu0
    %4206 = vmatprep.subr.bf16.mxu0 %v1164
    %4207 = vmatpush1.bf16.msra.mxu0 %v1163
    %4208 = vmatprep.subr.bf16.mxu0 %v1168
    %4209 = vmatpush1.bf16.msra.mxu0 %v1167
    %4210 = vmatprep.subr.bf16.mxu0 %v1172
    %4211 = vmatpush1.bf16.msra.mxu0 %v1171
    %4212 = vmatprep.subr.bf16.mxu0 %v1176
    %4213 = vmatpush1.bf16.msra.mxu0 %v1175
    %4214 = vmatprep.subr.bf16.mxu0 %v1180
    %4215 = vmatpush1.bf16.msra.mxu0 %v1179
    %4216 = vmatprep.subr.bf16.mxu0 %v1184
    %4217 = vmatpush1.bf16.msra.mxu0 %v1183
    %4218 = vmatprep.subr.bf16.mxu0 %v1188
    %4219 = vmatpush1.bf16.msra.mxu0 %v1187
    %4220 = vmatprep.subr.bf16.mxu0 %v1192
    %4221 = vmatpush1.bf16.msra.mxu0 %v1191
    %4222 = vmatprep.subr.bf16.mxu0 0
    %4223 = vmatpush1.bf16.msra.mxu0 0
    %4224 = vmatprep.subr.bf16.mxu0 0
    %4225 = vmatpush1.bf16.msra.mxu0 0
    %4226 = vmatprep.subr.bf16.mxu0 0
    %4227 = vmatpush1.bf16.msra.mxu0 0
    %4228 = vmatprep.subr.bf16.mxu0 0
    %4229 = vmatpush1.bf16.msra.mxu0 0
    %4230 = vmatprep.subr.bf16.mxu0 0
    %4231 = vmatpush1.bf16.msra.mxu0 0
    %4232 = vmatprep.subr.bf16.mxu0 0
    %4233 = vmatpush1.bf16.msra.mxu0 0
    %4234 = vmatprep.subr.bf16.mxu0 0
    %4235 = vmatpush1.bf16.msra.mxu0 0
    %4236 = vmatprep.subr.bf16.mxu0 0
    %4237 = vmatpush1.bf16.msra.mxu0 0
    %4238 = vmatprep.mubr.bf16.mxu0 0
    %4239 = vmatmul.mubr.bf16.gmra.mrb[0].mxu0 %v4164
    %v4240 = vpop.f32.mrb[0].mxu0
    %v4241 = vadd.f32 %v1056, %v4240
    %v4242 = vpop.f32.mrb[0].mxu0
    %v4243 = vadd.f32 %v1060, %v4242
    %v4244 = vpop.f32.mrb[0].mxu0
    %v4245 = vpop.f32.mrb[0].mxu0
    %4246 = vdwg.mxu0
    %v4247 = vpack.c.bf16 %v4048, %v4048
    %4248 = vmatprep.subr.bf16.mxu0 %v1404
    %4249 = vmatpush1.bf16.msra.mxu0 %v1403
    %4250 = vmatprep.subr.bf16.mxu0 %v1408
    %4251 = vmatpush1.bf16.msra.mxu0 %v1407
    %4252 = vmatprep.subr.bf16.mxu0 %v1412
    %4253 = vmatpush1.bf16.msra.mxu0 %v1411
    %4254 = vmatprep.subr.bf16.mxu0 %v1416
    %4255 = vmatpush1.bf16.msra.mxu0 %v1415
    %4256 = vmatprep.subr.bf16.mxu0 %v1420
    %4257 = vmatpush1.bf16.msra.mxu0 %v1419
    %4258 = vmatprep.subr.bf16.mxu0 %v1424
    %4259 = vmatpush1.bf16.msra.mxu0 %v1423
    %4260 = vmatprep.subr.bf16.mxu0 %v1428
    %4261 = vmatpush1.bf16.msra.mxu0 %v1427
    %4262 = vmatprep.subr.bf16.mxu0 %v1432
    %4263 = vmatpush1.bf16.msra.mxu0 %v1431
    %4264 = vmatprep.subr.bf16.mxu0 0
    %4265 = vmatpush1.bf16.msra.mxu0 0
    %4266 = vmatprep.subr.bf16.mxu0 0
    %4267 = vmatpush1.bf16.msra.mxu0 0
    %4268 = vmatprep.subr.bf16.mxu0 0
    %4269 = vmatpush1.bf16.msra.mxu0 0
    %4270 = vmatprep.subr.bf16.mxu0 0
    %4271 = vmatpush1.bf16.msra.mxu0 0
    %4272 = vmatprep.subr.bf16.mxu0 0
    %4273 = vmatpush1.bf16.msra.mxu0 0
    %4274 = vmatprep.subr.bf16.mxu0 0
    %4275 = vmatpush1.bf16.msra.mxu0 0
    %4276 = vmatprep.subr.bf16.mxu0 0
    %4277 = vmatpush1.bf16.msra.mxu0 0
    %4278 = vmatprep.subr.bf16.mxu0 0
    %4279 = vmatpush1.bf16.msra.mxu0 0
    %4280 = vmatprep.mubr.bf16.mxu0 0
    %4281 = vmatmul.mubr.bf16.gmra.mrb[0].mxu0 %v4247
    %v4282 = vpop.f32.mrb[0].mxu0
    %v4283 = vadd.f32 0.0, %v4282
    %v4284 = vpop.f32.mrb[0].mxu0
    %v4285 = vadd.f32 0.0, %v4284
    %v4286 = vpop.f32.mrb[0].mxu0
    %v4287 = vpop.f32.mrb[0].mxu0
    %4288 = vdwg.mxu0
    %4289 = vmatprep.subr.bf16.mxu0 %v1406
    %4290 = vmatpush1.bf16.msra.mxu0 %v1405
    %4291 = vmatprep.subr.bf16.mxu0 %v1410
    %4292 = vmatpush1.bf16.msra.mxu0 %v1409
    %4293 = vmatprep.subr.bf16.mxu0 %v1414
    %4294 = vmatpush1.bf16.msra.mxu0 %v1413
    %4295 = vmatprep.subr.bf16.mxu0 %v1418
    %4296 = vmatpush1.bf16.msra.mxu0 %v1417
    %4297 = vmatprep.subr.bf16.mxu0 %v1422
    %4298 = vmatpush1.bf16.msra.mxu0 %v1421
    %4299 = vmatprep.subr.bf16.mxu0 %v1426
    %4300 = vmatpush1.bf16.msra.mxu0 %v1425
    %4301 = vmatprep.subr.bf16.mxu0 %v1430
    %4302 = vmatpush1.bf16.msra.mxu0 %v1429
    %4303 = vmatprep.subr.bf16.mxu0 %v1434
    %4304 = vmatpush1.bf16.msra.mxu0 %v1433
    %4305 = vmatprep.subr.bf16.mxu0 0
    %4306 = vmatpush1.bf16.msra.mxu0 0
    %4307 = vmatprep.subr.bf16.mxu0 0
    %4308 = vmatpush1.bf16.msra.mxu0 0
    %4309 = vmatprep.subr.bf16.mxu0 0
    %4310 = vmatpush1.bf16.msra.mxu0 0
    %4311 = vmatprep.subr.bf16.mxu0 0
    %4312 = vmatpush1.bf16.msra.mxu0 0
    %4313 = vmatprep.subr.bf16.mxu0 0
    %4314 = vmatpush1.bf16.msra.mxu0 0
    %4315 = vmatprep.subr.bf16.mxu0 0
    %4316 = vmatpush1.bf16.msra.mxu0 0
    %4317 = vmatprep.subr.bf16.mxu0 0
    %4318 = vmatpush1.bf16.msra.mxu0 0
    %4319 = vmatprep.subr.bf16.mxu0 0
    %4320 = vmatpush1.bf16.msra.mxu0 0
    %4321 = vmatprep.mubr.bf16.mxu0 0
    %4322 = vmatmul.mubr.bf16.gmra.mrb[0].mxu0 %v4247
    %v4323 = vpop.f32.mrb[0].mxu0
    %v4324 = vadd.f32 0.0, %v4323
    %v4325 = vpop.f32.mrb[0].mxu0
    %v4326 = vadd.f32 0.0, %v4325
    %v4327 = vpop.f32.mrb[0].mxu0
    %v4328 = vpop.f32.mrb[0].mxu0
    %4329 = vdwg.mxu0
    %v4330 = vadd.f32 %v4200, %v4283
    %v4331 = vadd.f32 %v4202, %v4285
    %v4332 = vadd.f32 %v4241, %v4324
    %v4333 = vadd.f32 %v4243, %v4326
    %v4334 = vxor.u32 %v4330, 2147483648
    %v4335 = vmul.f32 %v4334, 1.442695
    %v4336 = vpow.pop %v4335
    %v4337 = vadd.f32 %v4336, 1.0
    %v4338 = vrcp.pop %v4337
    %v4339 = vmul.f32 1.0, %v4338
    %v4340 = vxor.u32 %v4331, 2147483648
    %v4341 = vmul.f32 %v4340, 1.442695
    %v4342 = vpow.pop %v4341
    %v4343 = vadd.f32 %v4342, 1.0
    %v4344 = vrcp.pop %v4343
    %v4345 = vmul.f32 1.0, %v4344
    %v4346 = vtanh.pop %v4332
    %v4347 = vxor.u32 %v4333, 2147483648
    %v4348 = vmul.f32 %v4347, 1.442695
    %v4349 = vpow.pop %v4348
    %v4350 = vadd.f32 %v4349, 1.0
    %v4351 = vrcp.pop %v4350
    %v4352 = vmul.f32 1.0, %v4351
    %v4353 = vmul.f32 %v4345, %v4046
    %v4354 = vmul.f32 %v4339, %v4346
    %v4355 = vadd.f32 %v4353, %v4354
    %v4356 = vtanh.pop %v4355
    %v4357 = vmul.f32 %v4352, %v4356
    %4358 = vst [vmem:[#allocation3 + $0x50] sm:$0xff] %v4357
    %v4359 = vlaneseq
    %v4360 = vshrl.u32 %v4359, 7
    %v4361 = vadd.s32 %v4360, 8
    %v4362 = vadd.s32 %v4360, 16
    %v4363 = vadd.s32 %v4360, 24
    %v4364 = vadd.s32 %v4360, 32
    %v4365 = vadd.s32 %v4360, 40
    %v4366 = vadd.s32 %v4360, 48
    %v4367 = vadd.s32 %v4360, 56
    %v4368 = vadd.s32 %v4360, 64
    %v4369 = vadd.s32 %v4360, 72
    %vm4370 = vcmp.lt.s32.totalorder %v4360, 0
    %v4371 = vsub.s32 0, %v4360
    %v4372 = vsel %vm4370, %v4371, %v4360
    %v4373 = vshrl.u32 %v4372, 3
    %v4374 = vand.u32 %v4372, 7
    %v4375 = vsub.s32 0, %v4374
    %v4376 = vsel %vm4370, %v4375, %v4374
    %vm4377 = vcmp.lt.s32.totalorder %v4361, 0
    %v4378 = vsub.s32 0, %v4361
    %v4379 = vsel %vm4377, %v4378, %v4361
    %v4380 = vshrl.u32 %v4379, 3
    %v4381 = vand.u32 %v4379, 7
    %v4382 = vsub.s32 0, %v4381
    %v4383 = vsel %vm4377, %v4382, %v4381
    %vm4384 = vcmp.lt.s32.totalorder %v4362, 0
    %v4385 = vsub.s32 0, %v4362
    %v4386 = vsel %vm4384, %v4385, %v4362
    %v4387 = vshrl.u32 %v4386, 3
    %v4388 = vand.u32 %v4386, 7
    %v4389 = vsub.s32 0, %v4388
    %v4390 = vsel %vm4384, %v4389, %v4388
    %vm4391 = vcmp.lt.s32.totalorder %v4363, 0
    %v4392 = vsub.s32 0, %v4363
    %v4393 = vsel %vm4391, %v4392, %v4363
    %v4394 = vshrl.u32 %v4393, 3
    %v4395 = vand.u32 %v4393, 7
    %v4396 = vsub.s32 0, %v4395
    %v4397 = vsel %vm4391, %v4396, %v4395
    %vm4398 = vcmp.lt.s32.totalorder %v4364, 0
    %v4399 = vsub.s32 0, %v4364
    %v4400 = vsel %vm4398, %v4399, %v4364
    %v4401 = vshrl.u32 %v4400, 3
    %v4402 = vand.u32 %v4400, 7
    %v4403 = vsub.s32 0, %v4402
    %v4404 = vsel %vm4398, %v4403, %v4402
    %vm4405 = vcmp.lt.s32.totalorder %v4365, 0
    %v4406 = vsub.s32 0, %v4365
    %v4407 = vsel %vm4405, %v4406, %v4365
    %v4408 = vshrl.u32 %v4407, 3
    %v4409 = vand.u32 %v4407, 7
    %v4410 = vsub.s32 0, %v4409
    %v4411 = vsel %vm4405, %v4410, %v4409
    %vm4412 = vcmp.lt.s32.totalorder %v4366, 0
    %v4413 = vsub.s32 0, %v4366
    %v4414 = vsel %vm4412, %v4413, %v4366
    %v4415 = vshrl.u32 %v4414, 3
    %v4416 = vand.u32 %v4414, 7
    %v4417 = vsub.s32 0, %v4416
    %v4418 = vsel %vm4412, %v4417, %v4416
    %vm4419 = vcmp.lt.s32.totalorder %v4367, 0
    %v4420 = vsub.s32 0, %v4367
    %v4421 = vsel %vm4419, %v4420, %v4367
    %v4422 = vshrl.u32 %v4421, 3
    %v4423 = vand.u32 %v4421, 7
    %v4424 = vsub.s32 0, %v4423
    %v4425 = vsel %vm4419, %v4424, %v4423
    %vm4426 = vcmp.lt.s32.totalorder %v4368, 0
    %v4427 = vsub.s32 0, %v4368
    %v4428 = vsel %vm4426, %v4427, %v4368
    %v4429 = vshrl.u32 %v4428, 3
    %v4430 = vand.u32 %v4428, 7
    %v4431 = vsub.s32 0, %v4430
    %v4432 = vsel %vm4426, %v4431, %v4430
    %vm4433 = vcmp.lt.s32.totalorder %v4369, 0
    %v4434 = vsub.s32 0, %v4369
    %v4435 = vsel %vm4433, %v4434, %v4369
    %v4436 = vshrl.u32 %v4435, 3
    %v4437 = vand.u32 %v4435, 7
    %v4438 = vsub.s32 0, %v4437
    %v4439 = vsel %vm4433, %v4438, %v4437
    %vm4440 = vcmp.ne.s32.totalorder %v4376, 0
    %vm4441 = vcmp.ne.s32.totalorder %v4383, 0
    %vm4442 = vcmp.ne.s32.totalorder %v4390, 0
    %vm4443 = vcmp.ne.s32.totalorder %v4397, 0
    %vm4444 = vcmp.ne.s32.totalorder %v4404, 0
    %vm4445 = vcmp.ne.s32.totalorder %v4411, 0
    %vm4446 = vcmp.ne.s32.totalorder %v4418, 0
    %vm4447 = vcmp.ne.s32.totalorder %v4425, 0
    %vm4448 = vcmp.ne.s32.totalorder %v4432, 0
    %vm4449 = vcmp.ne.s32.totalorder %v4439, 0
    %vm4450 = vcmp.lt.s32.totalorder %v4376, 0
    %vm4451 = vcmp.lt.s32.totalorder %v4383, 0
    %vm4452 = vcmp.lt.s32.totalorder %v4390, 0
    %vm4453 = vcmp.lt.s32.totalorder %v4397, 0
    %vm4454 = vcmp.lt.s32.totalorder %v4404, 0
    %vm4455 = vcmp.lt.s32.totalorder %v4411, 0
    %vm4456 = vcmp.lt.s32.totalorder %v4418, 0
    %vm4457 = vcmp.lt.s32.totalorder %v4425, 0
    %vm4458 = vcmp.lt.s32.totalorder %v4432, 0
    %vm4459 = vcmp.lt.s32.totalorder %v4439, 0
    %vm4460 = vmand %vm4450, %vm4440
    %vm4461 = vmand %vm4451, %vm4441
    %vm4462 = vmand %vm4452, %vm4442
    %vm4463 = vmand %vm4453, %vm4443
    %vm4464 = vmand %vm4454, %vm4444
    %vm4465 = vmand %vm4455, %vm4445
    %vm4466 = vmand %vm4456, %vm4446
    %vm4467 = vmand %vm4457, %vm4447
    %vm4468 = vmand %vm4458, %vm4448
    %vm4469 = vmand %vm4459, %vm4449
    %v4470 = vadd.s32 %v4376, 8
    %v4471 = vadd.s32 %v4383, 8
    %v4472 = vadd.s32 %v4390, 8
    %v4473 = vadd.s32 %v4397, 8
    %v4474 = vadd.s32 %v4404, 8
    %v4475 = vadd.s32 %v4411, 8
    %v4476 = vadd.s32 %v4418, 8
    %v4477 = vadd.s32 %v4425, 8
    %v4478 = vadd.s32 %v4432, 8
    %v4479 = vadd.s32 %v4439, 8
    %v4480 = vsel %vm4460, %v4470, %v4376
    %v4481 = vsel %vm4461, %v4471, %v4383
    %v4482 = vsel %vm4462, %v4472, %v4390
    %v4483 = vsel %vm4463, %v4473, %v4397
    %v4484 = vsel %vm4464, %v4474, %v4404
    %v4485 = vsel %vm4465, %v4475, %v4411
    %v4486 = vsel %vm4466, %v4476, %v4418
    %v4487 = vsel %vm4467, %v4477, %v4425
    %v4488 = vsel %vm4468, %v4478, %v4432
    %v4489 = vsel %vm4469, %v4479, %v4439
    %vm4490 = vcmp.lt.s32.totalorder %v4480, 2
    %vm4491 = vcmp.lt.s32.totalorder %v4481, 2
    %vm4492 = vcmp.lt.s32.totalorder %v4482, 2
    %vm4493 = vcmp.lt.s32.totalorder %v4483, 2
    %vm4494 = vcmp.lt.s32.totalorder %v4484, 2
    %vm4495 = vcmp.lt.s32.totalorder %v4485, 2
    %vm4496 = vcmp.lt.s32.totalorder %v4486, 2
    %vm4497 = vcmp.lt.s32.totalorder %v4487, 2
    %vm4498 = vcmp.lt.s32.totalorder %v4488, 2
    %vm4499 = vcmp.lt.s32.totalorder %v4489, 2
    %v4500 = vsel %vm4490, 1, 0
    %v4501 = vsel %vm4491, 1, 0
    %v4502 = vsel %vm4492, 1, 0
    %v4503 = vsel %vm4493, 1, 0
    %v4504 = vsel %vm4494, 1, 0
    %v4505 = vsel %vm4495, 1, 0
    %v4506 = vsel %vm4496, 1, 0
    %v4507 = vsel %vm4497, 1, 0
    %v4508 = vsel %vm4498, 1, 0
    %v4509 = vsel %vm4499, 1, 0
    %v4510 = vcvt.s32.f32 %v4500
    %v4511 = vcvt.s32.f32 %v4501
    %v4512 = vcvt.s32.f32 %v4502
    %v4513 = vcvt.s32.f32 %v4503
    %v4514 = vcvt.s32.f32 %v4504
    %v4515 = vcvt.s32.f32 %v4505
    %v4516 = vcvt.s32.f32 %v4506
    %v4517 = vcvt.s32.f32 %v4507
    %v4518 = vcvt.s32.f32 %v4508
    %v4519 = vcvt.s32.f32 %v4509
    %s4520 = smul.u32 4, 3
    %s4521 = smul.u32 %s4520, 16
    %s4522 = smul.u32 %s4521, 2
    %s4523 = sshll.u32 %s4522, 4
    %4524 = dma.done [#allocation8], %s4523
    %v4525 = vld [vmem:[#allocation3] sm:$0xff]
    %v4526 = vld [vmem:[#allocation3 + $0x8] sm:$0xff]
    %v4527 = vld [vmem:[#allocation3 + $0x10] sm:$0xff]
    %v4528 = vld [vmem:[#allocation3 + $0x18] sm:$0xff]
    %v4529 = vld [vmem:[#allocation3 + $0x20] sm:$0xff]
    %v4530 = vld [vmem:[#allocation3 + $0x28] sm:$0xff]
    %v4531 = vld [vmem:[#allocation3 + $0x30] sm:$0xff]
    %v4532 = vld [vmem:[#allocation3 + $0x38] sm:$0xff]
    %v4533 = vld [vmem:[#allocation3 + $0x40] sm:$0xff]
    %v4534 = vld [vmem:[#allocation3 + $0x48] sm:$0xff]
    %v4535 = vld [vmem:[#allocation3 + $0x50] sm:$0xff]
    %v4536 = vld [vmem:[#allocation3 + $0x58] sm:$0xff]
    %v4537 = vpack.c.bf16 %v4526, %v4525
    %v4538 = vpack.c.bf16 %v4528, %v4527
    %v4539 = vpack.c.bf16 %v4530, %v4529
    %v4540 = vpack.c.bf16 %v4532, %v4531
    %v4541 = vpack.c.bf16 %v4534, %v4533
    %v4542 = vpack.c.bf16 %v4536, %v4535
    %v4543 = vld [vmem:[#allocation5] sm:$0xff]
    %v4544 = vld [vmem:[#allocation5 + $0x8] sm:$0xff]
    %v4545 = vld [vmem:[#allocation5 + $0x10] sm:$0xff]
    %v4546 = vld [vmem:[#allocation5 + $0x18] sm:$0xff]
    %v4547 = vld [vmem:[#allocation5 + $0x20] sm:$0xff]
    %v4548 = vld [vmem:[#allocation5 + $0x28] sm:$0xff]
    %v4549 = vld [vmem:[#allocation5 + $0x30] sm:$0xff]
    %v4550 = vld [vmem:[#allocation5 + $0x38] sm:$0xff]
    %v4551 = vld [vmem:[#allocation5 + $0x40] sm:$0xff]
    %v4552 = vld [vmem:[#allocation5 + $0x48] sm:$0xff]
    %v4553 = vld [vmem:[#allocation5 + $0x50] sm:$0xff]
    %v4554 = vld [vmem:[#allocation5 + $0x58] sm:$0xff]
    %v4555 = vld [vmem:[#allocation5 + $0x60] sm:$0xff]
    %v4556 = vld [vmem:[#allocation5 + $0x68] sm:$0xff]
    %v4557 = vld [vmem:[#allocation5 + $0x70] sm:$0xff]
    %v4558 = vld [vmem:[#allocation5 + $0x78] sm:$0xff]
    %s4559 = scalar_lea.vmem [#allocation5], 128
    %v4560 = vld [vmem:[%s4559] sm:$0xff]
    %v4561 = vld [vmem:[%s4559 + $0x8] sm:$0xff]
    %v4562 = vld [vmem:[%s4559 + $0x10] sm:$0xff]
    %v4563 = vld [vmem:[%s4559 + $0x18] sm:$0xff]
    %v4564 = vld [vmem:[%s4559 + $0x20] sm:$0xff]
    %v4565 = vld [vmem:[%s4559 + $0x28] sm:$0xff]
    %v4566 = vld [vmem:[%s4559 + $0x30] sm:$0xff]
    %v4567 = vld [vmem:[%s4559 + $0x38] sm:$0xff]
    %v4568 = vld [vmem:[%s4559 + $0x40] sm:$0xff]
    %v4569 = vld [vmem:[%s4559 + $0x48] sm:$0xff]
    %v4570 = vld [vmem:[%s4559 + $0x50] sm:$0xff]
    %v4571 = vld [vmem:[%s4559 + $0x58] sm:$0xff]
    %v4572 = vld [vmem:[%s4559 + $0x60] sm:$0xff]
    %v4573 = vld [vmem:[%s4559 + $0x68] sm:$0xff]
    %v4574 = vld [vmem:[%s4559 + $0x70] sm:$0xff]
    %v4575 = vld [vmem:[%s4559 + $0x78] sm:$0xff]
    %vm4582 = vcmask 1043456
    %v4583 = vrot.slane %v4537, 4
    %v4584 = vrot.slane %v4538, 4
    %v4585 = vsel %vm4582, %v4583, %v4584
    %v4586 = vrot.slane %v4539, 4
    %v4587 = vsel %vm4582, %v4584, %v4586
    %v4588 = vrot.slane %v4540, 4
    %v4589 = vsel %vm4582, %v4586, %v4588
    %v4590 = vrot.slane %v4541, 4
    %v4591 = vsel %vm4582, %v4588, %v4590
    %v4592 = vrot.slane %v4542, 4
    %v4593 = vsel %vm4582, %v4590, %v4592
    %4599 = vmatprep.subr.bf16.mxu0 %v4561
    %4600 = vmatpush1.bf16.msra.mxu0 %v4560
    %4601 = vmatprep.subr.bf16.mxu0 %v4563
    %4602 = vmatpush1.bf16.msra.mxu0 %v4562
    %4603 = vmatprep.subr.bf16.mxu0 %v4565
    %4604 = vmatpush1.bf16.msra.mxu0 %v4564
    %4605 = vmatprep.subr.bf16.mxu0 %v4567
    %4606 = vmatpush1.bf16.msra.mxu0 %v4566
    %4607 = vmatprep.subr.bf16.mxu0 %v4569
    %4608 = vmatpush1.bf16.msra.mxu0 %v4568
    %4609 = vmatprep.subr.bf16.mxu0 %v4571
    %4610 = vmatpush1.bf16.msra.mxu0 %v4570
    %4611 = vmatprep.subr.bf16.mxu0 %v4573
    %4612 = vmatpush1.bf16.msra.mxu0 %v4572
    %4613 = vmatprep.subr.bf16.mxu0 %v4575
    %4614 = vmatpush1.bf16.msra.mxu0 %v4574
    %4615 = vmatprep.subr.bf16.mxu0 0
    %4616 = vmatpush1.bf16.msra.mxu0 0
    %4617 = vmatprep.subr.bf16.mxu0 0
    %4618 = vmatpush1.bf16.msra.mxu0 0
    %4619 = vmatprep.subr.bf16.mxu0 0
    %4620 = vmatpush1.bf16.msra.mxu0 0
    %4621 = vmatprep.subr.bf16.mxu0 0
    %4622 = vmatpush1.bf16.msra.mxu0 0
    %4623 = vmatprep.subr.bf16.mxu0 0
    %4624 = vmatpush1.bf16.msra.mxu0 0
    %4625 = vmatprep.subr.bf16.mxu0 0
    %4626 = vmatpush1.bf16.msra.mxu0 0
    %4627 = vmatprep.subr.bf16.mxu0 0
    %4628 = vmatpush1.bf16.msra.mxu0 0
    %4629 = vmatprep.subr.bf16.mxu0 0
    %4630 = vmatpush1.bf16.msra.mxu0 0
    %4631 = vmatprep.mubr.bf16.mxu0 0
    %4632 = vmatmul.mubr.bf16.gmra.mrb[0].mxu0 %v4585
    %v4633 = vpop.f32.mrb[0].mxu0
    %v4634 = vadd.f32 0.0, %v4633
    %v4635 = vpop.f32.mrb[0].mxu0
    %v4636 = vadd.f32 0.0, %v4635
    %v4637 = vpop.f32.mrb[0].mxu0
    %v4638 = vadd.f32 0.0, %v4637
    %v4639 = vpop.f32.mrb[0].mxu0
    %v4640 = vadd.f32 0.0, %v4639
    %4641 = vmatprep.mubr.bf16.mxu0 0
    %4642 = vmatmul.mubr.bf16.gmra.mrb[0].mxu0 %v4587
    %v4643 = vpop.f32.mrb[0].mxu0
    %v4644 = vadd.f32 0.0, %v4643
    %v4645 = vpop.f32.mrb[0].mxu0
    %v4646 = vadd.f32 0.0, %v4645
    %v4647 = vpop.f32.mrb[0].mxu0
    %v4648 = vadd.f32 0.0, %v4647
    %v4649 = vpop.f32.mrb[0].mxu0
    %v4650 = vadd.f32 0.0, %v4649
    %4651 = vmatprep.mubr.bf16.mxu0 0
    %4652 = vmatmul.mubr.bf16.gmra.mrb[0].mxu0 %v4589
    %v4653 = vpop.f32.mrb[0].mxu0
    %v4654 = vadd.f32 0.0, %v4653
    %v4655 = vpop.f32.mrb[0].mxu0
    %v4656 = vadd.f32 0.0, %v4655
    %v4657 = vpop.f32.mrb[0].mxu0
    %v4658 = vadd.f32 0.0, %v4657
    %v4659 = vpop.f32.mrb[0].mxu0
    %v4660 = vadd.f32 0.0, %v4659
    %4661 = vmatprep.mubr.bf16.mxu0 0
    %4662 = vmatmul.mubr.bf16.gmra.mrb[0].mxu0 %v4591
    %v4663 = vpop.f32.mrb[0].mxu0
    %v4664 = vadd.f32 0.0, %v4663
    %v4665 = vpop.f32.mrb[0].mxu0
    %v4666 = vadd.f32 0.0, %v4665
    %v4667 = vpop.f32.mrb[0].mxu0
    %v4668 = vadd.f32 0.0, %v4667
    %v4669 = vpop.f32.mrb[0].mxu0
    %v4670 = vadd.f32 0.0, %v4669
    %4671 = vmatprep.mubr.bf16.mxu0 0
    %4672 = vmatmul.mubr.bf16.gmra.mrb[0].mxu0 %v4593
    %v4673 = vpop.f32.mrb[0].mxu0
    %v4674 = vadd.f32 0.0, %v4673
    %v4675 = vpop.f32.mrb[0].mxu0
    %v4676 = vadd.f32 0.0, %v4675
    %v4677 = vpop.f32.mrb[0].mxu0
    %v4678 = vadd.f32 0.0, %v4677
    %v4679 = vpop.f32.mrb[0].mxu0
    %v4680 = vadd.f32 0.0, %v4679
    %4681 = vdwg.mxu0
    %4682 = vmatprep.subr.bf16.mxu0 %v4544
    %4683 = vmatpush1.bf16.msra.mxu0 %v4543
    %4684 = vmatprep.subr.bf16.mxu0 %v4546
    %4685 = vmatpush1.bf16.msra.mxu0 %v4545
    %4686 = vmatprep.subr.bf16.mxu0 %v4548
    %4687 = vmatpush1.bf16.msra.mxu0 %v4547
    %4688 = vmatprep.subr.bf16.mxu0 %v4550
    %4689 = vmatpush1.bf16.msra.mxu0 %v4549
    %4690 = vmatprep.subr.bf16.mxu0 %v4552
    %4691 = vmatpush1.bf16.msra.mxu0 %v4551
    %4692 = vmatprep.subr.bf16.mxu0 %v4554
    %4693 = vmatpush1.bf16.msra.mxu0 %v4553
    %4694 = vmatprep.subr.bf16.mxu0 %v4556
    %4695 = vmatpush1.bf16.msra.mxu0 %v4555
    %4696 = vmatprep.subr.bf16.mxu0 %v4558
    %4697 = vmatpush1.bf16.msra.mxu0 %v4557
    %4698 = vmatprep.subr.bf16.mxu0 0
    %4699 = vmatpush1.bf16.msra.mxu0 0
    %4700 = vmatprep.subr.bf16.mxu0 0
    %4701 = vmatpush1.bf16.msra.mxu0 0
    %4702 = vmatprep.subr.bf16.mxu0 0
    %4703 = vmatpush1.bf16.msra.mxu0 0
    %4704 = vmatprep.subr.bf16.mxu0 0
    %4705 = vmatpush1.bf16.msra.mxu0 0
    %4706 = vmatprep.subr.bf16.mxu0 0
    %4707 = vmatpush1.bf16.msra.mxu0 0
    %4708 = vmatprep.subr.bf16.mxu0 0
    %4709 = vmatpush1.bf16.msra.mxu0 0
    %4710 = vmatprep.subr.bf16.mxu0 0
    %4711 = vmatpush1.bf16.msra.mxu0 0
    %4712 = vmatprep.subr.bf16.mxu0 0
    %4713 = vmatpush1.bf16.msra.mxu0 0
    %4714 = vmatprep.mubr.bf16.mxu0 0
    %4715 = vmatmul.mubr.bf16.gmra.mrb[0].mxu0 %v4537
    %v4716 = vpop.f32.mrb[0].mxu0
    %v4717 = vadd.f32 %v4634, %v4716
    %v4718 = vpop.f32.mrb[0].mxu0
    %v4719 = vadd.f32 %v4636, %v4718
    %v4720 = vpop.f32.mrb[0].mxu0
    %v4721 = vadd.f32 %v4638, %v4720
    %v4722 = vpop.f32.mrb[0].mxu0
    %v4723 = vadd.f32 %v4640, %v4722
    %4724 = vmatprep.mubr.bf16.mxu0 0
    %4725 = vmatmul.mubr.bf16.gmra.mrb[0].mxu0 %v4538
    %v4726 = vpop.f32.mrb[0].mxu0
    %v4727 = vadd.f32 %v4644, %v4726
    %v4728 = vpop.f32.mrb[0].mxu0
    %v4729 = vadd.f32 %v4646, %v4728
    %v4730 = vpop.f32.mrb[0].mxu0
    %v4731 = vadd.f32 %v4648, %v4730
    %v4732 = vpop.f32.mrb[0].mxu0
    %v4733 = vadd.f32 %v4650, %v4732
    %4734 = vmatprep.mubr.bf16.mxu0 0
    %4735 = vmatmul.mubr.bf16.gmra.mrb[0].mxu0 %v4539
    %v4736 = vpop.f32.mrb[0].mxu0
    %v4737 = vadd.f32 %v4654, %v4736
    %v4738 = vpop.f32.mrb[0].mxu0
    %v4739 = vadd.f32 %v4656, %v4738
    %v4740 = vpop.f32.mrb[0].mxu0
    %v4741 = vadd.f32 %v4658, %v4740
    %v4742 = vpop.f32.mrb[0].mxu0
    %v4743 = vadd.f32 %v4660, %v4742
    %4744 = vmatprep.mubr.bf16.mxu0 0
    %4745 = vmatmul.mubr.bf16.gmra.mrb[0].mxu0 %v4540
    %v4746 = vpop.f32.mrb[0].mxu0
    %v4747 = vadd.f32 %v4664, %v4746
    %v4748 = vpop.f32.mrb[0].mxu0
    %v4749 = vadd.f32 %v4666, %v4748
    %v4750 = vpop.f32.mrb[0].mxu0
    %v4751 = vadd.f32 %v4668, %v4750
    %v4752 = vpop.f32.mrb[0].mxu0
    %v4753 = vadd.f32 %v4670, %v4752
    %4754 = vmatprep.mubr.bf16.mxu0 0
    %4755 = vmatmul.mubr.bf16.gmra.mrb[0].mxu0 %v4541
    %v4756 = vpop.f32.mrb[0].mxu0
    %v4757 = vadd.f32 %v4674, %v4756
    %v4758 = vpop.f32.mrb[0].mxu0
    %v4759 = vadd.f32 %v4676, %v4758
    %v4760 = vpop.f32.mrb[0].mxu0
    %v4761 = vadd.f32 %v4678, %v4760
    %v4762 = vpop.f32.mrb[0].mxu0
    %v4763 = vadd.f32 %v4680, %v4762
    %4764 = vdwg.mxu0
    %s4765 = scalar_lea.vmem [#allocation5], 256
    %v4766 = vld [vmem:[%s4765] sm:$0xff]
    %v4767 = vld [vmem:[%s4765 + $0x8] sm:$0xff]
    %v4768 = vld [vmem:[%s4765 + $0x10] sm:$0xff]
    %v4769 = vld [vmem:[%s4765 + $0x18] sm:$0xff]
    %v4770 = vld [vmem:[%s4765 + $0x20] sm:$0xff]
    %v4771 = vld [vmem:[%s4765 + $0x28] sm:$0xff]
    %v4772 = vld [vmem:[%s4765 + $0x30] sm:$0xff]
    %v4773 = vld [vmem:[%s4765 + $0x38] sm:$0xff]
    %v4774 = vld [vmem:[%s4765 + $0x40] sm:$0xff]
    %v4775 = vld [vmem:[%s4765 + $0x48] sm:$0xff]
    %v4776 = vld [vmem:[%s4765 + $0x50] sm:$0xff]
    %v4777 = vld [vmem:[%s4765 + $0x58] sm:$0xff]
    %v4778 = vld [vmem:[%s4765 + $0x60] sm:$0xff]
    %v4779 = vld [vmem:[%s4765 + $0x68] sm:$0xff]
    %v4780 = vld [vmem:[%s4765 + $0x70] sm:$0xff]
    %v4781 = vld [vmem:[%s4765 + $0x78] sm:$0xff]
    %4782 = vmatprep.subr.bf16.mxu0 %v4767
    %4783 = vmatpush1.bf16.msra.mxu0 %v4766
    %4784 = vmatprep.subr.bf16.mxu0 %v4769
    %4785 = vmatpush1.bf16.msra.mxu0 %v4768
    %4786 = vmatprep.subr.bf16.mxu0 %v4771
    %4787 = vmatpush1.bf16.msra.mxu0 %v4770
    %4788 = vmatprep.subr.bf16.mxu0 %v4773
    %4789 = vmatpush1.bf16.msra.mxu0 %v4772
    %4790 = vmatprep.subr.bf16.mxu0 %v4775
    %4791 = vmatpush1.bf16.msra.mxu0 %v4774
    %4792 = vmatprep.subr.bf16.mxu0 %v4777
    %4793 = vmatpush1.bf16.msra.mxu0 %v4776
    %4794 = vmatprep.subr.bf16.mxu0 %v4779
    %4795 = vmatpush1.bf16.msra.mxu0 %v4778
    %4796 = vmatprep.subr.bf16.mxu0 %v4781
    %4797 = vmatpush1.bf16.msra.mxu0 %v4780
    %4798 = vmatprep.subr.bf16.mxu0 0
    %4799 = vmatpush1.bf16.msra.mxu0 0
    %4800 = vmatprep.subr.bf16.mxu0 0
    %4801 = vmatpush1.bf16.msra.mxu0 0
    %4802 = vmatprep.subr.bf16.mxu0 0
    %4803 = vmatpush1.bf16.msra.mxu0 0
    %4804 = vmatprep.subr.bf16.mxu0 0
    %4805 = vmatpush1.bf16.msra.mxu0 0
    %4806 = vmatprep.subr.bf16.mxu0 0
    %4807 = vmatpush1.bf16.msra.mxu0 0
    %4808 = vmatprep.subr.bf16.mxu0 0
    %4809 = vmatpush1.bf16.msra.mxu0 0
    %4810 = vmatprep.subr.bf16.mxu0 0
    %4811 = vmatpush1.bf16.msra.mxu0 0
    %4812 = vmatprep.subr.bf16.mxu0 0
    %4813 = vmatpush1.bf16.msra.mxu0 0
    %4814 = vmatprep.mubr.bf16.mxu0 0
    %4815 = vmatmul.mubr.bf16.gmra.mrb[0].mxu0 %v4538
    %v4816 = vpop.f32.mrb[0].mxu0
    %v4817 = vadd.f32 0.0, %v4816
    %v4818 = vpop.f32.mrb[0].mxu0
    %v4819 = vadd.f32 0.0, %v4818
    %v4820 = vpop.f32.mrb[0].mxu0
    %v4821 = vadd.f32 0.0, %v4820
    %v4822 = vpop.f32.mrb[0].mxu0
    %v4823 = vadd.f32 0.0, %v4822
    %4824 = vmatprep.mubr.bf16.mxu0 0
    %4825 = vmatmul.mubr.bf16.gmra.mrb[0].mxu0 %v4539
    %v4826 = vpop.f32.mrb[0].mxu0
    %v4827 = vadd.f32 0.0, %v4826
    %v4828 = vpop.f32.mrb[0].mxu0
    %v4829 = vadd.f32 0.0, %v4828
    %v4830 = vpop.f32.mrb[0].mxu0
    %v4831 = vadd.f32 0.0, %v4830
    %v4832 = vpop.f32.mrb[0].mxu0
    %v4833 = vadd.f32 0.0, %v4832
    %4834 = vmatprep.mubr.bf16.mxu0 0
    %4835 = vmatmul.mubr.bf16.gmra.mrb[0].mxu0 %v4540
    %v4836 = vpop.f32.mrb[0].mxu0
    %v4837 = vadd.f32 0.0, %v4836
    %v4838 = vpop.f32.mrb[0].mxu0
    %v4839 = vadd.f32 0.0, %v4838
    %v4840 = vpop.f32.mrb[0].mxu0
    %v4841 = vadd.f32 0.0, %v4840
    %v4842 = vpop.f32.mrb[0].mxu0
    %v4843 = vadd.f32 0.0, %v4842
    %4844 = vmatprep.mubr.bf16.mxu0 0
    %4845 = vmatmul.mubr.bf16.gmra.mrb[0].mxu0 %v4541
    %v4846 = vpop.f32.mrb[0].mxu0
    %v4847 = vadd.f32 0.0, %v4846
    %v4848 = vpop.f32.mrb[0].mxu0
    %v4849 = vadd.f32 0.0, %v4848
    %v4850 = vpop.f32.mrb[0].mxu0
    %v4851 = vadd.f32 0.0, %v4850
    %v4852 = vpop.f32.mrb[0].mxu0
    %v4853 = vadd.f32 0.0, %v4852
    %4854 = vmatprep.mubr.bf16.mxu0 0
    %4855 = vmatmul.mubr.bf16.gmra.mrb[0].mxu0 %v4542
    %v4856 = vpop.f32.mrb[0].mxu0
    %v4857 = vadd.f32 0.0, %v4856
    %v4858 = vpop.f32.mrb[0].mxu0
    %v4859 = vadd.f32 0.0, %v4858
    %v4860 = vpop.f32.mrb[0].mxu0
    %v4861 = vadd.f32 0.0, %v4860
    %v4862 = vpop.f32.mrb[0].mxu0
    %v4863 = vadd.f32 0.0, %v4862
    %4864 = vdwg.mxu0
    %v4865 = vadd.f32 %v4717, %v4817
    %v4866 = vadd.f32 %v4719, %v4819
    %v4867 = vadd.f32 %v4721, %v4821
    %v4868 = vadd.f32 %v4723, %v4823
    %v4869 = vadd.f32 %v4727, %v4827
    %v4870 = vadd.f32 %v4729, %v4829
    %v4871 = vadd.f32 %v4731, %v4831
    %v4872 = vadd.f32 %v4733, %v4833
    %v4873 = vadd.f32 %v4737, %v4837
    %v4874 = vadd.f32 %v4739, %v4839
    %v4875 = vadd.f32 %v4741, %v4841
    %v4876 = vadd.f32 %v4743, %v4843
    %v4877 = vadd.f32 %v4747, %v4847
    %v4878 = vadd.f32 %v4749, %v4849
    %v4879 = vadd.f32 %v4751, %v4851
    %v4880 = vadd.f32 %v4753, %v4853
    %v4881 = vadd.f32 %v4757, %v4857
    %v4882 = vadd.f32 %v4759, %v4859
    %v4883 = vadd.f32 %v4761, %v4861
    %v4884 = vadd.f32 %v4763, %v4863
    %v4885 = vld [vmem:[%s7] sm:$0x3]
    %v4887 = vlaneseq
    %v4888 = vshrl.u32 %v4887, 7
    %v4889 = vsub.s32 0, %v4888
    %v4890 = vrot.slane %v4885, %v4889
    %v4891 = vlaneseq
    %v4892 = vshrl.u32 %v4891, 7
    %v4893 = vsub.s32 1, %v4892
    %v4894 = vrot.slane %v4885, %v4893
    %v4897 = vadd.f32 %v4865, %v4890
    %v4898 = vadd.f32 %v4866, %v4894
    %v4899 = vadd.f32 %v4867, %v4890
    %v4900 = vadd.f32 %v4868, %v4894
    %v4901 = vadd.f32 %v4869, %v4890
    %v4902 = vadd.f32 %v4870, %v4894
    %v4903 = vadd.f32 %v4871, %v4890
    %v4904 = vadd.f32 %v4872, %v4894
    %v4905 = vadd.f32 %v4873, %v4890
    %v4906 = vadd.f32 %v4874, %v4894
    %v4907 = vadd.f32 %v4875, %v4890
    %v4908 = vadd.f32 %v4876, %v4894
    %v4909 = vadd.f32 %v4877, %v4890
    %v4910 = vadd.f32 %v4878, %v4894
    %v4911 = vadd.f32 %v4879, %v4890
    %v4912 = vadd.f32 %v4880, %v4894
    %v4913 = vadd.f32 %v4881, %v4890
    %v4914 = vadd.f32 %v4882, %v4894
    %v4915 = vadd.f32 %v4883, %v4890
    %v4916 = vadd.f32 %v4884, %v4894
    %v4917 = vmul.f32 %v4897, %v4510
    %v4918 = vmul.f32 %v4898, %v4510
    %v4919 = vmul.f32 %v4899, %v4511
    %v4920 = vmul.f32 %v4900, %v4511
    %v4921 = vmul.f32 %v4901, %v4512
    %v4922 = vmul.f32 %v4902, %v4512
    %v4923 = vmul.f32 %v4903, %v4513
    %v4924 = vmul.f32 %v4904, %v4513
    %v4925 = vmul.f32 %v4905, %v4514
    %v4926 = vmul.f32 %v4906, %v4514
    %v4927 = vmul.f32 %v4907, %v4515
    %v4928 = vmul.f32 %v4908, %v4515
    %v4929 = vmul.f32 %v4909, %v4516
    %v4930 = vmul.f32 %v4910, %v4516
    %v4931 = vmul.f32 %v4911, %v4517
    %v4932 = vmul.f32 %v4912, %v4517
    %v4933 = vmul.f32 %v4913, %v4518
    %v4934 = vmul.f32 %v4914, %v4518
    %v4935 = vmul.f32 %v4915, %v4519
    %v4936 = vmul.f32 %v4916, %v4519
    %v4937 = vadd.f32 %v4917, %v4919
    %v4938 = vadd.f32 %v4937, %v4921
    %v4939 = vadd.f32 %v4938, %v4923
    %v4940 = vadd.f32 %v4939, %v4925
    %v4941 = vadd.f32 %v4940, %v4927
    %v4942 = vadd.f32 %v4941, %v4929
    %v4943 = vadd.f32 %v4942, %v4931
    %v4944 = vadd.f32 %v4943, %v4933
    %v4945 = vadd.f32 %v4944, %v4935
    %v4946 = vrot.slane %v4945, 4
    %v4947 = vadd.f32 %v4945, %v4946
    %v4948 = vrot.slane %v4947, 2
    %v4949 = vadd.f32 %v4947, %v4948
    %v4950 = vrot.slane %v4949, 1
    %v4951 = vadd.f32 %v4949, %v4950
    %v4952 = vadd.f32 %v4918, %v4920
    %v4953 = vadd.f32 %v4952, %v4922
    %v4954 = vadd.f32 %v4953, %v4924
    %v4955 = vadd.f32 %v4954, %v4926
    %v4956 = vadd.f32 %v4955, %v4928
    %v4957 = vadd.f32 %v4956, %v4930
    %v4958 = vadd.f32 %v4957, %v4932
    %v4959 = vadd.f32 %v4958, %v4934
    %v4960 = vadd.f32 %v4959, %v4936
    %v4961 = vrot.slane %v4960, 4
    %v4962 = vadd.f32 %v4960, %v4961
    %v4963 = vrot.slane %v4962, 2
    %v4964 = vadd.f32 %v4962, %v4963
    %v4965 = vrot.slane %v4964, 1
    %v4966 = vadd.f32 %v4964, %v4965
    %v4967 = vmul.f32 %v4951, 0.05
    %v4968 = vmul.f32 %v4966, 0.05
    %v4969 = vmul.f32 %v4917, %v4917
    %v4970 = vmul.f32 %v4918, %v4918
    %v4971 = vmul.f32 %v4919, %v4919
    %v4972 = vmul.f32 %v4920, %v4920
    %v4973 = vmul.f32 %v4921, %v4921
    %v4974 = vmul.f32 %v4922, %v4922
    %v4975 = vmul.f32 %v4923, %v4923
    %v4976 = vmul.f32 %v4924, %v4924
    %v4977 = vmul.f32 %v4925, %v4925
    %v4978 = vmul.f32 %v4926, %v4926
    %v4979 = vmul.f32 %v4927, %v4927
    %v4980 = vmul.f32 %v4928, %v4928
    %v4981 = vmul.f32 %v4929, %v4929
    %v4982 = vmul.f32 %v4930, %v4930
    %v4983 = vmul.f32 %v4931, %v4931
    %v4984 = vmul.f32 %v4932, %v4932
    %v4985 = vmul.f32 %v4933, %v4933
    %v4986 = vmul.f32 %v4934, %v4934
    %v4987 = vmul.f32 %v4935, %v4935
    %v4988 = vmul.f32 %v4936, %v4936
    %v4989 = vadd.f32 %v4969, %v4971
    %v4990 = vadd.f32 %v4989, %v4973
    %v4991 = vadd.f32 %v4990, %v4975
    %v4992 = vadd.f32 %v4991, %v4977
    %v4993 = vadd.f32 %v4992, %v4979
    %v4994 = vadd.f32 %v4993, %v4981
    %v4995 = vadd.f32 %v4994, %v4983
    %v4996 = vadd.f32 %v4995, %v4985
    %v4997 = vadd.f32 %v4996, %v4987
    %v4998 = vrot.slane %v4997, 4
    %v4999 = vadd.f32 %v4997, %v4998
    %v5000 = vrot.slane %v4999, 2
    %v5001 = vadd.f32 %v4999, %v5000
    %v5002 = vrot.slane %v5001, 1
    %v5003 = vadd.f32 %v5001, %v5002
    %v5004 = vadd.f32 %v4970, %v4972
    %v5005 = vadd.f32 %v5004, %v4974
    %v5006 = vadd.f32 %v5005, %v4976
    %v5007 = vadd.f32 %v5006, %v4978
    %v5008 = vadd.f32 %v5007, %v4980
    %v5009 = vadd.f32 %v5008, %v4982
    %v5010 = vadd.f32 %v5009, %v4984
    %v5011 = vadd.f32 %v5010, %v4986
    %v5012 = vadd.f32 %v5011, %v4988
    %v5013 = vrot.slane %v5012, 4
    %v5014 = vadd.f32 %v5012, %v5013
    %v5015 = vrot.slane %v5014, 2
    %v5016 = vadd.f32 %v5014, %v5015
    %v5017 = vrot.slane %v5016, 1
    %v5018 = vadd.f32 %v5016, %v5017
    %v5019 = vmul.f32 %v5003, 0.05
    %v5020 = vmul.f32 %v5018, 0.05
    %v5021 = vmul.f32 %v4967, %v4967
    %v5022 = vmul.f32 %v4968, %v4968
    %v5023 = vsub.f32 %v5019, %v5021
    %v5024 = vsub.f32 %v5020, %v5022
    %v5025 = vmax.f32 %v5023, 0.0
    %v5026 = vmax.f32 %v5024, 0.0
    %v5027 = vsub.f32 %v4897, %v4967
    %v5028 = vsub.f32 %v4898, %v4968
    %v5029 = vsub.f32 %v4899, %v4967
    %v5030 = vsub.f32 %v4900, %v4968
    %v5031 = vsub.f32 %v4901, %v4967
    %v5032 = vsub.f32 %v4902, %v4968
    %v5033 = vsub.f32 %v4903, %v4967
    %v5034 = vsub.f32 %v4904, %v4968
    %v5035 = vsub.f32 %v4905, %v4967
    %v5036 = vsub.f32 %v4906, %v4968
    %v5037 = vsub.f32 %v4907, %v4967
    %v5038 = vsub.f32 %v4908, %v4968
    %v5039 = vsub.f32 %v4909, %v4967
    %v5040 = vsub.f32 %v4910, %v4968
    %v5041 = vsub.f32 %v4911, %v4967
    %v5042 = vsub.f32 %v4912, %v4968
    %v5043 = vsub.f32 %v4913, %v4967
    %v5044 = vsub.f32 %v4914, %v4968
    %v5045 = vsub.f32 %v4915, %v4967
    %v5046 = vsub.f32 %v4916, %v4968
    %v5047 = vadd.f32 %v5025, 1e-05
    %v5048 = vadd.f32 %v5026, 1e-05
    %v5049 = vrsqrt.pop %v5047
    %v5050 = vrsqrt.pop %v5048
    %v5051 = vmul.f32 %v5027, %v5049
    %v5052 = vmul.f32 %v5028, %v5050
    %v5053 = vmul.f32 %v5029, %v5049
    %v5054 = vmul.f32 %v5030, %v5050
    %v5055 = vmul.f32 %v5031, %v5049
    %v5056 = vmul.f32 %v5032, %v5050
    %v5057 = vmul.f32 %v5033, %v5049
    %v5058 = vmul.f32 %v5034, %v5050
    %v5059 = vmul.f32 %v5035, %v5049
    %v5060 = vmul.f32 %v5036, %v5050
    %v5061 = vmul.f32 %v5037, %v5049
    %v5062 = vmul.f32 %v5038, %v5050
    %v5063 = vmul.f32 %v5039, %v5049
    %v5064 = vmul.f32 %v5040, %v5050
    %v5065 = vmul.f32 %v5041, %v5049
    %v5066 = vmul.f32 %v5042, %v5050
    %v5067 = vmul.f32 %v5043, %v5049
    %v5068 = vmul.f32 %v5044, %v5050
    %v5069 = vmul.f32 %v5045, %v5049
    %v5070 = vmul.f32 %v5046, %v5050
    %v5071 = vld [vmem:[%s8] sm:$0x3]
    %v5073 = vlaneseq
    %v5074 = vshrl.u32 %v5073, 7
    %v5075 = vsub.s32 0, %v5074
    %v5076 = vrot.slane %v5071, %v5075
    %v5077 = vlaneseq
    %v5078 = vshrl.u32 %v5077, 7
    %v5079 = vsub.s32 1, %v5078
    %v5080 = vrot.slane %v5071, %v5079
    %v5083 = vmul.f32 %v5051, %v5076
    %v5084 = vmul.f32 %v5052, %v5080
    %v5085 = vmul.f32 %v5053, %v5076
    %v5086 = vmul.f32 %v5054, %v5080
    %v5087 = vmul.f32 %v5055, %v5076
    %v5088 = vmul.f32 %v5056, %v5080
    %v5089 = vmul.f32 %v5057, %v5076
    %v5090 = vmul.f32 %v5058, %v5080
    %v5091 = vmul.f32 %v5059, %v5076
    %v5092 = vmul.f32 %v5060, %v5080
    %v5093 = vmul.f32 %v5061, %v5076
    %v5094 = vmul.f32 %v5062, %v5080
    %v5095 = vmul.f32 %v5063, %v5076
    %v5096 = vmul.f32 %v5064, %v5080
    %v5097 = vmul.f32 %v5065, %v5076
    %v5098 = vmul.f32 %v5066, %v5080
    %v5099 = vmul.f32 %v5067, %v5076
    %v5100 = vmul.f32 %v5068, %v5080
    %v5101 = vmul.f32 %v5069, %v5076
    %v5102 = vmul.f32 %v5070, %v5080
    %v5103 = vld [vmem:[%s9] sm:$0x3]
    %v5105 = vlaneseq
    %v5106 = vshrl.u32 %v5105, 7
    %v5107 = vsub.s32 0, %v5106
    %v5108 = vrot.slane %v5103, %v5107
    %v5109 = vlaneseq
    %v5110 = vshrl.u32 %v5109, 7
    %v5111 = vsub.s32 1, %v5110
    %v5112 = vrot.slane %v5103, %v5111
    %v5115 = vadd.f32 %v5083, %v5108
    %v5116 = vadd.f32 %v5084, %v5112
    %v5117 = vadd.f32 %v5085, %v5108
    %v5118 = vadd.f32 %v5086, %v5112
    %v5119 = vadd.f32 %v5087, %v5108
    %v5120 = vadd.f32 %v5088, %v5112
    %v5121 = vadd.f32 %v5089, %v5108
    %v5122 = vadd.f32 %v5090, %v5112
    %v5123 = vadd.f32 %v5091, %v5108
    %v5124 = vadd.f32 %v5092, %v5112
    %v5125 = vadd.f32 %v5093, %v5108
    %v5126 = vadd.f32 %v5094, %v5112
    %v5127 = vadd.f32 %v5095, %v5108
    %v5128 = vadd.f32 %v5096, %v5112
    %v5129 = vadd.f32 %v5097, %v5108
    %v5130 = vadd.f32 %v5098, %v5112
    %v5131 = vadd.f32 %v5099, %v5108
    %v5132 = vadd.f32 %v5100, %v5112
    %v5133 = vadd.f32 %v5101, %v5108
    %v5134 = vadd.f32 %v5102, %v5112
    %v5135 = vmax.f32 %v5115, 0.0
    %v5136 = vmax.f32 %v5116, 0.0
    %v5137 = vmax.f32 %v5117, 0.0
    %v5138 = vmax.f32 %v5118, 0.0
    %v5139 = vmax.f32 %v5119, 0.0
    %v5140 = vmax.f32 %v5120, 0.0
    %v5141 = vmax.f32 %v5121, 0.0
    %v5142 = vmax.f32 %v5122, 0.0
    %v5143 = vmax.f32 %v5123, 0.0
    %v5144 = vmax.f32 %v5124, 0.0
    %v5145 = vmax.f32 %v5125, 0.0
    %v5146 = vmax.f32 %v5126, 0.0
    %v5147 = vmax.f32 %v5127, 0.0
    %v5148 = vmax.f32 %v5128, 0.0
    %v5149 = vmax.f32 %v5129, 0.0
    %v5150 = vmax.f32 %v5130, 0.0
    %v5151 = vmax.f32 %v5131, 0.0
    %v5152 = vmax.f32 %v5132, 0.0
    %v5153 = vmax.f32 %v5133, 0.0
    %v5154 = vmax.f32 %v5134, 0.0
    %5155 = vst [vmem:[#allocation4] sm:$0xff] 0.0
    %5156 = vst [vmem:[#allocation4 + $0x8] sm:$0xff] 0.0
    %5157 = vst [vmem:[#allocation4 + $0xb0] sm:$0xff] 0.0
    %5158 = vst [vmem:[#allocation4 + $0xb8] sm:$0xff] 0.0
    %5159 = vst [vmem:[#allocation4 + $0x10] sm:$0xff] %v5135
    %5160 = vst [vmem:[#allocation4 + $0x18] sm:$0xff] %v5136
    %5161 = vst [vmem:[#allocation4 + $0x20] sm:$0xff] %v5137
    %5162 = vst [vmem:[#allocation4 + $0x28] sm:$0xff] %v5138
    %5163 = vst [vmem:[#allocation4 + $0x30] sm:$0xff] %v5139
    %5164 = vst [vmem:[#allocation4 + $0x38] sm:$0xff] %v5140
    %5165 = vst [vmem:[#allocation4 + $0x40] sm:$0xff] %v5141
    %5166 = vst [vmem:[#allocation4 + $0x48] sm:$0xff] %v5142
    %5167 = vst [vmem:[#allocation4 + $0x50] sm:$0xff] %v5143
    %5168 = vst [vmem:[#allocation4 + $0x58] sm:$0xff] %v5144
    %5169 = vst [vmem:[#allocation4 + $0x60] sm:$0xff] %v5145
    %5170 = vst [vmem:[#allocation4 + $0x68] sm:$0xff] %v5146
    %5171 = vst [vmem:[#allocation4 + $0x70] sm:$0xff] %v5147
    %5172 = vst [vmem:[#allocation4 + $0x78] sm:$0xff] %v5148
    %5173 = vst [vmem:[#allocation4 + $0x80] sm:$0xff] %v5149
    %5174 = vst [vmem:[#allocation4 + $0x88] sm:$0xff] %v5150
    %5175 = vst [vmem:[#allocation4 + $0x90] sm:$0xff] %v5151
    %5176 = vst [vmem:[#allocation4 + $0x98] sm:$0xff] %v5152
    %5177 = vst [vmem:[#allocation4 + $0xa0] sm:$0xff] %v5153
    %5178 = vst [vmem:[#allocation4 + $0xa8] sm:$0xff] %v5154
    %s5179 = smul.u32 %s4520, 32
    %s5180 = smul.u32 %s5179, 1
    %s5181 = sshll.u32 %s5180, 4
    %5182 = dma.done %s141, %s5181
    %v5183 = vld [vmem:[#allocation4] sm:$0xff]
    %v5184 = vld [vmem:[#allocation4 + $0x8] sm:$0xff]
    %v5185 = vld [vmem:[#allocation4 + $0x10] sm:$0xff]
    %v5186 = vld [vmem:[#allocation4 + $0x18] sm:$0xff]
    %v5187 = vld [vmem:[#allocation4 + $0x20] sm:$0xff]
    %v5188 = vld [vmem:[#allocation4 + $0x28] sm:$0xff]
    %v5189 = vld [vmem:[#allocation4 + $0x30] sm:$0xff]
    %v5190 = vld [vmem:[#allocation4 + $0x38] sm:$0xff]
    %v5191 = vld [vmem:[#allocation4 + $0x40] sm:$0xff]
    %v5192 = vld [vmem:[#allocation4 + $0x48] sm:$0xff]
    %v5193 = vld [vmem:[#allocation4 + $0x50] sm:$0xff]
    %v5194 = vld [vmem:[#allocation4 + $0x58] sm:$0xff]
    %v5195 = vld [vmem:[#allocation4 + $0x60] sm:$0xff]
    %v5196 = vld [vmem:[#allocation4 + $0x68] sm:$0xff]
    %v5197 = vld [vmem:[#allocation4 + $0x70] sm:$0xff]
    %v5198 = vld [vmem:[#allocation4 + $0x78] sm:$0xff]
    %v5199 = vld [vmem:[#allocation4 + $0x80] sm:$0xff]
    %v5200 = vld [vmem:[#allocation4 + $0x88] sm:$0xff]
    %v5201 = vld [vmem:[#allocation4 + $0x90] sm:$0xff]
    %v5202 = vld [vmem:[#allocation4 + $0x98] sm:$0xff]
    %v5203 = vld [vmem:[#allocation4 + $0xa0] sm:$0xff]
    %v5204 = vld [vmem:[#allocation4 + $0xa8] sm:$0xff]
    %v5205 = vld [vmem:[#allocation4 + $0xb0] sm:$0xff]
    %v5206 = vld [vmem:[#allocation4 + $0xb8] sm:$0xff]
    %v5207 = vpack.c.bf16 %v5185, %v5183
    %v5208 = vpack.c.bf16 %v5186, %v5184
    %v5209 = vpack.c.bf16 %v5189, %v5187
    %v5210 = vpack.c.bf16 %v5190, %v5188
    %v5211 = vpack.c.bf16 %v5193, %v5191
    %v5212 = vpack.c.bf16 %v5194, %v5192
    %v5213 = vpack.c.bf16 %v5197, %v5195
    %v5214 = vpack.c.bf16 %v5198, %v5196
    %v5215 = vpack.c.bf16 %v5201, %v5199
    %v5216 = vpack.c.bf16 %v5202, %v5200
    %v5217 = vpack.c.bf16 %v5205, %v5203
    %v5218 = vpack.c.bf16 %v5206, %v5204
    %v5219 = vld [vmem:[#allocation6] sm:$0xff]
    %v5220 = vld [vmem:[#allocation6 + $0x8] sm:$0xff]
    %v5221 = vld [vmem:[#allocation6 + $0x10] sm:$0xff]
    %v5222 = vld [vmem:[#allocation6 + $0x18] sm:$0xff]
    %v5223 = vld [vmem:[#allocation6 + $0x20] sm:$0xff]
    %v5224 = vld [vmem:[#allocation6 + $0x28] sm:$0xff]
    %v5225 = vld [vmem:[#allocation6 + $0x30] sm:$0xff]
    %v5226 = vld [vmem:[#allocation6 + $0x38] sm:$0xff]
    %v5227 = vld [vmem:[#allocation6 + $0x40] sm:$0xff]
    %v5228 = vld [vmem:[#allocation6 + $0x48] sm:$0xff]
    %v5229 = vld [vmem:[#allocation6 + $0x50] sm:$0xff]
    %v5230 = vld [vmem:[#allocation6 + $0x58] sm:$0xff]
    %v5231 = vld [vmem:[#allocation6 + $0x60] sm:$0xff]
    %v5232 = vld [vmem:[#allocation6 + $0x68] sm:$0xff]
    %v5233 = vld [vmem:[#allocation6 + $0x70] sm:$0xff]
    %v5234 = vld [vmem:[#allocation6 + $0x78] sm:$0xff]
    %s5235 = scalar_lea.vmem [#allocation6], 128
    %v5236 = vld [vmem:[%s5235] sm:$0xff]
    %v5237 = vld [vmem:[%s5235 + $0x8] sm:$0xff]
    %v5238 = vld [vmem:[%s5235 + $0x10] sm:$0xff]
    %v5239 = vld [vmem:[%s5235 + $0x18] sm:$0xff]
    %v5240 = vld [vmem:[%s5235 + $0x20] sm:$0xff]
    %v5241 = vld [vmem:[%s5235 + $0x28] sm:$0xff]
    %v5242 = vld [vmem:[%s5235 + $0x30] sm:$0xff]
    %v5243 = vld [vmem:[%s5235 + $0x38] sm:$0xff]
    %v5244 = vld [vmem:[%s5235 + $0x40] sm:$0xff]
    %v5245 = vld [vmem:[%s5235 + $0x48] sm:$0xff]
    %v5246 = vld [vmem:[%s5235 + $0x50] sm:$0xff]
    %v5247 = vld [vmem:[%s5235 + $0x58] sm:$0xff]
    %v5248 = vld [vmem:[%s5235 + $0x60] sm:$0xff]
    %v5249 = vld [vmem:[%s5235 + $0x68] sm:$0xff]
    %v5250 = vld [vmem:[%s5235 + $0x70] sm:$0xff]
    %v5251 = vld [vmem:[%s5235 + $0x78] sm:$0xff]
    %v5264 = vrot.slane %v5207, 4
    %v5265 = vrot.slane %v5209, 4
    %v5266 = vsel %vm4582, %v5264, %v5265
    %v5267 = vrot.slane %v5208, 4
    %v5268 = vrot.slane %v5210, 4
    %v5269 = vsel %vm4582, %v5267, %v5268
    %v5270 = vrot.slane %v5211, 4
    %v5271 = vsel %vm4582, %v5265, %v5270
    %v5272 = vrot.slane %v5212, 4
    %v5273 = vsel %vm4582, %v5268, %v5272
    %v5274 = vrot.slane %v5213, 4
    %v5275 = vsel %vm4582, %v5270, %v5274
    %v5276 = vrot.slane %v5214, 4
    %v5277 = vsel %vm4582, %v5272, %v5276
    %v5278 = vrot.slane %v5215, 4
    %v5279 = vsel %vm4582, %v5274, %v5278
    %v5280 = vrot.slane %v5216, 4
    %v5281 = vsel %vm4582, %v5276, %v5280
    %v5282 = vrot.slane %v5217, 4
    %v5283 = vsel %vm4582, %v5278, %v5282
    %v5284 = vrot.slane %v5218, 4
    %v5285 = vsel %vm4582, %v5280, %v5284
    %5296 = vmatprep.subr.bf16.mxu0 0
    %5297 = vmatpush1.bf16.msra.mxu0 %v5236
    %5298 = vmatprep.subr.bf16.mxu0 0
    %5299 = vmatpush1.bf16.msra.mxu0 %v5237
    %5300 = vmatprep.subr.bf16.mxu0 0
    %5301 = vmatpush1.bf16.msra.mxu0 %v5238
    %5302 = vmatprep.subr.bf16.mxu0 0
    %5303 = vmatpush1.bf16.msra.mxu0 %v5239
    %5304 = vmatprep.subr.bf16.mxu0 0
    %5305 = vmatpush1.bf16.msra.mxu0 %v5240
    %5306 = vmatprep.subr.bf16.mxu0 0
    %5307 = vmatpush1.bf16.msra.mxu0 %v5241
    %5308 = vmatprep.subr.bf16.mxu0 0
    %5309 = vmatpush1.bf16.msra.mxu0 %v5242
    %5310 = vmatprep.subr.bf16.mxu0 0
    %5311 = vmatpush1.bf16.msra.mxu0 %v5243
    %5312 = vmatprep.subr.bf16.mxu0 0
    %5313 = vmatpush1.bf16.msra.mxu0 %v5244
    %5314 = vmatprep.subr.bf16.mxu0 0
    %5315 = vmatpush1.bf16.msra.mxu0 %v5245
    %5316 = vmatprep.subr.bf16.mxu0 0
    %5317 = vmatpush1.bf16.msra.mxu0 %v5246
    %5318 = vmatprep.subr.bf16.mxu0 0
    %5319 = vmatpush1.bf16.msra.mxu0 %v5247
    %5320 = vmatprep.subr.bf16.mxu0 0
    %5321 = vmatpush1.bf16.msra.mxu0 %v5248
    %5322 = vmatprep.subr.bf16.mxu0 0
    %5323 = vmatpush1.bf16.msra.mxu0 %v5249
    %5324 = vmatprep.subr.bf16.mxu0 0
    %5325 = vmatpush1.bf16.msra.mxu0 %v5250
    %5326 = vmatprep.subr.bf16.mxu0 0
    %5327 = vmatpush1.bf16.msra.mxu0 %v5251
    %5328 = vmatprep.mubr.bf16.mxu0 %v5269
    %5329 = vmatmul.mubr.bf16.gmra.mrb[0].mxu0 %v5266
    %v5330 = vpop.f32.mrb[0].mxu0
    %v5331 = vadd.f32 0.0, %v5330
    %v5332 = vpop.f32.mrb[0].mxu0
    %v5333 = vpop.f32.mrb[0].mxu0
    %v5334 = vadd.f32 0.0, %v5333
    %v5335 = vpop.f32.mrb[0].mxu0
    %5336 = vmatprep.mubr.bf16.mxu0 %v5273
    %5337 = vmatmul.mubr.bf16.gmra.mrb[0].mxu0 %v5271
    %v5338 = vpop.f32.mrb[0].mxu0
    %v5339 = vadd.f32 0.0, %v5338
    %v5340 = vpop.f32.mrb[0].mxu0
    %v5341 = vpop.f32.mrb[0].mxu0
    %v5342 = vadd.f32 0.0, %v5341
    %v5343 = vpop.f32.mrb[0].mxu0
    %5344 = vmatprep.mubr.bf16.mxu0 %v5277
    %5345 = vmatmul.mubr.bf16.gmra.mrb[0].mxu0 %v5275
    %v5346 = vpop.f32.mrb[0].mxu0
    %v5347 = vadd.f32 0.0, %v5346
    %v5348 = vpop.f32.mrb[0].mxu0
    %v5349 = vpop.f32.mrb[0].mxu0
    %v5350 = vadd.f32 0.0, %v5349
    %v5351 = vpop.f32.mrb[0].mxu0
    %5352 = vmatprep.mubr.bf16.mxu0 %v5281
    %5353 = vmatmul.mubr.bf16.gmra.mrb[0].mxu0 %v5279
    %v5354 = vpop.f32.mrb[0].mxu0
    %v5355 = vadd.f32 0.0, %v5354
    %v5356 = vpop.f32.mrb[0].mxu0
    %v5357 = vpop.f32.mrb[0].mxu0
    %v5358 = vadd.f32 0.0, %v5357
    %v5359 = vpop.f32.mrb[0].mxu0
    %5360 = vmatprep.mubr.bf16.mxu0 %v5285
    %5361 = vmatmul.mubr.bf16.gmra.mrb[0].mxu0 %v5283
    %v5362 = vpop.f32.mrb[0].mxu0
    %v5363 = vadd.f32 0.0, %v5362
    %v5364 = vpop.f32.mrb[0].mxu0
    %v5365 = vpop.f32.mrb[0].mxu0
    %v5366 = vadd.f32 0.0, %v5365
    %v5367 = vpop.f32.mrb[0].mxu0
    %5368 = vdwg.mxu0
    %5369 = vmatprep.subr.bf16.mxu0 0
    %5370 = vmatpush1.bf16.msra.mxu0 %v5219
    %5371 = vmatprep.subr.bf16.mxu0 0
    %5372 = vmatpush1.bf16.msra.mxu0 %v5220
    %5373 = vmatprep.subr.bf16.mxu0 0
    %5374 = vmatpush1.bf16.msra.mxu0 %v5221
    %5375 = vmatprep.subr.bf16.mxu0 0
    %5376 = vmatpush1.bf16.msra.mxu0 %v5222
    %5377 = vmatprep.subr.bf16.mxu0 0
    %5378 = vmatpush1.bf16.msra.mxu0 %v5223
    %5379 = vmatprep.subr.bf16.mxu0 0
    %5380 = vmatpush1.bf16.msra.mxu0 %v5224
    %5381 = vmatprep.subr.bf16.mxu0 0
    %5382 = vmatpush1.bf16.msra.mxu0 %v5225
    %5383 = vmatprep.subr.bf16.mxu0 0
    %5384 = vmatpush1.bf16.msra.mxu0 %v5226
    %5385 = vmatprep.subr.bf16.mxu0 0
    %5386 = vmatpush1.bf16.msra.mxu0 %v5227
    %5387 = vmatprep.subr.bf16.mxu0 0
    %5388 = vmatpush1.bf16.msra.mxu0 %v5228
    %5389 = vmatprep.subr.bf16.mxu0 0
    %5390 = vmatpush1.bf16.msra.mxu0 %v5229
    %5391 = vmatprep.subr.bf16.mxu0 0
    %5392 = vmatpush1.bf16.msra.mxu0 %v5230
    %5393 = vmatprep.subr.bf16.mxu0 0
    %5394 = vmatpush1.bf16.msra.mxu0 %v5231
    %5395 = vmatprep.subr.bf16.mxu0 0
    %5396 = vmatpush1.bf16.msra.mxu0 %v5232
    %5397 = vmatprep.subr.bf16.mxu0 0
    %5398 = vmatpush1.bf16.msra.mxu0 %v5233
    %5399 = vmatprep.subr.bf16.mxu0 0
    %5400 = vmatpush1.bf16.msra.mxu0 %v5234
    %5401 = vmatprep.mubr.bf16.mxu0 %v5208
    %5402 = vmatmul.mubr.bf16.gmra.mrb[0].mxu0 %v5207
    %v5403 = vpop.f32.mrb[0].mxu0
    %v5404 = vadd.f32 %v5331, %v5403
    %v5405 = vpop.f32.mrb[0].mxu0
    %v5406 = vpop.f32.mrb[0].mxu0
    %v5407 = vadd.f32 %v5334, %v5406
    %v5408 = vpop.f32.mrb[0].mxu0
    %5409 = vmatprep.mubr.bf16.mxu0 %v5210
    %5410 = vmatmul.mubr.bf16.gmra.mrb[0].mxu0 %v5209
    %v5411 = vpop.f32.mrb[0].mxu0
    %v5412 = vadd.f32 %v5339, %v5411
    %v5413 = vpop.f32.mrb[0].mxu0
    %v5414 = vpop.f32.mrb[0].mxu0
    %v5415 = vadd.f32 %v5342, %v5414
    %v5416 = vpop.f32.mrb[0].mxu0
    %5417 = vmatprep.mubr.bf16.mxu0 %v5212
    %5418 = vmatmul.mubr.bf16.gmra.mrb[0].mxu0 %v5211
    %v5419 = vpop.f32.mrb[0].mxu0
    %v5420 = vadd.f32 %v5347, %v5419
    %v5421 = vpop.f32.mrb[0].mxu0
    %v5422 = vpop.f32.mrb[0].mxu0
    %v5423 = vadd.f32 %v5350, %v5422
    %v5424 = vpop.f32.mrb[0].mxu0
    %5425 = vmatprep.mubr.bf16.mxu0 %v5214
    %5426 = vmatmul.mubr.bf16.gmra.mrb[0].mxu0 %v5213
    %v5427 = vpop.f32.mrb[0].mxu0
    %v5428 = vadd.f32 %v5355, %v5427
    %v5429 = vpop.f32.mrb[0].mxu0
    %v5430 = vpop.f32.mrb[0].mxu0
    %v5431 = vadd.f32 %v5358, %v5430
    %v5432 = vpop.f32.mrb[0].mxu0
    %5433 = vmatprep.mubr.bf16.mxu0 %v5216
    %5434 = vmatmul.mubr.bf16.gmra.mrb[0].mxu0 %v5215
    %v5435 = vpop.f32.mrb[0].mxu0
    %v5436 = vadd.f32 %v5363, %v5435
    %v5437 = vpop.f32.mrb[0].mxu0
    %v5438 = vpop.f32.mrb[0].mxu0
    %v5439 = vadd.f32 %v5366, %v5438
    %v5440 = vpop.f32.mrb[0].mxu0
    %5441 = vdwg.mxu0
    %s5442 = scalar_lea.vmem [#allocation6], 256
    %v5443 = vld [vmem:[%s5442] sm:$0xff]
    %v5444 = vld [vmem:[%s5442 + $0x8] sm:$0xff]
    %v5445 = vld [vmem:[%s5442 + $0x10] sm:$0xff]
    %v5446 = vld [vmem:[%s5442 + $0x18] sm:$0xff]
    %v5447 = vld [vmem:[%s5442 + $0x20] sm:$0xff]
    %v5448 = vld [vmem:[%s5442 + $0x28] sm:$0xff]
    %v5449 = vld [vmem:[%s5442 + $0x30] sm:$0xff]
    %v5450 = vld [vmem:[%s5442 + $0x38] sm:$0xff]
    %v5451 = vld [vmem:[%s5442 + $0x40] sm:$0xff]
    %v5452 = vld [vmem:[%s5442 + $0x48] sm:$0xff]
    %v5453 = vld [vmem:[%s5442 + $0x50] sm:$0xff]
    %v5454 = vld [vmem:[%s5442 + $0x58] sm:$0xff]
    %v5455 = vld [vmem:[%s5442 + $0x60] sm:$0xff]
    %v5456 = vld [vmem:[%s5442 + $0x68] sm:$0xff]
    %v5457 = vld [vmem:[%s5442 + $0x70] sm:$0xff]
    %v5458 = vld [vmem:[%s5442 + $0x78] sm:$0xff]
    %5459 = vmatprep.subr.bf16.mxu0 0
    %5460 = vmatpush1.bf16.msra.mxu0 %v5443
    %5461 = vmatprep.subr.bf16.mxu0 0
    %5462 = vmatpush1.bf16.msra.mxu0 %v5444
    %5463 = vmatprep.subr.bf16.mxu0 0
    %5464 = vmatpush1.bf16.msra.mxu0 %v5445
    %5465 = vmatprep.subr.bf16.mxu0 0
    %5466 = vmatpush1.bf16.msra.mxu0 %v5446
    %5467 = vmatprep.subr.bf16.mxu0 0
    %5468 = vmatpush1.bf16.msra.mxu0 %v5447
    %5469 = vmatprep.subr.bf16.mxu0 0
    %5470 = vmatpush1.bf16.msra.mxu0 %v5448
    %5471 = vmatprep.subr.bf16.mxu0 0
    %5472 = vmatpush1.bf16.msra.mxu0 %v5449
    %5473 = vmatprep.subr.bf16.mxu0 0
    %5474 = vmatpush1.bf16.msra.mxu0 %v5450
    %5475 = vmatprep.subr.bf16.mxu0 0
    %5476 = vmatpush1.bf16.msra.mxu0 %v5451
    %5477 = vmatprep.subr.bf16.mxu0 0
    %5478 = vmatpush1.bf16.msra.mxu0 %v5452
    %5479 = vmatprep.subr.bf16.mxu0 0
    %5480 = vmatpush1.bf16.msra.mxu0 %v5453
    %5481 = vmatprep.subr.bf16.mxu0 0
    %5482 = vmatpush1.bf16.msra.mxu0 %v5454
    %5483 = vmatprep.subr.bf16.mxu0 0
    %5484 = vmatpush1.bf16.msra.mxu0 %v5455
    %5485 = vmatprep.subr.bf16.mxu0 0
    %5486 = vmatpush1.bf16.msra.mxu0 %v5456
    %5487 = vmatprep.subr.bf16.mxu0 0
    %5488 = vmatpush1.bf16.msra.mxu0 %v5457
    %5489 = vmatprep.subr.bf16.mxu0 0
    %5490 = vmatpush1.bf16.msra.mxu0 %v5458
    %5491 = vmatprep.mubr.bf16.mxu0 %v5210
    %5492 = vmatmul.mubr.bf16.gmra.mrb[0].mxu0 %v5209
    %v5493 = vpop.f32.mrb[0].mxu0
    %v5494 = vadd.f32 0.0, %v5493
    %v5495 = vpop.f32.mrb[0].mxu0
    %v5496 = vpop.f32.mrb[0].mxu0
    %v5497 = vadd.f32 0.0, %v5496
    %v5498 = vpop.f32.mrb[0].mxu0
    %5499 = vmatprep.mubr.bf16.mxu0 %v5212
    %5500 = vmatmul.mubr.bf16.gmra.mrb[0].mxu0 %v5211
    %v5501 = vpop.f32.mrb[0].mxu0
    %v5502 = vadd.f32 0.0, %v5501
    %v5503 = vpop.f32.mrb[0].mxu0
    %v5504 = vpop.f32.mrb[0].mxu0
    %v5505 = vadd.f32 0.0, %v5504
    %v5506 = vpop.f32.mrb[0].mxu0
    %5507 = vmatprep.mubr.bf16.mxu0 %v5214
    %5508 = vmatmul.mubr.bf16.gmra.mrb[0].mxu0 %v5213
    %v5509 = vpop.f32.mrb[0].mxu0
    %v5510 = vadd.f32 0.0, %v5509
    %v5511 = vpop.f32.mrb[0].mxu0
    %v5512 = vpop.f32.mrb[0].mxu0
    %v5513 = vadd.f32 0.0, %v5512
    %v5514 = vpop.f32.mrb[0].mxu0
    %5515 = vmatprep.mubr.bf16.mxu0 %v5216
    %5516 = vmatmul.mubr.bf16.gmra.mrb[0].mxu0 %v5215
    %v5517 = vpop.f32.mrb[0].mxu0
    %v5518 = vadd.f32 0.0, %v5517
    %v5519 = vpop.f32.mrb[0].mxu0
    %v5520 = vpop.f32.mrb[0].mxu0
    %v5521 = vadd.f32 0.0, %v5520
    %v5522 = vpop.f32.mrb[0].mxu0
    %5523 = vmatprep.mubr.bf16.mxu0 %v5218
    %5524 = vmatmul.mubr.bf16.gmra.mrb[0].mxu0 %v5217
    %v5525 = vpop.f32.mrb[0].mxu0
    %v5526 = vadd.f32 0.0, %v5525
    %v5527 = vpop.f32.mrb[0].mxu0
    %v5528 = vpop.f32.mrb[0].mxu0
    %v5529 = vadd.f32 0.0, %v5528
    %v5530 = vpop.f32.mrb[0].mxu0
    %5531 = vdwg.mxu0
    %v5532 = vadd.f32 %v5404, %v5494
    %v5533 = vadd.f32 %v5407, %v5497
    %v5534 = vadd.f32 %v5412, %v5502
    %v5535 = vadd.f32 %v5415, %v5505
    %v5536 = vadd.f32 %v5420, %v5510
    %v5537 = vadd.f32 %v5423, %v5513
    %v5538 = vadd.f32 %v5428, %v5518
    %v5539 = vadd.f32 %v5431, %v5521
    %v5540 = vadd.f32 %v5436, %v5526
    %v5541 = vadd.f32 %v5439, %v5529
    %v5542 = vld [vmem:[%s10] sm:$0x1]
    %v5544 = vlaneseq
    %v5545 = vshrl.u32 %v5544, 7
    %v5546 = vsub.s32 0, %v5545
    %v5547 = vrot.slane %v5542, %v5546
    %v5549 = vadd.f32 %v5532, %v5547
    %v5550 = vadd.f32 %v5533, %v5547
    %v5551 = vadd.f32 %v5534, %v5547
    %v5552 = vadd.f32 %v5535, %v5547
    %v5553 = vadd.f32 %v5536, %v5547
    %v5554 = vadd.f32 %v5537, %v5547
    %v5555 = vadd.f32 %v5538, %v5547
    %v5556 = vadd.f32 %v5539, %v5547
    %v5557 = vadd.f32 %v5540, %v5547
    %v5558 = vadd.f32 %v5541, %v5547
    %v5559 = vmul.f32 %v5549, %v4510
    %v5560 = vmul.f32 %v5550, %v4511
    %v5561 = vmul.f32 %v5551, %v4512
    %v5562 = vmul.f32 %v5552, %v4513
    %v5563 = vmul.f32 %v5553, %v4514
    %v5564 = vmul.f32 %v5554, %v4515
    %v5565 = vmul.f32 %v5555, %v4516
    %v5566 = vmul.f32 %v5556, %v4517
    %v5567 = vmul.f32 %v5557, %v4518
    %v5568 = vmul.f32 %v5558, %v4519
    %v5569 = vadd.f32 %v5559, %v5560
    %v5570 = vadd.f32 %v5569, %v5561
    %v5571 = vadd.f32 %v5570, %v5562
    %v5572 = vadd.f32 %v5571, %v5563
    %v5573 = vadd.f32 %v5572, %v5564
    %v5574 = vadd.f32 %v5573, %v5565
    %v5575 = vadd.f32 %v5574, %v5566
    %v5576 = vadd.f32 %v5575, %v5567
    %v5577 = vadd.f32 %v5576, %v5568
    %v5578 = vrot.slane %v5577, 4
    %v5579 = vadd.f32 %v5577, %v5578
    %v5580 = vrot.slane %v5579, 2
    %v5581 = vadd.f32 %v5579, %v5580
    %v5582 = vrot.slane %v5581, 1
    %v5583 = vadd.f32 %v5581, %v5582
    %v5584 = vmul.f32 %v5583, 0.05
    %v5585 = vmul.f32 %v5559, %v5559
    %v5586 = vmul.f32 %v5560, %v5560
    %v5587 = vmul.f32 %v5561, %v5561
    %v5588 = vmul.f32 %v5562, %v5562
    %v5589 = vmul.f32 %v5563, %v5563
    %v5590 = vmul.f32 %v5564, %v5564
    %v5591 = vmul.f32 %v5565, %v5565
    %v5592 = vmul.f32 %v5566, %v5566
    %v5593 = vmul.f32 %v5567, %v5567
    %v5594 = vmul.f32 %v5568, %v5568
    %v5595 = vadd.f32 %v5585, %v5586
    %v5596 = vadd.f32 %v5595, %v5587
    %v5597 = vadd.f32 %v5596, %v5588
    %v5598 = vadd.f32 %v5597, %v5589
    %v5599 = vadd.f32 %v5598, %v5590
    %v5600 = vadd.f32 %v5599, %v5591
    %v5601 = vadd.f32 %v5600, %v5592
    %v5602 = vadd.f32 %v5601, %v5593
    %v5603 = vadd.f32 %v5602, %v5594
    %v5604 = vrot.slane %v5603, 4
    %v5605 = vadd.f32 %v5603, %v5604
    %v5606 = vrot.slane %v5605, 2
    %v5607 = vadd.f32 %v5605, %v5606
    %v5608 = vrot.slane %v5607, 1
    %v5609 = vadd.f32 %v5607, %v5608
    %v5610 = vmul.f32 %v5609, 0.05
    %v5611 = vmul.f32 %v5584, %v5584
    %v5612 = vsub.f32 %v5610, %v5611
    %v5613 = vmax.f32 %v5612, 0.0
    %v5614 = vsub.f32 %v5549, %v5584
    %v5615 = vsub.f32 %v5550, %v5584
    %v5616 = vsub.f32 %v5551, %v5584
    %v5617 = vsub.f32 %v5552, %v5584
    %v5618 = vsub.f32 %v5553, %v5584
    %v5619 = vsub.f32 %v5554, %v5584
    %v5620 = vsub.f32 %v5555, %v5584
    %v5621 = vsub.f32 %v5556, %v5584
    %v5622 = vsub.f32 %v5557, %v5584
    %v5623 = vsub.f32 %v5558, %v5584
    %v5624 = vadd.f32 %v5613, 1e-05
    %v5625 = vrsqrt.pop %v5624
    %v5626 = vmul.f32 %v5614, %v5625
    %v5627 = vmul.f32 %v5615, %v5625
    %v5628 = vmul.f32 %v5616, %v5625
    %v5629 = vmul.f32 %v5617, %v5625
    %v5630 = vmul.f32 %v5618, %v5625
    %v5631 = vmul.f32 %v5619, %v5625
    %v5632 = vmul.f32 %v5620, %v5625
    %v5633 = vmul.f32 %v5621, %v5625
    %v5634 = vmul.f32 %v5622, %v5625
    %v5635 = vmul.f32 %v5623, %v5625
    %v5636 = vld [vmem:[%s11] sm:$0x1]
    %v5638 = vlaneseq
    %v5639 = vshrl.u32 %v5638, 7
    %v5640 = vsub.s32 0, %v5639
    %v5641 = vrot.slane %v5636, %v5640
    %v5643 = vmul.f32 %v5626, %v5641
    %v5644 = vmul.f32 %v5627, %v5641
    %v5645 = vmul.f32 %v5628, %v5641
    %v5646 = vmul.f32 %v5629, %v5641
    %v5647 = vmul.f32 %v5630, %v5641
    %v5648 = vmul.f32 %v5631, %v5641
    %v5649 = vmul.f32 %v5632, %v5641
    %v5650 = vmul.f32 %v5633, %v5641
    %v5651 = vmul.f32 %v5634, %v5641
    %v5652 = vmul.f32 %v5635, %v5641
    %v5653 = vld [vmem:[%s12] sm:$0x1]
    %v5655 = vlaneseq
    %v5656 = vshrl.u32 %v5655, 7
    %v5657 = vsub.s32 0, %v5656
    %v5658 = vrot.slane %v5653, %v5657
    %v5660 = vadd.f32 %v5643, %v5658
    %v5661 = vadd.f32 %v5644, %v5658
    %v5662 = vadd.f32 %v5645, %v5658
    %v5663 = vadd.f32 %v5646, %v5658
    %v5664 = vadd.f32 %v5647, %v5658
    %v5665 = vadd.f32 %v5648, %v5658
    %v5666 = vadd.f32 %v5649, %v5658
    %v5667 = vadd.f32 %v5650, %v5658
    %v5668 = vadd.f32 %v5651, %v5658
    %v5669 = vadd.f32 %v5652, %v5658
    %v5670 = vmax.f32 %v5660, 0.0
    %v5671 = vmax.f32 %v5661, 0.0
    %v5672 = vmax.f32 %v5662, 0.0
    %v5673 = vmax.f32 %v5663, 0.0
    %v5674 = vmax.f32 %v5664, 0.0
    %v5675 = vmax.f32 %v5665, 0.0
    %v5676 = vmax.f32 %v5666, 0.0
    %v5677 = vmax.f32 %v5667, 0.0
    %v5678 = vmax.f32 %v5668, 0.0
    %v5679 = vmax.f32 %v5669, 0.0
    %s5680 = smul.u32 4, 16
    %s5681 = smul.u32 %s5680, 1
    %s5682 = sshll.u32 %s5681, 4
    %5683 = dma.done %s153, %s5682
    %v5684 = vpack.c.bf16 %v5671, %v5670
    %v5685 = vpack.c.bf16 %v5673, %v5672
    %v5686 = vpack.c.bf16 %v5675, %v5674
    %v5687 = vpack.c.bf16 %v5677, %v5676
    %v5688 = vpack.c.bf16 %v5679, %v5678
    %v5689 = vld [vmem:[#allocation7] sm:$0xff]
    %v5690 = vld [vmem:[#allocation7 + $0x8] sm:$0xff]
    %v5691 = vld [vmem:[#allocation7 + $0x10] sm:$0xff]
    %v5692 = vld [vmem:[#allocation7 + $0x18] sm:$0xff]
    %v5693 = vld [vmem:[#allocation7 + $0x20] sm:$0xff]
    %v5694 = vld [vmem:[#allocation7 + $0x28] sm:$0xff]
    %v5695 = vld [vmem:[#allocation7 + $0x30] sm:$0xff]
    %v5696 = vld [vmem:[#allocation7 + $0x38] sm:$0xff]
    %v5697 = vld [vmem:[%s13] sm:$0x1]
    %v5699 = vlaneseq
    %v5700 = vshrl.u32 %v5699, 7
    %v5701 = vsub.s32 0, %v5700
    %v5702 = vrot.slane %v5697, %v5701
    %5704 = vmatprep.subr.bf16.mxu0 0
    %5705 = vmatpush1.bf16.msra.mxu0 %v5689
    %5706 = vmatprep.subr.bf16.mxu0 0
    %5707 = vmatpush1.bf16.msra.mxu0 %v5690
    %5708 = vmatprep.subr.bf16.mxu0 0
    %5709 = vmatpush1.bf16.msra.mxu0 %v5691
    %5710 = vmatprep.subr.bf16.mxu0 0
    %5711 = vmatpush1.bf16.msra.mxu0 %v5692
    %5712 = vmatprep.subr.bf16.mxu0 0
    %5713 = vmatpush1.bf16.msra.mxu0 %v5693
    %5714 = vmatprep.subr.bf16.mxu0 0
    %5715 = vmatpush1.bf16.msra.mxu0 %v5694
    %5716 = vmatprep.subr.bf16.mxu0 0
    %5717 = vmatpush1.bf16.msra.mxu0 %v5695
    %5718 = vmatprep.subr.bf16.mxu0 0
    %5719 = vmatpush1.bf16.msra.mxu0 %v5696
    %5720 = vmatprep.subr.bf16.mxu0 0
    %5721 = vmatpush1.bf16.msra.mxu0 0
    %5722 = vmatprep.subr.bf16.mxu0 0
    %5723 = vmatpush1.bf16.msra.mxu0 0
    %5724 = vmatprep.subr.bf16.mxu0 0
    %5725 = vmatpush1.bf16.msra.mxu0 0
    %5726 = vmatprep.subr.bf16.mxu0 0
    %5727 = vmatpush1.bf16.msra.mxu0 0
    %5728 = vmatprep.subr.bf16.mxu0 0
    %5729 = vmatpush1.bf16.msra.mxu0 0
    %5730 = vmatprep.subr.bf16.mxu0 0
    %5731 = vmatpush1.bf16.msra.mxu0 0
    %5732 = vmatprep.subr.bf16.mxu0 0
    %5733 = vmatpush1.bf16.msra.mxu0 0
    %5734 = vmatprep.subr.bf16.mxu0 0
    %5735 = vmatpush1.bf16.msra.mxu0 0
    %5736 = vmatprep.mubr.bf16.mxu0 0
    %5737 = vmatmul.mubr.bf16.gmra.mrb[0].mxu0 %v5684
    %v5738 = vpop.f32.mrb[0].mxu0
    %v5739 = vadd.f32 %v5702, %v5738
    %v5740 = vpop.f32.mrb[0].mxu0
    %v5741 = vpop.f32.mrb[0].mxu0
    %v5742 = vadd.f32 %v5702, %v5741
    %v5743 = vpop.f32.mrb[0].mxu0
    %5744 = vmatprep.mubr.bf16.mxu0 0
    %5745 = vmatmul.mubr.bf16.gmra.mrb[0].mxu0 %v5685
    %v5746 = vpop.f32.mrb[0].mxu0
    %v5747 = vadd.f32 %v5702, %v5746
    %v5748 = vpop.f32.mrb[0].mxu0
    %v5749 = vpop.f32.mrb[0].mxu0
    %v5750 = vadd.f32 %v5702, %v5749
    %v5751 = vpop.f32.mrb[0].mxu0
    %5752 = vmatprep.mubr.bf16.mxu0 0
    %5753 = vmatmul.mubr.bf16.gmra.mrb[0].mxu0 %v5686
    %v5754 = vpop.f32.mrb[0].mxu0
    %v5755 = vadd.f32 %v5702, %v5754
    %v5756 = vpop.f32.mrb[0].mxu0
    %v5757 = vpop.f32.mrb[0].mxu0
    %v5758 = vadd.f32 %v5702, %v5757
    %v5759 = vpop.f32.mrb[0].mxu0
    %5760 = vmatprep.mubr.bf16.mxu0 0
    %5761 = vmatmul.mubr.bf16.gmra.mrb[0].mxu0 %v5687
    %v5762 = vpop.f32.mrb[0].mxu0
    %v5763 = vadd.f32 %v5702, %v5762
    %v5764 = vpop.f32.mrb[0].mxu0
    %v5765 = vpop.f32.mrb[0].mxu0
    %v5766 = vadd.f32 %v5702, %v5765
    %v5767 = vpop.f32.mrb[0].mxu0
    %5768 = vmatprep.mubr.bf16.mxu0 0
    %5769 = vmatmul.mubr.bf16.gmra.mrb[0].mxu0 %v5688
    %v5770 = vpop.f32.mrb[0].mxu0
    %v5771 = vadd.f32 %v5702, %v5770
    %v5772 = vpop.f32.mrb[0].mxu0
    %v5773 = vpop.f32.mrb[0].mxu0
    %v5774 = vadd.f32 %v5702, %v5773
    %v5775 = vpop.f32.mrb[0].mxu0
    %5776 = vdwg.mxu0
    %v5777 = vtanh.pop %v5739
    %v5778 = vtanh.pop %v5742
    %v5779 = vtanh.pop %v5747
    %v5780 = vtanh.pop %v5750
    %v5781 = vtanh.pop %v5755
    %v5782 = vtanh.pop %v5758
    %v5783 = vtanh.pop %v5763
    %v5784 = vtanh.pop %v5766
    %v5785 = vtanh.pop %v5771
    %v5786 = vtanh.pop %v5774
    %5787 = vst [vmem:[%s17] sm:$0xff] %v5777
    %5788 = vst [vmem:[%s17 + $0x8] sm:$0xff] %v5778
    %5789 = vst [vmem:[%s17 + $0x10] sm:$0xff] %v5779
    %5790 = vst [vmem:[%s17 + $0x18] sm:$0xff] %v5780
    %5791 = vst [vmem:[%s17 + $0x20] sm:$0xff] %v5781
    %5792 = vst [vmem:[%s17 + $0x28] sm:$0xff] %v5782
    %5793 = vst [vmem:[%s17 + $0x30] sm:$0xff] %v5783
    %5794 = vst [vmem:[%s17 + $0x38] sm:$0xff] %v5784
    %5795 = vst [vmem:[%s17 + $0x40] sm:$0xff] %v5785
    %5796 = vst [vmem:[%s17 + $0x48] sm:$0xff] %v5786
    // Predicated region
    $region112: #{generator_forward.1} parent=1 // pred_check
      _
    $region113: #{generator_forward.1} parent=1 // pred_check_branch
      %5798 = sbr.rel (0) target = $region115
    $region114: #{generator_forward.1} parent=1 // pred_region
      _
    $region115: #{generator_forward.1} parent=1 // pred_fallthru
      _
    // Predicated region
    $region116: #{generator_forward.1} parent=1 // pred_check
      _
    $region117: #{generator_forward.1} parent=1 // pred_check_branch
      %5800 = sbr.rel (0) target = $region119
    $region118: #{generator_forward.1} parent=1 // pred_region
      _
    $region119: #{generator_forward.1} parent=1 // pred_fallthru
      _
    %5801 = vsyncpa [#allocation10], 1
    %5802 = vsyncpa [#allocation12], 1
    %5803 = vsyncpa [#allocation15], 1
  %5804 = vsyncmov [#allocation8]
  %s5805 = vpop.sfrf %5804
  %p5806 = scmp.eq.s32.totalorder %s5805, 0
  %p5807 = pneg %p5806
  %5809 = shalt.err (%p5807)
  %s5810 = scalar_lea.sflag [#allocation8], 1
  %5811 = vsyncmov %s5810
  %s5812 = vpop.sfrf %5811
  %p5813 = scmp.eq.s32.totalorder %s5812, 0
  %p5814 = pneg %p5813
  %5816 = shalt.err (%p5814)
  %s5817 = scalar_lea.sflag [#allocation8], 2
  %5818 = vsyncmov %s5817
  %s5819 = vpop.sfrf %5818
  %p5820 = scmp.eq.s32.totalorder %s5819, 0
  %p5821 = pneg %p5820
  %5823 = shalt.err (%p5821)

</llo_original>
